<compile_context>
chip_gen: v6e
topology: v6e:2x2x1
jax: 0.10.0
libtpu: 0.0.40
codegen_flags: <defaults>
</compile_context>

<pallas_src>
import functools

import numpy as np
import jax
import jax.numpy as jnp
from jax.experimental import pallas as pl
from jax.experimental.pallas import tpu as pltpu

LANE = 128
NODE_PAD = 512          # pad node count to a multiple of this => A tiles >= 512


def _round_up(x, m):
    return ((x + m - 1) // m) * m


def _choose_row_tile(n_pad, pref):
    """Largest tile <= pref dividing n_pad; prefer >=2 row tiles (v7x 2 TCs)
    when that still keeps the tile >= 512."""
    tile = NODE_PAD
    for t in (2048, 1024, 512):
        if t <= pref and n_pad % t == 0:
            tile = t
            break
    if n_pad // tile == 1 and (n_pad // 2) >= 512 and (n_pad // 2) % 128 == 0:
        tile = n_pad // 2
    return tile


def _agg_tiles(n_pad):
    assert n_pad % NODE_PAD == 0
    tm = _choose_row_tile(n_pad, pref=1024)   # row tile (amortizes epilogue/writeback)
    tk = 512                                  # reduction (A column) tile
    return tm, tk


# ---------------------------------------------------------------------------
# Pallas kernels
# ---------------------------------------------------------------------------
def xw_kernel(x_ref, w_ref, o_ref, acc_ref):
    # row/K-tiled  X @ W^T  with f32 accumulator, bf16 out
    k = pl.program_id(1)

    @pl.when(k == 0)
    def _():
        acc_ref[...] = jnp.zeros_like(acc_ref)

    acc_ref[...] += jnp.dot(x_ref[...], w_ref[...],
                            preferred_element_type=jnp.float32)

    @pl.when(k == pl.num_programs(1) - 1)
    def _():
        o_ref[...] = acc_ref[...].astype(o_ref.dtype)


def agg_kernel(blk_idx_ref, blk_cnt_ref, a_ref, xw_ref, b_ref, o_ref, acc_ref,
               *, tk, a_scale, activation, num_valid):
    """out_rowtile = act(scale * sum_k A[i, k_tile] @ XW[k_tile] + b).

    A tiles are selected through a block-CSR table (scalar prefetch); XW is a
    single VMEM-resident block sliced in-kernel; A may be int8/fp8 and is cast
    to bf16 on the VPU (the global dequant scale is folded into the epilogue).
    """
    i = pl.program_id(0)
    k = pl.program_id(1)

    @pl.when(k == 0)
    def _():
        acc_ref[...] = jnp.zeros_like(acc_ref)

    # Skip compute on padded block-CSR entries (their A DMA is dedup'd anyway).
    @pl.when(k < blk_cnt_ref[i])
    def _():
        kk = blk_idx_ref[i, k]
        off = pl.multiple_of(kk * tk, tk)
        xw_tile = xw_ref[pl.ds(off, tk), :]
        a = a_ref[...].astype(jnp.bfloat16)
        acc_ref[...] += jnp.dot(a, xw_tile, preferred_element_type=jnp.float32)

    @pl.when(k == pl.num_programs(1) - 1)
    def _():
        acc = acc_ref[...]
        if a_scale != 1.0:
            acc = acc * a_scale            # fold A-dequant scale into epilogue
        logits = acc + b_ref[...]
        if activation == "relu":
            o_ref[...] = jnp.maximum(logits, 0.0).astype(o_ref.dtype)
        else:
            # masked log_softmax over the valid label lanes (f32 epilogue)
            col = jax.lax.broadcasted_iota(jnp.int32, logits.shape, 1)
            valid = col < num_valid
            masked = jnp.where(valid, logits, -1e30)
            m = jnp.max(masked, axis=1, keepdims=True)
            lse = jnp.log(jnp.sum(jnp.exp(masked - m), axis=1, keepdims=True)) + m
            o_ref[...] = jnp.where(valid, logits - lse, 0.0).astype(o_ref.dtype)


# ---------------------------------------------------------------------------
# pallas_call wrappers
# ---------------------------------------------------------------------------
def gcn_xw(x_bf16, w_t_bf16):
    """XW = x @ W^T.  x:[n_pad, f_in_pad] bf16, W^T:[f_in_pad, f_out_pad] bf16."""
    n_pad, f_in = x_bf16.shape
    f_out = w_t_bf16.shape[1]
    tm = _choose_row_tile(n_pad, pref=512)
    if f_in <= 512:
        tkf = f_in
    elif f_in % 512 == 0:
        tkf = 512
    elif f_in % 256 == 0:
        tkf = 256
    else:
        tkf = 128
    grid = (n_pad // tm, f_in // tkf)
    vmem_est = (2 * tm * tkf * 2 + 2 * tkf * f_out * 2
                + tm * f_out * 4 + 2 * tm * f_out * 2)
    return pl.pallas_call(
        xw_kernel,
        out_shape=jax.ShapeDtypeStruct((n_pad, f_out), jnp.bfloat16),
        grid_spec=pltpu.PrefetchScalarGridSpec(
            num_scalar_prefetch=0,
            grid=grid,
            in_specs=[
                pl.BlockSpec((tm, tkf), lambda i, k: (i, k)),
                pl.BlockSpec((tkf, f_out), lambda i, k: (k, 0)),
            ],
            out_specs=pl.BlockSpec((tm, f_out), lambda i, k: (i, 0)),
            scratch_shapes=[pltpu.VMEM((tm, f_out), jnp.float32)],
        ),
        compiler_params=pltpu.CompilerParams(
            dimension_semantics=("parallel", "arbitrary"),
            vmem_limit_bytes=int(min(56 << 20, max(2 * vmem_est, 32 << 20))),
        ),
    )(x_bf16, w_t_bf16)


def gcn_aggregate(adj_q, xw_bf16, bias, blk_idx, blk_cnt, *,
                  a_scale, activation, num_valid, out_dtype):
    """out = act(A @ XW + b) with block-sparse A tiles, resident XW, f32 acc."""
    n_pad = adj_q.shape[0]
    f_pad = xw_bf16.shape[1]
    tm, tk = _agg_tiles(n_pad)
    nrt = n_pad // tm
    max_blocks = blk_idx.shape[1]
    grid = (nrt, max_blocks)

    kernel = functools.partial(agg_kernel, tk=tk, a_scale=a_scale,
                               activation=activation, num_valid=num_valid)

    a_bytes = jnp.dtype(adj_q.dtype).itemsize
    out_bytes = jnp.dtype(out_dtype).itemsize
    vmem_est = (2 * tm * tk * a_bytes          # A double-buffer
                + 2 * n_pad * f_pad * 2        # resident XW (conservative x2)
                + tm * f_pad * 4               # f32 accumulator
                + 2 * tm * f_pad * out_bytes   # output double-buffer
                + 2 * f_pad * 4)               # bias
    vmem_limit = int(min(56 << 20, max(2 * vmem_est, 32 << 20)))

    return pl.pallas_call(
        kernel,
        out_shape=jax.ShapeDtypeStruct((n_pad, f_pad), out_dtype),
        grid_spec=pltpu.PrefetchScalarGridSpec(
            num_scalar_prefetch=2,             # block-CSR column table + counts
            grid=grid,
            in_specs=[
                # A tile, column picked from the block-CSR table (skips zero tiles)
                pl.BlockSpec((tm, tk), lambda i, k, idx, cnt: (i, idx[i, k])),
                # XW fully VMEM-resident: single block, constant index -> one DMA
                pl.BlockSpec((n_pad, f_pad), lambda i, k, idx, cnt: (0, 0)),
                # bias (resident)
                pl.BlockSpec((1, f_pad), lambda i, k, idx, cnt: (0, 0)),
            ],
            out_specs=pl.BlockSpec((tm, f_pad), lambda i, k, idx, cnt: (i, 0)),
            scratch_shapes=[pltpu.VMEM((tm, f_pad), jnp.float32)],
        ),
        compiler_params=pltpu.CompilerParams(
            dimension_semantics=("parallel", "arbitrary"),
            vmem_limit_bytes=vmem_limit,
        ),
    )(blk_idx, blk_cnt, adj_q, xw_bf16, bias)


# ---------------------------------------------------------------------------
# Host-side glue (graph preprocessing, quantization, parameter init)
# ---------------------------------------------------------------------------
def build_norm_adj(edge_index, num_nodes, n_pad=None):
    """Dense normalized adjacency (self-loops + deg^-1/2 norm), zero-padded to
    a multiple of NODE_PAD.  Built ONCE and cached/reused across forwards."""
    ei = np.asarray(edge_index)
    frm, to = ei[0], ei[1]
    keep = frm != to                       # drop existing self-loops
    loop = np.arange(num_nodes, dtype=ei.dtype)
    frm = np.concatenate([frm[keep], loop])
    to = np.concatenate([to[keep], loop])
    deg = np.zeros(num_nodes, dtype=np.float32)
    np.add.at(deg, to, 1.0)
    with np.errstate(divide="ignore"):
        dinv = deg ** -0.5
    dinv[np.isinf(dinv)] = 0.0
    w = dinv[frm] * 1.0 * dinv[to]
    if n_pad is None:
        n_pad = _round_up(max(num_nodes, NODE_PAD), NODE_PAD)
    adj = np.zeros((n_pad, n_pad), dtype=np.float32)
    np.add.at(adj, (to, frm), w)           # aggregation at destination (aggr='add')
    return adj


def build_block_csr(adj_np, tm, tk):
    """Per row tile, the list of nonzero tk-wide column tiles (block-CSR).
    Padding entries repeat the last valid index so the DMA is dedup'd."""
    n_pad = adj_np.shape[0]
    nrt, nkt = n_pad // tm, n_pad // tk
    nz_mask = (adj_np != 0).reshape(nrt, tm, nkt, tk).any(axis=(1, 3))
    cnt = nz_mask.sum(axis=1).astype(np.int32)
    max_blocks = max(int(cnt.max()), 1)
    idx = np.zeros((nrt, max_blocks), dtype=np.int32)
    for i in range(nrt):
        nz = np.nonzero(nz_mask[i])[0].astype(np.int32)
        if nz.size:
            idx[i, :nz.size] = nz
            idx[i, nz.size:] = nz[-1]
    return jnp.asarray(idx), jnp.asarray(cnt)


def _probe_cast_matmul(dtype):
    """Check that `dtype -> bf16 cast + MXU matmul` lowers on this chip."""
    try:
        def k(a_ref, b_ref, o_ref):
            o_ref[...] = jnp.dot(a_ref[...].astype(jnp.bfloat16), b_ref[...],
                                 preferred_element_type=jnp.float32)
        a = jnp.ones((128, 128), dtype)
        b = jnp.ones((128, 128), jnp.bfloat16)
        out = pl.pallas_call(
            k, out_shape=jax.ShapeDtypeStruct((128, 128), jnp.float32))(a, b)
        jax.block_until_ready(out)
        return True
    except Exception:
        return False


def _pick_adj_dtype():
    """Generation-dispatched adjacency compression (A stream is the HBM bound)."""
    try:
        kind = jax.devices()[0].device_kind.lower()
    except Exception:
        return jnp.bfloat16
    if "v5" in kind or "v6" in kind:
        cand = jnp.int8                                    # halve A bytes, exact cast
    elif "7" in kind:
        cand = getattr(jnp, "float8_e4m3fn", jnp.bfloat16)  # v7x MXU has no int path
    else:
        cand = jnp.bfloat16
    if cand != jnp.bfloat16 and not _probe_cast_matmul(cand):
        cand = jnp.bfloat16
    return cand


def quantize_adj(adj_np, dtype):
    """Returns (quantized adjacency, global dequant scale)."""
    if dtype == jnp.int8:
        amax = float(np.abs(adj_np).max())
        scale = (amax / 127.0) if amax > 0 else 1.0
        q = np.clip(np.rint(adj_np / scale), -127, 127).astype(np.int8)
        return jnp.asarray(q), float(scale)
    # bf16 / fp8: values lie in [0, 1], store directly (scale folded = 1.0)
    return jnp.asarray(adj_np).astype(dtype), 1.0


def xavier_uniform(key, fan_in, fan_out):
    bound = np.sqrt(6.0 / (fan_in + fan_out))
    # stored directly as W^T, shape [fan_in, fan_out]
    return jax.random.uniform(key, (fan_in, fan_out), jnp.float32, -bound, bound)


def init_gcn_params(key, num_features, num_labels, hidden=16):
    """Weights stored as lane-padded W^T slabs (zero-padded rows/cols)."""
    k1, k2 = jax.random.split(key)
    f_in_pad = _round_up(num_features, LANE)
    hid_pad = _round_up(hidden, LANE)
    lab_pad = _round_up(num_labels, LANE)
    w1 = jnp.zeros((f_in_pad, hid_pad), jnp.float32).at[
        :num_features, :hidden].set(xavier_uniform(k1, num_features, hidden))
    w2 = jnp.zeros((hid_pad, lab_pad), jnp.float32).at[
        :hidden, :num_labels].set(xavier_uniform(k2, hidden, num_labels))
    return {
        "w1": w1, "b1": jnp.zeros((1, hid_pad), jnp.float32),
        "w2": w2, "b2": jnp.zeros((1, lab_pad), jnp.float32),
    }


@functools.partial(jax.jit,
                   static_argnames=("a_scale", "num_labels", "num_nodes"))
def gcn_forward(adj_q, x_pad, params, blk_idx, blk_cnt, *,
                a_scale, num_labels, num_nodes):
    # layer 1: relu(A @ (x @ W1^T) + b1)
    xw1 = gcn_xw(x_pad.astype(jnp.bfloat16), params["w1"].astype(jnp.bfloat16))
    h = gcn_aggregate(adj_q, xw1, params["b1"], blk_idx, blk_cnt,
                      a_scale=a_scale, activation="relu",
                      num_valid=None, out_dtype=jnp.bfloat16)
    # TODO(synk): F.dropout(training=True) not reproduced; eval-mode identity used.
    # layer 2: log_softmax(A @ (h @ W2^T) + b2) over the (masked) label lanes
    # TODO(synk): layer-2 XW could be fused into the aggregation kernel
    #             (W2^T resident per k tile) to save one small HBM round-trip.
    xw2 = gcn_xw(h, params["w2"].astype(jnp.bfloat16))
    logp = gcn_aggregate(adj_q, xw2, params["b2"], blk_idx, blk_cnt,
                         a_scale=a_scale, activation="log_softmax",
                         num_valid=num_labels, out_dtype=jnp.float32)
    return logp[:num_nodes, :num_labels]


def reference_forward(x, adj_dense, params, num_nodes, num_features, hidden,
                      num_labels):
    """Pure-JAX f32 reference."""
    a = jnp.asarray(adj_dense[:num_nodes, :num_nodes], jnp.float32)
    w1 = params["w1"][:num_features, :hidden]
    b1 = params["b1"][:, :hidden]
    w2 = params["w2"][:hidden, :num_labels]
    b2 = params["b2"][:, :num_labels]
    h = jnp.maximum(a @ (x @ w1) + b1, 0.0)
    logits = a @ (h @ w2) + b2
    return jax.nn.log_softmax(logits, axis=1)


# ---------------------------------------------------------------------------
if __name__ == "__main__":
    num_nodes = 16
    num_features = 8
    num_labels = 4
    num_edges = 40
    hidden = 16

    key = jax.random.PRNGKey(0)
    kx, ke, kp = jax.random.split(key, 3)

    x = jax.random.normal(kx, (num_nodes, num_features), jnp.float32)
    edge_index = jax.random.randint(ke, (2, num_edges), 0, num_nodes, jnp.int32)

    params = init_gcn_params(kp, num_features, num_labels, hidden=hidden)

    # Precompute (cache) the normalized adjacency once; compress it per TPU gen.
    adj_np = build_norm_adj(np.asarray(edge_index), num_nodes)
    n_pad = adj_np.shape[0]
    adj_dtype = _pick_adj_dtype()
    adj_q, a_scale = quantize_adj(adj_np, adj_dtype)

    # Block-CSR table of nonzero A tiles (built once, reused by both layers).
    tm_agg, tk_agg = _agg_tiles(n_pad)
    blk_idx, blk_cnt = build_block_csr(adj_np, tm_agg, tk_agg)

    # Zero-pad node features to [n_pad, f_in_pad] (lane-dense input slab).
    f_in_pad = _round_up(num_features, LANE)
    x_pad = jnp.zeros((n_pad, f_in_pad), jnp.float32).at[
        :num_nodes, :num_features].set(x)

    out = gcn_forward(adj_q, x_pad, params, blk_idx, blk_cnt,
                      a_scale=a_scale, num_labels=num_labels,
                      num_nodes=num_nodes)
    out = jax.block_until_ready(out)

    assert out.shape == (num_nodes, num_labels)
    assert bool(jnp.all(jnp.isfinite(out)))
    # rows of log_softmax should exp-sum to ~1
    assert bool(jnp.allclose(jnp.sum(jnp.exp(out), axis=1), 1.0, atol=1e-4))

    # (1) kernel correctness: compare against a reference built from the SAME
    #     (dequantized) adjacency -> isolates bf16/kernel error from A quant.
    adj_deq = np.asarray(jnp.asarray(adj_q, jnp.float32)) * a_scale
    ref_q = reference_forward(x, adj_deq, params, num_nodes, num_features,
                              hidden, num_labels)
    err_q = float(jnp.max(jnp.abs(out - ref_q)))
    assert err_q < 0.1, err_q

    # (2) end-to-end sanity vs the exact f32 adjacency (looser when A is fp8).
    ref_f = reference_forward(x, adj_np, params, num_nodes, num_features,
                              hidden, num_labels)
    loose_tol = 0.6 if adj_dtype not in (jnp.bfloat16, jnp.int8) else 0.25
    err_f = float(jnp.max(jnp.abs(out - ref_f)))
    assert err_f < loose_tol, err_f

    print("KERNEL_OK")
</pallas_src>

<mosaic_0001>
module attributes {stable_mosaic.version = 11 : i64} {
  func.func @agg_kernel(%arg0: i32, %arg1: i32, %arg2: memref<1x1xi32, #tpu.memory_space<smem>>, %arg3: memref<1xi32, #tpu.memory_space<smem>>, %arg4: memref<512x512xbf16, #tpu.memory_space<vmem>>, %arg5: memref<512x128xbf16, #tpu.memory_space<vmem>>, %arg6: memref<1x128xf32, #tpu.memory_space<vmem>>, %arg7: memref<512x128xbf16, #tpu.memory_space<vmem>>, %arg8: memref<512x128xf32, #tpu.memory_space<vmem>>) attributes {dimension_semantics = [#tpu.dimension_semantics<parallel>, #tpu.dimension_semantics<arbitrary>], iteration_bounds = array<i64: 1, 1>, scalar_prefetch = 2 : i64, scratch_operands = 1 : i64, tpu.core_type = #tpu.core_type<tc>, window_params = [{transform_indices = @transform_0, window_bounds = array<i64: 512, 512>}, {pipeline_mode = #tpu.pipeline_mode<synchronous>, transform_indices = @transform_1, window_bounds = array<i64: 512, 128>}, {pipeline_mode = #tpu.pipeline_mode<synchronous>, transform_indices = @transform_2, window_bounds = array<i64: 1, 128>}, {transform_indices = @transform_3, window_bounds = array<i64: 512, 128>}]} {
    %c0_i32 = arith.constant 0 : i32
    %0 = arith.cmpi eq, %arg1, %c0_i32 : i32
    %1 = arith.extui %0 : i1 to i32
    %c0_i32_0 = arith.constant 0 : i32
    %2 = arith.cmpi ne, %1, %c0_i32_0 : i32
    scf.if %2 {
      %cst = arith.constant 0.000000e+00 : f32
      %11 = vector.broadcast %cst : f32 to vector<512x128xf32>
      %c0 = arith.constant 0 : index
      %c0_4 = arith.constant 0 : index
      %12 = vector.load %arg8[%c0, %c0_4] : memref<512x128xf32, #tpu.memory_space<vmem>>, vector<512x128xf32>
      tpu.vector_store %arg8[%c0, %c0_4], %11 {strides = array<i32>} : memref<512x128xf32, #tpu.memory_space<vmem>>, vector<512x128xf32>,
    } else {
    }
    %3 = arith.index_cast %arg0 : i32 to index
    %4 = memref.load %arg3[%3] : memref<1xi32, #tpu.memory_space<smem>>
    %5 = arith.cmpi slt, %arg1, %4 : i32
    %6 = arith.extui %5 : i1 to i32
    %c0_i32_1 = arith.constant 0 : i32
    %7 = arith.cmpi ne, %6, %c0_i32_1 : i32
    scf.if %7 {
      %11 = arith.index_cast %arg0 : i32 to index
      %12 = arith.index_cast %arg1 : i32 to index
      %13 = memref.load %arg2[%11, %12] : memref<1x1xi32, #tpu.memory_space<smem>>
      %c512_i32 = arith.constant 512 : i32
      %14 = arith.muli %13, %c512_i32 : i32
      %15 = tpu.assume_multiple %14, 512 : i32
      %16 = arith.index_cast %15 : i32 to index
      %c0 = arith.constant 0 : index
      %17 = vector.load %arg5[%16, %c0] : memref<512x128xbf16, #tpu.memory_space<vmem>>, vector<512x128xbf16>
      %c0_4 = arith.constant 0 : index
      %c0_5 = arith.constant 0 : index
      %18 = vector.load %arg4[%c0_4, %c0_5] : memref<512x512xbf16, #tpu.memory_space<vmem>>, vector<512x512xbf16>
      %c0_6 = arith.constant 0 : index
      %c0_7 = arith.constant 0 : index
      %19 = vector.load %arg8[%c0_6, %c0_7] : memref<512x128xf32, #tpu.memory_space<vmem>>, vector<512x128xf32>
      %cst = arith.constant dense<0.000000e+00> : vector<512x128xf32>
      %20 = tpu.matmul %18, %17, %cst {dimension_numbers = #tpu.dot_dimension_numbers<[1], [0], [0], [1], [0, 0, 1, 1], [], []>} : vector<512x512xbf16>, vector<512x128xbf16>, vector<512x128xf32> -> vector<512x128xf32>
      %21 = arith.addf %19, %20 : vector<512x128xf32>
      %c0_8 = arith.constant 0 : index
      %c0_9 = arith.constant 0 : index
      %22 = vector.load %arg8[%c0_8, %c0_9] : memref<512x128xf32, #tpu.memory_space<vmem>>, vector<512x128xf32>
      tpu.vector_store %arg8[%c0_8, %c0_9], %21 {strides = array<i32>} : memref<512x128xf32, #tpu.memory_space<vmem>>, vector<512x128xf32>,
    } else {
    }
    %c0_i32_2 = arith.constant 0 : i32
    %8 = arith.cmpi eq, %arg1, %c0_i32_2 : i32
    %9 = arith.extui %8 : i1 to i32
    %c0_i32_3 = arith.constant 0 : i32
    %10 = arith.cmpi ne, %9, %c0_i32_3 : i32
    scf.if %10 {
      %c0 = arith.constant 0 : index
      %c0_4 = arith.constant 0 : index
      %11 = vector.load %arg8[%c0, %c0_4] : memref<512x128xf32, #tpu.memory_space<vmem>>, vector<512x128xf32>
      %c0_5 = arith.constant 0 : index
      %c0_6 = arith.constant 0 : index
      %12 = vector.load %arg6[%c0_5, %c0_6] : memref<1x128xf32, #tpu.memory_space<vmem>>, vector<1x128xf32>
      %13 = vector.broadcast %12 : vector<1x128xf32> to vector<512x128xf32>
      %14 = arith.addf %11, %13 : vector<512x128xf32>
      %cst = arith.constant 0.000000e+00 : f32
      %15 = vector.broadcast %cst : f32 to vector<512x128xf32>
      %16 = arith.maximumf %14, %15 : vector<512x128xf32>
      %17 = arith.truncf %16 : vector<512x128xf32> to vector<512x128xbf16>
      %c0_7 = arith.constant 0 : index
      %c0_8 = arith.constant 0 : index
      %18 = vector.load %arg7[%c0_7, %c0_8] : memref<512x128xbf16, #tpu.memory_space<vmem>>, vector<512x128xbf16>
      tpu.vector_store %arg7[%c0_7, %c0_8], %17 {strides = array<i32>} : memref<512x128xbf16, #tpu.memory_space<vmem>>, vector<512x128xbf16>,
    } else {
    }
    return
  }
  func.func @transform_0(%arg0: i32, %arg1: i32, %arg2: memref<1x1xi32, #tpu.memory_space<smem>>, %arg3: memref<1xi32, #tpu.memory_space<smem>>) -> (i32, i32) {
    %0 = arith.index_cast %arg0 : i32 to index
    %1 = arith.index_cast %arg1 : i32 to index
    %2 = memref.load %arg2[%0, %1] : memref<1x1xi32, #tpu.memory_space<smem>>
    %c0_i32 = arith.constant 0 : i32
    return %arg0, %2 : i32, i32
  }
  func.func @transform_1(%arg0: i32, %arg1: i32, %arg2: memref<1x1xi32, #tpu.memory_space<smem>>, %arg3: memref<1xi32, #tpu.memory_space<smem>>) -> (i32, i32) {
    %c0_i32 = arith.constant 0 : i32
    %c0_i32_0 = arith.constant 0 : i32
    %c0_i32_1 = arith.constant 0 : i32
    return %c0_i32, %c0_i32_0 : i32, i32
  }
  func.func @transform_2(%arg0: i32, %arg1: i32, %arg2: memref<1x1xi32, #tpu.memory_space<smem>>, %arg3: memref<1xi32, #tpu.memory_space<smem>>) -> (i32, i32) {
    %c0_i32 = arith.constant 0 : i32
    %c0_i32_0 = arith.constant 0 : i32
    %c0_i32_1 = arith.constant 0 : i32
    return %c0_i32, %c0_i32_0 : i32, i32
  }
  func.func @transform_3(%arg0: i32, %arg1: i32, %arg2: memref<1x1xi32, #tpu.memory_space<smem>>, %arg3: memref<1xi32, #tpu.memory_space<smem>>) -> (i32, i32) {
    %c0_i32 = arith.constant 0 : i32
    %c0_i32_0 = arith.constant 0 : i32
    return %arg0, %c0_i32 : i32, i32
  }
}

module attributes {stable_mosaic.version = 11 : i64} {
  func.func @xw_kernel(%arg0: i32, %arg1: i32, %arg2: memref<512x128xbf16, #tpu.memory_space<vmem>>, %arg3: memref<128x128xbf16, #tpu.memory_space<vmem>>, %arg4: memref<512x128xbf16, #tpu.memory_space<vmem>>, %arg5: memref<512x128xf32, #tpu.memory_space<vmem>>) attributes {dimension_semantics = [#tpu.dimension_semantics<parallel>, #tpu.dimension_semantics<arbitrary>], iteration_bounds = array<i64: 1, 1>, scalar_prefetch = 0 : i64, scratch_operands = 1 : i64, tpu.core_type = #tpu.core_type<tc>, window_params = [{transform_indices = @transform_0, window_bounds = array<i64: 512, 128>}, {transform_indices = @transform_1, window_bounds = array<i64: 128, 128>}, {transform_indices = @transform_2, window_bounds = array<i64: 512, 128>}]} {
    %c0_i32 = arith.constant 0 : i32
    %0 = arith.cmpi eq, %arg1, %c0_i32 : i32
    %1 = arith.extui %0 : i1 to i32
    %c0_i32_0 = arith.constant 0 : i32
    %2 = arith.cmpi ne, %1, %c0_i32_0 : i32
    scf.if %2 {
      %cst_10 = arith.constant 0.000000e+00 : f32
      %12 = vector.broadcast %cst_10 : f32 to vector<512x128xf32>
      %c0_11 = arith.constant 0 : index
      %c0_12 = arith.constant 0 : index
      %13 = vector.load %arg5[%c0_11, %c0_12] : memref<512x128xf32, #tpu.memory_space<vmem>>, vector<512x128xf32>
      tpu.vector_store %arg5[%c0_11, %c0_12], %12 {strides = array<i32>} : memref<512x128xf32, #tpu.memory_space<vmem>>, vector<512x128xf32>,
    } else {
    }
    %c0 = arith.constant 0 : index
    %c0_1 = arith.constant 0 : index
    %3 = vector.load %arg5[%c0, %c0_1] : memref<512x128xf32, #tpu.memory_space<vmem>>, vector<512x128xf32>
    %c0_2 = arith.constant 0 : index
    %c0_3 = arith.constant 0 : index
    %4 = vector.load %arg2[%c0_2, %c0_3] : memref<512x128xbf16, #tpu.memory_space<vmem>>, vector<512x128xbf16>
    %c0_4 = arith.constant 0 : index
    %c0_5 = arith.constant 0 : index
    %5 = vector.load %arg3[%c0_4, %c0_5] : memref<128x128xbf16, #tpu.memory_space<vmem>>, vector<128x128xbf16>
    %cst = arith.constant dense<0.000000e+00> : vector<512x128xf32>
    %6 = tpu.matmul %4, %5, %cst {dimension_numbers = #tpu.dot_dimension_numbers<[1], [0], [0], [1], [0, 0, 1, 1], [], []>} : vector<512x128xbf16>, vector<128x128xbf16>, vector<512x128xf32> -> vector<512x128xf32>
    %7 = arith.addf %3, %6 : vector<512x128xf32>
    %c0_6 = arith.constant 0 : index
    %c0_7 = arith.constant 0 : index
    %8 = vector.load %arg5[%c0_6, %c0_7] : memref<512x128xf32, #tpu.memory_space<vmem>>, vector<512x128xf32>
    tpu.vector_store %arg5[%c0_6, %c0_7], %7 {strides = array<i32>} : memref<512x128xf32, #tpu.memory_space<vmem>>, vector<512x128xf32>,
    %c0_i32_8 = arith.constant 0 : i32
    %9 = arith.cmpi eq, %arg1, %c0_i32_8 : i32
    %10 = arith.extui %9 : i1 to i32
    %c0_i32_9 = arith.constant 0 : i32
    %11 = arith.cmpi ne, %10, %c0_i32_9 : i32
    scf.if %11 {
      %c0_10 = arith.constant 0 : index
      %c0_11 = arith.constant 0 : index
      %12 = vector.load %arg5[%c0_10, %c0_11] : memref<512x128xf32, #tpu.memory_space<vmem>>, vector<512x128xf32>
      %13 = arith.truncf %12 : vector<512x128xf32> to vector<512x128xbf16>
      %c0_12 = arith.constant 0 : index
      %c0_13 = arith.constant 0 : index
      %14 = vector.load %arg4[%c0_12, %c0_13] : memref<512x128xbf16, #tpu.memory_space<vmem>>, vector<512x128xbf16>
      tpu.vector_store %arg4[%c0_12, %c0_13], %13 {strides = array<i32>} : memref<512x128xbf16, #tpu.memory_space<vmem>>, vector<512x128xbf16>,
    } else {
    }
    return
  }
  func.func @transform_0(%arg0: i32, %arg1: i32) -> (i32, i32) {
    %c0_i32 = arith.constant 0 : i32
    return %arg0, %arg1 : i32, i32
  }
  func.func @transform_1(%arg0: i32, %arg1: i32) -> (i32, i32) {
    %c0_i32 = arith.constant 0 : i32
    %c0_i32_0 = arith.constant 0 : i32
    return %arg1, %c0_i32 : i32, i32
  }
  func.func @transform_2(%arg0: i32, %arg1: i32) -> (i32, i32) {
    %c0_i32 = arith.constant 0 : i32
    %c0_i32_0 = arith.constant 0 : i32
    return %arg0, %c0_i32 : i32, i32
  }
}

module attributes {stable_mosaic.version = 11 : i64} {
  func.func @agg_kernel(%arg0: i32, %arg1: i32, %arg2: memref<1x1xi32, #tpu.memory_space<smem>>, %arg3: memref<1xi32, #tpu.memory_space<smem>>, %arg4: memref<512x512xbf16, #tpu.memory_space<vmem>>, %arg5: memref<512x128xbf16, #tpu.memory_space<vmem>>, %arg6: memref<1x128xf32, #tpu.memory_space<vmem>>, %arg7: memref<512x128xf32, #tpu.memory_space<vmem>>, %arg8: memref<512x128xf32, #tpu.memory_space<vmem>>) attributes {dimension_semantics = [#tpu.dimension_semantics<parallel>, #tpu.dimension_semantics<arbitrary>], iteration_bounds = array<i64: 1, 1>, scalar_prefetch = 2 : i64, scratch_operands = 1 : i64, tpu.core_type = #tpu.core_type<tc>, window_params = [{transform_indices = @transform_0, window_bounds = array<i64: 512, 512>}, {pipeline_mode = #tpu.pipeline_mode<synchronous>, transform_indices = @transform_1, window_bounds = array<i64: 512, 128>}, {pipeline_mode = #tpu.pipeline_mode<synchronous>, transform_indices = @transform_2, window_bounds = array<i64: 1, 128>}, {transform_indices = @transform_3, window_bounds = array<i64: 512, 128>}]} {
    %c0_i32 = arith.constant 0 : i32
    %0 = arith.cmpi eq, %arg1, %c0_i32 : i32
    %1 = arith.extui %0 : i1 to i32
    %c0_i32_0 = arith.constant 0 : i32
    %2 = arith.cmpi ne, %1, %c0_i32_0 : i32
    scf.if %2 {
      %cst = arith.constant 0.000000e+00 : f32
      %11 = vector.broadcast %cst : f32 to vector<512x128xf32>
      %c0 = arith.constant 0 : index
      %c0_4 = arith.constant 0 : index
      %12 = vector.load %arg8[%c0, %c0_4] : memref<512x128xf32, #tpu.memory_space<vmem>>, vector<512x128xf32>
      tpu.vector_store %arg8[%c0, %c0_4], %11 {strides = array<i32>} : memref<512x128xf32, #tpu.memory_space<vmem>>, vector<512x128xf32>,
    } else {
    }
    %3 = arith.index_cast %arg0 : i32 to index
    %4 = memref.load %arg3[%3] : memref<1xi32, #tpu.memory_space<smem>>
    %5 = arith.cmpi slt, %arg1, %4 : i32
    %6 = arith.extui %5 : i1 to i32
    %c0_i32_1 = arith.constant 0 : i32
    %7 = arith.cmpi ne, %6, %c0_i32_1 : i32
    scf.if %7 {
      %11 = arith.index_cast %arg0 : i32 to index
      %12 = arith.index_cast %arg1 : i32 to index
      %13 = memref.load %arg2[%11, %12] : memref<1x1xi32, #tpu.memory_space<smem>>
      %c512_i32 = arith.constant 512 : i32
      %14 = arith.muli %13, %c512_i32 : i32
      %15 = tpu.assume_multiple %14, 512 : i32
      %16 = arith.index_cast %15 : i32 to index
      %c0 = arith.constant 0 : index
      %17 = vector.load %arg5[%16, %c0] : memref<512x128xbf16, #tpu.memory_space<vmem>>, vector<512x128xbf16>
      %c0_4 = arith.constant 0 : index
      %c0_5 = arith.constant 0 : index
      %18 = vector.load %arg4[%c0_4, %c0_5] : memref<512x512xbf16, #tpu.memory_space<vmem>>, vector<512x512xbf16>
      %c0_6 = arith.constant 0 : index
      %c0_7 = arith.constant 0 : index
      %19 = vector.load %arg8[%c0_6, %c0_7] : memref<512x128xf32, #tpu.memory_space<vmem>>, vector<512x128xf32>
      %cst = arith.constant dense<0.000000e+00> : vector<512x128xf32>
      %20 = tpu.matmul %18, %17, %cst {dimension_numbers = #tpu.dot_dimension_numbers<[1], [0], [0], [1], [0, 0, 1, 1], [], []>} : vector<512x512xbf16>, vector<512x128xbf16>, vector<512x128xf32> -> vector<512x128xf32>
      %21 = arith.addf %19, %20 : vector<512x128xf32>
      %c0_8 = arith.constant 0 : index
      %c0_9 = arith.constant 0 : index
      %22 = vector.load %arg8[%c0_8, %c0_9] : memref<512x128xf32, #tpu.memory_space<vmem>>, vector<512x128xf32>
      tpu.vector_store %arg8[%c0_8, %c0_9], %21 {strides = array<i32>} : memref<512x128xf32, #tpu.memory_space<vmem>>, vector<512x128xf32>,
    } else {
    }
    %c0_i32_2 = arith.constant 0 : i32
    %8 = arith.cmpi eq, %arg1, %c0_i32_2 : i32
    %9 = arith.extui %8 : i1 to i32
    %c0_i32_3 = arith.constant 0 : i32
    %10 = arith.cmpi ne, %9, %c0_i32_3 : i32
    scf.if %10 {
      %c0 = arith.constant 0 : index
      %c0_4 = arith.constant 0 : index
      %11 = vector.load %arg8[%c0, %c0_4] : memref<512x128xf32, #tpu.memory_space<vmem>>, vector<512x128xf32>
      %c0_5 = arith.constant 0 : index
      %c0_6 = arith.constant 0 : index
      %12 = vector.load %arg6[%c0_5, %c0_6] : memref<1x128xf32, #tpu.memory_space<vmem>>, vector<1x128xf32>
      %13 = vector.broadcast %12 : vector<1x128xf32> to vector<512x128xf32>
      %14 = arith.addf %11, %13 : vector<512x128xf32>
      %15 = tpu.iota {dimensions = array<i32: 1>} : vector<512x128xi32>
      %c4_i32 = arith.constant 4 : i32
      %16 = vector.broadcast %c4_i32 : i32 to vector<512x128xi32>
      %17 = arith.cmpi slt, %15, %16 : vector<512x128xi32>
      %cst = arith.constant -1.000000e+30 : f32
      %18 = vector.broadcast %cst : f32 to vector<512x128xf32>
      %19 = arith.select %17, %14, %18 : vector<512x128xi1>, vector<512x128xf32>
      %cst_7 = arith.constant dense<0xFF800000> : vector<512xf32>
      %20 = vector.multi_reduction <maximumf>, %19, %cst_7 [1] : vector<512x128xf32> to vector<512xf32>
      %21 = vector.shape_cast %20 : vector<512xf32> to vector<512x1xf32>
      %22 = vector.broadcast %21 : vector<512x1xf32> to vector<512x128xf32>
      %23 = arith.subf %19, %22 : vector<512x128xf32>
      %24 = math.exp %23 : vector<512x128xf32>
      %cst_8 = arith.constant dense<0.000000e+00> : vector<512xf32>
      %25 = vector.multi_reduction <add>, %24, %cst_8 [1] : vector<512x128xf32> to vector<512xf32>
      %26 = vector.shape_cast %25 : vector<512xf32> to vector<512x1xf32>
      %27 = math.log %26 : vector<512x1xf32>
      %28 = arith.addf %27, %21 : vector<512x1xf32>
      %29 = vector.broadcast %28 : vector<512x1xf32> to vector<512x128xf32>
      %30 = arith.subf %14, %29 : vector<512x128xf32>
      %cst_9 = arith.constant 0.000000e+00 : f32
      %31 = vector.broadcast %cst_9 : f32 to vector<512x128xf32>
      %32 = arith.select %17, %30, %31 : vector<512x128xi1>, vector<512x128xf32>
      %c0_10 = arith.constant 0 : index
      %c0_11 = arith.constant 0 : index
      %33 = vector.load %arg7[%c0_10, %c0_11] : memref<512x128xf32, #tpu.memory_space<vmem>>, vector<512x128xf32>
      tpu.vector_store %arg7[%c0_10, %c0_11], %32 {strides = array<i32>} : memref<512x128xf32, #tpu.memory_space<vmem>>, vector<512x128xf32>,
    } else {
    }
    return
  }
  func.func @transform_0(%arg0: i32, %arg1: i32, %arg2: memref<1x1xi32, #tpu.memory_space<smem>>, %arg3: memref<1xi32, #tpu.memory_space<smem>>) -> (i32, i32) {
    %0 = arith.index_cast %arg0 : i32 to index
    %1 = arith.index_cast %arg1 : i32 to index
    %2 = memref.load %arg2[%0, %1] : memref<1x1xi32, #tpu.memory_space<smem>>
    %c0_i32 = arith.constant 0 : i32
    return %arg0, %2 : i32, i32
  }
  func.func @transform_1(%arg0: i32, %arg1: i32, %arg2: memref<1x1xi32, #tpu.memory_space<smem>>, %arg3: memref<1xi32, #tpu.memory_space<smem>>) -> (i32, i32) {
    %c0_i32 = arith.constant 0 : i32
    %c0_i32_0 = arith.constant 0 : i32
    %c0_i32_1 = arith.constant 0 : i32
    return %c0_i32, %c0_i32_0 : i32, i32
  }
  func.func @transform_2(%arg0: i32, %arg1: i32, %arg2: memref<1x1xi32, #tpu.memory_space<smem>>, %arg3: memref<1xi32, #tpu.memory_space<smem>>) -> (i32, i32) {
    %c0_i32 = arith.constant 0 : i32
    %c0_i32_0 = arith.constant 0 : i32
    %c0_i32_1 = arith.constant 0 : i32
    return %c0_i32, %c0_i32_0 : i32, i32
  }
  func.func @transform_3(%arg0: i32, %arg1: i32, %arg2: memref<1x1xi32, #tpu.memory_space<smem>>, %arg3: memref<1xi32, #tpu.memory_space<smem>>) -> (i32, i32) {
    %c0_i32 = arith.constant 0 : i32
    %c0_i32_0 = arith.constant 0 : i32
    return %arg0, %c0_i32 : i32, i32
  }
}

</mosaic_0001>

<llo_original>
// kernel: gcn_forward.4
$region0: #{gcn_forward.4}
  #allocation0 [shape = 'u32[]', space=smem, size = 0x4, offset = 0x4, fixed_abs, tag = 'smem constant byte address 0x4 - core index']
  #allocation1 [shape = 'u32[144,128]{1,0:T(1,128)}', space=vmem, size = 0x12000, scoped, tag = 'internal scratch']
  #allocation2 [shape = 'f32[512,128]{1,0:T(8,128)}', space=vmem, size = 0x40000, scoped, tag = 'scratch operand']
  %s0 = inlined_call_operand.vmem [shape: bf16[512,128], index: 0, kind: input, shape index: {}]
  %s1 = inlined_call_operand.vmem [shape: bf16[128,128], index: 1, kind: input, shape index: {}]
  %s2 = inlined_call_operand.vmem [shape: bf16[512,128], index: 2, kind: output, shape index: {}]
  %s3 = sld [smem:[#allocation0]]
  $region26: #{gcn_forward.4} parent=0
    _
  %s5 = ssub.s32 1, %s3
  %s6 = scalar_select 0, %s5, %s3
  // Predicated region
  $region2: #{gcn_forward.4} parent=0 // pred_check
    _
  $region3: #{gcn_forward.4} parent=0 // pred_check_branch
    %8 = sbr.rel (0) target = $region5
  $region4: #{gcn_forward.4} parent=0 // pred_region
    _
  $region5: #{gcn_forward.4} parent=0 // pred_fallthru
    _
  // Predicated region
  $region6: #{gcn_forward.4} parent=0 // pred_check
    _
  $region7: #{gcn_forward.4} parent=0 // pred_check_branch
    %10 = sbr.rel (0) target = $region9
  $region8: #{gcn_forward.4} parent=0 // pred_region
    _
  $region9: #{gcn_forward.4} parent=0 // pred_fallthru
    _
  %p12 = scmp.eq.s32.totalorder 0, 0
  // Predicated region
  $region10: #{gcn_forward.4} parent=0 // pred_check
    %p13 = pneg %p12
  $region11: #{gcn_forward.4} parent=0 // pred_check_branch
    %15 = sbr.rel (%p13) target = $region13
  $region12: #{gcn_forward.4} parent=0 // pred_region
    %16 = vst [vmem:[#allocation2] sm:$0xff] 0.0
    %17 = vst [vmem:[#allocation2 + $0x8] sm:$0xff] 0.0
    %18 = vst [vmem:[#allocation2 + $0x10] sm:$0xff] 0.0
    %19 = vst [vmem:[#allocation2 + $0x18] sm:$0xff] 0.0
    %20 = vst [vmem:[#allocation2 + $0x20] sm:$0xff] 0.0
    %21 = vst [vmem:[#allocation2 + $0x28] sm:$0xff] 0.0
    %22 = vst [vmem:[#allocation2 + $0x30] sm:$0xff] 0.0
    %23 = vst [vmem:[#allocation2 + $0x38] sm:$0xff] 0.0
    %24 = vst [vmem:[#allocation2 + $0x40] sm:$0xff] 0.0
    %25 = vst [vmem:[#allocation2 + $0x48] sm:$0xff] 0.0
    %26 = vst [vmem:[#allocation2 + $0x50] sm:$0xff] 0.0
    %27 = vst [vmem:[#allocation2 + $0x58] sm:$0xff] 0.0
    %28 = vst [vmem:[#allocation2 + $0x60] sm:$0xff] 0.0
    %29 = vst [vmem:[#allocation2 + $0x68] sm:$0xff] 0.0
    %30 = vst [vmem:[#allocation2 + $0x70] sm:$0xff] 0.0
    %31 = vst [vmem:[#allocation2 + $0x78] sm:$0xff] 0.0
    %32 = vst [vmem:[#allocation2 + $0x80] sm:$0xff] 0.0
    %33 = vst [vmem:[#allocation2 + $0x88] sm:$0xff] 0.0
    %34 = vst [vmem:[#allocation2 + $0x90] sm:$0xff] 0.0
    %35 = vst [vmem:[#allocation2 + $0x98] sm:$0xff] 0.0
    %36 = vst [vmem:[#allocation2 + $0xa0] sm:$0xff] 0.0
    %37 = vst [vmem:[#allocation2 + $0xa8] sm:$0xff] 0.0
    %38 = vst [vmem:[#allocation2 + $0xb0] sm:$0xff] 0.0
    %39 = vst [vmem:[#allocation2 + $0xb8] sm:$0xff] 0.0
    %40 = vst [vmem:[#allocation2 + $0xc0] sm:$0xff] 0.0
    %41 = vst [vmem:[#allocation2 + $0xc8] sm:$0xff] 0.0
    %42 = vst [vmem:[#allocation2 + $0xd0] sm:$0xff] 0.0
    %43 = vst [vmem:[#allocation2 + $0xd8] sm:$0xff] 0.0
    %44 = vst [vmem:[#allocation2 + $0xe0] sm:$0xff] 0.0
    %45 = vst [vmem:[#allocation2 + $0xe8] sm:$0xff] 0.0
    %46 = vst [vmem:[#allocation2 + $0xf0] sm:$0xff] 0.0
    %47 = vst [vmem:[#allocation2 + $0xf8] sm:$0xff] 0.0
    %48 = vst [vmem:[#allocation2 + $0x100] sm:$0xff] 0.0
    %49 = vst [vmem:[#allocation2 + $0x108] sm:$0xff] 0.0
    %50 = vst [vmem:[#allocation2 + $0x110] sm:$0xff] 0.0
    %51 = vst [vmem:[#allocation2 + $0x118] sm:$0xff] 0.0
    %52 = vst [vmem:[#allocation2 + $0x120] sm:$0xff] 0.0
    %53 = vst [vmem:[#allocation2 + $0x128] sm:$0xff] 0.0
    %54 = vst [vmem:[#allocation2 + $0x130] sm:$0xff] 0.0
    %55 = vst [vmem:[#allocation2 + $0x138] sm:$0xff] 0.0
    %56 = vst [vmem:[#allocation2 + $0x140] sm:$0xff] 0.0
    %57 = vst [vmem:[#allocation2 + $0x148] sm:$0xff] 0.0
    %58 = vst [vmem:[#allocation2 + $0x150] sm:$0xff] 0.0
    %59 = vst [vmem:[#allocation2 + $0x158] sm:$0xff] 0.0
    %60 = vst [vmem:[#allocation2 + $0x160] sm:$0xff] 0.0
    %61 = vst [vmem:[#allocation2 + $0x168] sm:$0xff] 0.0
    %62 = vst [vmem:[#allocation2 + $0x170] sm:$0xff] 0.0
    %63 = vst [vmem:[#allocation2 + $0x178] sm:$0xff] 0.0
    %64 = vst [vmem:[#allocation2 + $0x180] sm:$0xff] 0.0
    %65 = vst [vmem:[#allocation2 + $0x188] sm:$0xff] 0.0
    %66 = vst [vmem:[#allocation2 + $0x190] sm:$0xff] 0.0
    %67 = vst [vmem:[#allocation2 + $0x198] sm:$0xff] 0.0
    %68 = vst [vmem:[#allocation2 + $0x1a0] sm:$0xff] 0.0
    %69 = vst [vmem:[#allocation2 + $0x1a8] sm:$0xff] 0.0
    %70 = vst [vmem:[#allocation2 + $0x1b0] sm:$0xff] 0.0
    %71 = vst [vmem:[#allocation2 + $0x1b8] sm:$0xff] 0.0
    %72 = vst [vmem:[#allocation2 + $0x1c0] sm:$0xff] 0.0
    %73 = vst [vmem:[#allocation2 + $0x1c8] sm:$0xff] 0.0
    %74 = vst [vmem:[#allocation2 + $0x1d0] sm:$0xff] 0.0
    %75 = vst [vmem:[#allocation2 + $0x1d8] sm:$0xff] 0.0
    %76 = vst [vmem:[#allocation2 + $0x1e0] sm:$0xff] 0.0
    %77 = vst [vmem:[#allocation2 + $0x1e8] sm:$0xff] 0.0
    %78 = vst [vmem:[#allocation2 + $0x1f0] sm:$0xff] 0.0
    %79 = vst [vmem:[#allocation2 + $0x1f8] sm:$0xff] 0.0
  $region13: #{gcn_forward.4} parent=0 // pred_fallthru
    _
  %v80 = vld [vmem:[#allocation2] sm:$0xff]
  %v81 = vld [vmem:[#allocation2 + $0x8] sm:$0xff]
  %v82 = vld [vmem:[#allocation2 + $0x10] sm:$0xff]
  %v83 = vld [vmem:[#allocation2 + $0x18] sm:$0xff]
  %v84 = vld [vmem:[#allocation2 + $0x20] sm:$0xff]
  %v85 = vld [vmem:[#allocation2 + $0x28] sm:$0xff]
  %v86 = vld [vmem:[#allocation2 + $0x30] sm:$0xff]
  %v87 = vld [vmem:[#allocation2 + $0x38] sm:$0xff]
  %v88 = vld [vmem:[#allocation2 + $0x40] sm:$0xff]
  %v89 = vld [vmem:[#allocation2 + $0x48] sm:$0xff]
  %v90 = vld [vmem:[#allocation2 + $0x50] sm:$0xff]
  %v91 = vld [vmem:[#allocation2 + $0x58] sm:$0xff]
  %v92 = vld [vmem:[#allocation2 + $0x60] sm:$0xff]
  %v93 = vld [vmem:[#allocation2 + $0x68] sm:$0xff]
  %v94 = vld [vmem:[#allocation2 + $0x70] sm:$0xff]
  %v95 = vld [vmem:[#allocation2 + $0x78] sm:$0xff]
  %v96 = vld [vmem:[#allocation2 + $0x80] sm:$0xff]
  %v97 = vld [vmem:[#allocation2 + $0x88] sm:$0xff]
  %v98 = vld [vmem:[#allocation2 + $0x90] sm:$0xff]
  %v99 = vld [vmem:[#allocation2 + $0x98] sm:$0xff]
  %v100 = vld [vmem:[#allocation2 + $0xa0] sm:$0xff]
  %v101 = vld [vmem:[#allocation2 + $0xa8] sm:$0xff]
  %v102 = vld [vmem:[#allocation2 + $0xb0] sm:$0xff]
  %v103 = vld [vmem:[#allocation2 + $0xb8] sm:$0xff]
  %v104 = vld [vmem:[#allocation2 + $0xc0] sm:$0xff]
  %v105 = vld [vmem:[#allocation2 + $0xc8] sm:$0xff]
  %v106 = vld [vmem:[#allocation2 + $0xd0] sm:$0xff]
  %v107 = vld [vmem:[#allocation2 + $0xd8] sm:$0xff]
  %v108 = vld [vmem:[#allocation2 + $0xe0] sm:$0xff]
  %v109 = vld [vmem:[#allocation2 + $0xe8] sm:$0xff]
  %v110 = vld [vmem:[#allocation2 + $0xf0] sm:$0xff]
  %v111 = vld [vmem:[#allocation2 + $0xf8] sm:$0xff]
  %v112 = vld [vmem:[#allocation2 + $0x100] sm:$0xff]
  %v113 = vld [vmem:[#allocation2 + $0x108] sm:$0xff]
  %v114 = vld [vmem:[#allocation2 + $0x110] sm:$0xff]
  %v115 = vld [vmem:[#allocation2 + $0x118] sm:$0xff]
  %v116 = vld [vmem:[#allocation2 + $0x120] sm:$0xff]
  %v117 = vld [vmem:[#allocation2 + $0x128] sm:$0xff]
  %v118 = vld [vmem:[#allocation2 + $0x130] sm:$0xff]
  %v119 = vld [vmem:[#allocation2 + $0x138] sm:$0xff]
  %v120 = vld [vmem:[#allocation2 + $0x140] sm:$0xff]
  %v121 = vld [vmem:[#allocation2 + $0x148] sm:$0xff]
  %v122 = vld [vmem:[#allocation2 + $0x150] sm:$0xff]
  %v123 = vld [vmem:[#allocation2 + $0x158] sm:$0xff]
  %v124 = vld [vmem:[#allocation2 + $0x160] sm:$0xff]
  %v125 = vld [vmem:[#allocation2 + $0x168] sm:$0xff]
  %v126 = vld [vmem:[#allocation2 + $0x170] sm:$0xff]
  %v127 = vld [vmem:[#allocation2 + $0x178] sm:$0xff]
  %v128 = vld [vmem:[#allocation2 + $0x180] sm:$0xff]
  %v129 = vld [vmem:[#allocation2 + $0x188] sm:$0xff]
  %v130 = vld [vmem:[#allocation2 + $0x190] sm:$0xff]
  %v131 = vld [vmem:[#allocation2 + $0x198] sm:$0xff]
  %v132 = vld [vmem:[#allocation2 + $0x1a0] sm:$0xff]
  %v133 = vld [vmem:[#allocation2 + $0x1a8] sm:$0xff]
  %v134 = vld [vmem:[#allocation2 + $0x1b0] sm:$0xff]
  %v135 = vld [vmem:[#allocation2 + $0x1b8] sm:$0xff]
  %v136 = vld [vmem:[#allocation2 + $0x1c0] sm:$0xff]
  %v137 = vld [vmem:[#allocation2 + $0x1c8] sm:$0xff]
  %v138 = vld [vmem:[#allocation2 + $0x1d0] sm:$0xff]
  %v139 = vld [vmem:[#allocation2 + $0x1d8] sm:$0xff]
  %v140 = vld [vmem:[#allocation2 + $0x1e0] sm:$0xff]
  %v141 = vld [vmem:[#allocation2 + $0x1e8] sm:$0xff]
  %v142 = vld [vmem:[#allocation2 + $0x1f0] sm:$0xff]
  %v143 = vld [vmem:[#allocation2 + $0x1f8] sm:$0xff]
  %v144 = vld [vmem:[%s0] sm:$0xf]
  %v145 = vld [vmem:[%s0 + $0x4] sm:$0xf]
  %v146 = vld [vmem:[%s0 + $0x8] sm:$0xf]
  %v147 = vld [vmem:[%s0 + $0xc] sm:$0xf]
  %v148 = vld [vmem:[%s0 + $0x10] sm:$0xf]
  %v149 = vld [vmem:[%s0 + $0x14] sm:$0xf]
  %v150 = vld [vmem:[%s0 + $0x18] sm:$0xf]
  %v151 = vld [vmem:[%s0 + $0x1c] sm:$0xf]
  %v152 = vld [vmem:[%s0 + $0x20] sm:$0xf]
  %v153 = vld [vmem:[%s0 + $0x24] sm:$0xf]
  %v154 = vld [vmem:[%s0 + $0x28] sm:$0xf]
  %v155 = vld [vmem:[%s0 + $0x2c] sm:$0xf]
  %v156 = vld [vmem:[%s0 + $0x30] sm:$0xf]
  %v157 = vld [vmem:[%s0 + $0x34] sm:$0xf]
  %v158 = vld [vmem:[%s0 + $0x38] sm:$0xf]
  %v159 = vld [vmem:[%s0 + $0x3c] sm:$0xf]
  %v160 = vld [vmem:[%s0 + $0x40] sm:$0xf]
  %v161 = vld [vmem:[%s0 + $0x44] sm:$0xf]
  %v162 = vld [vmem:[%s0 + $0x48] sm:$0xf]
  %v163 = vld [vmem:[%s0 + $0x4c] sm:$0xf]
  %v164 = vld [vmem:[%s0 + $0x50] sm:$0xf]
  %v165 = vld [vmem:[%s0 + $0x54] sm:$0xf]
  %v166 = vld [vmem:[%s0 + $0x58] sm:$0xf]
  %v167 = vld [vmem:[%s0 + $0x5c] sm:$0xf]
  %v168 = vld [vmem:[%s0 + $0x60] sm:$0xf]
  %v169 = vld [vmem:[%s0 + $0x64] sm:$0xf]
  %v170 = vld [vmem:[%s0 + $0x68] sm:$0xf]
  %v171 = vld [vmem:[%s0 + $0x6c] sm:$0xf]
  %v172 = vld [vmem:[%s0 + $0x70] sm:$0xf]
  %v173 = vld [vmem:[%s0 + $0x74] sm:$0xf]
  %v174 = vld [vmem:[%s0 + $0x78] sm:$0xf]
  %v175 = vld [vmem:[%s0 + $0x7c] sm:$0xf]
  %v176 = vld [vmem:[%s0 + $0x80] sm:$0xf]
  %v177 = vld [vmem:[%s0 + $0x84] sm:$0xf]
  %v178 = vld [vmem:[%s0 + $0x88] sm:$0xf]
  %v179 = vld [vmem:[%s0 + $0x8c] sm:$0xf]
  %v180 = vld [vmem:[%s0 + $0x90] sm:$0xf]
  %v181 = vld [vmem:[%s0 + $0x94] sm:$0xf]
  %v182 = vld [vmem:[%s0 + $0x98] sm:$0xf]
  %v183 = vld [vmem:[%s0 + $0x9c] sm:$0xf]
  %v184 = vld [vmem:[%s0 + $0xa0] sm:$0xf]
  %v185 = vld [vmem:[%s0 + $0xa4] sm:$0xf]
  %v186 = vld [vmem:[%s0 + $0xa8] sm:$0xf]
  %v187 = vld [vmem:[%s0 + $0xac] sm:$0xf]
  %v188 = vld [vmem:[%s0 + $0xb0] sm:$0xf]
  %v189 = vld [vmem:[%s0 + $0xb4] sm:$0xf]
  %v190 = vld [vmem:[%s0 + $0xb8] sm:$0xf]
  %v191 = vld [vmem:[%s0 + $0xbc] sm:$0xf]
  %v192 = vld [vmem:[%s0 + $0xc0] sm:$0xf]
  %v193 = vld [vmem:[%s0 + $0xc4] sm:$0xf]
  %v194 = vld [vmem:[%s0 + $0xc8] sm:$0xf]
  %v195 = vld [vmem:[%s0 + $0xcc] sm:$0xf]
  %v196 = vld [vmem:[%s0 + $0xd0] sm:$0xf]
  %v197 = vld [vmem:[%s0 + $0xd4] sm:$0xf]
  %v198 = vld [vmem:[%s0 + $0xd8] sm:$0xf]
  %v199 = vld [vmem:[%s0 + $0xdc] sm:$0xf]
  %v200 = vld [vmem:[%s0 + $0xe0] sm:$0xf]
  %v201 = vld [vmem:[%s0 + $0xe4] sm:$0xf]
  %v202 = vld [vmem:[%s0 + $0xe8] sm:$0xf]
  %v203 = vld [vmem:[%s0 + $0xec] sm:$0xf]
  %v204 = vld [vmem:[%s0 + $0xf0] sm:$0xf]
  %v205 = vld [vmem:[%s0 + $0xf4] sm:$0xf]
  %v206 = vld [vmem:[%s0 + $0xf8] sm:$0xf]
  %v207 = vld [vmem:[%s0 + $0xfc] sm:$0xf]
  %v208 = vld [vmem:[%s1] sm:$0xf]
  %v209 = vld [vmem:[%s1 + $0x4] sm:$0xf]
  %v210 = vld [vmem:[%s1 + $0x8] sm:$0xf]
  %v211 = vld [vmem:[%s1 + $0xc] sm:$0xf]
  %v212 = vld [vmem:[%s1 + $0x10] sm:$0xf]
  %v213 = vld [vmem:[%s1 + $0x14] sm:$0xf]
  %v214 = vld [vmem:[%s1 + $0x18] sm:$0xf]
  %v215 = vld [vmem:[%s1 + $0x1c] sm:$0xf]
  %v216 = vld [vmem:[%s1 + $0x20] sm:$0xf]
  %v217 = vld [vmem:[%s1 + $0x24] sm:$0xf]
  %v218 = vld [vmem:[%s1 + $0x28] sm:$0xf]
  %v219 = vld [vmem:[%s1 + $0x2c] sm:$0xf]
  %v220 = vld [vmem:[%s1 + $0x30] sm:$0xf]
  %v221 = vld [vmem:[%s1 + $0x34] sm:$0xf]
  %v222 = vld [vmem:[%s1 + $0x38] sm:$0xf]
  %v223 = vld [vmem:[%s1 + $0x3c] sm:$0xf]
  %v288 = vunpack.c.l.b16 %v144
  %v289 = vunpack.c.l.b16 %v145
  %v290 = vunpack.c.l.b16 %v146
  %v291 = vunpack.c.l.b16 %v147
  %v292 = vunpack.c.l.b16 %v148
  %v293 = vunpack.c.l.b16 %v149
  %v294 = vunpack.c.l.b16 %v150
  %v295 = vunpack.c.l.b16 %v151
  %v296 = vunpack.c.l.b16 %v152
  %v297 = vunpack.c.l.b16 %v153
  %v298 = vunpack.c.l.b16 %v154
  %v299 = vunpack.c.l.b16 %v155
  %v300 = vunpack.c.l.b16 %v156
  %v301 = vunpack.c.l.b16 %v157
  %v302 = vunpack.c.l.b16 %v158
  %v303 = vunpack.c.l.b16 %v159
  %v304 = vunpack.c.l.b16 %v160
  %v305 = vunpack.c.l.b16 %v161
  %v306 = vunpack.c.l.b16 %v162
  %v307 = vunpack.c.l.b16 %v163
  %v308 = vunpack.c.l.b16 %v164
  %v309 = vunpack.c.l.b16 %v165
  %v310 = vunpack.c.l.b16 %v166
  %v311 = vunpack.c.l.b16 %v167
  %v312 = vunpack.c.l.b16 %v168
  %v313 = vunpack.c.l.b16 %v169
  %v314 = vunpack.c.l.b16 %v170
  %v315 = vunpack.c.l.b16 %v171
  %v316 = vunpack.c.l.b16 %v172
  %v317 = vunpack.c.l.b16 %v173
  %v318 = vunpack.c.l.b16 %v174
  %v319 = vunpack.c.l.b16 %v175
  %v320 = vunpack.c.l.b16 %v176
  %v321 = vunpack.c.l.b16 %v177
  %v322 = vunpack.c.l.b16 %v178
  %v323 = vunpack.c.l.b16 %v179
  %v324 = vunpack.c.l.b16 %v180
  %v325 = vunpack.c.l.b16 %v181
  %v326 = vunpack.c.l.b16 %v182
  %v327 = vunpack.c.l.b16 %v183
  %v328 = vunpack.c.l.b16 %v184
  %v329 = vunpack.c.l.b16 %v185
  %v330 = vunpack.c.l.b16 %v186
  %v331 = vunpack.c.l.b16 %v187
  %v332 = vunpack.c.l.b16 %v188
  %v333 = vunpack.c.l.b16 %v189
  %v334 = vunpack.c.l.b16 %v190
  %v335 = vunpack.c.l.b16 %v191
  %v336 = vunpack.c.l.b16 %v192
  %v337 = vunpack.c.l.b16 %v193
  %v338 = vunpack.c.l.b16 %v194
  %v339 = vunpack.c.l.b16 %v195
  %v340 = vunpack.c.l.b16 %v196
  %v341 = vunpack.c.l.b16 %v197
  %v342 = vunpack.c.l.b16 %v198
  %v343 = vunpack.c.l.b16 %v199
  %v344 = vunpack.c.l.b16 %v200
  %v345 = vunpack.c.l.b16 %v201
  %v346 = vunpack.c.l.b16 %v202
  %v347 = vunpack.c.l.b16 %v203
  %v348 = vunpack.c.l.b16 %v204
  %v349 = vunpack.c.l.b16 %v205
  %v350 = vunpack.c.l.b16 %v206
  %v351 = vunpack.c.l.b16 %v207
  %v352 = vpack.c.b16 %v289, %v288
  %v353 = vpack.c.b16 %v291, %v290
  %v354 = vpack.c.b16 %v293, %v292
  %v355 = vpack.c.b16 %v295, %v294
  %v356 = vpack.c.b16 %v297, %v296
  %v357 = vpack.c.b16 %v299, %v298
  %v358 = vpack.c.b16 %v301, %v300
  %v359 = vpack.c.b16 %v303, %v302
  %v360 = vpack.c.b16 %v305, %v304
  %v361 = vpack.c.b16 %v307, %v306
  %v362 = vpack.c.b16 %v309, %v308
  %v363 = vpack.c.b16 %v311, %v310
  %v364 = vpack.c.b16 %v313, %v312
  %v365 = vpack.c.b16 %v315, %v314
  %v366 = vpack.c.b16 %v317, %v316
  %v367 = vpack.c.b16 %v319, %v318
  %v368 = vpack.c.b16 %v321, %v320
  %v369 = vpack.c.b16 %v323, %v322
  %v370 = vpack.c.b16 %v325, %v324
  %v371 = vpack.c.b16 %v327, %v326
  %v372 = vpack.c.b16 %v329, %v328
  %v373 = vpack.c.b16 %v331, %v330
  %v374 = vpack.c.b16 %v333, %v332
  %v375 = vpack.c.b16 %v335, %v334
  %v376 = vpack.c.b16 %v337, %v336
  %v377 = vpack.c.b16 %v339, %v338
  %v378 = vpack.c.b16 %v341, %v340
  %v379 = vpack.c.b16 %v343, %v342
  %v380 = vpack.c.b16 %v345, %v344
  %v381 = vpack.c.b16 %v347, %v346
  %v382 = vpack.c.b16 %v349, %v348
  %v383 = vpack.c.b16 %v351, %v350
  %v432 = vunpack.c.l.b16 %v208
  %v433 = vunpack.c.l.b16 %v209
  %v434 = vunpack.c.l.b16 %v210
  %v435 = vunpack.c.l.b16 %v211
  %v436 = vunpack.c.l.b16 %v212
  %v437 = vunpack.c.l.b16 %v213
  %v438 = vunpack.c.l.b16 %v214
  %v439 = vunpack.c.l.b16 %v215
  %v440 = vunpack.c.l.b16 %v216
  %v441 = vunpack.c.l.b16 %v217
  %v442 = vunpack.c.l.b16 %v218
  %v443 = vunpack.c.l.b16 %v219
  %v444 = vunpack.c.l.b16 %v220
  %v445 = vunpack.c.l.b16 %v221
  %v446 = vunpack.c.l.b16 %v222
  %v447 = vunpack.c.l.b16 %v223
  %v448 = vpack.c.b16 %v433, %v432
  %v449 = vpack.c.b16 %v435, %v434
  %v450 = vpack.c.b16 %v437, %v436
  %v451 = vpack.c.b16 %v439, %v438
  %v452 = vpack.c.b16 %v441, %v440
  %v453 = vpack.c.b16 %v443, %v442
  %v454 = vpack.c.b16 %v445, %v444
  %v455 = vpack.c.b16 %v447, %v446
  %464 = vmatprep.subr.bf16.mxu0 0
  %465 = vmatpush1.bf16.msra.mxu0 %v455
  %466 = vmatprep.subr.bf16.mxu0 0
  %467 = vmatpush1.bf16.msra.mxu0 %v454
  %468 = vmatprep.subr.bf16.mxu0 0
  %469 = vmatpush1.bf16.msra.mxu0 %v453
  %470 = vmatprep.subr.bf16.mxu0 0
  %471 = vmatpush1.bf16.msra.mxu0 %v452
  %472 = vmatprep.subr.bf16.mxu0 0
  %473 = vmatpush1.bf16.msra.mxu0 %v451
  %474 = vmatprep.subr.bf16.mxu0 0
  %475 = vmatpush1.bf16.msra.mxu0 %v450
  %476 = vmatprep.subr.bf16.mxu0 0
  %477 = vmatpush1.bf16.msra.mxu0 %v449
  %478 = vmatprep.subr.bf16.mxu0 0
  %479 = vmatpush1.bf16.msra.mxu0 %v448
  %480 = vmatprep.subr.bf16.mxu0 0
  %481 = vmatpush2.bf16.msra.mxu0 0
  %482 = vmatprep.subr.bf16.mxu0 0
  %483 = vmatpush2.bf16.msra.mxu0 0
  %484 = vmatprep.subr.bf16.mxu0 0
  %485 = vmatpush2.bf16.msra.mxu0 0
  %486 = vmatprep.subr.bf16.mxu0 0
  %487 = vmatpush2.bf16.msra.mxu0 0
  %488 = vmatprep.subr.bf16.mxu0 0
  %489 = vmatpush2.bf16.msra.mxu0 0
  %490 = vmatprep.subr.bf16.mxu0 0
  %491 = vmatpush2.bf16.msra.mxu0 0
  %492 = vmatprep.subr.bf16.mxu0 0
  %493 = vmatpush2.bf16.msra.mxu0 0
  %494 = vmatprep.subr.bf16.mxu0 0
  %495 = vmatpush2.bf16.msra.mxu0 0
  %496 = vmatprep.mubr.bf16.mxu0 0
  %497 = vmatmul.mubr.bf16.gmra.mxu0 %v352
  %v498 = vpop.f32.mrf.mxu0
  %v499 = vadd.f32 0.0, %v498
  %v500 = vpop.f32.mrf.mxu0
  %v501 = vpop.f32.mrf.mxu0
  %v502 = vadd.f32 0.0, %v501
  %v503 = vpop.f32.mrf.mxu0
  %504 = vmatprep.mubr.bf16.mxu0 0
  %505 = vmatmul.mubr.bf16.gmra.mxu0 %v353
  %v506 = vpop.f32.mrf.mxu0
  %v507 = vadd.f32 0.0, %v506
  %v508 = vpop.f32.mrf.mxu0
  %v509 = vpop.f32.mrf.mxu0
  %v510 = vadd.f32 0.0, %v509
  %v511 = vpop.f32.mrf.mxu0
  %512 = vmatprep.mubr.bf16.mxu0 0
  %513 = vmatmul.mubr.bf16.gmra.mxu0 %v354
  %v514 = vpop.f32.mrf.mxu0
  %v515 = vadd.f32 0.0, %v514
  %v516 = vpop.f32.mrf.mxu0
  %v517 = vpop.f32.mrf.mxu0
  %v518 = vadd.f32 0.0, %v517
  %v519 = vpop.f32.mrf.mxu0
  %520 = vmatprep.mubr.bf16.mxu0 0
  %521 = vmatmul.mubr.bf16.gmra.mxu0 %v355
  %v522 = vpop.f32.mrf.mxu0
  %v523 = vadd.f32 0.0, %v522
  %v524 = vpop.f32.mrf.mxu0
  %v525 = vpop.f32.mrf.mxu0
  %v526 = vadd.f32 0.0, %v525
  %v527 = vpop.f32.mrf.mxu0
  %528 = vmatprep.mubr.bf16.mxu0 0
  %529 = vmatmul.mubr.bf16.gmra.mxu0 %v356
  %v530 = vpop.f32.mrf.mxu0
  %v531 = vadd.f32 0.0, %v530
  %v532 = vpop.f32.mrf.mxu0
  %v533 = vpop.f32.mrf.mxu0
  %v534 = vadd.f32 0.0, %v533
  %v535 = vpop.f32.mrf.mxu0
  %536 = vmatprep.mubr.bf16.mxu0 0
  %537 = vmatmul.mubr.bf16.gmra.mxu0 %v357
  %v538 = vpop.f32.mrf.mxu0
  %v539 = vadd.f32 0.0, %v538
  %v540 = vpop.f32.mrf.mxu0
  %v541 = vpop.f32.mrf.mxu0
  %v542 = vadd.f32 0.0, %v541
  %v543 = vpop.f32.mrf.mxu0
  %544 = vmatprep.mubr.bf16.mxu0 0
  %545 = vmatmul.mubr.bf16.gmra.mxu0 %v358
  %v546 = vpop.f32.mrf.mxu0
  %v547 = vadd.f32 0.0, %v546
  %v548 = vpop.f32.mrf.mxu0
  %v549 = vpop.f32.mrf.mxu0
  %v550 = vadd.f32 0.0, %v549
  %v551 = vpop.f32.mrf.mxu0
  %552 = vmatprep.mubr.bf16.mxu0 0
  %553 = vmatmul.mubr.bf16.gmra.mxu0 %v359
  %v554 = vpop.f32.mrf.mxu0
  %v555 = vadd.f32 0.0, %v554
  %v556 = vpop.f32.mrf.mxu0
  %v557 = vpop.f32.mrf.mxu0
  %v558 = vadd.f32 0.0, %v557
  %v559 = vpop.f32.mrf.mxu0
  %560 = vmatprep.mubr.bf16.mxu0 0
  %561 = vmatmul.mubr.bf16.gmra.mxu0 %v360
  %v562 = vpop.f32.mrf.mxu0
  %v563 = vadd.f32 0.0, %v562
  %v564 = vpop.f32.mrf.mxu0
  %v565 = vpop.f32.mrf.mxu0
  %v566 = vadd.f32 0.0, %v565
  %v567 = vpop.f32.mrf.mxu0
  %568 = vmatprep.mubr.bf16.mxu0 0
  %569 = vmatmul.mubr.bf16.gmra.mxu0 %v361
  %v570 = vpop.f32.mrf.mxu0
  %v571 = vadd.f32 0.0, %v570
  %v572 = vpop.f32.mrf.mxu0
  %v573 = vpop.f32.mrf.mxu0
  %v574 = vadd.f32 0.0, %v573
  %v575 = vpop.f32.mrf.mxu0
  %576 = vmatprep.mubr.bf16.mxu0 0
  %577 = vmatmul.mubr.bf16.gmra.mxu0 %v362
  %v578 = vpop.f32.mrf.mxu0
  %v579 = vadd.f32 0.0, %v578
  %v580 = vpop.f32.mrf.mxu0
  %v581 = vpop.f32.mrf.mxu0
  %v582 = vadd.f32 0.0, %v581
  %v583 = vpop.f32.mrf.mxu0
  %584 = vmatprep.mubr.bf16.mxu0 0
  %585 = vmatmul.mubr.bf16.gmra.mxu0 %v363
  %v586 = vpop.f32.mrf.mxu0
  %v587 = vadd.f32 0.0, %v586
  %v588 = vpop.f32.mrf.mxu0
  %v589 = vpop.f32.mrf.mxu0
  %v590 = vadd.f32 0.0, %v589
  %v591 = vpop.f32.mrf.mxu0
  %592 = vmatprep.mubr.bf16.mxu0 0
  %593 = vmatmul.mubr.bf16.gmra.mxu0 %v364
  %v594 = vpop.f32.mrf.mxu0
  %v595 = vadd.f32 0.0, %v594
  %v596 = vpop.f32.mrf.mxu0
  %v597 = vpop.f32.mrf.mxu0
  %v598 = vadd.f32 0.0, %v597
  %v599 = vpop.f32.mrf.mxu0
  %600 = vmatprep.mubr.bf16.mxu0 0
  %601 = vmatmul.mubr.bf16.gmra.mxu0 %v365
  %v602 = vpop.f32.mrf.mxu0
  %v603 = vadd.f32 0.0, %v602
  %v604 = vpop.f32.mrf.mxu0
  %v605 = vpop.f32.mrf.mxu0
  %v606 = vadd.f32 0.0, %v605
  %v607 = vpop.f32.mrf.mxu0
  %608 = vmatprep.mubr.bf16.mxu0 0
  %609 = vmatmul.mubr.bf16.gmra.mxu0 %v366
  %v610 = vpop.f32.mrf.mxu0
  %v611 = vadd.f32 0.0, %v610
  %v612 = vpop.f32.mrf.mxu0
  %v613 = vpop.f32.mrf.mxu0
  %v614 = vadd.f32 0.0, %v613
  %v615 = vpop.f32.mrf.mxu0
  %616 = vmatprep.mubr.bf16.mxu0 0
  %617 = vmatmul.mubr.bf16.gmra.mxu0 %v367
  %v618 = vpop.f32.mrf.mxu0
  %v619 = vadd.f32 0.0, %v618
  %v620 = vpop.f32.mrf.mxu0
  %v621 = vpop.f32.mrf.mxu0
  %v622 = vadd.f32 0.0, %v621
  %v623 = vpop.f32.mrf.mxu0
  %624 = vmatprep.mubr.bf16.mxu0 0
  %625 = vmatmul.mubr.bf16.gmra.mxu0 %v368
  %v626 = vpop.f32.mrf.mxu0
  %v627 = vadd.f32 0.0, %v626
  %v628 = vpop.f32.mrf.mxu0
  %v629 = vpop.f32.mrf.mxu0
  %v630 = vadd.f32 0.0, %v629
  %v631 = vpop.f32.mrf.mxu0
  %632 = vmatprep.mubr.bf16.mxu0 0
  %633 = vmatmul.mubr.bf16.gmra.mxu0 %v369
  %v634 = vpop.f32.mrf.mxu0
  %v635 = vadd.f32 0.0, %v634
  %v636 = vpop.f32.mrf.mxu0
  %v637 = vpop.f32.mrf.mxu0
  %v638 = vadd.f32 0.0, %v637
  %v639 = vpop.f32.mrf.mxu0
  %640 = vmatprep.mubr.bf16.mxu0 0
  %641 = vmatmul.mubr.bf16.gmra.mxu0 %v370
  %v642 = vpop.f32.mrf.mxu0
  %v643 = vadd.f32 0.0, %v642
  %v644 = vpop.f32.mrf.mxu0
  %v645 = vpop.f32.mrf.mxu0
  %v646 = vadd.f32 0.0, %v645
  %v647 = vpop.f32.mrf.mxu0
  %648 = vmatprep.mubr.bf16.mxu0 0
  %649 = vmatmul.mubr.bf16.gmra.mxu0 %v371
  %v650 = vpop.f32.mrf.mxu0
  %v651 = vadd.f32 0.0, %v650
  %v652 = vpop.f32.mrf.mxu0
  %v653 = vpop.f32.mrf.mxu0
  %v654 = vadd.f32 0.0, %v653
  %v655 = vpop.f32.mrf.mxu0
  %656 = vmatprep.mubr.bf16.mxu0 0
  %657 = vmatmul.mubr.bf16.gmra.mxu0 %v372
  %v658 = vpop.f32.mrf.mxu0
  %v659 = vadd.f32 0.0, %v658
  %v660 = vpop.f32.mrf.mxu0
  %v661 = vpop.f32.mrf.mxu0
  %v662 = vadd.f32 0.0, %v661
  %v663 = vpop.f32.mrf.mxu0
  %664 = vmatprep.mubr.bf16.mxu0 0
  %665 = vmatmul.mubr.bf16.gmra.mxu0 %v373
  %v666 = vpop.f32.mrf.mxu0
  %v667 = vadd.f32 0.0, %v666
  %v668 = vpop.f32.mrf.mxu0
  %v669 = vpop.f32.mrf.mxu0
  %v670 = vadd.f32 0.0, %v669
  %v671 = vpop.f32.mrf.mxu0
  %672 = vmatprep.mubr.bf16.mxu0 0
  %673 = vmatmul.mubr.bf16.gmra.mxu0 %v374
  %v674 = vpop.f32.mrf.mxu0
  %v675 = vadd.f32 0.0, %v674
  %v676 = vpop.f32.mrf.mxu0
  %v677 = vpop.f32.mrf.mxu0
  %v678 = vadd.f32 0.0, %v677
  %v679 = vpop.f32.mrf.mxu0
  %680 = vmatprep.mubr.bf16.mxu0 0
  %681 = vmatmul.mubr.bf16.gmra.mxu0 %v375
  %v682 = vpop.f32.mrf.mxu0
  %v683 = vadd.f32 0.0, %v682
  %v684 = vpop.f32.mrf.mxu0
  %v685 = vpop.f32.mrf.mxu0
  %v686 = vadd.f32 0.0, %v685
  %v687 = vpop.f32.mrf.mxu0
  %688 = vmatprep.mubr.bf16.mxu0 0
  %689 = vmatmul.mubr.bf16.gmra.mxu0 %v376
  %v690 = vpop.f32.mrf.mxu0
  %v691 = vadd.f32 0.0, %v690
  %v692 = vpop.f32.mrf.mxu0
  %v693 = vpop.f32.mrf.mxu0
  %v694 = vadd.f32 0.0, %v693
  %v695 = vpop.f32.mrf.mxu0
  %696 = vmatprep.mubr.bf16.mxu0 0
  %697 = vmatmul.mubr.bf16.gmra.mxu0 %v377
  %v698 = vpop.f32.mrf.mxu0
  %v699 = vadd.f32 0.0, %v698
  %v700 = vpop.f32.mrf.mxu0
  %v701 = vpop.f32.mrf.mxu0
  %v702 = vadd.f32 0.0, %v701
  %v703 = vpop.f32.mrf.mxu0
  %704 = vmatprep.mubr.bf16.mxu0 0
  %705 = vmatmul.mubr.bf16.gmra.mxu0 %v378
  %v706 = vpop.f32.mrf.mxu0
  %v707 = vadd.f32 0.0, %v706
  %v708 = vpop.f32.mrf.mxu0
  %v709 = vpop.f32.mrf.mxu0
  %v710 = vadd.f32 0.0, %v709
  %v711 = vpop.f32.mrf.mxu0
  %712 = vmatprep.mubr.bf16.mxu0 0
  %713 = vmatmul.mubr.bf16.gmra.mxu0 %v379
  %v714 = vpop.f32.mrf.mxu0
  %v715 = vadd.f32 0.0, %v714
  %v716 = vpop.f32.mrf.mxu0
  %v717 = vpop.f32.mrf.mxu0
  %v718 = vadd.f32 0.0, %v717
  %v719 = vpop.f32.mrf.mxu0
  %720 = vmatprep.mubr.bf16.mxu0 0
  %721 = vmatmul.mubr.bf16.gmra.mxu0 %v380
  %v722 = vpop.f32.mrf.mxu0
  %v723 = vadd.f32 0.0, %v722
  %v724 = vpop.f32.mrf.mxu0
  %v725 = vpop.f32.mrf.mxu0
  %v726 = vadd.f32 0.0, %v725
  %v727 = vpop.f32.mrf.mxu0
  %728 = vmatprep.mubr.bf16.mxu0 0
  %729 = vmatmul.mubr.bf16.gmra.mxu0 %v381
  %v730 = vpop.f32.mrf.mxu0
  %v731 = vadd.f32 0.0, %v730
  %v732 = vpop.f32.mrf.mxu0
  %v733 = vpop.f32.mrf.mxu0
  %v734 = vadd.f32 0.0, %v733
  %v735 = vpop.f32.mrf.mxu0
  %736 = vmatprep.mubr.bf16.mxu0 0
  %737 = vmatmul.mubr.bf16.gmra.mxu0 %v382
  %v738 = vpop.f32.mrf.mxu0
  %v739 = vadd.f32 0.0, %v738
  %v740 = vpop.f32.mrf.mxu0
  %v741 = vpop.f32.mrf.mxu0
  %v742 = vadd.f32 0.0, %v741
  %v743 = vpop.f32.mrf.mxu0
  %744 = vmatprep.mubr.bf16.mxu0 0
  %745 = vmatmul.mubr.bf16.gmra.mxu0 %v383
  %v746 = vpop.f32.mrf.mxu0
  %v747 = vadd.f32 0.0, %v746
  %v748 = vpop.f32.mrf.mxu0
  %v749 = vpop.f32.mrf.mxu0
  %v750 = vadd.f32 0.0, %v749
  %v751 = vpop.f32.mrf.mxu0
  %752 = vdwg.mxu0
  %v753 = vadd.f32 %v80, %v499
  %v754 = vadd.f32 %v81, %v502
  %v755 = vadd.f32 %v82, %v507
  %v756 = vadd.f32 %v83, %v510
  %v757 = vadd.f32 %v84, %v515
  %v758 = vadd.f32 %v85, %v518
  %v759 = vadd.f32 %v86, %v523
  %v760 = vadd.f32 %v87, %v526
  %v761 = vadd.f32 %v88, %v531
  %v762 = vadd.f32 %v89, %v534
  %v763 = vadd.f32 %v90, %v539
  %v764 = vadd.f32 %v91, %v542
  %v765 = vadd.f32 %v92, %v547
  %v766 = vadd.f32 %v93, %v550
  %v767 = vadd.f32 %v94, %v555
  %v768 = vadd.f32 %v95, %v558
  %v769 = vadd.f32 %v96, %v563
  %v770 = vadd.f32 %v97, %v566
  %v771 = vadd.f32 %v98, %v571
  %v772 = vadd.f32 %v99, %v574
  %v773 = vadd.f32 %v100, %v579
  %v774 = vadd.f32 %v101, %v582
  %v775 = vadd.f32 %v102, %v587
  %v776 = vadd.f32 %v103, %v590
  %v777 = vadd.f32 %v104, %v595
  %v778 = vadd.f32 %v105, %v598
  %v779 = vadd.f32 %v106, %v603
  %v780 = vadd.f32 %v107, %v606
  %v781 = vadd.f32 %v108, %v611
  %v782 = vadd.f32 %v109, %v614
  %v783 = vadd.f32 %v110, %v619
  %v784 = vadd.f32 %v111, %v622
  %v785 = vadd.f32 %v112, %v627
  %v786 = vadd.f32 %v113, %v630
  %v787 = vadd.f32 %v114, %v635
  %v788 = vadd.f32 %v115, %v638
  %v789 = vadd.f32 %v116, %v643
  %v790 = vadd.f32 %v117, %v646
  %v791 = vadd.f32 %v118, %v651
  %v792 = vadd.f32 %v119, %v654
  %v793 = vadd.f32 %v120, %v659
  %v794 = vadd.f32 %v121, %v662
  %v795 = vadd.f32 %v122, %v667
  %v796 = vadd.f32 %v123, %v670
  %v797 = vadd.f32 %v124, %v675
  %v798 = vadd.f32 %v125, %v678
  %v799 = vadd.f32 %v126, %v683
  %v800 = vadd.f32 %v127, %v686
  %v801 = vadd.f32 %v128, %v691
  %v802 = vadd.f32 %v129, %v694
  %v803 = vadd.f32 %v130, %v699
  %v804 = vadd.f32 %v131, %v702
  %v805 = vadd.f32 %v132, %v707
  %v806 = vadd.f32 %v133, %v710
  %v807 = vadd.f32 %v134, %v715
  %v808 = vadd.f32 %v135, %v718
  %v809 = vadd.f32 %v136, %v723
  %v810 = vadd.f32 %v137, %v726
  %v811 = vadd.f32 %v138, %v731
  %v812 = vadd.f32 %v139, %v734
  %v813 = vadd.f32 %v140, %v739
  %v814 = vadd.f32 %v141, %v742
  %v815 = vadd.f32 %v142, %v747
  %v816 = vadd.f32 %v143, %v750
  %817 = vst [vmem:[#allocation2] sm:$0xff] %v753
  %818 = vst [vmem:[#allocation2 + $0x8] sm:$0xff] %v754
  %819 = vst [vmem:[#allocation2 + $0x10] sm:$0xff] %v755
  %820 = vst [vmem:[#allocation2 + $0x18] sm:$0xff] %v756
  %821 = vst [vmem:[#allocation2 + $0x20] sm:$0xff] %v757
  %822 = vst [vmem:[#allocation2 + $0x28] sm:$0xff] %v758
  %823 = vst [vmem:[#allocation2 + $0x30] sm:$0xff] %v759
  %824 = vst [vmem:[#allocation2 + $0x38] sm:$0xff] %v760
  %825 = vst [vmem:[#allocation2 + $0x40] sm:$0xff] %v761
  %826 = vst [vmem:[#allocation2 + $0x48] sm:$0xff] %v762
  %827 = vst [vmem:[#allocation2 + $0x50] sm:$0xff] %v763
  %828 = vst [vmem:[#allocation2 + $0x58] sm:$0xff] %v764
  %829 = vst [vmem:[#allocation2 + $0x60] sm:$0xff] %v765
  %830 = vst [vmem:[#allocation2 + $0x68] sm:$0xff] %v766
  %831 = vst [vmem:[#allocation2 + $0x70] sm:$0xff] %v767
  %832 = vst [vmem:[#allocation2 + $0x78] sm:$0xff] %v768
  %833 = vst [vmem:[#allocation2 + $0x80] sm:$0xff] %v769
  %834 = vst [vmem:[#allocation2 + $0x88] sm:$0xff] %v770
  %835 = vst [vmem:[#allocation2 + $0x90] sm:$0xff] %v771
  %836 = vst [vmem:[#allocation2 + $0x98] sm:$0xff] %v772
  %837 = vst [vmem:[#allocation2 + $0xa0] sm:$0xff] %v773
  %838 = vst [vmem:[#allocation2 + $0xa8] sm:$0xff] %v774
  %839 = vst [vmem:[#allocation2 + $0xb0] sm:$0xff] %v775
  %840 = vst [vmem:[#allocation2 + $0xb8] sm:$0xff] %v776
  %841 = vst [vmem:[#allocation2 + $0xc0] sm:$0xff] %v777
  %842 = vst [vmem:[#allocation2 + $0xc8] sm:$0xff] %v778
  %843 = vst [vmem:[#allocation2 + $0xd0] sm:$0xff] %v779
  %844 = vst [vmem:[#allocation2 + $0xd8] sm:$0xff] %v780
  %845 = vst [vmem:[#allocation2 + $0xe0] sm:$0xff] %v781
  %846 = vst [vmem:[#allocation2 + $0xe8] sm:$0xff] %v782
  %847 = vst [vmem:[#allocation2 + $0xf0] sm:$0xff] %v783
  %848 = vst [vmem:[#allocation2 + $0xf8] sm:$0xff] %v784
  %849 = vst [vmem:[#allocation2 + $0x100] sm:$0xff] %v785
  %850 = vst [vmem:[#allocation2 + $0x108] sm:$0xff] %v786
  %851 = vst [vmem:[#allocation2 + $0x110] sm:$0xff] %v787
  %852 = vst [vmem:[#allocation2 + $0x118] sm:$0xff] %v788
  %853 = vst [vmem:[#allocation2 + $0x120] sm:$0xff] %v789
  %854 = vst [vmem:[#allocation2 + $0x128] sm:$0xff] %v790
  %855 = vst [vmem:[#allocation2 + $0x130] sm:$0xff] %v791
  %856 = vst [vmem:[#allocation2 + $0x138] sm:$0xff] %v792
  %857 = vst [vmem:[#allocation2 + $0x140] sm:$0xff] %v793
  %858 = vst [vmem:[#allocation2 + $0x148] sm:$0xff] %v794
  %859 = vst [vmem:[#allocation2 + $0x150] sm:$0xff] %v795
  %860 = vst [vmem:[#allocation2 + $0x158] sm:$0xff] %v796
  %861 = vst [vmem:[#allocation2 + $0x160] sm:$0xff] %v797
  %862 = vst [vmem:[#allocation2 + $0x168] sm:$0xff] %v798
  %863 = vst [vmem:[#allocation2 + $0x170] sm:$0xff] %v799
  %864 = vst [vmem:[#allocation2 + $0x178] sm:$0xff] %v800
  %865 = vst [vmem:[#allocation2 + $0x180] sm:$0xff] %v801
  %866 = vst [vmem:[#allocation2 + $0x188] sm:$0xff] %v802
  %867 = vst [vmem:[#allocation2 + $0x190] sm:$0xff] %v803
  %868 = vst [vmem:[#allocation2 + $0x198] sm:$0xff] %v804
  %869 = vst [vmem:[#allocation2 + $0x1a0] sm:$0xff] %v805
  %870 = vst [vmem:[#allocation2 + $0x1a8] sm:$0xff] %v806
  %871 = vst [vmem:[#allocation2 + $0x1b0] sm:$0xff] %v807
  %872 = vst [vmem:[#allocation2 + $0x1b8] sm:$0xff] %v808
  %873 = vst [vmem:[#allocation2 + $0x1c0] sm:$0xff] %v809
  %874 = vst [vmem:[#allocation2 + $0x1c8] sm:$0xff] %v810
  %875 = vst [vmem:[#allocation2 + $0x1d0] sm:$0xff] %v811
  %876 = vst [vmem:[#allocation2 + $0x1d8] sm:$0xff] %v812
  %877 = vst [vmem:[#allocation2 + $0x1e0] sm:$0xff] %v813
  %878 = vst [vmem:[#allocation2 + $0x1e8] sm:$0xff] %v814
  %879 = vst [vmem:[#allocation2 + $0x1f0] sm:$0xff] %v815
  %880 = vst [vmem:[#allocation2 + $0x1f8] sm:$0xff] %v816
  // Predicated region
  $region14: #{gcn_forward.4} parent=0 // pred_check
    %p881 = pneg %p12
  $region15: #{gcn_forward.4} parent=0 // pred_check_branch
    %883 = sbr.rel (%p881) target = $region17
  $region16: #{gcn_forward.4} parent=0 // pred_region
    %v884 = vld [vmem:[#allocation2] sm:$0xff]
    %v885 = vld [vmem:[#allocation2 + $0x8] sm:$0xff]
    %v886 = vld [vmem:[#allocation2 + $0x10] sm:$0xff]
    %v887 = vld [vmem:[#allocation2 + $0x18] sm:$0xff]
    %v888 = vld [vmem:[#allocation2 + $0x20] sm:$0xff]
    %v889 = vld [vmem:[#allocation2 + $0x28] sm:$0xff]
    %v890 = vld [vmem:[#allocation2 + $0x30] sm:$0xff]
    %v891 = vld [vmem:[#allocation2 + $0x38] sm:$0xff]
    %v892 = vld [vmem:[#allocation2 + $0x40] sm:$0xff]
    %v893 = vld [vmem:[#allocation2 + $0x48] sm:$0xff]
    %v894 = vld [vmem:[#allocation2 + $0x50] sm:$0xff]
    %v895 = vld [vmem:[#allocation2 + $0x58] sm:$0xff]
    %v896 = vld [vmem:[#allocation2 + $0x60] sm:$0xff]
    %v897 = vld [vmem:[#allocation2 + $0x68] sm:$0xff]
    %v898 = vld [vmem:[#allocation2 + $0x70] sm:$0xff]
    %v899 = vld [vmem:[#allocation2 + $0x78] sm:$0xff]
    %v900 = vld [vmem:[#allocation2 + $0x80] sm:$0xff]
    %v901 = vld [vmem:[#allocation2 + $0x88] sm:$0xff]
    %v902 = vld [vmem:[#allocation2 + $0x90] sm:$0xff]
    %v903 = vld [vmem:[#allocation2 + $0x98] sm:$0xff]
    %v904 = vld [vmem:[#allocation2 + $0xa0] sm:$0xff]
    %v905 = vld [vmem:[#allocation2 + $0xa8] sm:$0xff]
    %v906 = vld [vmem:[#allocation2 + $0xb0] sm:$0xff]
    %v907 = vld [vmem:[#allocation2 + $0xb8] sm:$0xff]
    %v908 = vld [vmem:[#allocation2 + $0xc0] sm:$0xff]
    %v909 = vld [vmem:[#allocation2 + $0xc8] sm:$0xff]
    %v910 = vld [vmem:[#allocation2 + $0xd0] sm:$0xff]
    %v911 = vld [vmem:[#allocation2 + $0xd8] sm:$0xff]
    %v912 = vld [vmem:[#allocation2 + $0xe0] sm:$0xff]
    %v913 = vld [vmem:[#allocation2 + $0xe8] sm:$0xff]
    %v914 = vld [vmem:[#allocation2 + $0xf0] sm:$0xff]
    %v915 = vld [vmem:[#allocation2 + $0xf8] sm:$0xff]
    %v916 = vld [vmem:[#allocation2 + $0x100] sm:$0xff]
    %v917 = vld [vmem:[#allocation2 + $0x108] sm:$0xff]
    %v918 = vld [vmem:[#allocation2 + $0x110] sm:$0xff]
    %v919 = vld [vmem:[#allocation2 + $0x118] sm:$0xff]
    %v920 = vld [vmem:[#allocation2 + $0x120] sm:$0xff]
    %v921 = vld [vmem:[#allocation2 + $0x128] sm:$0xff]
    %v922 = vld [vmem:[#allocation2 + $0x130] sm:$0xff]
    %v923 = vld [vmem:[#allocation2 + $0x138] sm:$0xff]
    %v924 = vld [vmem:[#allocation2 + $0x140] sm:$0xff]
    %v925 = vld [vmem:[#allocation2 + $0x148] sm:$0xff]
    %v926 = vld [vmem:[#allocation2 + $0x150] sm:$0xff]
    %v927 = vld [vmem:[#allocation2 + $0x158] sm:$0xff]
    %v928 = vld [vmem:[#allocation2 + $0x160] sm:$0xff]
    %v929 = vld [vmem:[#allocation2 + $0x168] sm:$0xff]
    %v930 = vld [vmem:[#allocation2 + $0x170] sm:$0xff]
    %v931 = vld [vmem:[#allocation2 + $0x178] sm:$0xff]
    %v932 = vld [vmem:[#allocation2 + $0x180] sm:$0xff]
    %v933 = vld [vmem:[#allocation2 + $0x188] sm:$0xff]
    %v934 = vld [vmem:[#allocation2 + $0x190] sm:$0xff]
    %v935 = vld [vmem:[#allocation2 + $0x198] sm:$0xff]
    %v936 = vld [vmem:[#allocation2 + $0x1a0] sm:$0xff]
    %v937 = vld [vmem:[#allocation2 + $0x1a8] sm:$0xff]
    %v938 = vld [vmem:[#allocation2 + $0x1b0] sm:$0xff]
    %v939 = vld [vmem:[#allocation2 + $0x1b8] sm:$0xff]
    %v940 = vld [vmem:[#allocation2 + $0x1c0] sm:$0xff]
    %v941 = vld [vmem:[#allocation2 + $0x1c8] sm:$0xff]
    %v942 = vld [vmem:[#allocation2 + $0x1d0] sm:$0xff]
    %v943 = vld [vmem:[#allocation2 + $0x1d8] sm:$0xff]
    %v944 = vld [vmem:[#allocation2 + $0x1e0] sm:$0xff]
    %v945 = vld [vmem:[#allocation2 + $0x1e8] sm:$0xff]
    %v946 = vld [vmem:[#allocation2 + $0x1f0] sm:$0xff]
    %v947 = vld [vmem:[#allocation2 + $0x1f8] sm:$0xff]
    %v948 = vpack.c.bf16 %v885, %v884
    %v949 = vpack.c.bf16 %v887, %v886
    %v950 = vpack.c.bf16 %v889, %v888
    %v951 = vpack.c.bf16 %v891, %v890
    %v952 = vpack.c.bf16 %v893, %v892
    %v953 = vpack.c.bf16 %v895, %v894
    %v954 = vpack.c.bf16 %v897, %v896
    %v955 = vpack.c.bf16 %v899, %v898
    %v956 = vpack.c.bf16 %v901, %v900
    %v957 = vpack.c.bf16 %v903, %v902
    %v958 = vpack.c.bf16 %v905, %v904
    %v959 = vpack.c.bf16 %v907, %v906
    %v960 = vpack.c.bf16 %v909, %v908
    %v961 = vpack.c.bf16 %v911, %v910
    %v962 = vpack.c.bf16 %v913, %v912
    %v963 = vpack.c.bf16 %v915, %v914
    %v964 = vpack.c.bf16 %v917, %v916
    %v965 = vpack.c.bf16 %v919, %v918
    %v966 = vpack.c.bf16 %v921, %v920
    %v967 = vpack.c.bf16 %v923, %v922
    %v968 = vpack.c.bf16 %v925, %v924
    %v969 = vpack.c.bf16 %v927, %v926
    %v970 = vpack.c.bf16 %v929, %v928
    %v971 = vpack.c.bf16 %v931, %v930
    %v972 = vpack.c.bf16 %v933, %v932
    %v973 = vpack.c.bf16 %v935, %v934
    %v974 = vpack.c.bf16 %v937, %v936
    %v975 = vpack.c.bf16 %v939, %v938
    %v976 = vpack.c.bf16 %v941, %v940
    %v977 = vpack.c.bf16 %v943, %v942
    %v978 = vpack.c.bf16 %v945, %v944
    %v979 = vpack.c.bf16 %v947, %v946
    %v1012 = vunpack.c.l.b16 %v948
    %v1013 = vunpack.c.h.b16 %v948
    %v1014 = vunpack.c.l.b16 %v949
    %v1015 = vunpack.c.h.b16 %v949
    %v1016 = vunpack.c.l.b16 %v950
    %v1017 = vunpack.c.h.b16 %v950
    %v1018 = vunpack.c.l.b16 %v951
    %v1019 = vunpack.c.h.b16 %v951
    %v1020 = vunpack.c.l.b16 %v952
    %v1021 = vunpack.c.h.b16 %v952
    %v1022 = vunpack.c.l.b16 %v953
    %v1023 = vunpack.c.h.b16 %v953
    %v1024 = vunpack.c.l.b16 %v954
    %v1025 = vunpack.c.h.b16 %v954
    %v1026 = vunpack.c.l.b16 %v955
    %v1027 = vunpack.c.h.b16 %v955
    %v1028 = vunpack.c.l.b16 %v956
    %v1029 = vunpack.c.h.b16 %v956
    %v1030 = vunpack.c.l.b16 %v957
    %v1031 = vunpack.c.h.b16 %v957
    %v1032 = vunpack.c.l.b16 %v958
    %v1033 = vunpack.c.h.b16 %v958
    %v1034 = vunpack.c.l.b16 %v959
    %v1035 = vunpack.c.h.b16 %v959
    %v1036 = vunpack.c.l.b16 %v960
    %v1037 = vunpack.c.h.b16 %v960
    %v1038 = vunpack.c.l.b16 %v961
    %v1039 = vunpack.c.h.b16 %v961
    %v1040 = vunpack.c.l.b16 %v962
    %v1041 = vunpack.c.h.b16 %v962
    %v1042 = vunpack.c.l.b16 %v963
    %v1043 = vunpack.c.h.b16 %v963
    %v1044 = vunpack.c.l.b16 %v964
    %v1045 = vunpack.c.h.b16 %v964
    %v1046 = vunpack.c.l.b16 %v965
    %v1047 = vunpack.c.h.b16 %v965
    %v1048 = vunpack.c.l.b16 %v966
    %v1049 = vunpack.c.h.b16 %v966
    %v1050 = vunpack.c.l.b16 %v967
    %v1051 = vunpack.c.h.b16 %v967
    %v1052 = vunpack.c.l.b16 %v968
    %v1053 = vunpack.c.h.b16 %v968
    %v1054 = vunpack.c.l.b16 %v969
    %v1055 = vunpack.c.h.b16 %v969
    %v1056 = vunpack.c.l.b16 %v970
    %v1057 = vunpack.c.h.b16 %v970
    %v1058 = vunpack.c.l.b16 %v971
    %v1059 = vunpack.c.h.b16 %v971
    %v1060 = vunpack.c.l.b16 %v972
    %v1061 = vunpack.c.h.b16 %v972
    %v1062 = vunpack.c.l.b16 %v973
    %v1063 = vunpack.c.h.b16 %v973
    %v1064 = vunpack.c.l.b16 %v974
    %v1065 = vunpack.c.h.b16 %v974
    %v1066 = vunpack.c.l.b16 %v975
    %v1067 = vunpack.c.h.b16 %v975
    %v1068 = vunpack.c.l.b16 %v976
    %v1069 = vunpack.c.h.b16 %v976
    %v1070 = vunpack.c.l.b16 %v977
    %v1071 = vunpack.c.h.b16 %v977
    %v1072 = vunpack.c.l.b16 %v978
    %v1073 = vunpack.c.h.b16 %v978
    %v1074 = vunpack.c.l.b16 %v979
    %v1075 = vunpack.c.h.b16 %v979
    %v1076 = vpack.c.b16 %v1012, %v1012
    %v1077 = vpack.c.b16 %v1013, %v1013
    %v1078 = vpack.c.b16 %v1014, %v1014
    %v1079 = vpack.c.b16 %v1015, %v1015
    %v1080 = vpack.c.b16 %v1016, %v1016
    %v1081 = vpack.c.b16 %v1017, %v1017
    %v1082 = vpack.c.b16 %v1018, %v1018
    %v1083 = vpack.c.b16 %v1019, %v1019
    %v1084 = vpack.c.b16 %v1020, %v1020
    %v1085 = vpack.c.b16 %v1021, %v1021
    %v1086 = vpack.c.b16 %v1022, %v1022
    %v1087 = vpack.c.b16 %v1023, %v1023
    %v1088 = vpack.c.b16 %v1024, %v1024
    %v1089 = vpack.c.b16 %v1025, %v1025
    %v1090 = vpack.c.b16 %v1026, %v1026
    %v1091 = vpack.c.b16 %v1027, %v1027
    %v1092 = vpack.c.b16 %v1028, %v1028
    %v1093 = vpack.c.b16 %v1029, %v1029
    %v1094 = vpack.c.b16 %v1030, %v1030
    %v1095 = vpack.c.b16 %v1031, %v1031
    %v1096 = vpack.c.b16 %v1032, %v1032
    %v1097 = vpack.c.b16 %v1033, %v1033
    %v1098 = vpack.c.b16 %v1034, %v1034
    %v1099 = vpack.c.b16 %v1035, %v1035
    %v1100 = vpack.c.b16 %v1036, %v1036
    %v1101 = vpack.c.b16 %v1037, %v1037
    %v1102 = vpack.c.b16 %v1038, %v1038
    %v1103 = vpack.c.b16 %v1039, %v1039
    %v1104 = vpack.c.b16 %v1040, %v1040
    %v1105 = vpack.c.b16 %v1041, %v1041
    %v1106 = vpack.c.b16 %v1042, %v1042
    %v1107 = vpack.c.b16 %v1043, %v1043
    %v1108 = vpack.c.b16 %v1044, %v1044
    %v1109 = vpack.c.b16 %v1045, %v1045
    %v1110 = vpack.c.b16 %v1046, %v1046
    %v1111 = vpack.c.b16 %v1047, %v1047
    %v1112 = vpack.c.b16 %v1048, %v1048
    %v1113 = vpack.c.b16 %v1049, %v1049
    %v1114 = vpack.c.b16 %v1050, %v1050
    %v1115 = vpack.c.b16 %v1051, %v1051
    %v1116 = vpack.c.b16 %v1052, %v1052
    %v1117 = vpack.c.b16 %v1053, %v1053
    %v1118 = vpack.c.b16 %v1054, %v1054
    %v1119 = vpack.c.b16 %v1055, %v1055
    %v1120 = vpack.c.b16 %v1056, %v1056
    %v1121 = vpack.c.b16 %v1057, %v1057
    %v1122 = vpack.c.b16 %v1058, %v1058
    %v1123 = vpack.c.b16 %v1059, %v1059
    %v1124 = vpack.c.b16 %v1060, %v1060
    %v1125 = vpack.c.b16 %v1061, %v1061
    %v1126 = vpack.c.b16 %v1062, %v1062
    %v1127 = vpack.c.b16 %v1063, %v1063
    %v1128 = vpack.c.b16 %v1064, %v1064
    %v1129 = vpack.c.b16 %v1065, %v1065
    %v1130 = vpack.c.b16 %v1066, %v1066
    %v1131 = vpack.c.b16 %v1067, %v1067
    %v1132 = vpack.c.b16 %v1068, %v1068
    %v1133 = vpack.c.b16 %v1069, %v1069
    %v1134 = vpack.c.b16 %v1070, %v1070
    %v1135 = vpack.c.b16 %v1071, %v1071
    %v1136 = vpack.c.b16 %v1072, %v1072
    %v1137 = vpack.c.b16 %v1073, %v1073
    %v1138 = vpack.c.b16 %v1074, %v1074
    %v1139 = vpack.c.b16 %v1075, %v1075
    %1204 = vst [vmem:[%s2] sm:$0xf] %v1076
    %1205 = vst [vmem:[%s2 + $0x4] sm:$0xf] %v1077
    %1206 = vst [vmem:[%s2 + $0x8] sm:$0xf] %v1078
    %1207 = vst [vmem:[%s2 + $0xc] sm:$0xf] %v1079
    %1208 = vst [vmem:[%s2 + $0x10] sm:$0xf] %v1080
    %1209 = vst [vmem:[%s2 + $0x14] sm:$0xf] %v1081
    %1210 = vst [vmem:[%s2 + $0x18] sm:$0xf] %v1082
    %1211 = vst [vmem:[%s2 + $0x1c] sm:$0xf] %v1083
    %1212 = vst [vmem:[%s2 + $0x20] sm:$0xf] %v1084
    %1213 = vst [vmem:[%s2 + $0x24] sm:$0xf] %v1085
    %1214 = vst [vmem:[%s2 + $0x28] sm:$0xf] %v1086
    %1215 = vst [vmem:[%s2 + $0x2c] sm:$0xf] %v1087
    %1216 = vst [vmem:[%s2 + $0x30] sm:$0xf] %v1088
    %1217 = vst [vmem:[%s2 + $0x34] sm:$0xf] %v1089
    %1218 = vst [vmem:[%s2 + $0x38] sm:$0xf] %v1090
    %1219 = vst [vmem:[%s2 + $0x3c] sm:$0xf] %v1091
    %1220 = vst [vmem:[%s2 + $0x40] sm:$0xf] %v1092
    %1221 = vst [vmem:[%s2 + $0x44] sm:$0xf] %v1093
    %1222 = vst [vmem:[%s2 + $0x48] sm:$0xf] %v1094
    %1223 = vst [vmem:[%s2 + $0x4c] sm:$0xf] %v1095
    %1224 = vst [vmem:[%s2 + $0x50] sm:$0xf] %v1096
    %1225 = vst [vmem:[%s2 + $0x54] sm:$0xf] %v1097
    %1226 = vst [vmem:[%s2 + $0x58] sm:$0xf] %v1098
    %1227 = vst [vmem:[%s2 + $0x5c] sm:$0xf] %v1099
    %1228 = vst [vmem:[%s2 + $0x60] sm:$0xf] %v1100
    %1229 = vst [vmem:[%s2 + $0x64] sm:$0xf] %v1101
    %1230 = vst [vmem:[%s2 + $0x68] sm:$0xf] %v1102
    %1231 = vst [vmem:[%s2 + $0x6c] sm:$0xf] %v1103
    %1232 = vst [vmem:[%s2 + $0x70] sm:$0xf] %v1104
    %1233 = vst [vmem:[%s2 + $0x74] sm:$0xf] %v1105
    %1234 = vst [vmem:[%s2 + $0x78] sm:$0xf] %v1106
    %1235 = vst [vmem:[%s2 + $0x7c] sm:$0xf] %v1107
    %1236 = vst [vmem:[%s2 + $0x80] sm:$0xf] %v1108
    %1237 = vst [vmem:[%s2 + $0x84] sm:$0xf] %v1109
    %1238 = vst [vmem:[%s2 + $0x88] sm:$0xf] %v1110
    %1239 = vst [vmem:[%s2 + $0x8c] sm:$0xf] %v1111
    %1240 = vst [vmem:[%s2 + $0x90] sm:$0xf] %v1112
    %1241 = vst [vmem:[%s2 + $0x94] sm:$0xf] %v1113
    %1242 = vst [vmem:[%s2 + $0x98] sm:$0xf] %v1114
    %1243 = vst [vmem:[%s2 + $0x9c] sm:$0xf] %v1115
    %1244 = vst [vmem:[%s2 + $0xa0] sm:$0xf] %v1116
    %1245 = vst [vmem:[%s2 + $0xa4] sm:$0xf] %v1117
    %1246 = vst [vmem:[%s2 + $0xa8] sm:$0xf] %v1118
    %1247 = vst [vmem:[%s2 + $0xac] sm:$0xf] %v1119
    %1248 = vst [vmem:[%s2 + $0xb0] sm:$0xf] %v1120
    %1249 = vst [vmem:[%s2 + $0xb4] sm:$0xf] %v1121
    %1250 = vst [vmem:[%s2 + $0xb8] sm:$0xf] %v1122
    %1251 = vst [vmem:[%s2 + $0xbc] sm:$0xf] %v1123
    %1252 = vst [vmem:[%s2 + $0xc0] sm:$0xf] %v1124
    %1253 = vst [vmem:[%s2 + $0xc4] sm:$0xf] %v1125
    %1254 = vst [vmem:[%s2 + $0xc8] sm:$0xf] %v1126
    %1255 = vst [vmem:[%s2 + $0xcc] sm:$0xf] %v1127
    %1256 = vst [vmem:[%s2 + $0xd0] sm:$0xf] %v1128
    %1257 = vst [vmem:[%s2 + $0xd4] sm:$0xf] %v1129
    %1258 = vst [vmem:[%s2 + $0xd8] sm:$0xf] %v1130
    %1259 = vst [vmem:[%s2 + $0xdc] sm:$0xf] %v1131
    %1260 = vst [vmem:[%s2 + $0xe0] sm:$0xf] %v1132
    %1261 = vst [vmem:[%s2 + $0xe4] sm:$0xf] %v1133
    %1262 = vst [vmem:[%s2 + $0xe8] sm:$0xf] %v1134
    %1263 = vst [vmem:[%s2 + $0xec] sm:$0xf] %v1135
    %1264 = vst [vmem:[%s2 + $0xf0] sm:$0xf] %v1136
    %1265 = vst [vmem:[%s2 + $0xf4] sm:$0xf] %v1137
    %1266 = vst [vmem:[%s2 + $0xf8] sm:$0xf] %v1138
    %1267 = vst [vmem:[%s2 + $0xfc] sm:$0xf] %v1139
  $region17: #{gcn_forward.4} parent=0 // pred_fallthru
    _
  // Predicated region
  $region18: #{gcn_forward.4} parent=0 // pred_check
    _
  $region19: #{gcn_forward.4} parent=0 // pred_check_branch
    %1269 = sbr.rel (0) target = $region21
  $region20: #{gcn_forward.4} parent=0 // pred_region
    _
  $region21: #{gcn_forward.4} parent=0 // pred_fallthru
    _
  // Predicated region
  $region22: #{gcn_forward.4} parent=0 // pred_check
    _
  $region23: #{gcn_forward.4} parent=0 // pred_check_branch
    %1271 = sbr.rel (0) target = $region25
  $region24: #{gcn_forward.4} parent=0 // pred_region
    _
  $region25: #{gcn_forward.4} parent=0 // pred_fallthru
    _

// kernel: gcn_forward.5
$region0: #{gcn_forward.5}
  #allocation0 [shape = 'u32[]', space=smem, size = 0x4, offset = 0x4, fixed_abs, tag = 'smem constant byte address 0x4 - core index']
  #allocation1 [shape = 'u32[144,128]{1,0:T(1,128)}', space=vmem, size = 0x12000, scoped, tag = 'internal scratch']
  #allocation2 [shape = 'f32[512,128]{1,0:T(8,128)}', space=vmem, size = 0x40000, scoped, tag = 'scratch operand']
  #allocation3 [shape = 's32[1]{0}', space=sflag, size = 0x4, scoped, tag = 'scoped memory for gcn_forward.5']
  #allocation4 [shape = 's32[1,1]{1,0:T(1,128)S(6)}', space=smem, size = 0x200, scoped, tag = 'prefetched SMEM operand 0']
  #allocation5 [shape = 's32[1]{0:T(128)S(6)}', space=smem, size = 0x200, scoped, tag = 'prefetched SMEM operand 1']
  %s0 = inlined_call_operand.<no memory space> [shape: s32[1,1], index: 0, kind: input, shape index: {}]
  %s1 = inlined_call_operand.<no memory space> [shape: s32[1], index: 1, kind: input, shape index: {}]
  %s2 = inlined_call_operand.vmem [shape: bf16[512,512], index: 2, kind: input, shape index: {}]
  %s3 = inlined_call_operand.vmem [shape: bf16[512,128], index: 3, kind: input, shape index: {}]
  %s4 = inlined_call_operand.vmem [shape: f32[1,128], index: 4, kind: input, shape index: {}]
  %s5 = inlined_call_operand.vmem [shape: bf16[512,128], index: 5, kind: output, shape index: {}]
  %s6 = sld [smem:[#allocation0]]
  $region34: #{gcn_forward.5} parent=0
    _
  %s8 = ssub.s32 1, %s6
  %s9 = scalar_select 0, %s8, %s6
  %10 = sst [smem:[#allocation4]] %s0
  %11 = sst [smem:[#allocation5]] %s1
  // Predicated region
  $region2: #{gcn_forward.5} parent=0 // pred_check
    _
  $region3: #{gcn_forward.5} parent=0 // pred_check_branch
    %13 = sbr.rel (0) target = $region5
  $region4: #{gcn_forward.5} parent=0 // pred_region
    %s14 = sadd.s32 0, 0
    %s15 = smul.u32 %s14, 128
    %s16 = sadd.s32 %s15, 0
    %s17 = sld [smem:[#allocation4 + %s16]]
    %s18 = smul.u32 4, %s17
    %p19 = scmp.lt.s32.totalorder %s18, 3
    %s20 = scalar_select %p19, %s18, 3
    %s21 = smul.addr %s20, 4
    %s22 = scalar_lea.vmem %s2, %s21
    %s23 = sadd.s32 0, 0
    %s24 = smul.u32 %s23, 128
    %s25 = sadd.s32 %s24, 0
    %s26 = sld [smem:[#allocation4 + %s25]]
    %s27 = smul.u32 4, %s26
  $region5: #{gcn_forward.5} parent=0 // pred_fallthru
    _
  // Predicated region
  $region6: #{gcn_forward.5} parent=0 // pred_check
    _
  $region7: #{gcn_forward.5} parent=0 // pred_check_branch
    %29 = sbr.rel (0) target = $region9
  $region8: #{gcn_forward.5} parent=0 // pred_region
    _
  $region9: #{gcn_forward.5} parent=0 // pred_fallthru
    _
  // Predicated region
  $region10: #{gcn_forward.5} parent=0 // pred_check
    _
  $region11: #{gcn_forward.5} parent=0 // pred_check_branch
    %31 = sbr.rel (0) target = $region13
  $region12: #{gcn_forward.5} parent=0 // pred_region
    _
  $region13: #{gcn_forward.5} parent=0 // pred_fallthru
    _
  %s32 = sadd.s32 0, 0
  %s33 = smul.u32 %s32, 128
  %s34 = sadd.s32 %s33, 0
  %s35 = sld [smem:[#allocation4 + %s34]]
  %s36 = smul.u32 4, %s35
  %p37 = scmp.lt.s32.totalorder %s36, 3
  %s38 = scalar_select %p37, %s36, 3
  %s39 = smul.addr %s38, 4
  %s40 = scalar_lea.vmem %s2, %s39
  %s41 = sadd.s32 0, 0
  %s42 = smul.u32 %s41, 128
  %s43 = sadd.s32 %s42, 0
  %s44 = sld [smem:[#allocation4 + %s43]]
  %s45 = smul.u32 4, %s44
  %p46 = scmp.lt.s32.totalorder %s45, 3
  %s47 = scalar_select %p46, %s45, 3
  %s48 = smul.addr %s47, 4
  %s49 = scalar_lea.vmem %s2, %s48
  %s50 = sadd.s32 0, 0
  %s51 = smul.u32 %s50, 128
  %s52 = sadd.s32 %s51, 0
  %s53 = sld [smem:[#allocation4 + %s52]]
  %s54 = smul.u32 4, %s53
  %p56 = scmp.eq.s32.totalorder 0, 0
  // Predicated region
  $region14: #{gcn_forward.5} parent=0 // pred_check
    %p57 = pneg %p56
  $region15: #{gcn_forward.5} parent=0 // pred_check_branch
    %59 = sbr.rel (%p57) target = $region17
  $region16: #{gcn_forward.5} parent=0 // pred_region
    %60 = vst [vmem:[#allocation2] sm:$0xff] 0.0
    %61 = vst [vmem:[#allocation2 + $0x8] sm:$0xff] 0.0
    %62 = vst [vmem:[#allocation2 + $0x10] sm:$0xff] 0.0
    %63 = vst [vmem:[#allocation2 + $0x18] sm:$0xff] 0.0
    %64 = vst [vmem:[#allocation2 + $0x20] sm:$0xff] 0.0
    %65 = vst [vmem:[#allocation2 + $0x28] sm:$0xff] 0.0
    %66 = vst [vmem:[#allocation2 + $0x30] sm:$0xff] 0.0
    %67 = vst [vmem:[#allocation2 + $0x38] sm:$0xff] 0.0
    %68 = vst [vmem:[#allocation2 + $0x40] sm:$0xff] 0.0
    %69 = vst [vmem:[#allocation2 + $0x48] sm:$0xff] 0.0
    %70 = vst [vmem:[#allocation2 + $0x50] sm:$0xff] 0.0
    %71 = vst [vmem:[#allocation2 + $0x58] sm:$0xff] 0.0
    %72 = vst [vmem:[#allocation2 + $0x60] sm:$0xff] 0.0
    %73 = vst [vmem:[#allocation2 + $0x68] sm:$0xff] 0.0
    %74 = vst [vmem:[#allocation2 + $0x70] sm:$0xff] 0.0
    %75 = vst [vmem:[#allocation2 + $0x78] sm:$0xff] 0.0
    %76 = vst [vmem:[#allocation2 + $0x80] sm:$0xff] 0.0
    %77 = vst [vmem:[#allocation2 + $0x88] sm:$0xff] 0.0
    %78 = vst [vmem:[#allocation2 + $0x90] sm:$0xff] 0.0
    %79 = vst [vmem:[#allocation2 + $0x98] sm:$0xff] 0.0
    %80 = vst [vmem:[#allocation2 + $0xa0] sm:$0xff] 0.0
    %81 = vst [vmem:[#allocation2 + $0xa8] sm:$0xff] 0.0
    %82 = vst [vmem:[#allocation2 + $0xb0] sm:$0xff] 0.0
    %83 = vst [vmem:[#allocation2 + $0xb8] sm:$0xff] 0.0
    %84 = vst [vmem:[#allocation2 + $0xc0] sm:$0xff] 0.0
    %85 = vst [vmem:[#allocation2 + $0xc8] sm:$0xff] 0.0
    %86 = vst [vmem:[#allocation2 + $0xd0] sm:$0xff] 0.0
    %87 = vst [vmem:[#allocation2 + $0xd8] sm:$0xff] 0.0
    %88 = vst [vmem:[#allocation2 + $0xe0] sm:$0xff] 0.0
    %89 = vst [vmem:[#allocation2 + $0xe8] sm:$0xff] 0.0
    %90 = vst [vmem:[#allocation2 + $0xf0] sm:$0xff] 0.0
    %91 = vst [vmem:[#allocation2 + $0xf8] sm:$0xff] 0.0
    %92 = vst [vmem:[#allocation2 + $0x100] sm:$0xff] 0.0
    %93 = vst [vmem:[#allocation2 + $0x108] sm:$0xff] 0.0
    %94 = vst [vmem:[#allocation2 + $0x110] sm:$0xff] 0.0
    %95 = vst [vmem:[#allocation2 + $0x118] sm:$0xff] 0.0
    %96 = vst [vmem:[#allocation2 + $0x120] sm:$0xff] 0.0
    %97 = vst [vmem:[#allocation2 + $0x128] sm:$0xff] 0.0
    %98 = vst [vmem:[#allocation2 + $0x130] sm:$0xff] 0.0
    %99 = vst [vmem:[#allocation2 + $0x138] sm:$0xff] 0.0
    %100 = vst [vmem:[#allocation2 + $0x140] sm:$0xff] 0.0
    %101 = vst [vmem:[#allocation2 + $0x148] sm:$0xff] 0.0
    %102 = vst [vmem:[#allocation2 + $0x150] sm:$0xff] 0.0
    %103 = vst [vmem:[#allocation2 + $0x158] sm:$0xff] 0.0
    %104 = vst [vmem:[#allocation2 + $0x160] sm:$0xff] 0.0
    %105 = vst [vmem:[#allocation2 + $0x168] sm:$0xff] 0.0
    %106 = vst [vmem:[#allocation2 + $0x170] sm:$0xff] 0.0
    %107 = vst [vmem:[#allocation2 + $0x178] sm:$0xff] 0.0
    %108 = vst [vmem:[#allocation2 + $0x180] sm:$0xff] 0.0
    %109 = vst [vmem:[#allocation2 + $0x188] sm:$0xff] 0.0
    %110 = vst [vmem:[#allocation2 + $0x190] sm:$0xff] 0.0
    %111 = vst [vmem:[#allocation2 + $0x198] sm:$0xff] 0.0
    %112 = vst [vmem:[#allocation2 + $0x1a0] sm:$0xff] 0.0
    %113 = vst [vmem:[#allocation2 + $0x1a8] sm:$0xff] 0.0
    %114 = vst [vmem:[#allocation2 + $0x1b0] sm:$0xff] 0.0
    %115 = vst [vmem:[#allocation2 + $0x1b8] sm:$0xff] 0.0
    %116 = vst [vmem:[#allocation2 + $0x1c0] sm:$0xff] 0.0
    %117 = vst [vmem:[#allocation2 + $0x1c8] sm:$0xff] 0.0
    %118 = vst [vmem:[#allocation2 + $0x1d0] sm:$0xff] 0.0
    %119 = vst [vmem:[#allocation2 + $0x1d8] sm:$0xff] 0.0
    %120 = vst [vmem:[#allocation2 + $0x1e0] sm:$0xff] 0.0
    %121 = vst [vmem:[#allocation2 + $0x1e8] sm:$0xff] 0.0
    %122 = vst [vmem:[#allocation2 + $0x1f0] sm:$0xff] 0.0
    %123 = vst [vmem:[#allocation2 + $0x1f8] sm:$0xff] 0.0
  $region17: #{gcn_forward.5} parent=0 // pred_fallthru
    _
  %s124 = sld [smem:[#allocation5]]
  %p125 = scmp.lt.s32.totalorder 0, %s124
  // Predicated region
  $region18: #{gcn_forward.5} parent=0 // pred_check
    %p126 = pneg %p125
  $region19: #{gcn_forward.5} parent=0 // pred_check_branch
    %128 = sbr.rel (%p126) target = $region21
  $region20: #{gcn_forward.5} parent=0 // pred_region
    %s129 = sadd.s32 0, 0
    %s130 = smul.u32 %s129, 128
    %s131 = sadd.s32 %s130, 0
    %s132 = sld [smem:[#allocation4 + %s131]]
    %s133 = smul.u32 %s132, 512
    %s134 = sshra.s32 %s133, 3
    %s135 = sand.u32 %s133, 7
    %s136 = smul.addr %s134, 4
    %s137 = scalar_lea.vmem %s3, %s136
    %v138 = vld [vmem:[%s137] sm:$0xf]
    %v139 = vld [vmem:[%s137 + $0x4] sm:$0xf]
    %v140 = vld [vmem:[%s137 + $0x8] sm:$0xf]
    %v141 = vld [vmem:[%s137 + $0xc] sm:$0xf]
    %v142 = vld [vmem:[%s137 + $0x10] sm:$0xf]
    %v143 = vld [vmem:[%s137 + $0x14] sm:$0xf]
    %v144 = vld [vmem:[%s137 + $0x18] sm:$0xf]
    %v145 = vld [vmem:[%s137 + $0x1c] sm:$0xf]
    %v146 = vld [vmem:[%s137 + $0x20] sm:$0xf]
    %v147 = vld [vmem:[%s137 + $0x24] sm:$0xf]
    %v148 = vld [vmem:[%s137 + $0x28] sm:$0xf]
    %v149 = vld [vmem:[%s137 + $0x2c] sm:$0xf]
    %v150 = vld [vmem:[%s137 + $0x30] sm:$0xf]
    %v151 = vld [vmem:[%s137 + $0x34] sm:$0xf]
    %v152 = vld [vmem:[%s137 + $0x38] sm:$0xf]
    %v153 = vld [vmem:[%s137 + $0x3c] sm:$0xf]
    %v154 = vld [vmem:[%s137 + $0x40] sm:$0xf]
    %v155 = vld [vmem:[%s137 + $0x44] sm:$0xf]
    %v156 = vld [vmem:[%s137 + $0x48] sm:$0xf]
    %v157 = vld [vmem:[%s137 + $0x4c] sm:$0xf]
    %v158 = vld [vmem:[%s137 + $0x50] sm:$0xf]
    %v159 = vld [vmem:[%s137 + $0x54] sm:$0xf]
    %v160 = vld [vmem:[%s137 + $0x58] sm:$0xf]
    %v161 = vld [vmem:[%s137 + $0x5c] sm:$0xf]
    %v162 = vld [vmem:[%s137 + $0x60] sm:$0xf]
    %v163 = vld [vmem:[%s137 + $0x64] sm:$0xf]
    %v164 = vld [vmem:[%s137 + $0x68] sm:$0xf]
    %v165 = vld [vmem:[%s137 + $0x6c] sm:$0xf]
    %v166 = vld [vmem:[%s137 + $0x70] sm:$0xf]
    %v167 = vld [vmem:[%s137 + $0x74] sm:$0xf]
    %v168 = vld [vmem:[%s137 + $0x78] sm:$0xf]
    %v169 = vld [vmem:[%s137 + $0x7c] sm:$0xf]
    %v170 = vld [vmem:[%s137 + $0x80] sm:$0xf]
    %v171 = vld [vmem:[%s137 + $0x84] sm:$0xf]
    %v172 = vld [vmem:[%s137 + $0x88] sm:$0xf]
    %v173 = vld [vmem:[%s137 + $0x8c] sm:$0xf]
    %v174 = vld [vmem:[%s137 + $0x90] sm:$0xf]
    %v175 = vld [vmem:[%s137 + $0x94] sm:$0xf]
    %v176 = vld [vmem:[%s137 + $0x98] sm:$0xf]
    %v177 = vld [vmem:[%s137 + $0x9c] sm:$0xf]
    %v178 = vld [vmem:[%s137 + $0xa0] sm:$0xf]
    %v179 = vld [vmem:[%s137 + $0xa4] sm:$0xf]
    %v180 = vld [vmem:[%s137 + $0xa8] sm:$0xf]
    %v181 = vld [vmem:[%s137 + $0xac] sm:$0xf]
    %v182 = vld [vmem:[%s137 + $0xb0] sm:$0xf]
    %v183 = vld [vmem:[%s137 + $0xb4] sm:$0xf]
    %v184 = vld [vmem:[%s137 + $0xb8] sm:$0xf]
    %v185 = vld [vmem:[%s137 + $0xbc] sm:$0xf]
    %v186 = vld [vmem:[%s137 + $0xc0] sm:$0xf]
    %v187 = vld [vmem:[%s137 + $0xc4] sm:$0xf]
    %v188 = vld [vmem:[%s137 + $0xc8] sm:$0xf]
    %v189 = vld [vmem:[%s137 + $0xcc] sm:$0xf]
    %v190 = vld [vmem:[%s137 + $0xd0] sm:$0xf]
    %v191 = vld [vmem:[%s137 + $0xd4] sm:$0xf]
    %v192 = vld [vmem:[%s137 + $0xd8] sm:$0xf]
    %v193 = vld [vmem:[%s137 + $0xdc] sm:$0xf]
    %v194 = vld [vmem:[%s137 + $0xe0] sm:$0xf]
    %v195 = vld [vmem:[%s137 + $0xe4] sm:$0xf]
    %v196 = vld [vmem:[%s137 + $0xe8] sm:$0xf]
    %v197 = vld [vmem:[%s137 + $0xec] sm:$0xf]
    %v198 = vld [vmem:[%s137 + $0xf0] sm:$0xf]
    %v199 = vld [vmem:[%s137 + $0xf4] sm:$0xf]
    %v200 = vld [vmem:[%s137 + $0xf8] sm:$0xf]
    %v201 = vld [vmem:[%s137 + $0xfc] sm:$0xf]
    %v202 = vld [vmem:[%s49] sm:$0xff]
    %v203 = vld [vmem:[%s49 + $0x8] sm:$0xff]
    %v204 = vld [vmem:[%s49 + $0x10] sm:$0xff]
    %v205 = vld [vmem:[%s49 + $0x18] sm:$0xff]
    %v206 = vld [vmem:[%s49 + $0x20] sm:$0xff]
    %v207 = vld [vmem:[%s49 + $0x28] sm:$0xff]
    %v208 = vld [vmem:[%s49 + $0x30] sm:$0xff]
    %v209 = vld [vmem:[%s49 + $0x38] sm:$0xff]
    %v210 = vld [vmem:[%s49 + $0x40] sm:$0xff]
    %v211 = vld [vmem:[%s49 + $0x48] sm:$0xff]
    %v212 = vld [vmem:[%s49 + $0x50] sm:$0xff]
    %v213 = vld [vmem:[%s49 + $0x58] sm:$0xff]
    %v214 = vld [vmem:[%s49 + $0x60] sm:$0xff]
    %v215 = vld [vmem:[%s49 + $0x68] sm:$0xff]
    %v216 = vld [vmem:[%s49 + $0x70] sm:$0xff]
    %v217 = vld [vmem:[%s49 + $0x78] sm:$0xff]
    %v218 = vld [vmem:[%s49 + $0x80] sm:$0xff]
    %v219 = vld [vmem:[%s49 + $0x88] sm:$0xff]
    %v220 = vld [vmem:[%s49 + $0x90] sm:$0xff]
    %v221 = vld [vmem:[%s49 + $0x98] sm:$0xff]
    %v222 = vld [vmem:[%s49 + $0xa0] sm:$0xff]
    %v223 = vld [vmem:[%s49 + $0xa8] sm:$0xff]
    %v224 = vld [vmem:[%s49 + $0xb0] sm:$0xff]
    %v225 = vld [vmem:[%s49 + $0xb8] sm:$0xff]
    %v226 = vld [vmem:[%s49 + $0xc0] sm:$0xff]
    %v227 = vld [vmem:[%s49 + $0xc8] sm:$0xff]
    %v228 = vld [vmem:[%s49 + $0xd0] sm:$0xff]
    %v229 = vld [vmem:[%s49 + $0xd8] sm:$0xff]
    %v230 = vld [vmem:[%s49 + $0xe0] sm:$0xff]
    %v231 = vld [vmem:[%s49 + $0xe8] sm:$0xff]
    %v232 = vld [vmem:[%s49 + $0xf0] sm:$0xff]
    %v233 = vld [vmem:[%s49 + $0xf8] sm:$0xff]
    %v234 = vld [vmem:[%s49 + $0x100] sm:$0xff]
    %v235 = vld [vmem:[%s49 + $0x108] sm:$0xff]
    %v236 = vld [vmem:[%s49 + $0x110] sm:$0xff]
    %v237 = vld [vmem:[%s49 + $0x118] sm:$0xff]
    %v238 = vld [vmem:[%s49 + $0x120] sm:$0xff]
    %v239 = vld [vmem:[%s49 + $0x128] sm:$0xff]
    %v240 = vld [vmem:[%s49 + $0x130] sm:$0xff]
    %v241 = vld [vmem:[%s49 + $0x138] sm:$0xff]
    %v242 = vld [vmem:[%s49 + $0x140] sm:$0xff]
    %v243 = vld [vmem:[%s49 + $0x148] sm:$0xff]
    %v244 = vld [vmem:[%s49 + $0x150] sm:$0xff]
    %v245 = vld [vmem:[%s49 + $0x158] sm:$0xff]
    %v246 = vld [vmem:[%s49 + $0x160] sm:$0xff]
    %v247 = vld [vmem:[%s49 + $0x168] sm:$0xff]
    %v248 = vld [vmem:[%s49 + $0x170] sm:$0xff]
    %v249 = vld [vmem:[%s49 + $0x178] sm:$0xff]
    %v250 = vld [vmem:[%s49 + $0x180] sm:$0xff]
    %v251 = vld [vmem:[%s49 + $0x188] sm:$0xff]
    %v252 = vld [vmem:[%s49 + $0x190] sm:$0xff]
    %v253 = vld [vmem:[%s49 + $0x198] sm:$0xff]
    %v254 = vld [vmem:[%s49 + $0x1a0] sm:$0xff]
    %v255 = vld [vmem:[%s49 + $0x1a8] sm:$0xff]
    %v256 = vld [vmem:[%s49 + $0x1b0] sm:$0xff]
    %v257 = vld [vmem:[%s49 + $0x1b8] sm:$0xff]
    %v258 = vld [vmem:[%s49 + $0x1c0] sm:$0xff]
    %v259 = vld [vmem:[%s49 + $0x1c8] sm:$0xff]
    %v260 = vld [vmem:[%s49 + $0x1d0] sm:$0xff]
    %v261 = vld [vmem:[%s49 + $0x1d8] sm:$0xff]
    %v262 = vld [vmem:[%s49 + $0x1e0] sm:$0xff]
    %v263 = vld [vmem:[%s49 + $0x1e8] sm:$0xff]
    %v264 = vld [vmem:[%s49 + $0x1f0] sm:$0xff]
    %v265 = vld [vmem:[%s49 + $0x1f8] sm:$0xff]
    %v266 = vld [vmem:[%s49 + $0x200] sm:$0xff]
    %v267 = vld [vmem:[%s49 + $0x208] sm:$0xff]
    %v268 = vld [vmem:[%s49 + $0x210] sm:$0xff]
    %v269 = vld [vmem:[%s49 + $0x218] sm:$0xff]
    %v270 = vld [vmem:[%s49 + $0x220] sm:$0xff]
    %v271 = vld [vmem:[%s49 + $0x228] sm:$0xff]
    %v272 = vld [vmem:[%s49 + $0x230] sm:$0xff]
    %v273 = vld [vmem:[%s49 + $0x238] sm:$0xff]
    %v274 = vld [vmem:[%s49 + $0x240] sm:$0xff]
    %v275 = vld [vmem:[%s49 + $0x248] sm:$0xff]
    %v276 = vld [vmem:[%s49 + $0x250] sm:$0xff]
    %v277 = vld [vmem:[%s49 + $0x258] sm:$0xff]
    %v278 = vld [vmem:[%s49 + $0x260] sm:$0xff]
    %v279 = vld [vmem:[%s49 + $0x268] sm:$0xff]
    %v280 = vld [vmem:[%s49 + $0x270] sm:$0xff]
    %v281 = vld [vmem:[%s49 + $0x278] sm:$0xff]
    %v282 = vld [vmem:[%s49 + $0x280] sm:$0xff]
    %v283 = vld [vmem:[%s49 + $0x288] sm:$0xff]
    %v284 = vld [vmem:[%s49 + $0x290] sm:$0xff]
    %v285 = vld [vmem:[%s49 + $0x298] sm:$0xff]
    %v286 = vld [vmem:[%s49 + $0x2a0] sm:$0xff]
    %v287 = vld [vmem:[%s49 + $0x2a8] sm:$0xff]
    %v288 = vld [vmem:[%s49 + $0x2b0] sm:$0xff]
    %v289 = vld [vmem:[%s49 + $0x2b8] sm:$0xff]
    %v290 = vld [vmem:[%s49 + $0x2c0] sm:$0xff]
    %v291 = vld [vmem:[%s49 + $0x2c8] sm:$0xff]
    %v292 = vld [vmem:[%s49 + $0x2d0] sm:$0xff]
    %v293 = vld [vmem:[%s49 + $0x2d8] sm:$0xff]
    %v294 = vld [vmem:[%s49 + $0x2e0] sm:$0xff]
    %v295 = vld [vmem:[%s49 + $0x2e8] sm:$0xff]
    %v296 = vld [vmem:[%s49 + $0x2f0] sm:$0xff]
    %v297 = vld [vmem:[%s49 + $0x2f8] sm:$0xff]
    %v298 = vld [vmem:[%s49 + $0x300] sm:$0xff]
    %v299 = vld [vmem:[%s49 + $0x308] sm:$0xff]
    %v300 = vld [vmem:[%s49 + $0x310] sm:$0xff]
    %v301 = vld [vmem:[%s49 + $0x318] sm:$0xff]
    %v302 = vld [vmem:[%s49 + $0x320] sm:$0xff]
    %v303 = vld [vmem:[%s49 + $0x328] sm:$0xff]
    %v304 = vld [vmem:[%s49 + $0x330] sm:$0xff]
    %v305 = vld [vmem:[%s49 + $0x338] sm:$0xff]
    %v306 = vld [vmem:[%s49 + $0x340] sm:$0xff]
    %v307 = vld [vmem:[%s49 + $0x348] sm:$0xff]
    %v308 = vld [vmem:[%s49 + $0x350] sm:$0xff]
    %v309 = vld [vmem:[%s49 + $0x358] sm:$0xff]
    %v310 = vld [vmem:[%s49 + $0x360] sm:$0xff]
    %v311 = vld [vmem:[%s49 + $0x368] sm:$0xff]
    %v312 = vld [vmem:[%s49 + $0x370] sm:$0xff]
    %v313 = vld [vmem:[%s49 + $0x378] sm:$0xff]
    %v314 = vld [vmem:[%s49 + $0x380] sm:$0xff]
    %v315 = vld [vmem:[%s49 + $0x388] sm:$0xff]
    %v316 = vld [vmem:[%s49 + $0x390] sm:$0xff]
    %v317 = vld [vmem:[%s49 + $0x398] sm:$0xff]
    %v318 = vld [vmem:[%s49 + $0x3a0] sm:$0xff]
    %v319 = vld [vmem:[%s49 + $0x3a8] sm:$0xff]
    %v320 = vld [vmem:[%s49 + $0x3b0] sm:$0xff]
    %v321 = vld [vmem:[%s49 + $0x3b8] sm:$0xff]
    %v322 = vld [vmem:[%s49 + $0x3c0] sm:$0xff]
    %v323 = vld [vmem:[%s49 + $0x3c8] sm:$0xff]
    %v324 = vld [vmem:[%s49 + $0x3d0] sm:$0xff]
    %v325 = vld [vmem:[%s49 + $0x3d8] sm:$0xff]
    %v326 = vld [vmem:[%s49 + $0x3e0] sm:$0xff]
    %v327 = vld [vmem:[%s49 + $0x3e8] sm:$0xff]
    %v328 = vld [vmem:[%s49 + $0x3f0] sm:$0xff]
    %v329 = vld [vmem:[%s49 + $0x3f8] sm:$0xff]
    %v330 = vld [vmem:[#allocation2] sm:$0xff]
    %v331 = vld [vmem:[#allocation2 + $0x8] sm:$0xff]
    %v332 = vld [vmem:[#allocation2 + $0x10] sm:$0xff]
    %v333 = vld [vmem:[#allocation2 + $0x18] sm:$0xff]
    %v334 = vld [vmem:[#allocation2 + $0x20] sm:$0xff]
    %v335 = vld [vmem:[#allocation2 + $0x28] sm:$0xff]
    %v336 = vld [vmem:[#allocation2 + $0x30] sm:$0xff]
    %v337 = vld [vmem:[#allocation2 + $0x38] sm:$0xff]
    %v338 = vld [vmem:[#allocation2 + $0x40] sm:$0xff]
    %v339 = vld [vmem:[#allocation2 + $0x48] sm:$0xff]
    %v340 = vld [vmem:[#allocation2 + $0x50] sm:$0xff]
    %v341 = vld [vmem:[#allocation2 + $0x58] sm:$0xff]
    %v342 = vld [vmem:[#allocation2 + $0x60] sm:$0xff]
    %v343 = vld [vmem:[#allocation2 + $0x68] sm:$0xff]
    %v344 = vld [vmem:[#allocation2 + $0x70] sm:$0xff]
    %v345 = vld [vmem:[#allocation2 + $0x78] sm:$0xff]
    %v346 = vld [vmem:[#allocation2 + $0x80] sm:$0xff]
    %v347 = vld [vmem:[#allocation2 + $0x88] sm:$0xff]
    %v348 = vld [vmem:[#allocation2 + $0x90] sm:$0xff]
    %v349 = vld [vmem:[#allocation2 + $0x98] sm:$0xff]
    %v350 = vld [vmem:[#allocation2 + $0xa0] sm:$0xff]
    %v351 = vld [vmem:[#allocation2 + $0xa8] sm:$0xff]
    %v352 = vld [vmem:[#allocation2 + $0xb0] sm:$0xff]
    %v353 = vld [vmem:[#allocation2 + $0xb8] sm:$0xff]
    %v354 = vld [vmem:[#allocation2 + $0xc0] sm:$0xff]
    %v355 = vld [vmem:[#allocation2 + $0xc8] sm:$0xff]
    %v356 = vld [vmem:[#allocation2 + $0xd0] sm:$0xff]
    %v357 = vld [vmem:[#allocation2 + $0xd8] sm:$0xff]
    %v358 = vld [vmem:[#allocation2 + $0xe0] sm:$0xff]
    %v359 = vld [vmem:[#allocation2 + $0xe8] sm:$0xff]
    %v360 = vld [vmem:[#allocation2 + $0xf0] sm:$0xff]
    %v361 = vld [vmem:[#allocation2 + $0xf8] sm:$0xff]
    %v362 = vld [vmem:[#allocation2 + $0x100] sm:$0xff]
    %v363 = vld [vmem:[#allocation2 + $0x108] sm:$0xff]
    %v364 = vld [vmem:[#allocation2 + $0x110] sm:$0xff]
    %v365 = vld [vmem:[#allocation2 + $0x118] sm:$0xff]
    %v366 = vld [vmem:[#allocation2 + $0x120] sm:$0xff]
    %v367 = vld [vmem:[#allocation2 + $0x128] sm:$0xff]
    %v368 = vld [vmem:[#allocation2 + $0x130] sm:$0xff]
    %v369 = vld [vmem:[#allocation2 + $0x138] sm:$0xff]
    %v370 = vld [vmem:[#allocation2 + $0x140] sm:$0xff]
    %v371 = vld [vmem:[#allocation2 + $0x148] sm:$0xff]
    %v372 = vld [vmem:[#allocation2 + $0x150] sm:$0xff]
    %v373 = vld [vmem:[#allocation2 + $0x158] sm:$0xff]
    %v374 = vld [vmem:[#allocation2 + $0x160] sm:$0xff]
    %v375 = vld [vmem:[#allocation2 + $0x168] sm:$0xff]
    %v376 = vld [vmem:[#allocation2 + $0x170] sm:$0xff]
    %v377 = vld [vmem:[#allocation2 + $0x178] sm:$0xff]
    %v378 = vld [vmem:[#allocation2 + $0x180] sm:$0xff]
    %v379 = vld [vmem:[#allocation2 + $0x188] sm:$0xff]
    %v380 = vld [vmem:[#allocation2 + $0x190] sm:$0xff]
    %v381 = vld [vmem:[#allocation2 + $0x198] sm:$0xff]
    %v382 = vld [vmem:[#allocation2 + $0x1a0] sm:$0xff]
    %v383 = vld [vmem:[#allocation2 + $0x1a8] sm:$0xff]
    %v384 = vld [vmem:[#allocation2 + $0x1b0] sm:$0xff]
    %v385 = vld [vmem:[#allocation2 + $0x1b8] sm:$0xff]
    %v386 = vld [vmem:[#allocation2 + $0x1c0] sm:$0xff]
    %v387 = vld [vmem:[#allocation2 + $0x1c8] sm:$0xff]
    %v388 = vld [vmem:[#allocation2 + $0x1d0] sm:$0xff]
    %v389 = vld [vmem:[#allocation2 + $0x1d8] sm:$0xff]
    %v390 = vld [vmem:[#allocation2 + $0x1e0] sm:$0xff]
    %v391 = vld [vmem:[#allocation2 + $0x1e8] sm:$0xff]
    %v392 = vld [vmem:[#allocation2 + $0x1f0] sm:$0xff]
    %v393 = vld [vmem:[#allocation2 + $0x1f8] sm:$0xff]
    %v522 = vunpack.c.l.b16 %v202
    %v523 = vunpack.c.h.b16 %v202
    %v524 = vunpack.c.l.b16 %v203
    %v525 = vunpack.c.h.b16 %v203
    %v526 = vunpack.c.l.b16 %v204
    %v527 = vunpack.c.h.b16 %v204
    %v528 = vunpack.c.l.b16 %v205
    %v529 = vunpack.c.h.b16 %v205
    %v530 = vunpack.c.l.b16 %v206
    %v531 = vunpack.c.h.b16 %v206
    %v532 = vunpack.c.l.b16 %v207
    %v533 = vunpack.c.h.b16 %v207
    %v534 = vunpack.c.l.b16 %v208
    %v535 = vunpack.c.h.b16 %v208
    %v536 = vunpack.c.l.b16 %v209
    %v537 = vunpack.c.h.b16 %v209
    %v538 = vunpack.c.l.b16 %v210
    %v539 = vunpack.c.h.b16 %v210
    %v540 = vunpack.c.l.b16 %v211
    %v541 = vunpack.c.h.b16 %v211
    %v542 = vunpack.c.l.b16 %v212
    %v543 = vunpack.c.h.b16 %v212
    %v544 = vunpack.c.l.b16 %v213
    %v545 = vunpack.c.h.b16 %v213
    %v546 = vunpack.c.l.b16 %v214
    %v547 = vunpack.c.h.b16 %v214
    %v548 = vunpack.c.l.b16 %v215
    %v549 = vunpack.c.h.b16 %v215
    %v550 = vunpack.c.l.b16 %v216
    %v551 = vunpack.c.h.b16 %v216
    %v552 = vunpack.c.l.b16 %v217
    %v553 = vunpack.c.h.b16 %v217
    %v554 = vunpack.c.l.b16 %v218
    %v555 = vunpack.c.h.b16 %v218
    %v556 = vunpack.c.l.b16 %v219
    %v557 = vunpack.c.h.b16 %v219
    %v558 = vunpack.c.l.b16 %v220
    %v559 = vunpack.c.h.b16 %v220
    %v560 = vunpack.c.l.b16 %v221
    %v561 = vunpack.c.h.b16 %v221
    %v562 = vunpack.c.l.b16 %v222
    %v563 = vunpack.c.h.b16 %v222
    %v564 = vunpack.c.l.b16 %v223
    %v565 = vunpack.c.h.b16 %v223
    %v566 = vunpack.c.l.b16 %v224
    %v567 = vunpack.c.h.b16 %v224
    %v568 = vunpack.c.l.b16 %v225
    %v569 = vunpack.c.h.b16 %v225
    %v570 = vunpack.c.l.b16 %v226
    %v571 = vunpack.c.h.b16 %v226
    %v572 = vunpack.c.l.b16 %v227
    %v573 = vunpack.c.h.b16 %v227
    %v574 = vunpack.c.l.b16 %v228
    %v575 = vunpack.c.h.b16 %v228
    %v576 = vunpack.c.l.b16 %v229
    %v577 = vunpack.c.h.b16 %v229
    %v578 = vunpack.c.l.b16 %v230
    %v579 = vunpack.c.h.b16 %v230
    %v580 = vunpack.c.l.b16 %v231
    %v581 = vunpack.c.h.b16 %v231
    %v582 = vunpack.c.l.b16 %v232
    %v583 = vunpack.c.h.b16 %v232
    %v584 = vunpack.c.l.b16 %v233
    %v585 = vunpack.c.h.b16 %v233
    %v586 = vunpack.c.l.b16 %v234
    %v587 = vunpack.c.h.b16 %v234
    %v588 = vunpack.c.l.b16 %v235
    %v589 = vunpack.c.h.b16 %v235
    %v590 = vunpack.c.l.b16 %v236
    %v591 = vunpack.c.h.b16 %v236
    %v592 = vunpack.c.l.b16 %v237
    %v593 = vunpack.c.h.b16 %v237
    %v594 = vunpack.c.l.b16 %v238
    %v595 = vunpack.c.h.b16 %v238
    %v596 = vunpack.c.l.b16 %v239
    %v597 = vunpack.c.h.b16 %v239
    %v598 = vunpack.c.l.b16 %v240
    %v599 = vunpack.c.h.b16 %v240
    %v600 = vunpack.c.l.b16 %v241
    %v601 = vunpack.c.h.b16 %v241
    %v602 = vunpack.c.l.b16 %v242
    %v603 = vunpack.c.h.b16 %v242
    %v604 = vunpack.c.l.b16 %v243
    %v605 = vunpack.c.h.b16 %v243
    %v606 = vunpack.c.l.b16 %v244
    %v607 = vunpack.c.h.b16 %v244
    %v608 = vunpack.c.l.b16 %v245
    %v609 = vunpack.c.h.b16 %v245
    %v610 = vunpack.c.l.b16 %v246
    %v611 = vunpack.c.h.b16 %v246
    %v612 = vunpack.c.l.b16 %v247
    %v613 = vunpack.c.h.b16 %v247
    %v614 = vunpack.c.l.b16 %v248
    %v615 = vunpack.c.h.b16 %v248
    %v616 = vunpack.c.l.b16 %v249
    %v617 = vunpack.c.h.b16 %v249
    %v618 = vunpack.c.l.b16 %v250
    %v619 = vunpack.c.h.b16 %v250
    %v620 = vunpack.c.l.b16 %v251
    %v621 = vunpack.c.h.b16 %v251
    %v622 = vunpack.c.l.b16 %v252
    %v623 = vunpack.c.h.b16 %v252
    %v624 = vunpack.c.l.b16 %v253
    %v625 = vunpack.c.h.b16 %v253
    %v626 = vunpack.c.l.b16 %v254
    %v627 = vunpack.c.h.b16 %v254
    %v628 = vunpack.c.l.b16 %v255
    %v629 = vunpack.c.h.b16 %v255
    %v630 = vunpack.c.l.b16 %v256
    %v631 = vunpack.c.h.b16 %v256
    %v632 = vunpack.c.l.b16 %v257
    %v633 = vunpack.c.h.b16 %v257
    %v634 = vunpack.c.l.b16 %v258
    %v635 = vunpack.c.h.b16 %v258
    %v636 = vunpack.c.l.b16 %v259
    %v637 = vunpack.c.h.b16 %v259
    %v638 = vunpack.c.l.b16 %v260
    %v639 = vunpack.c.h.b16 %v260
    %v640 = vunpack.c.l.b16 %v261
    %v641 = vunpack.c.h.b16 %v261
    %v642 = vunpack.c.l.b16 %v262
    %v643 = vunpack.c.h.b16 %v262
    %v644 = vunpack.c.l.b16 %v263
    %v645 = vunpack.c.h.b16 %v263
    %v646 = vunpack.c.l.b16 %v264
    %v647 = vunpack.c.h.b16 %v264
    %v648 = vunpack.c.l.b16 %v265
    %v649 = vunpack.c.h.b16 %v265
    %v650 = vunpack.c.l.b16 %v266
    %v651 = vunpack.c.h.b16 %v266
    %v652 = vunpack.c.l.b16 %v267
    %v653 = vunpack.c.h.b16 %v267
    %v654 = vunpack.c.l.b16 %v268
    %v655 = vunpack.c.h.b16 %v268
    %v656 = vunpack.c.l.b16 %v269
    %v657 = vunpack.c.h.b16 %v269
    %v658 = vunpack.c.l.b16 %v270
    %v659 = vunpack.c.h.b16 %v270
    %v660 = vunpack.c.l.b16 %v271
    %v661 = vunpack.c.h.b16 %v271
    %v662 = vunpack.c.l.b16 %v272
    %v663 = vunpack.c.h.b16 %v272
    %v664 = vunpack.c.l.b16 %v273
    %v665 = vunpack.c.h.b16 %v273
    %v666 = vunpack.c.l.b16 %v274
    %v667 = vunpack.c.h.b16 %v274
    %v668 = vunpack.c.l.b16 %v275
    %v669 = vunpack.c.h.b16 %v275
    %v670 = vunpack.c.l.b16 %v276
    %v671 = vunpack.c.h.b16 %v276
    %v672 = vunpack.c.l.b16 %v277
    %v673 = vunpack.c.h.b16 %v277
    %v674 = vunpack.c.l.b16 %v278
    %v675 = vunpack.c.h.b16 %v278
    %v676 = vunpack.c.l.b16 %v279
    %v677 = vunpack.c.h.b16 %v279
    %v678 = vunpack.c.l.b16 %v280
    %v679 = vunpack.c.h.b16 %v280
    %v680 = vunpack.c.l.b16 %v281
    %v681 = vunpack.c.h.b16 %v281
    %v682 = vunpack.c.l.b16 %v282
    %v683 = vunpack.c.h.b16 %v282
    %v684 = vunpack.c.l.b16 %v283
    %v685 = vunpack.c.h.b16 %v283
    %v686 = vunpack.c.l.b16 %v284
    %v687 = vunpack.c.h.b16 %v284
    %v688 = vunpack.c.l.b16 %v285
    %v689 = vunpack.c.h.b16 %v285
    %v690 = vunpack.c.l.b16 %v286
    %v691 = vunpack.c.h.b16 %v286
    %v692 = vunpack.c.l.b16 %v287
    %v693 = vunpack.c.h.b16 %v287
    %v694 = vunpack.c.l.b16 %v288
    %v695 = vunpack.c.h.b16 %v288
    %v696 = vunpack.c.l.b16 %v289
    %v697 = vunpack.c.h.b16 %v289
    %v698 = vunpack.c.l.b16 %v290
    %v699 = vunpack.c.h.b16 %v290
    %v700 = vunpack.c.l.b16 %v291
    %v701 = vunpack.c.h.b16 %v291
    %v702 = vunpack.c.l.b16 %v292
    %v703 = vunpack.c.h.b16 %v292
    %v704 = vunpack.c.l.b16 %v293
    %v705 = vunpack.c.h.b16 %v293
    %v706 = vunpack.c.l.b16 %v294
    %v707 = vunpack.c.h.b16 %v294
    %v708 = vunpack.c.l.b16 %v295
    %v709 = vunpack.c.h.b16 %v295
    %v710 = vunpack.c.l.b16 %v296
    %v711 = vunpack.c.h.b16 %v296
    %v712 = vunpack.c.l.b16 %v297
    %v713 = vunpack.c.h.b16 %v297
    %v714 = vunpack.c.l.b16 %v298
    %v715 = vunpack.c.h.b16 %v298
    %v716 = vunpack.c.l.b16 %v299
    %v717 = vunpack.c.h.b16 %v299
    %v718 = vunpack.c.l.b16 %v300
    %v719 = vunpack.c.h.b16 %v300
    %v720 = vunpack.c.l.b16 %v301
    %v721 = vunpack.c.h.b16 %v301
    %v722 = vunpack.c.l.b16 %v302
    %v723 = vunpack.c.h.b16 %v302
    %v724 = vunpack.c.l.b16 %v303
    %v725 = vunpack.c.h.b16 %v303
    %v726 = vunpack.c.l.b16 %v304
    %v727 = vunpack.c.h.b16 %v304
    %v728 = vunpack.c.l.b16 %v305
    %v729 = vunpack.c.h.b16 %v305
    %v730 = vunpack.c.l.b16 %v306
    %v731 = vunpack.c.h.b16 %v306
    %v732 = vunpack.c.l.b16 %v307
    %v733 = vunpack.c.h.b16 %v307
    %v734 = vunpack.c.l.b16 %v308
    %v735 = vunpack.c.h.b16 %v308
    %v736 = vunpack.c.l.b16 %v309
    %v737 = vunpack.c.h.b16 %v309
    %v738 = vunpack.c.l.b16 %v310
    %v739 = vunpack.c.h.b16 %v310
    %v740 = vunpack.c.l.b16 %v311
    %v741 = vunpack.c.h.b16 %v311
    %v742 = vunpack.c.l.b16 %v312
    %v743 = vunpack.c.h.b16 %v312
    %v744 = vunpack.c.l.b16 %v313
    %v745 = vunpack.c.h.b16 %v313
    %v746 = vunpack.c.l.b16 %v314
    %v747 = vunpack.c.h.b16 %v314
    %v748 = vunpack.c.l.b16 %v315
    %v749 = vunpack.c.h.b16 %v315
    %v750 = vunpack.c.l.b16 %v316
    %v751 = vunpack.c.h.b16 %v316
    %v752 = vunpack.c.l.b16 %v317
    %v753 = vunpack.c.h.b16 %v317
    %v754 = vunpack.c.l.b16 %v318
    %v755 = vunpack.c.h.b16 %v318
    %v756 = vunpack.c.l.b16 %v319
    %v757 = vunpack.c.h.b16 %v319
    %v758 = vunpack.c.l.b16 %v320
    %v759 = vunpack.c.h.b16 %v320
    %v760 = vunpack.c.l.b16 %v321
    %v761 = vunpack.c.h.b16 %v321
    %v762 = vunpack.c.l.b16 %v322
    %v763 = vunpack.c.h.b16 %v322
    %v764 = vunpack.c.l.b16 %v323
    %v765 = vunpack.c.h.b16 %v323
    %v766 = vunpack.c.l.b16 %v324
    %v767 = vunpack.c.h.b16 %v324
    %v768 = vunpack.c.l.b16 %v325
    %v769 = vunpack.c.h.b16 %v325
    %v770 = vunpack.c.l.b16 %v326
    %v771 = vunpack.c.h.b16 %v326
    %v772 = vunpack.c.l.b16 %v327
    %v773 = vunpack.c.h.b16 %v327
    %v774 = vunpack.c.l.b16 %v328
    %v775 = vunpack.c.h.b16 %v328
    %v776 = vunpack.c.l.b16 %v329
    %v777 = vunpack.c.h.b16 %v329
    %v778 = vpack.c.b16 %v526, %v522
    %v779 = vpack.c.b16 %v527, %v523
    %v780 = vpack.c.b16 %v528, %v524
    %v781 = vpack.c.b16 %v529, %v525
    %v782 = vpack.c.b16 %v534, %v530
    %v783 = vpack.c.b16 %v535, %v531
    %v784 = vpack.c.b16 %v536, %v532
    %v785 = vpack.c.b16 %v537, %v533
    %v786 = vpack.c.b16 %v542, %v538
    %v787 = vpack.c.b16 %v543, %v539
    %v788 = vpack.c.b16 %v544, %v540
    %v789 = vpack.c.b16 %v545, %v541
    %v790 = vpack.c.b16 %v550, %v546
    %v791 = vpack.c.b16 %v551, %v547
    %v792 = vpack.c.b16 %v552, %v548
    %v793 = vpack.c.b16 %v553, %v549
    %v794 = vpack.c.b16 %v558, %v554
    %v795 = vpack.c.b16 %v559, %v555
    %v796 = vpack.c.b16 %v560, %v556
    %v797 = vpack.c.b16 %v561, %v557
    %v798 = vpack.c.b16 %v566, %v562
    %v799 = vpack.c.b16 %v567, %v563
    %v800 = vpack.c.b16 %v568, %v564
    %v801 = vpack.c.b16 %v569, %v565
    %v802 = vpack.c.b16 %v574, %v570
    %v803 = vpack.c.b16 %v575, %v571
    %v804 = vpack.c.b16 %v576, %v572
    %v805 = vpack.c.b16 %v577, %v573
    %v806 = vpack.c.b16 %v582, %v578
    %v807 = vpack.c.b16 %v583, %v579
    %v808 = vpack.c.b16 %v584, %v580
    %v809 = vpack.c.b16 %v585, %v581
    %v810 = vpack.c.b16 %v590, %v586
    %v811 = vpack.c.b16 %v591, %v587
    %v812 = vpack.c.b16 %v592, %v588
    %v813 = vpack.c.b16 %v593, %v589
    %v814 = vpack.c.b16 %v598, %v594
    %v815 = vpack.c.b16 %v599, %v595
    %v816 = vpack.c.b16 %v600, %v596
    %v817 = vpack.c.b16 %v601, %v597
    %v818 = vpack.c.b16 %v606, %v602
    %v819 = vpack.c.b16 %v607, %v603
    %v820 = vpack.c.b16 %v608, %v604
    %v821 = vpack.c.b16 %v609, %v605
    %v822 = vpack.c.b16 %v614, %v610
    %v823 = vpack.c.b16 %v615, %v611
    %v824 = vpack.c.b16 %v616, %v612
    %v825 = vpack.c.b16 %v617, %v613
    %v826 = vpack.c.b16 %v622, %v618
    %v827 = vpack.c.b16 %v623, %v619
    %v828 = vpack.c.b16 %v624, %v620
    %v829 = vpack.c.b16 %v625, %v621
    %v830 = vpack.c.b16 %v630, %v626
    %v831 = vpack.c.b16 %v631, %v627
    %v832 = vpack.c.b16 %v632, %v628
    %v833 = vpack.c.b16 %v633, %v629
    %v834 = vpack.c.b16 %v638, %v634
    %v835 = vpack.c.b16 %v639, %v635
    %v836 = vpack.c.b16 %v640, %v636
    %v837 = vpack.c.b16 %v641, %v637
    %v838 = vpack.c.b16 %v646, %v642
    %v839 = vpack.c.b16 %v647, %v643
    %v840 = vpack.c.b16 %v648, %v644
    %v841 = vpack.c.b16 %v649, %v645
    %v842 = vpack.c.b16 %v654, %v650
    %v843 = vpack.c.b16 %v655, %v651
    %v844 = vpack.c.b16 %v656, %v652
    %v845 = vpack.c.b16 %v657, %v653
    %v846 = vpack.c.b16 %v662, %v658
    %v847 = vpack.c.b16 %v663, %v659
    %v848 = vpack.c.b16 %v664, %v660
    %v849 = vpack.c.b16 %v665, %v661
    %v850 = vpack.c.b16 %v670, %v666
    %v851 = vpack.c.b16 %v671, %v667
    %v852 = vpack.c.b16 %v672, %v668
    %v853 = vpack.c.b16 %v673, %v669
    %v854 = vpack.c.b16 %v678, %v674
    %v855 = vpack.c.b16 %v679, %v675
    %v856 = vpack.c.b16 %v680, %v676
    %v857 = vpack.c.b16 %v681, %v677
    %v858 = vpack.c.b16 %v686, %v682
    %v859 = vpack.c.b16 %v687, %v683
    %v860 = vpack.c.b16 %v688, %v684
    %v861 = vpack.c.b16 %v689, %v685
    %v862 = vpack.c.b16 %v694, %v690
    %v863 = vpack.c.b16 %v695, %v691
    %v864 = vpack.c.b16 %v696, %v692
    %v865 = vpack.c.b16 %v697, %v693
    %v866 = vpack.c.b16 %v702, %v698
    %v867 = vpack.c.b16 %v703, %v699
    %v868 = vpack.c.b16 %v704, %v700
    %v869 = vpack.c.b16 %v705, %v701
    %v870 = vpack.c.b16 %v710, %v706
    %v871 = vpack.c.b16 %v711, %v707
    %v872 = vpack.c.b16 %v712, %v708
    %v873 = vpack.c.b16 %v713, %v709
    %v874 = vpack.c.b16 %v718, %v714
    %v875 = vpack.c.b16 %v719, %v715
    %v876 = vpack.c.b16 %v720, %v716
    %v877 = vpack.c.b16 %v721, %v717
    %v878 = vpack.c.b16 %v726, %v722
    %v879 = vpack.c.b16 %v727, %v723
    %v880 = vpack.c.b16 %v728, %v724
    %v881 = vpack.c.b16 %v729, %v725
    %v882 = vpack.c.b16 %v734, %v730
    %v883 = vpack.c.b16 %v735, %v731
    %v884 = vpack.c.b16 %v736, %v732
    %v885 = vpack.c.b16 %v737, %v733
    %v886 = vpack.c.b16 %v742, %v738
    %v887 = vpack.c.b16 %v743, %v739
    %v888 = vpack.c.b16 %v744, %v740
    %v889 = vpack.c.b16 %v745, %v741
    %v890 = vpack.c.b16 %v750, %v746
    %v891 = vpack.c.b16 %v751, %v747
    %v892 = vpack.c.b16 %v752, %v748
    %v893 = vpack.c.b16 %v753, %v749
    %v894 = vpack.c.b16 %v758, %v754
    %v895 = vpack.c.b16 %v759, %v755
    %v896 = vpack.c.b16 %v760, %v756
    %v897 = vpack.c.b16 %v761, %v757
    %v898 = vpack.c.b16 %v766, %v762
    %v899 = vpack.c.b16 %v767, %v763
    %v900 = vpack.c.b16 %v768, %v764
    %v901 = vpack.c.b16 %v769, %v765
    %v902 = vpack.c.b16 %v774, %v770
    %v903 = vpack.c.b16 %v775, %v771
    %v904 = vpack.c.b16 %v776, %v772
    %v905 = vpack.c.b16 %v777, %v773
    %v1098 = vunpack.c.l.b16 %v138
    %v1099 = vunpack.c.l.b16 %v139
    %v1100 = vunpack.c.l.b16 %v140
    %v1101 = vunpack.c.l.b16 %v141
    %v1102 = vunpack.c.l.b16 %v142
    %v1103 = vunpack.c.l.b16 %v143
    %v1104 = vunpack.c.l.b16 %v144
    %v1105 = vunpack.c.l.b16 %v145
    %v1106 = vunpack.c.l.b16 %v146
    %v1107 = vunpack.c.l.b16 %v147
    %v1108 = vunpack.c.l.b16 %v148
    %v1109 = vunpack.c.l.b16 %v149
    %v1110 = vunpack.c.l.b16 %v150
    %v1111 = vunpack.c.l.b16 %v151
    %v1112 = vunpack.c.l.b16 %v152
    %v1113 = vunpack.c.l.b16 %v153
    %v1114 = vunpack.c.l.b16 %v154
    %v1115 = vunpack.c.l.b16 %v155
    %v1116 = vunpack.c.l.b16 %v156
    %v1117 = vunpack.c.l.b16 %v157
    %v1118 = vunpack.c.l.b16 %v158
    %v1119 = vunpack.c.l.b16 %v159
    %v1120 = vunpack.c.l.b16 %v160
    %v1121 = vunpack.c.l.b16 %v161
    %v1122 = vunpack.c.l.b16 %v162
    %v1123 = vunpack.c.l.b16 %v163
    %v1124 = vunpack.c.l.b16 %v164
    %v1125 = vunpack.c.l.b16 %v165
    %v1126 = vunpack.c.l.b16 %v166
    %v1127 = vunpack.c.l.b16 %v167
    %v1128 = vunpack.c.l.b16 %v168
    %v1129 = vunpack.c.l.b16 %v169
    %v1130 = vunpack.c.l.b16 %v170
    %v1131 = vunpack.c.l.b16 %v171
    %v1132 = vunpack.c.l.b16 %v172
    %v1133 = vunpack.c.l.b16 %v173
    %v1134 = vunpack.c.l.b16 %v174
    %v1135 = vunpack.c.l.b16 %v175
    %v1136 = vunpack.c.l.b16 %v176
    %v1137 = vunpack.c.l.b16 %v177
    %v1138 = vunpack.c.l.b16 %v178
    %v1139 = vunpack.c.l.b16 %v179
    %v1140 = vunpack.c.l.b16 %v180
    %v1141 = vunpack.c.l.b16 %v181
    %v1142 = vunpack.c.l.b16 %v182
    %v1143 = vunpack.c.l.b16 %v183
    %v1144 = vunpack.c.l.b16 %v184
    %v1145 = vunpack.c.l.b16 %v185
    %v1146 = vunpack.c.l.b16 %v186
    %v1147 = vunpack.c.l.b16 %v187
    %v1148 = vunpack.c.l.b16 %v188
    %v1149 = vunpack.c.l.b16 %v189
    %v1150 = vunpack.c.l.b16 %v190
    %v1151 = vunpack.c.l.b16 %v191
    %v1152 = vunpack.c.l.b16 %v192
    %v1153 = vunpack.c.l.b16 %v193
    %v1154 = vunpack.c.l.b16 %v194
    %v1155 = vunpack.c.l.b16 %v195
    %v1156 = vunpack.c.l.b16 %v196
    %v1157 = vunpack.c.l.b16 %v197
    %v1158 = vunpack.c.l.b16 %v198
    %v1159 = vunpack.c.l.b16 %v199
    %v1160 = vunpack.c.l.b16 %v200
    %v1161 = vunpack.c.l.b16 %v201
    %v1162 = vpack.c.b16 %v1099, %v1098
    %v1163 = vpack.c.b16 %v1101, %v1100
    %v1164 = vpack.c.b16 %v1103, %v1102
    %v1165 = vpack.c.b16 %v1105, %v1104
    %v1166 = vpack.c.b16 %v1107, %v1106
    %v1167 = vpack.c.b16 %v1109, %v1108
    %v1168 = vpack.c.b16 %v1111, %v1110
    %v1169 = vpack.c.b16 %v1113, %v1112
    %v1170 = vpack.c.b16 %v1115, %v1114
    %v1171 = vpack.c.b16 %v1117, %v1116
    %v1172 = vpack.c.b16 %v1119, %v1118
    %v1173 = vpack.c.b16 %v1121, %v1120
    %v1174 = vpack.c.b16 %v1123, %v1122
    %v1175 = vpack.c.b16 %v1125, %v1124
    %v1176 = vpack.c.b16 %v1127, %v1126
    %v1177 = vpack.c.b16 %v1129, %v1128
    %v1178 = vpack.c.b16 %v1131, %v1130
    %v1179 = vpack.c.b16 %v1133, %v1132
    %v1180 = vpack.c.b16 %v1135, %v1134
    %v1181 = vpack.c.b16 %v1137, %v1136
    %v1182 = vpack.c.b16 %v1139, %v1138
    %v1183 = vpack.c.b16 %v1141, %v1140
    %v1184 = vpack.c.b16 %v1143, %v1142
    %v1185 = vpack.c.b16 %v1145, %v1144
    %v1186 = vpack.c.b16 %v1147, %v1146
    %v1187 = vpack.c.b16 %v1149, %v1148
    %v1188 = vpack.c.b16 %v1151, %v1150
    %v1189 = vpack.c.b16 %v1153, %v1152
    %v1190 = vpack.c.b16 %v1155, %v1154
    %v1191 = vpack.c.b16 %v1157, %v1156
    %v1192 = vpack.c.b16 %v1159, %v1158
    %v1193 = vpack.c.b16 %v1161, %v1160
    %1226 = vmatprep.subr.bf16.mxu0 0
    %1227 = vmatpush1.bf16.msra.mxu0 %v1169
    %1228 = vmatprep.subr.bf16.mxu0 0
    %1229 = vmatpush1.bf16.msra.mxu0 %v1168
    %1230 = vmatprep.subr.bf16.mxu0 0
    %1231 = vmatpush1.bf16.msra.mxu0 %v1167
    %1232 = vmatprep.subr.bf16.mxu0 0
    %1233 = vmatpush1.bf16.msra.mxu0 %v1166
    %1234 = vmatprep.subr.bf16.mxu0 0
    %1235 = vmatpush1.bf16.msra.mxu0 %v1165
    %1236 = vmatprep.subr.bf16.mxu0 0
    %1237 = vmatpush1.bf16.msra.mxu0 %v1164
    %1238 = vmatprep.subr.bf16.mxu0 0
    %1239 = vmatpush1.bf16.msra.mxu0 %v1163
    %1240 = vmatprep.subr.bf16.mxu0 0
    %1241 = vmatpush1.bf16.msra.mxu0 %v1162
    %1242 = vmatprep.subr.bf16.mxu0 0
    %1243 = vmatpush2.bf16.msra.mxu0 %v1177
    %1244 = vmatprep.subr.bf16.mxu0 0
    %1245 = vmatpush2.bf16.msra.mxu0 %v1176
    %1246 = vmatprep.subr.bf16.mxu0 0
    %1247 = vmatpush2.bf16.msra.mxu0 %v1175
    %1248 = vmatprep.subr.bf16.mxu0 0
    %1249 = vmatpush2.bf16.msra.mxu0 %v1174
    %1250 = vmatprep.subr.bf16.mxu0 0
    %1251 = vmatpush2.bf16.msra.mxu0 %v1173
    %1252 = vmatprep.subr.bf16.mxu0 0
    %1253 = vmatpush2.bf16.msra.mxu0 %v1172
    %1254 = vmatprep.subr.bf16.mxu0 0
    %1255 = vmatpush2.bf16.msra.mxu0 %v1171
    %1256 = vmatprep.subr.bf16.mxu0 0
    %1257 = vmatpush2.bf16.msra.mxu0 %v1170
    %1258 = vmatprep.mubr.bf16.mxu0 %v779
    %1259 = vmatmul.mubr.bf16.gmra.mxu0 %v778
    %v1260 = vpop.f32.mrf.mxu0
    %v1261 = vadd.f32 0.0, %v1260
    %v1262 = vpop.f32.mrf.mxu0
    %v1263 = vpop.f32.mrf.mxu0
    %v1264 = vadd.f32 0.0, %v1263
    %v1265 = vpop.f32.mrf.mxu0
    %1266 = vmatprep.mubr.bf16.mxu0 %v783
    %1267 = vmatmul.mubr.bf16.gmra.mxu0 %v782
    %v1268 = vpop.f32.mrf.mxu0
    %v1269 = vadd.f32 0.0, %v1268
    %v1270 = vpop.f32.mrf.mxu0
    %v1271 = vpop.f32.mrf.mxu0
    %v1272 = vadd.f32 0.0, %v1271
    %v1273 = vpop.f32.mrf.mxu0
    %1274 = vmatprep.mubr.bf16.mxu0 %v787
    %1275 = vmatmul.mubr.bf16.gmra.mxu0 %v786
    %v1276 = vpop.f32.mrf.mxu0
    %v1277 = vadd.f32 0.0, %v1276
    %v1278 = vpop.f32.mrf.mxu0
    %v1279 = vpop.f32.mrf.mxu0
    %v1280 = vadd.f32 0.0, %v1279
    %v1281 = vpop.f32.mrf.mxu0
    %1282 = vmatprep.mubr.bf16.mxu0 %v791
    %1283 = vmatmul.mubr.bf16.gmra.mxu0 %v790
    %v1284 = vpop.f32.mrf.mxu0
    %v1285 = vadd.f32 0.0, %v1284
    %v1286 = vpop.f32.mrf.mxu0
    %v1287 = vpop.f32.mrf.mxu0
    %v1288 = vadd.f32 0.0, %v1287
    %v1289 = vpop.f32.mrf.mxu0
    %1290 = vmatprep.mubr.bf16.mxu0 %v795
    %1291 = vmatmul.mubr.bf16.gmra.mxu0 %v794
    %v1292 = vpop.f32.mrf.mxu0
    %v1293 = vadd.f32 0.0, %v1292
    %v1294 = vpop.f32.mrf.mxu0
    %v1295 = vpop.f32.mrf.mxu0
    %v1296 = vadd.f32 0.0, %v1295
    %v1297 = vpop.f32.mrf.mxu0
    %1298 = vmatprep.mubr.bf16.mxu0 %v799
    %1299 = vmatmul.mubr.bf16.gmra.mxu0 %v798
    %v1300 = vpop.f32.mrf.mxu0
    %v1301 = vadd.f32 0.0, %v1300
    %v1302 = vpop.f32.mrf.mxu0
    %v1303 = vpop.f32.mrf.mxu0
    %v1304 = vadd.f32 0.0, %v1303
    %v1305 = vpop.f32.mrf.mxu0
    %1306 = vmatprep.mubr.bf16.mxu0 %v803
    %1307 = vmatmul.mubr.bf16.gmra.mxu0 %v802
    %v1308 = vpop.f32.mrf.mxu0
    %v1309 = vadd.f32 0.0, %v1308
    %v1310 = vpop.f32.mrf.mxu0
    %v1311 = vpop.f32.mrf.mxu0
    %v1312 = vadd.f32 0.0, %v1311
    %v1313 = vpop.f32.mrf.mxu0
    %1314 = vmatprep.mubr.bf16.mxu0 %v807
    %1315 = vmatmul.mubr.bf16.gmra.mxu0 %v806
    %v1316 = vpop.f32.mrf.mxu0
    %v1317 = vadd.f32 0.0, %v1316
    %v1318 = vpop.f32.mrf.mxu0
    %v1319 = vpop.f32.mrf.mxu0
    %v1320 = vadd.f32 0.0, %v1319
    %v1321 = vpop.f32.mrf.mxu0
    %1322 = vmatprep.mubr.bf16.mxu0 %v811
    %1323 = vmatmul.mubr.bf16.gmra.mxu0 %v810
    %v1324 = vpop.f32.mrf.mxu0
    %v1325 = vadd.f32 0.0, %v1324
    %v1326 = vpop.f32.mrf.mxu0
    %v1327 = vpop.f32.mrf.mxu0
    %v1328 = vadd.f32 0.0, %v1327
    %v1329 = vpop.f32.mrf.mxu0
    %1330 = vmatprep.mubr.bf16.mxu0 %v815
    %1331 = vmatmul.mubr.bf16.gmra.mxu0 %v814
    %v1332 = vpop.f32.mrf.mxu0
    %v1333 = vadd.f32 0.0, %v1332
    %v1334 = vpop.f32.mrf.mxu0
    %v1335 = vpop.f32.mrf.mxu0
    %v1336 = vadd.f32 0.0, %v1335
    %v1337 = vpop.f32.mrf.mxu0
    %1338 = vmatprep.mubr.bf16.mxu0 %v819
    %1339 = vmatmul.mubr.bf16.gmra.mxu0 %v818
    %v1340 = vpop.f32.mrf.mxu0
    %v1341 = vadd.f32 0.0, %v1340
    %v1342 = vpop.f32.mrf.mxu0
    %v1343 = vpop.f32.mrf.mxu0
    %v1344 = vadd.f32 0.0, %v1343
    %v1345 = vpop.f32.mrf.mxu0
    %1346 = vmatprep.mubr.bf16.mxu0 %v823
    %1347 = vmatmul.mubr.bf16.gmra.mxu0 %v822
    %v1348 = vpop.f32.mrf.mxu0
    %v1349 = vadd.f32 0.0, %v1348
    %v1350 = vpop.f32.mrf.mxu0
    %v1351 = vpop.f32.mrf.mxu0
    %v1352 = vadd.f32 0.0, %v1351
    %v1353 = vpop.f32.mrf.mxu0
    %1354 = vmatprep.mubr.bf16.mxu0 %v827
    %1355 = vmatmul.mubr.bf16.gmra.mxu0 %v826
    %v1356 = vpop.f32.mrf.mxu0
    %v1357 = vadd.f32 0.0, %v1356
    %v1358 = vpop.f32.mrf.mxu0
    %v1359 = vpop.f32.mrf.mxu0
    %v1360 = vadd.f32 0.0, %v1359
    %v1361 = vpop.f32.mrf.mxu0
    %1362 = vmatprep.mubr.bf16.mxu0 %v831
    %1363 = vmatmul.mubr.bf16.gmra.mxu0 %v830
    %v1364 = vpop.f32.mrf.mxu0
    %v1365 = vadd.f32 0.0, %v1364
    %v1366 = vpop.f32.mrf.mxu0
    %v1367 = vpop.f32.mrf.mxu0
    %v1368 = vadd.f32 0.0, %v1367
    %v1369 = vpop.f32.mrf.mxu0
    %1370 = vmatprep.mubr.bf16.mxu0 %v835
    %1371 = vmatmul.mubr.bf16.gmra.mxu0 %v834
    %v1372 = vpop.f32.mrf.mxu0
    %v1373 = vadd.f32 0.0, %v1372
    %v1374 = vpop.f32.mrf.mxu0
    %v1375 = vpop.f32.mrf.mxu0
    %v1376 = vadd.f32 0.0, %v1375
    %v1377 = vpop.f32.mrf.mxu0
    %1378 = vmatprep.mubr.bf16.mxu0 %v839
    %1379 = vmatmul.mubr.bf16.gmra.mxu0 %v838
    %v1380 = vpop.f32.mrf.mxu0
    %v1381 = vadd.f32 0.0, %v1380
    %v1382 = vpop.f32.mrf.mxu0
    %v1383 = vpop.f32.mrf.mxu0
    %v1384 = vadd.f32 0.0, %v1383
    %v1385 = vpop.f32.mrf.mxu0
    %1386 = vmatprep.mubr.bf16.mxu0 %v843
    %1387 = vmatmul.mubr.bf16.gmra.mxu0 %v842
    %v1388 = vpop.f32.mrf.mxu0
    %v1389 = vadd.f32 0.0, %v1388
    %v1390 = vpop.f32.mrf.mxu0
    %v1391 = vpop.f32.mrf.mxu0
    %v1392 = vadd.f32 0.0, %v1391
    %v1393 = vpop.f32.mrf.mxu0
    %1394 = vmatprep.mubr.bf16.mxu0 %v847
    %1395 = vmatmul.mubr.bf16.gmra.mxu0 %v846
    %v1396 = vpop.f32.mrf.mxu0
    %v1397 = vadd.f32 0.0, %v1396
    %v1398 = vpop.f32.mrf.mxu0
    %v1399 = vpop.f32.mrf.mxu0
    %v1400 = vadd.f32 0.0, %v1399
    %v1401 = vpop.f32.mrf.mxu0
    %1402 = vmatprep.mubr.bf16.mxu0 %v851
    %1403 = vmatmul.mubr.bf16.gmra.mxu0 %v850
    %v1404 = vpop.f32.mrf.mxu0
    %v1405 = vadd.f32 0.0, %v1404
    %v1406 = vpop.f32.mrf.mxu0
    %v1407 = vpop.f32.mrf.mxu0
    %v1408 = vadd.f32 0.0, %v1407
    %v1409 = vpop.f32.mrf.mxu0
    %1410 = vmatprep.mubr.bf16.mxu0 %v855
    %1411 = vmatmul.mubr.bf16.gmra.mxu0 %v854
    %v1412 = vpop.f32.mrf.mxu0
    %v1413 = vadd.f32 0.0, %v1412
    %v1414 = vpop.f32.mrf.mxu0
    %v1415 = vpop.f32.mrf.mxu0
    %v1416 = vadd.f32 0.0, %v1415
    %v1417 = vpop.f32.mrf.mxu0
    %1418 = vmatprep.mubr.bf16.mxu0 %v859
    %1419 = vmatmul.mubr.bf16.gmra.mxu0 %v858
    %v1420 = vpop.f32.mrf.mxu0
    %v1421 = vadd.f32 0.0, %v1420
    %v1422 = vpop.f32.mrf.mxu0
    %v1423 = vpop.f32.mrf.mxu0
    %v1424 = vadd.f32 0.0, %v1423
    %v1425 = vpop.f32.mrf.mxu0
    %1426 = vmatprep.mubr.bf16.mxu0 %v863
    %1427 = vmatmul.mubr.bf16.gmra.mxu0 %v862
    %v1428 = vpop.f32.mrf.mxu0
    %v1429 = vadd.f32 0.0, %v1428
    %v1430 = vpop.f32.mrf.mxu0
    %v1431 = vpop.f32.mrf.mxu0
    %v1432 = vadd.f32 0.0, %v1431
    %v1433 = vpop.f32.mrf.mxu0
    %1434 = vmatprep.mubr.bf16.mxu0 %v867
    %1435 = vmatmul.mubr.bf16.gmra.mxu0 %v866
    %v1436 = vpop.f32.mrf.mxu0
    %v1437 = vadd.f32 0.0, %v1436
    %v1438 = vpop.f32.mrf.mxu0
    %v1439 = vpop.f32.mrf.mxu0
    %v1440 = vadd.f32 0.0, %v1439
    %v1441 = vpop.f32.mrf.mxu0
    %1442 = vmatprep.mubr.bf16.mxu0 %v871
    %1443 = vmatmul.mubr.bf16.gmra.mxu0 %v870
    %v1444 = vpop.f32.mrf.mxu0
    %v1445 = vadd.f32 0.0, %v1444
    %v1446 = vpop.f32.mrf.mxu0
    %v1447 = vpop.f32.mrf.mxu0
    %v1448 = vadd.f32 0.0, %v1447
    %v1449 = vpop.f32.mrf.mxu0
    %1450 = vmatprep.mubr.bf16.mxu0 %v875
    %1451 = vmatmul.mubr.bf16.gmra.mxu0 %v874
    %v1452 = vpop.f32.mrf.mxu0
    %v1453 = vadd.f32 0.0, %v1452
    %v1454 = vpop.f32.mrf.mxu0
    %v1455 = vpop.f32.mrf.mxu0
    %v1456 = vadd.f32 0.0, %v1455
    %v1457 = vpop.f32.mrf.mxu0
    %1458 = vmatprep.mubr.bf16.mxu0 %v879
    %1459 = vmatmul.mubr.bf16.gmra.mxu0 %v878
    %v1460 = vpop.f32.mrf.mxu0
    %v1461 = vadd.f32 0.0, %v1460
    %v1462 = vpop.f32.mrf.mxu0
    %v1463 = vpop.f32.mrf.mxu0
    %v1464 = vadd.f32 0.0, %v1463
    %v1465 = vpop.f32.mrf.mxu0
    %1466 = vmatprep.mubr.bf16.mxu0 %v883
    %1467 = vmatmul.mubr.bf16.gmra.mxu0 %v882
    %v1468 = vpop.f32.mrf.mxu0
    %v1469 = vadd.f32 0.0, %v1468
    %v1470 = vpop.f32.mrf.mxu0
    %v1471 = vpop.f32.mrf.mxu0
    %v1472 = vadd.f32 0.0, %v1471
    %v1473 = vpop.f32.mrf.mxu0
    %1474 = vmatprep.mubr.bf16.mxu0 %v887
    %1475 = vmatmul.mubr.bf16.gmra.mxu0 %v886
    %v1476 = vpop.f32.mrf.mxu0
    %v1477 = vadd.f32 0.0, %v1476
    %v1478 = vpop.f32.mrf.mxu0
    %v1479 = vpop.f32.mrf.mxu0
    %v1480 = vadd.f32 0.0, %v1479
    %v1481 = vpop.f32.mrf.mxu0
    %1482 = vmatprep.mubr.bf16.mxu0 %v891
    %1483 = vmatmul.mubr.bf16.gmra.mxu0 %v890
    %v1484 = vpop.f32.mrf.mxu0
    %v1485 = vadd.f32 0.0, %v1484
    %v1486 = vpop.f32.mrf.mxu0
    %v1487 = vpop.f32.mrf.mxu0
    %v1488 = vadd.f32 0.0, %v1487
    %v1489 = vpop.f32.mrf.mxu0
    %1490 = vmatprep.mubr.bf16.mxu0 %v895
    %1491 = vmatmul.mubr.bf16.gmra.mxu0 %v894
    %v1492 = vpop.f32.mrf.mxu0
    %v1493 = vadd.f32 0.0, %v1492
    %v1494 = vpop.f32.mrf.mxu0
    %v1495 = vpop.f32.mrf.mxu0
    %v1496 = vadd.f32 0.0, %v1495
    %v1497 = vpop.f32.mrf.mxu0
    %1498 = vmatprep.mubr.bf16.mxu0 %v899
    %1499 = vmatmul.mubr.bf16.gmra.mxu0 %v898
    %v1500 = vpop.f32.mrf.mxu0
    %v1501 = vadd.f32 0.0, %v1500
    %v1502 = vpop.f32.mrf.mxu0
    %v1503 = vpop.f32.mrf.mxu0
    %v1504 = vadd.f32 0.0, %v1503
    %v1505 = vpop.f32.mrf.mxu0
    %1506 = vmatprep.mubr.bf16.mxu0 %v903
    %1507 = vmatmul.mubr.bf16.gmra.mxu0 %v902
    %v1508 = vpop.f32.mrf.mxu0
    %v1509 = vadd.f32 0.0, %v1508
    %v1510 = vpop.f32.mrf.mxu0
    %v1511 = vpop.f32.mrf.mxu0
    %v1512 = vadd.f32 0.0, %v1511
    %v1513 = vpop.f32.mrf.mxu0
    %1514 = vdwg.mxu0
    %1515 = vmatprep.subr.bf16.mxu0 0
    %1516 = vmatpush1.bf16.msra.mxu0 %v1185
    %1517 = vmatprep.subr.bf16.mxu0 0
    %1518 = vmatpush1.bf16.msra.mxu0 %v1184
    %1519 = vmatprep.subr.bf16.mxu0 0
    %1520 = vmatpush1.bf16.msra.mxu0 %v1183
    %1521 = vmatprep.subr.bf16.mxu0 0
    %1522 = vmatpush1.bf16.msra.mxu0 %v1182
    %1523 = vmatprep.subr.bf16.mxu0 0
    %1524 = vmatpush1.bf16.msra.mxu0 %v1181
    %1525 = vmatprep.subr.bf16.mxu0 0
    %1526 = vmatpush1.bf16.msra.mxu0 %v1180
    %1527 = vmatprep.subr.bf16.mxu0 0
    %1528 = vmatpush1.bf16.msra.mxu0 %v1179
    %1529 = vmatprep.subr.bf16.mxu0 0
    %1530 = vmatpush1.bf16.msra.mxu0 %v1178
    %1531 = vmatprep.subr.bf16.mxu0 0
    %1532 = vmatpush2.bf16.msra.mxu0 %v1193
    %1533 = vmatprep.subr.bf16.mxu0 0
    %1534 = vmatpush2.bf16.msra.mxu0 %v1192
    %1535 = vmatprep.subr.bf16.mxu0 0
    %1536 = vmatpush2.bf16.msra.mxu0 %v1191
    %1537 = vmatprep.subr.bf16.mxu0 0
    %1538 = vmatpush2.bf16.msra.mxu0 %v1190
    %1539 = vmatprep.subr.bf16.mxu0 0
    %1540 = vmatpush2.bf16.msra.mxu0 %v1189
    %1541 = vmatprep.subr.bf16.mxu0 0
    %1542 = vmatpush2.bf16.msra.mxu0 %v1188
    %1543 = vmatprep.subr.bf16.mxu0 0
    %1544 = vmatpush2.bf16.msra.mxu0 %v1187
    %1545 = vmatprep.subr.bf16.mxu0 0
    %1546 = vmatpush2.bf16.msra.mxu0 %v1186
    %1547 = vmatprep.mubr.bf16.mxu0 %v781
    %1548 = vmatmul.mubr.bf16.gmra.mxu0 %v780
    %v1549 = vpop.f32.mrf.mxu0
    %v1550 = vadd.f32 %v1261, %v1549
    %v1551 = vpop.f32.mrf.mxu0
    %v1552 = vpop.f32.mrf.mxu0
    %v1553 = vadd.f32 %v1264, %v1552
    %v1554 = vpop.f32.mrf.mxu0
    %1555 = vmatprep.mubr.bf16.mxu0 %v785
    %1556 = vmatmul.mubr.bf16.gmra.mxu0 %v784
    %v1557 = vpop.f32.mrf.mxu0
    %v1558 = vadd.f32 %v1269, %v1557
    %v1559 = vpop.f32.mrf.mxu0
    %v1560 = vpop.f32.mrf.mxu0
    %v1561 = vadd.f32 %v1272, %v1560
    %v1562 = vpop.f32.mrf.mxu0
    %1563 = vmatprep.mubr.bf16.mxu0 %v789
    %1564 = vmatmul.mubr.bf16.gmra.mxu0 %v788
    %v1565 = vpop.f32.mrf.mxu0
    %v1566 = vadd.f32 %v1277, %v1565
    %v1567 = vpop.f32.mrf.mxu0
    %v1568 = vpop.f32.mrf.mxu0
    %v1569 = vadd.f32 %v1280, %v1568
    %v1570 = vpop.f32.mrf.mxu0
    %1571 = vmatprep.mubr.bf16.mxu0 %v793
    %1572 = vmatmul.mubr.bf16.gmra.mxu0 %v792
    %v1573 = vpop.f32.mrf.mxu0
    %v1574 = vadd.f32 %v1285, %v1573
    %v1575 = vpop.f32.mrf.mxu0
    %v1576 = vpop.f32.mrf.mxu0
    %v1577 = vadd.f32 %v1288, %v1576
    %v1578 = vpop.f32.mrf.mxu0
    %1579 = vmatprep.mubr.bf16.mxu0 %v797
    %1580 = vmatmul.mubr.bf16.gmra.mxu0 %v796
    %v1581 = vpop.f32.mrf.mxu0
    %v1582 = vadd.f32 %v1293, %v1581
    %v1583 = vpop.f32.mrf.mxu0
    %v1584 = vpop.f32.mrf.mxu0
    %v1585 = vadd.f32 %v1296, %v1584
    %v1586 = vpop.f32.mrf.mxu0
    %1587 = vmatprep.mubr.bf16.mxu0 %v801
    %1588 = vmatmul.mubr.bf16.gmra.mxu0 %v800
    %v1589 = vpop.f32.mrf.mxu0
    %v1590 = vadd.f32 %v1301, %v1589
    %v1591 = vpop.f32.mrf.mxu0
    %v1592 = vpop.f32.mrf.mxu0
    %v1593 = vadd.f32 %v1304, %v1592
    %v1594 = vpop.f32.mrf.mxu0
    %1595 = vmatprep.mubr.bf16.mxu0 %v805
    %1596 = vmatmul.mubr.bf16.gmra.mxu0 %v804
    %v1597 = vpop.f32.mrf.mxu0
    %v1598 = vadd.f32 %v1309, %v1597
    %v1599 = vpop.f32.mrf.mxu0
    %v1600 = vpop.f32.mrf.mxu0
    %v1601 = vadd.f32 %v1312, %v1600
    %v1602 = vpop.f32.mrf.mxu0
    %1603 = vmatprep.mubr.bf16.mxu0 %v809
    %1604 = vmatmul.mubr.bf16.gmra.mxu0 %v808
    %v1605 = vpop.f32.mrf.mxu0
    %v1606 = vadd.f32 %v1317, %v1605
    %v1607 = vpop.f32.mrf.mxu0
    %v1608 = vpop.f32.mrf.mxu0
    %v1609 = vadd.f32 %v1320, %v1608
    %v1610 = vpop.f32.mrf.mxu0
    %1611 = vmatprep.mubr.bf16.mxu0 %v813
    %1612 = vmatmul.mubr.bf16.gmra.mxu0 %v812
    %v1613 = vpop.f32.mrf.mxu0
    %v1614 = vadd.f32 %v1325, %v1613
    %v1615 = vpop.f32.mrf.mxu0
    %v1616 = vpop.f32.mrf.mxu0
    %v1617 = vadd.f32 %v1328, %v1616
    %v1618 = vpop.f32.mrf.mxu0
    %1619 = vmatprep.mubr.bf16.mxu0 %v817
    %1620 = vmatmul.mubr.bf16.gmra.mxu0 %v816
    %v1621 = vpop.f32.mrf.mxu0
    %v1622 = vadd.f32 %v1333, %v1621
    %v1623 = vpop.f32.mrf.mxu0
    %v1624 = vpop.f32.mrf.mxu0
    %v1625 = vadd.f32 %v1336, %v1624
    %v1626 = vpop.f32.mrf.mxu0
    %1627 = vmatprep.mubr.bf16.mxu0 %v821
    %1628 = vmatmul.mubr.bf16.gmra.mxu0 %v820
    %v1629 = vpop.f32.mrf.mxu0
    %v1630 = vadd.f32 %v1341, %v1629
    %v1631 = vpop.f32.mrf.mxu0
    %v1632 = vpop.f32.mrf.mxu0
    %v1633 = vadd.f32 %v1344, %v1632
    %v1634 = vpop.f32.mrf.mxu0
    %1635 = vmatprep.mubr.bf16.mxu0 %v825
    %1636 = vmatmul.mubr.bf16.gmra.mxu0 %v824
    %v1637 = vpop.f32.mrf.mxu0
    %v1638 = vadd.f32 %v1349, %v1637
    %v1639 = vpop.f32.mrf.mxu0
    %v1640 = vpop.f32.mrf.mxu0
    %v1641 = vadd.f32 %v1352, %v1640
    %v1642 = vpop.f32.mrf.mxu0
    %1643 = vmatprep.mubr.bf16.mxu0 %v829
    %1644 = vmatmul.mubr.bf16.gmra.mxu0 %v828
    %v1645 = vpop.f32.mrf.mxu0
    %v1646 = vadd.f32 %v1357, %v1645
    %v1647 = vpop.f32.mrf.mxu0
    %v1648 = vpop.f32.mrf.mxu0
    %v1649 = vadd.f32 %v1360, %v1648
    %v1650 = vpop.f32.mrf.mxu0
    %1651 = vmatprep.mubr.bf16.mxu0 %v833
    %1652 = vmatmul.mubr.bf16.gmra.mxu0 %v832
    %v1653 = vpop.f32.mrf.mxu0
    %v1654 = vadd.f32 %v1365, %v1653
    %v1655 = vpop.f32.mrf.mxu0
    %v1656 = vpop.f32.mrf.mxu0
    %v1657 = vadd.f32 %v1368, %v1656
    %v1658 = vpop.f32.mrf.mxu0
    %1659 = vmatprep.mubr.bf16.mxu0 %v837
    %1660 = vmatmul.mubr.bf16.gmra.mxu0 %v836
    %v1661 = vpop.f32.mrf.mxu0
    %v1662 = vadd.f32 %v1373, %v1661
    %v1663 = vpop.f32.mrf.mxu0
    %v1664 = vpop.f32.mrf.mxu0
    %v1665 = vadd.f32 %v1376, %v1664
    %v1666 = vpop.f32.mrf.mxu0
    %1667 = vmatprep.mubr.bf16.mxu0 %v841
    %1668 = vmatmul.mubr.bf16.gmra.mxu0 %v840
    %v1669 = vpop.f32.mrf.mxu0
    %v1670 = vadd.f32 %v1381, %v1669
    %v1671 = vpop.f32.mrf.mxu0
    %v1672 = vpop.f32.mrf.mxu0
    %v1673 = vadd.f32 %v1384, %v1672
    %v1674 = vpop.f32.mrf.mxu0
    %1675 = vmatprep.mubr.bf16.mxu0 %v845
    %1676 = vmatmul.mubr.bf16.gmra.mxu0 %v844
    %v1677 = vpop.f32.mrf.mxu0
    %v1678 = vadd.f32 %v1389, %v1677
    %v1679 = vpop.f32.mrf.mxu0
    %v1680 = vpop.f32.mrf.mxu0
    %v1681 = vadd.f32 %v1392, %v1680
    %v1682 = vpop.f32.mrf.mxu0
    %1683 = vmatprep.mubr.bf16.mxu0 %v849
    %1684 = vmatmul.mubr.bf16.gmra.mxu0 %v848
    %v1685 = vpop.f32.mrf.mxu0
    %v1686 = vadd.f32 %v1397, %v1685
    %v1687 = vpop.f32.mrf.mxu0
    %v1688 = vpop.f32.mrf.mxu0
    %v1689 = vadd.f32 %v1400, %v1688
    %v1690 = vpop.f32.mrf.mxu0
    %1691 = vmatprep.mubr.bf16.mxu0 %v853
    %1692 = vmatmul.mubr.bf16.gmra.mxu0 %v852
    %v1693 = vpop.f32.mrf.mxu0
    %v1694 = vadd.f32 %v1405, %v1693
    %v1695 = vpop.f32.mrf.mxu0
    %v1696 = vpop.f32.mrf.mxu0
    %v1697 = vadd.f32 %v1408, %v1696
    %v1698 = vpop.f32.mrf.mxu0
    %1699 = vmatprep.mubr.bf16.mxu0 %v857
    %1700 = vmatmul.mubr.bf16.gmra.mxu0 %v856
    %v1701 = vpop.f32.mrf.mxu0
    %v1702 = vadd.f32 %v1413, %v1701
    %v1703 = vpop.f32.mrf.mxu0
    %v1704 = vpop.f32.mrf.mxu0
    %v1705 = vadd.f32 %v1416, %v1704
    %v1706 = vpop.f32.mrf.mxu0
    %1707 = vmatprep.mubr.bf16.mxu0 %v861
    %1708 = vmatmul.mubr.bf16.gmra.mxu0 %v860
    %v1709 = vpop.f32.mrf.mxu0
    %v1710 = vadd.f32 %v1421, %v1709
    %v1711 = vpop.f32.mrf.mxu0
    %v1712 = vpop.f32.mrf.mxu0
    %v1713 = vadd.f32 %v1424, %v1712
    %v1714 = vpop.f32.mrf.mxu0
    %1715 = vmatprep.mubr.bf16.mxu0 %v865
    %1716 = vmatmul.mubr.bf16.gmra.mxu0 %v864
    %v1717 = vpop.f32.mrf.mxu0
    %v1718 = vadd.f32 %v1429, %v1717
    %v1719 = vpop.f32.mrf.mxu0
    %v1720 = vpop.f32.mrf.mxu0
    %v1721 = vadd.f32 %v1432, %v1720
    %v1722 = vpop.f32.mrf.mxu0
    %1723 = vmatprep.mubr.bf16.mxu0 %v869
    %1724 = vmatmul.mubr.bf16.gmra.mxu0 %v868
    %v1725 = vpop.f32.mrf.mxu0
    %v1726 = vadd.f32 %v1437, %v1725
    %v1727 = vpop.f32.mrf.mxu0
    %v1728 = vpop.f32.mrf.mxu0
    %v1729 = vadd.f32 %v1440, %v1728
    %v1730 = vpop.f32.mrf.mxu0
    %1731 = vmatprep.mubr.bf16.mxu0 %v873
    %1732 = vmatmul.mubr.bf16.gmra.mxu0 %v872
    %v1733 = vpop.f32.mrf.mxu0
    %v1734 = vadd.f32 %v1445, %v1733
    %v1735 = vpop.f32.mrf.mxu0
    %v1736 = vpop.f32.mrf.mxu0
    %v1737 = vadd.f32 %v1448, %v1736
    %v1738 = vpop.f32.mrf.mxu0
    %1739 = vmatprep.mubr.bf16.mxu0 %v877
    %1740 = vmatmul.mubr.bf16.gmra.mxu0 %v876
    %v1741 = vpop.f32.mrf.mxu0
    %v1742 = vadd.f32 %v1453, %v1741
    %v1743 = vpop.f32.mrf.mxu0
    %v1744 = vpop.f32.mrf.mxu0
    %v1745 = vadd.f32 %v1456, %v1744
    %v1746 = vpop.f32.mrf.mxu0
    %1747 = vmatprep.mubr.bf16.mxu0 %v881
    %1748 = vmatmul.mubr.bf16.gmra.mxu0 %v880
    %v1749 = vpop.f32.mrf.mxu0
    %v1750 = vadd.f32 %v1461, %v1749
    %v1751 = vpop.f32.mrf.mxu0
    %v1752 = vpop.f32.mrf.mxu0
    %v1753 = vadd.f32 %v1464, %v1752
    %v1754 = vpop.f32.mrf.mxu0
    %1755 = vmatprep.mubr.bf16.mxu0 %v885
    %1756 = vmatmul.mubr.bf16.gmra.mxu0 %v884
    %v1757 = vpop.f32.mrf.mxu0
    %v1758 = vadd.f32 %v1469, %v1757
    %v1759 = vpop.f32.mrf.mxu0
    %v1760 = vpop.f32.mrf.mxu0
    %v1761 = vadd.f32 %v1472, %v1760
    %v1762 = vpop.f32.mrf.mxu0
    %1763 = vmatprep.mubr.bf16.mxu0 %v889
    %1764 = vmatmul.mubr.bf16.gmra.mxu0 %v888
    %v1765 = vpop.f32.mrf.mxu0
    %v1766 = vadd.f32 %v1477, %v1765
    %v1767 = vpop.f32.mrf.mxu0
    %v1768 = vpop.f32.mrf.mxu0
    %v1769 = vadd.f32 %v1480, %v1768
    %v1770 = vpop.f32.mrf.mxu0
    %1771 = vmatprep.mubr.bf16.mxu0 %v893
    %1772 = vmatmul.mubr.bf16.gmra.mxu0 %v892
    %v1773 = vpop.f32.mrf.mxu0
    %v1774 = vadd.f32 %v1485, %v1773
    %v1775 = vpop.f32.mrf.mxu0
    %v1776 = vpop.f32.mrf.mxu0
    %v1777 = vadd.f32 %v1488, %v1776
    %v1778 = vpop.f32.mrf.mxu0
    %1779 = vmatprep.mubr.bf16.mxu0 %v897
    %1780 = vmatmul.mubr.bf16.gmra.mxu0 %v896
    %v1781 = vpop.f32.mrf.mxu0
    %v1782 = vadd.f32 %v1493, %v1781
    %v1783 = vpop.f32.mrf.mxu0
    %v1784 = vpop.f32.mrf.mxu0
    %v1785 = vadd.f32 %v1496, %v1784
    %v1786 = vpop.f32.mrf.mxu0
    %1787 = vmatprep.mubr.bf16.mxu0 %v901
    %1788 = vmatmul.mubr.bf16.gmra.mxu0 %v900
    %v1789 = vpop.f32.mrf.mxu0
    %v1790 = vadd.f32 %v1501, %v1789
    %v1791 = vpop.f32.mrf.mxu0
    %v1792 = vpop.f32.mrf.mxu0
    %v1793 = vadd.f32 %v1504, %v1792
    %v1794 = vpop.f32.mrf.mxu0
    %1795 = vmatprep.mubr.bf16.mxu0 %v905
    %1796 = vmatmul.mubr.bf16.gmra.mxu0 %v904
    %v1797 = vpop.f32.mrf.mxu0
    %v1798 = vadd.f32 %v1509, %v1797
    %v1799 = vpop.f32.mrf.mxu0
    %v1800 = vpop.f32.mrf.mxu0
    %v1801 = vadd.f32 %v1512, %v1800
    %v1802 = vpop.f32.mrf.mxu0
    %1803 = vdwg.mxu0
    %v1804 = vadd.f32 %v330, %v1550
    %v1805 = vadd.f32 %v331, %v1553
    %v1806 = vadd.f32 %v332, %v1558
    %v1807 = vadd.f32 %v333, %v1561
    %v1808 = vadd.f32 %v334, %v1566
    %v1809 = vadd.f32 %v335, %v1569
    %v1810 = vadd.f32 %v336, %v1574
    %v1811 = vadd.f32 %v337, %v1577
    %v1812 = vadd.f32 %v338, %v1582
    %v1813 = vadd.f32 %v339, %v1585
    %v1814 = vadd.f32 %v340, %v1590
    %v1815 = vadd.f32 %v341, %v1593
    %v1816 = vadd.f32 %v342, %v1598
    %v1817 = vadd.f32 %v343, %v1601
    %v1818 = vadd.f32 %v344, %v1606
    %v1819 = vadd.f32 %v345, %v1609
    %v1820 = vadd.f32 %v346, %v1614
    %v1821 = vadd.f32 %v347, %v1617
    %v1822 = vadd.f32 %v348, %v1622
    %v1823 = vadd.f32 %v349, %v1625
    %v1824 = vadd.f32 %v350, %v1630
    %v1825 = vadd.f32 %v351, %v1633
    %v1826 = vadd.f32 %v352, %v1638
    %v1827 = vadd.f32 %v353, %v1641
    %v1828 = vadd.f32 %v354, %v1646
    %v1829 = vadd.f32 %v355, %v1649
    %v1830 = vadd.f32 %v356, %v1654
    %v1831 = vadd.f32 %v357, %v1657
    %v1832 = vadd.f32 %v358, %v1662
    %v1833 = vadd.f32 %v359, %v1665
    %v1834 = vadd.f32 %v360, %v1670
    %v1835 = vadd.f32 %v361, %v1673
    %v1836 = vadd.f32 %v362, %v1678
    %v1837 = vadd.f32 %v363, %v1681
    %v1838 = vadd.f32 %v364, %v1686
    %v1839 = vadd.f32 %v365, %v1689
    %v1840 = vadd.f32 %v366, %v1694
    %v1841 = vadd.f32 %v367, %v1697
    %v1842 = vadd.f32 %v368, %v1702
    %v1843 = vadd.f32 %v369, %v1705
    %v1844 = vadd.f32 %v370, %v1710
    %v1845 = vadd.f32 %v371, %v1713
    %v1846 = vadd.f32 %v372, %v1718
    %v1847 = vadd.f32 %v373, %v1721
    %v1848 = vadd.f32 %v374, %v1726
    %v1849 = vadd.f32 %v375, %v1729
    %v1850 = vadd.f32 %v376, %v1734
    %v1851 = vadd.f32 %v377, %v1737
    %v1852 = vadd.f32 %v378, %v1742
    %v1853 = vadd.f32 %v379, %v1745
    %v1854 = vadd.f32 %v380, %v1750
    %v1855 = vadd.f32 %v381, %v1753
    %v1856 = vadd.f32 %v382, %v1758
    %v1857 = vadd.f32 %v383, %v1761
    %v1858 = vadd.f32 %v384, %v1766
    %v1859 = vadd.f32 %v385, %v1769
    %v1860 = vadd.f32 %v386, %v1774
    %v1861 = vadd.f32 %v387, %v1777
    %v1862 = vadd.f32 %v388, %v1782
    %v1863 = vadd.f32 %v389, %v1785
    %v1864 = vadd.f32 %v390, %v1790
    %v1865 = vadd.f32 %v391, %v1793
    %v1866 = vadd.f32 %v392, %v1798
    %v1867 = vadd.f32 %v393, %v1801
    %1868 = vst [vmem:[#allocation2] sm:$0xff] %v1804
    %1869 = vst [vmem:[#allocation2 + $0x8] sm:$0xff] %v1805
    %1870 = vst [vmem:[#allocation2 + $0x10] sm:$0xff] %v1806
    %1871 = vst [vmem:[#allocation2 + $0x18] sm:$0xff] %v1807
    %1872 = vst [vmem:[#allocation2 + $0x20] sm:$0xff] %v1808
    %1873 = vst [vmem:[#allocation2 + $0x28] sm:$0xff] %v1809
    %1874 = vst [vmem:[#allocation2 + $0x30] sm:$0xff] %v1810
    %1875 = vst [vmem:[#allocation2 + $0x38] sm:$0xff] %v1811
    %1876 = vst [vmem:[#allocation2 + $0x40] sm:$0xff] %v1812
    %1877 = vst [vmem:[#allocation2 + $0x48] sm:$0xff] %v1813
    %1878 = vst [vmem:[#allocation2 + $0x50] sm:$0xff] %v1814
    %1879 = vst [vmem:[#allocation2 + $0x58] sm:$0xff] %v1815
    %1880 = vst [vmem:[#allocation2 + $0x60] sm:$0xff] %v1816
    %1881 = vst [vmem:[#allocation2 + $0x68] sm:$0xff] %v1817
    %1882 = vst [vmem:[#allocation2 + $0x70] sm:$0xff] %v1818
    %1883 = vst [vmem:[#allocation2 + $0x78] sm:$0xff] %v1819
    %1884 = vst [vmem:[#allocation2 + $0x80] sm:$0xff] %v1820
    %1885 = vst [vmem:[#allocation2 + $0x88] sm:$0xff] %v1821
    %1886 = vst [vmem:[#allocation2 + $0x90] sm:$0xff] %v1822
    %1887 = vst [vmem:[#allocation2 + $0x98] sm:$0xff] %v1823
    %1888 = vst [vmem:[#allocation2 + $0xa0] sm:$0xff] %v1824
    %1889 = vst [vmem:[#allocation2 + $0xa8] sm:$0xff] %v1825
    %1890 = vst [vmem:[#allocation2 + $0xb0] sm:$0xff] %v1826
    %1891 = vst [vmem:[#allocation2 + $0xb8] sm:$0xff] %v1827
    %1892 = vst [vmem:[#allocation2 + $0xc0] sm:$0xff] %v1828
    %1893 = vst [vmem:[#allocation2 + $0xc8] sm:$0xff] %v1829
    %1894 = vst [vmem:[#allocation2 + $0xd0] sm:$0xff] %v1830
    %1895 = vst [vmem:[#allocation2 + $0xd8] sm:$0xff] %v1831
    %1896 = vst [vmem:[#allocation2 + $0xe0] sm:$0xff] %v1832
    %1897 = vst [vmem:[#allocation2 + $0xe8] sm:$0xff] %v1833
    %1898 = vst [vmem:[#allocation2 + $0xf0] sm:$0xff] %v1834
    %1899 = vst [vmem:[#allocation2 + $0xf8] sm:$0xff] %v1835
    %1900 = vst [vmem:[#allocation2 + $0x100] sm:$0xff] %v1836
    %1901 = vst [vmem:[#allocation2 + $0x108] sm:$0xff] %v1837
    %1902 = vst [vmem:[#allocation2 + $0x110] sm:$0xff] %v1838
    %1903 = vst [vmem:[#allocation2 + $0x118] sm:$0xff] %v1839
    %1904 = vst [vmem:[#allocation2 + $0x120] sm:$0xff] %v1840
    %1905 = vst [vmem:[#allocation2 + $0x128] sm:$0xff] %v1841
    %1906 = vst [vmem:[#allocation2 + $0x130] sm:$0xff] %v1842
    %1907 = vst [vmem:[#allocation2 + $0x138] sm:$0xff] %v1843
    %1908 = vst [vmem:[#allocation2 + $0x140] sm:$0xff] %v1844
    %1909 = vst [vmem:[#allocation2 + $0x148] sm:$0xff] %v1845
    %1910 = vst [vmem:[#allocation2 + $0x150] sm:$0xff] %v1846
    %1911 = vst [vmem:[#allocation2 + $0x158] sm:$0xff] %v1847
    %1912 = vst [vmem:[#allocation2 + $0x160] sm:$0xff] %v1848
    %1913 = vst [vmem:[#allocation2 + $0x168] sm:$0xff] %v1849
    %1914 = vst [vmem:[#allocation2 + $0x170] sm:$0xff] %v1850
    %1915 = vst [vmem:[#allocation2 + $0x178] sm:$0xff] %v1851
    %1916 = vst [vmem:[#allocation2 + $0x180] sm:$0xff] %v1852
    %1917 = vst [vmem:[#allocation2 + $0x188] sm:$0xff] %v1853
    %1918 = vst [vmem:[#allocation2 + $0x190] sm:$0xff] %v1854
    %1919 = vst [vmem:[#allocation2 + $0x198] sm:$0xff] %v1855
    %1920 = vst [vmem:[#allocation2 + $0x1a0] sm:$0xff] %v1856
    %1921 = vst [vmem:[#allocation2 + $0x1a8] sm:$0xff] %v1857
    %1922 = vst [vmem:[#allocation2 + $0x1b0] sm:$0xff] %v1858
    %1923 = vst [vmem:[#allocation2 + $0x1b8] sm:$0xff] %v1859
    %1924 = vst [vmem:[#allocation2 + $0x1c0] sm:$0xff] %v1860
    %1925 = vst [vmem:[#allocation2 + $0x1c8] sm:$0xff] %v1861
    %1926 = vst [vmem:[#allocation2 + $0x1d0] sm:$0xff] %v1862
    %1927 = vst [vmem:[#allocation2 + $0x1d8] sm:$0xff] %v1863
    %1928 = vst [vmem:[#allocation2 + $0x1e0] sm:$0xff] %v1864
    %1929 = vst [vmem:[#allocation2 + $0x1e8] sm:$0xff] %v1865
    %1930 = vst [vmem:[#allocation2 + $0x1f0] sm:$0xff] %v1866
    %1931 = vst [vmem:[#allocation2 + $0x1f8] sm:$0xff] %v1867
  $region21: #{gcn_forward.5} parent=0 // pred_fallthru
    _
  // Predicated region
  $region22: #{gcn_forward.5} parent=0 // pred_check
    %p1932 = pneg %p56
  $region23: #{gcn_forward.5} parent=0 // pred_check_branch
    %1934 = sbr.rel (%p1932) target = $region25
  $region24: #{gcn_forward.5} parent=0 // pred_region
    %v1935 = vld [vmem:[#allocation2] sm:$0xff]
    %v1936 = vld [vmem:[#allocation2 + $0x8] sm:$0xff]
    %v1937 = vld [vmem:[#allocation2 + $0x10] sm:$0xff]
    %v1938 = vld [vmem:[#allocation2 + $0x18] sm:$0xff]
    %v1939 = vld [vmem:[#allocation2 + $0x20] sm:$0xff]
    %v1940 = vld [vmem:[#allocation2 + $0x28] sm:$0xff]
    %v1941 = vld [vmem:[#allocation2 + $0x30] sm:$0xff]
    %v1942 = vld [vmem:[#allocation2 + $0x38] sm:$0xff]
    %v1943 = vld [vmem:[#allocation2 + $0x40] sm:$0xff]
    %v1944 = vld [vmem:[#allocation2 + $0x48] sm:$0xff]
    %v1945 = vld [vmem:[#allocation2 + $0x50] sm:$0xff]
    %v1946 = vld [vmem:[#allocation2 + $0x58] sm:$0xff]
    %v1947 = vld [vmem:[#allocation2 + $0x60] sm:$0xff]
    %v1948 = vld [vmem:[#allocation2 + $0x68] sm:$0xff]
    %v1949 = vld [vmem:[#allocation2 + $0x70] sm:$0xff]
    %v1950 = vld [vmem:[#allocation2 + $0x78] sm:$0xff]
    %v1951 = vld [vmem:[#allocation2 + $0x80] sm:$0xff]
    %v1952 = vld [vmem:[#allocation2 + $0x88] sm:$0xff]
    %v1953 = vld [vmem:[#allocation2 + $0x90] sm:$0xff]
    %v1954 = vld [vmem:[#allocation2 + $0x98] sm:$0xff]
    %v1955 = vld [vmem:[#allocation2 + $0xa0] sm:$0xff]
    %v1956 = vld [vmem:[#allocation2 + $0xa8] sm:$0xff]
    %v1957 = vld [vmem:[#allocation2 + $0xb0] sm:$0xff]
    %v1958 = vld [vmem:[#allocation2 + $0xb8] sm:$0xff]
    %v1959 = vld [vmem:[#allocation2 + $0xc0] sm:$0xff]
    %v1960 = vld [vmem:[#allocation2 + $0xc8] sm:$0xff]
    %v1961 = vld [vmem:[#allocation2 + $0xd0] sm:$0xff]
    %v1962 = vld [vmem:[#allocation2 + $0xd8] sm:$0xff]
    %v1963 = vld [vmem:[#allocation2 + $0xe0] sm:$0xff]
    %v1964 = vld [vmem:[#allocation2 + $0xe8] sm:$0xff]
    %v1965 = vld [vmem:[#allocation2 + $0xf0] sm:$0xff]
    %v1966 = vld [vmem:[#allocation2 + $0xf8] sm:$0xff]
    %v1967 = vld [vmem:[#allocation2 + $0x100] sm:$0xff]
    %v1968 = vld [vmem:[#allocation2 + $0x108] sm:$0xff]
    %v1969 = vld [vmem:[#allocation2 + $0x110] sm:$0xff]
    %v1970 = vld [vmem:[#allocation2 + $0x118] sm:$0xff]
    %v1971 = vld [vmem:[#allocation2 + $0x120] sm:$0xff]
    %v1972 = vld [vmem:[#allocation2 + $0x128] sm:$0xff]
    %v1973 = vld [vmem:[#allocation2 + $0x130] sm:$0xff]
    %v1974 = vld [vmem:[#allocation2 + $0x138] sm:$0xff]
    %v1975 = vld [vmem:[#allocation2 + $0x140] sm:$0xff]
    %v1976 = vld [vmem:[#allocation2 + $0x148] sm:$0xff]
    %v1977 = vld [vmem:[#allocation2 + $0x150] sm:$0xff]
    %v1978 = vld [vmem:[#allocation2 + $0x158] sm:$0xff]
    %v1979 = vld [vmem:[#allocation2 + $0x160] sm:$0xff]
    %v1980 = vld [vmem:[#allocation2 + $0x168] sm:$0xff]
    %v1981 = vld [vmem:[#allocation2 + $0x170] sm:$0xff]
    %v1982 = vld [vmem:[#allocation2 + $0x178] sm:$0xff]
    %v1983 = vld [vmem:[#allocation2 + $0x180] sm:$0xff]
    %v1984 = vld [vmem:[#allocation2 + $0x188] sm:$0xff]
    %v1985 = vld [vmem:[#allocation2 + $0x190] sm:$0xff]
    %v1986 = vld [vmem:[#allocation2 + $0x198] sm:$0xff]
    %v1987 = vld [vmem:[#allocation2 + $0x1a0] sm:$0xff]
    %v1988 = vld [vmem:[#allocation2 + $0x1a8] sm:$0xff]
    %v1989 = vld [vmem:[#allocation2 + $0x1b0] sm:$0xff]
    %v1990 = vld [vmem:[#allocation2 + $0x1b8] sm:$0xff]
    %v1991 = vld [vmem:[#allocation2 + $0x1c0] sm:$0xff]
    %v1992 = vld [vmem:[#allocation2 + $0x1c8] sm:$0xff]
    %v1993 = vld [vmem:[#allocation2 + $0x1d0] sm:$0xff]
    %v1994 = vld [vmem:[#allocation2 + $0x1d8] sm:$0xff]
    %v1995 = vld [vmem:[#allocation2 + $0x1e0] sm:$0xff]
    %v1996 = vld [vmem:[#allocation2 + $0x1e8] sm:$0xff]
    %v1997 = vld [vmem:[#allocation2 + $0x1f0] sm:$0xff]
    %v1998 = vld [vmem:[#allocation2 + $0x1f8] sm:$0xff]
    %v1999 = vld [vmem:[%s4] sm:$0x1]
    %v2001 = vlaneseq
    %v2002 = vshrl.u32 %v2001, 7
    %v2003 = vsub.s32 0, %v2002
    %v2004 = vrot.slane %v1999, %v2003
    %v2006 = vadd.f32 %v1935, %v2004
    %v2007 = vadd.f32 %v1936, %v2004
    %v2008 = vadd.f32 %v1937, %v2004
    %v2009 = vadd.f32 %v1938, %v2004
    %v2010 = vadd.f32 %v1939, %v2004
    %v2011 = vadd.f32 %v1940, %v2004
    %v2012 = vadd.f32 %v1941, %v2004
    %v2013 = vadd.f32 %v1942, %v2004
    %v2014 = vadd.f32 %v1943, %v2004
    %v2015 = vadd.f32 %v1944, %v2004
    %v2016 = vadd.f32 %v1945, %v2004
    %v2017 = vadd.f32 %v1946, %v2004
    %v2018 = vadd.f32 %v1947, %v2004
    %v2019 = vadd.f32 %v1948, %v2004
    %v2020 = vadd.f32 %v1949, %v2004
    %v2021 = vadd.f32 %v1950, %v2004
    %v2022 = vadd.f32 %v1951, %v2004
    %v2023 = vadd.f32 %v1952, %v2004
    %v2024 = vadd.f32 %v1953, %v2004
    %v2025 = vadd.f32 %v1954, %v2004
    %v2026 = vadd.f32 %v1955, %v2004
    %v2027 = vadd.f32 %v1956, %v2004
    %v2028 = vadd.f32 %v1957, %v2004
    %v2029 = vadd.f32 %v1958, %v2004
    %v2030 = vadd.f32 %v1959, %v2004
    %v2031 = vadd.f32 %v1960, %v2004
    %v2032 = vadd.f32 %v1961, %v2004
    %v2033 = vadd.f32 %v1962, %v2004
    %v2034 = vadd.f32 %v1963, %v2004
    %v2035 = vadd.f32 %v1964, %v2004
    %v2036 = vadd.f32 %v1965, %v2004
    %v2037 = vadd.f32 %v1966, %v2004
    %v2038 = vadd.f32 %v1967, %v2004
    %v2039 = vadd.f32 %v1968, %v2004
    %v2040 = vadd.f32 %v1969, %v2004
    %v2041 = vadd.f32 %v1970, %v2004
    %v2042 = vadd.f32 %v1971, %v2004
    %v2043 = vadd.f32 %v1972, %v2004
    %v2044 = vadd.f32 %v1973, %v2004
    %v2045 = vadd.f32 %v1974, %v2004
    %v2046 = vadd.f32 %v1975, %v2004
    %v2047 = vadd.f32 %v1976, %v2004
    %v2048 = vadd.f32 %v1977, %v2004
    %v2049 = vadd.f32 %v1978, %v2004
    %v2050 = vadd.f32 %v1979, %v2004
    %v2051 = vadd.f32 %v1980, %v2004
    %v2052 = vadd.f32 %v1981, %v2004
    %v2053 = vadd.f32 %v1982, %v2004
    %v2054 = vadd.f32 %v1983, %v2004
    %v2055 = vadd.f32 %v1984, %v2004
    %v2056 = vadd.f32 %v1985, %v2004
    %v2057 = vadd.f32 %v1986, %v2004
    %v2058 = vadd.f32 %v1987, %v2004
    %v2059 = vadd.f32 %v1988, %v2004
    %v2060 = vadd.f32 %v1989, %v2004
    %v2061 = vadd.f32 %v1990, %v2004
    %v2062 = vadd.f32 %v1991, %v2004
    %v2063 = vadd.f32 %v1992, %v2004
    %v2064 = vadd.f32 %v1993, %v2004
    %v2065 = vadd.f32 %v1994, %v2004
    %v2066 = vadd.f32 %v1995, %v2004
    %v2067 = vadd.f32 %v1996, %v2004
    %v2068 = vadd.f32 %v1997, %v2004
    %v2069 = vadd.f32 %v1998, %v2004
    %v2070 = vmax.f32 %v2006, 0.0
    %v2071 = vmax.f32 %v2007, 0.0
    %v2072 = vmax.f32 %v2008, 0.0
    %v2073 = vmax.f32 %v2009, 0.0
    %v2074 = vmax.f32 %v2010, 0.0
    %v2075 = vmax.f32 %v2011, 0.0
    %v2076 = vmax.f32 %v2012, 0.0
    %v2077 = vmax.f32 %v2013, 0.0
    %v2078 = vmax.f32 %v2014, 0.0
    %v2079 = vmax.f32 %v2015, 0.0
    %v2080 = vmax.f32 %v2016, 0.0
    %v2081 = vmax.f32 %v2017, 0.0
    %v2082 = vmax.f32 %v2018, 0.0
    %v2083 = vmax.f32 %v2019, 0.0
    %v2084 = vmax.f32 %v2020, 0.0
    %v2085 = vmax.f32 %v2021, 0.0
    %v2086 = vmax.f32 %v2022, 0.0
    %v2087 = vmax.f32 %v2023, 0.0
    %v2088 = vmax.f32 %v2024, 0.0
    %v2089 = vmax.f32 %v2025, 0.0
    %v2090 = vmax.f32 %v2026, 0.0
    %v2091 = vmax.f32 %v2027, 0.0
    %v2092 = vmax.f32 %v2028, 0.0
    %v2093 = vmax.f32 %v2029, 0.0
    %v2094 = vmax.f32 %v2030, 0.0
    %v2095 = vmax.f32 %v2031, 0.0
    %v2096 = vmax.f32 %v2032, 0.0
    %v2097 = vmax.f32 %v2033, 0.0
    %v2098 = vmax.f32 %v2034, 0.0
    %v2099 = vmax.f32 %v2035, 0.0
    %v2100 = vmax.f32 %v2036, 0.0
    %v2101 = vmax.f32 %v2037, 0.0
    %v2102 = vmax.f32 %v2038, 0.0
    %v2103 = vmax.f32 %v2039, 0.0
    %v2104 = vmax.f32 %v2040, 0.0
    %v2105 = vmax.f32 %v2041, 0.0
    %v2106 = vmax.f32 %v2042, 0.0
    %v2107 = vmax.f32 %v2043, 0.0
    %v2108 = vmax.f32 %v2044, 0.0
    %v2109 = vmax.f32 %v2045, 0.0
    %v2110 = vmax.f32 %v2046, 0.0
    %v2111 = vmax.f32 %v2047, 0.0
    %v2112 = vmax.f32 %v2048, 0.0
    %v2113 = vmax.f32 %v2049, 0.0
    %v2114 = vmax.f32 %v2050, 0.0
    %v2115 = vmax.f32 %v2051, 0.0
    %v2116 = vmax.f32 %v2052, 0.0
    %v2117 = vmax.f32 %v2053, 0.0
    %v2118 = vmax.f32 %v2054, 0.0
    %v2119 = vmax.f32 %v2055, 0.0
    %v2120 = vmax.f32 %v2056, 0.0
    %v2121 = vmax.f32 %v2057, 0.0
    %v2122 = vmax.f32 %v2058, 0.0
    %v2123 = vmax.f32 %v2059, 0.0
    %v2124 = vmax.f32 %v2060, 0.0
    %v2125 = vmax.f32 %v2061, 0.0
    %v2126 = vmax.f32 %v2062, 0.0
    %v2127 = vmax.f32 %v2063, 0.0
    %v2128 = vmax.f32 %v2064, 0.0
    %v2129 = vmax.f32 %v2065, 0.0
    %v2130 = vmax.f32 %v2066, 0.0
    %v2131 = vmax.f32 %v2067, 0.0
    %v2132 = vmax.f32 %v2068, 0.0
    %v2133 = vmax.f32 %v2069, 0.0
    %v2134 = vpack.c.bf16 %v2071, %v2070
    %v2135 = vpack.c.bf16 %v2073, %v2072
    %v2136 = vpack.c.bf16 %v2075, %v2074
    %v2137 = vpack.c.bf16 %v2077, %v2076
    %v2138 = vpack.c.bf16 %v2079, %v2078
    %v2139 = vpack.c.bf16 %v2081, %v2080
    %v2140 = vpack.c.bf16 %v2083, %v2082
    %v2141 = vpack.c.bf16 %v2085, %v2084
    %v2142 = vpack.c.bf16 %v2087, %v2086
    %v2143 = vpack.c.bf16 %v2089, %v2088
    %v2144 = vpack.c.bf16 %v2091, %v2090
    %v2145 = vpack.c.bf16 %v2093, %v2092
    %v2146 = vpack.c.bf16 %v2095, %v2094
    %v2147 = vpack.c.bf16 %v2097, %v2096
    %v2148 = vpack.c.bf16 %v2099, %v2098
    %v2149 = vpack.c.bf16 %v2101, %v2100
    %v2150 = vpack.c.bf16 %v2103, %v2102
    %v2151 = vpack.c.bf16 %v2105, %v2104
    %v2152 = vpack.c.bf16 %v2107, %v2106
    %v2153 = vpack.c.bf16 %v2109, %v2108
    %v2154 = vpack.c.bf16 %v2111, %v2110
    %v2155 = vpack.c.bf16 %v2113, %v2112
    %v2156 = vpack.c.bf16 %v2115, %v2114
    %v2157 = vpack.c.bf16 %v2117, %v2116
    %v2158 = vpack.c.bf16 %v2119, %v2118
    %v2159 = vpack.c.bf16 %v2121, %v2120
    %v2160 = vpack.c.bf16 %v2123, %v2122
    %v2161 = vpack.c.bf16 %v2125, %v2124
    %v2162 = vpack.c.bf16 %v2127, %v2126
    %v2163 = vpack.c.bf16 %v2129, %v2128
    %v2164 = vpack.c.bf16 %v2131, %v2130
    %v2165 = vpack.c.bf16 %v2133, %v2132
    %v2198 = vunpack.c.l.b16 %v2134
    %v2199 = vunpack.c.h.b16 %v2134
    %v2200 = vunpack.c.l.b16 %v2135
    %v2201 = vunpack.c.h.b16 %v2135
    %v2202 = vunpack.c.l.b16 %v2136
    %v2203 = vunpack.c.h.b16 %v2136
    %v2204 = vunpack.c.l.b16 %v2137
    %v2205 = vunpack.c.h.b16 %v2137
    %v2206 = vunpack.c.l.b16 %v2138
    %v2207 = vunpack.c.h.b16 %v2138
    %v2208 = vunpack.c.l.b16 %v2139
    %v2209 = vunpack.c.h.b16 %v2139
    %v2210 = vunpack.c.l.b16 %v2140
    %v2211 = vunpack.c.h.b16 %v2140
    %v2212 = vunpack.c.l.b16 %v2141
    %v2213 = vunpack.c.h.b16 %v2141
    %v2214 = vunpack.c.l.b16 %v2142
    %v2215 = vunpack.c.h.b16 %v2142
    %v2216 = vunpack.c.l.b16 %v2143
    %v2217 = vunpack.c.h.b16 %v2143
    %v2218 = vunpack.c.l.b16 %v2144
    %v2219 = vunpack.c.h.b16 %v2144
    %v2220 = vunpack.c.l.b16 %v2145
    %v2221 = vunpack.c.h.b16 %v2145
    %v2222 = vunpack.c.l.b16 %v2146
    %v2223 = vunpack.c.h.b16 %v2146
    %v2224 = vunpack.c.l.b16 %v2147
    %v2225 = vunpack.c.h.b16 %v2147
    %v2226 = vunpack.c.l.b16 %v2148
    %v2227 = vunpack.c.h.b16 %v2148
    %v2228 = vunpack.c.l.b16 %v2149
    %v2229 = vunpack.c.h.b16 %v2149
    %v2230 = vunpack.c.l.b16 %v2150
    %v2231 = vunpack.c.h.b16 %v2150
    %v2232 = vunpack.c.l.b16 %v2151
    %v2233 = vunpack.c.h.b16 %v2151
    %v2234 = vunpack.c.l.b16 %v2152
    %v2235 = vunpack.c.h.b16 %v2152
    %v2236 = vunpack.c.l.b16 %v2153
    %v2237 = vunpack.c.h.b16 %v2153
    %v2238 = vunpack.c.l.b16 %v2154
    %v2239 = vunpack.c.h.b16 %v2154
    %v2240 = vunpack.c.l.b16 %v2155
    %v2241 = vunpack.c.h.b16 %v2155
    %v2242 = vunpack.c.l.b16 %v2156
    %v2243 = vunpack.c.h.b16 %v2156
    %v2244 = vunpack.c.l.b16 %v2157
    %v2245 = vunpack.c.h.b16 %v2157
    %v2246 = vunpack.c.l.b16 %v2158
    %v2247 = vunpack.c.h.b16 %v2158
    %v2248 = vunpack.c.l.b16 %v2159
    %v2249 = vunpack.c.h.b16 %v2159
    %v2250 = vunpack.c.l.b16 %v2160
    %v2251 = vunpack.c.h.b16 %v2160
    %v2252 = vunpack.c.l.b16 %v2161
    %v2253 = vunpack.c.h.b16 %v2161
    %v2254 = vunpack.c.l.b16 %v2162
    %v2255 = vunpack.c.h.b16 %v2162
    %v2256 = vunpack.c.l.b16 %v2163
    %v2257 = vunpack.c.h.b16 %v2163
    %v2258 = vunpack.c.l.b16 %v2164
    %v2259 = vunpack.c.h.b16 %v2164
    %v2260 = vunpack.c.l.b16 %v2165
    %v2261 = vunpack.c.h.b16 %v2165
    %v2262 = vpack.c.b16 %v2198, %v2198
    %v2263 = vpack.c.b16 %v2199, %v2199
    %v2264 = vpack.c.b16 %v2200, %v2200
    %v2265 = vpack.c.b16 %v2201, %v2201
    %v2266 = vpack.c.b16 %v2202, %v2202
    %v2267 = vpack.c.b16 %v2203, %v2203
    %v2268 = vpack.c.b16 %v2204, %v2204
    %v2269 = vpack.c.b16 %v2205, %v2205
    %v2270 = vpack.c.b16 %v2206, %v2206
    %v2271 = vpack.c.b16 %v2207, %v2207
    %v2272 = vpack.c.b16 %v2208, %v2208
    %v2273 = vpack.c.b16 %v2209, %v2209
    %v2274 = vpack.c.b16 %v2210, %v2210
    %v2275 = vpack.c.b16 %v2211, %v2211
    %v2276 = vpack.c.b16 %v2212, %v2212
    %v2277 = vpack.c.b16 %v2213, %v2213
    %v2278 = vpack.c.b16 %v2214, %v2214
    %v2279 = vpack.c.b16 %v2215, %v2215
    %v2280 = vpack.c.b16 %v2216, %v2216
    %v2281 = vpack.c.b16 %v2217, %v2217
    %v2282 = vpack.c.b16 %v2218, %v2218
    %v2283 = vpack.c.b16 %v2219, %v2219
    %v2284 = vpack.c.b16 %v2220, %v2220
    %v2285 = vpack.c.b16 %v2221, %v2221
    %v2286 = vpack.c.b16 %v2222, %v2222
    %v2287 = vpack.c.b16 %v2223, %v2223
    %v2288 = vpack.c.b16 %v2224, %v2224
    %v2289 = vpack.c.b16 %v2225, %v2225
    %v2290 = vpack.c.b16 %v2226, %v2226
    %v2291 = vpack.c.b16 %v2227, %v2227
    %v2292 = vpack.c.b16 %v2228, %v2228
    %v2293 = vpack.c.b16 %v2229, %v2229
    %v2294 = vpack.c.b16 %v2230, %v2230
    %v2295 = vpack.c.b16 %v2231, %v2231
    %v2296 = vpack.c.b16 %v2232, %v2232
    %v2297 = vpack.c.b16 %v2233, %v2233
    %v2298 = vpack.c.b16 %v2234, %v2234
    %v2299 = vpack.c.b16 %v2235, %v2235
    %v2300 = vpack.c.b16 %v2236, %v2236
    %v2301 = vpack.c.b16 %v2237, %v2237
    %v2302 = vpack.c.b16 %v2238, %v2238
    %v2303 = vpack.c.b16 %v2239, %v2239
    %v2304 = vpack.c.b16 %v2240, %v2240
    %v2305 = vpack.c.b16 %v2241, %v2241
    %v2306 = vpack.c.b16 %v2242, %v2242
    %v2307 = vpack.c.b16 %v2243, %v2243
    %v2308 = vpack.c.b16 %v2244, %v2244
    %v2309 = vpack.c.b16 %v2245, %v2245
    %v2310 = vpack.c.b16 %v2246, %v2246
    %v2311 = vpack.c.b16 %v2247, %v2247
    %v2312 = vpack.c.b16 %v2248, %v2248
    %v2313 = vpack.c.b16 %v2249, %v2249
    %v2314 = vpack.c.b16 %v2250, %v2250
    %v2315 = vpack.c.b16 %v2251, %v2251
    %v2316 = vpack.c.b16 %v2252, %v2252
    %v2317 = vpack.c.b16 %v2253, %v2253
    %v2318 = vpack.c.b16 %v2254, %v2254
    %v2319 = vpack.c.b16 %v2255, %v2255
    %v2320 = vpack.c.b16 %v2256, %v2256
    %v2321 = vpack.c.b16 %v2257, %v2257
    %v2322 = vpack.c.b16 %v2258, %v2258
    %v2323 = vpack.c.b16 %v2259, %v2259
    %v2324 = vpack.c.b16 %v2260, %v2260
    %v2325 = vpack.c.b16 %v2261, %v2261
    %2390 = vst [vmem:[%s5] sm:$0xf] %v2262
    %2391 = vst [vmem:[%s5 + $0x4] sm:$0xf] %v2263
    %2392 = vst [vmem:[%s5 + $0x8] sm:$0xf] %v2264
    %2393 = vst [vmem:[%s5 + $0xc] sm:$0xf] %v2265
    %2394 = vst [vmem:[%s5 + $0x10] sm:$0xf] %v2266
    %2395 = vst [vmem:[%s5 + $0x14] sm:$0xf] %v2267
    %2396 = vst [vmem:[%s5 + $0x18] sm:$0xf] %v2268
    %2397 = vst [vmem:[%s5 + $0x1c] sm:$0xf] %v2269
    %2398 = vst [vmem:[%s5 + $0x20] sm:$0xf] %v2270
    %2399 = vst [vmem:[%s5 + $0x24] sm:$0xf] %v2271
    %2400 = vst [vmem:[%s5 + $0x28] sm:$0xf] %v2272
    %2401 = vst [vmem:[%s5 + $0x2c] sm:$0xf] %v2273
    %2402 = vst [vmem:[%s5 + $0x30] sm:$0xf] %v2274
    %2403 = vst [vmem:[%s5 + $0x34] sm:$0xf] %v2275
    %2404 = vst [vmem:[%s5 + $0x38] sm:$0xf] %v2276
    %2405 = vst [vmem:[%s5 + $0x3c] sm:$0xf] %v2277
    %2406 = vst [vmem:[%s5 + $0x40] sm:$0xf] %v2278
    %2407 = vst [vmem:[%s5 + $0x44] sm:$0xf] %v2279
    %2408 = vst [vmem:[%s5 + $0x48] sm:$0xf] %v2280
    %2409 = vst [vmem:[%s5 + $0x4c] sm:$0xf] %v2281
    %2410 = vst [vmem:[%s5 + $0x50] sm:$0xf] %v2282
    %2411 = vst [vmem:[%s5 + $0x54] sm:$0xf] %v2283
    %2412 = vst [vmem:[%s5 + $0x58] sm:$0xf] %v2284
    %2413 = vst [vmem:[%s5 + $0x5c] sm:$0xf] %v2285
    %2414 = vst [vmem:[%s5 + $0x60] sm:$0xf] %v2286
    %2415 = vst [vmem:[%s5 + $0x64] sm:$0xf] %v2287
    %2416 = vst [vmem:[%s5 + $0x68] sm:$0xf] %v2288
    %2417 = vst [vmem:[%s5 + $0x6c] sm:$0xf] %v2289
    %2418 = vst [vmem:[%s5 + $0x70] sm:$0xf] %v2290
    %2419 = vst [vmem:[%s5 + $0x74] sm:$0xf] %v2291
    %2420 = vst [vmem:[%s5 + $0x78] sm:$0xf] %v2292
    %2421 = vst [vmem:[%s5 + $0x7c] sm:$0xf] %v2293
    %2422 = vst [vmem:[%s5 + $0x80] sm:$0xf] %v2294
    %2423 = vst [vmem:[%s5 + $0x84] sm:$0xf] %v2295
    %2424 = vst [vmem:[%s5 + $0x88] sm:$0xf] %v2296
    %2425 = vst [vmem:[%s5 + $0x8c] sm:$0xf] %v2297
    %2426 = vst [vmem:[%s5 + $0x90] sm:$0xf] %v2298
    %2427 = vst [vmem:[%s5 + $0x94] sm:$0xf] %v2299
    %2428 = vst [vmem:[%s5 + $0x98] sm:$0xf] %v2300
    %2429 = vst [vmem:[%s5 + $0x9c] sm:$0xf] %v2301
    %2430 = vst [vmem:[%s5 + $0xa0] sm:$0xf] %v2302
    %2431 = vst [vmem:[%s5 + $0xa4] sm:$0xf] %v2303
    %2432 = vst [vmem:[%s5 + $0xa8] sm:$0xf] %v2304
    %2433 = vst [vmem:[%s5 + $0xac] sm:$0xf] %v2305
    %2434 = vst [vmem:[%s5 + $0xb0] sm:$0xf] %v2306
    %2435 = vst [vmem:[%s5 + $0xb4] sm:$0xf] %v2307
    %2436 = vst [vmem:[%s5 + $0xb8] sm:$0xf] %v2308
    %2437 = vst [vmem:[%s5 + $0xbc] sm:$0xf] %v2309
    %2438 = vst [vmem:[%s5 + $0xc0] sm:$0xf] %v2310
    %2439 = vst [vmem:[%s5 + $0xc4] sm:$0xf] %v2311
    %2440 = vst [vmem:[%s5 + $0xc8] sm:$0xf] %v2312
    %2441 = vst [vmem:[%s5 + $0xcc] sm:$0xf] %v2313
    %2442 = vst [vmem:[%s5 + $0xd0] sm:$0xf] %v2314
    %2443 = vst [vmem:[%s5 + $0xd4] sm:$0xf] %v2315
    %2444 = vst [vmem:[%s5 + $0xd8] sm:$0xf] %v2316
    %2445 = vst [vmem:[%s5 + $0xdc] sm:$0xf] %v2317
    %2446 = vst [vmem:[%s5 + $0xe0] sm:$0xf] %v2318
    %2447 = vst [vmem:[%s5 + $0xe4] sm:$0xf] %v2319
    %2448 = vst [vmem:[%s5 + $0xe8] sm:$0xf] %v2320
    %2449 = vst [vmem:[%s5 + $0xec] sm:$0xf] %v2321
    %2450 = vst [vmem:[%s5 + $0xf0] sm:$0xf] %v2322
    %2451 = vst [vmem:[%s5 + $0xf4] sm:$0xf] %v2323
    %2452 = vst [vmem:[%s5 + $0xf8] sm:$0xf] %v2324
    %2453 = vst [vmem:[%s5 + $0xfc] sm:$0xf] %v2325
  $region25: #{gcn_forward.5} parent=0 // pred_fallthru
    _
  // Predicated region
  $region26: #{gcn_forward.5} parent=0 // pred_check
    _
  $region27: #{gcn_forward.5} parent=0 // pred_check_branch
    %2455 = sbr.rel (0) target = $region29
  $region28: #{gcn_forward.5} parent=0 // pred_region
    _
  $region29: #{gcn_forward.5} parent=0 // pred_fallthru
    _
  // Predicated region
  $region30: #{gcn_forward.5} parent=0 // pred_check
    _
  $region31: #{gcn_forward.5} parent=0 // pred_check_branch
    %2457 = sbr.rel (0) target = $region33
  $region32: #{gcn_forward.5} parent=0 // pred_region
    _
  $region33: #{gcn_forward.5} parent=0 // pred_fallthru
    _

// kernel: gcn_forward.7
$region0: #{gcn_forward.7}
  #allocation0 [shape = 'u32[]', space=smem, size = 0x4, offset = 0x4, fixed_abs, tag = 'smem constant byte address 0x4 - core index']
  #allocation1 [shape = 'u32[144,128]{1,0:T(1,128)}', space=vmem, size = 0x12000, scoped, tag = 'internal scratch']
  #allocation2 [shape = 'f32[512,128]{1,0:T(8,128)}', space=vmem, size = 0x40000, scoped, tag = 'scratch operand']
  #allocation3 [shape = 's32[1]{0}', space=sflag, size = 0x4, scoped, tag = 'scoped memory for gcn_forward.7']
  #allocation4 [shape = 's32[1,1]{1,0:T(1,128)S(6)}', space=smem, size = 0x200, scoped, tag = 'prefetched SMEM operand 0']
  #allocation5 [shape = 's32[1]{0:T(128)S(6)}', space=smem, size = 0x200, scoped, tag = 'prefetched SMEM operand 1']
  %s0 = inlined_call_operand.<no memory space> [shape: s32[1,1], index: 0, kind: input, shape index: {}]
  %s1 = inlined_call_operand.<no memory space> [shape: s32[1], index: 1, kind: input, shape index: {}]
  %s2 = inlined_call_operand.vmem [shape: bf16[512,512], index: 2, kind: input, shape index: {}]
  %s3 = inlined_call_operand.vmem [shape: bf16[512,128], index: 3, kind: input, shape index: {}]
  %s4 = inlined_call_operand.vmem [shape: f32[1,128], index: 4, kind: input, shape index: {}]
  %s5 = inlined_call_operand.vmem [shape: f32[512,128], index: 5, kind: output, shape index: {}]
  %s6 = sld [smem:[#allocation0]]
  $region34: #{gcn_forward.7} parent=0
    _
  %s8 = ssub.s32 1, %s6
  %s9 = scalar_select 0, %s8, %s6
  %10 = sst [smem:[#allocation4]] %s0
  %11 = sst [smem:[#allocation5]] %s1
  // Predicated region
  $region2: #{gcn_forward.7} parent=0 // pred_check
    _
  $region3: #{gcn_forward.7} parent=0 // pred_check_branch
    %13 = sbr.rel (0) target = $region5
  $region4: #{gcn_forward.7} parent=0 // pred_region
    %s14 = sadd.s32 0, 0
    %s15 = smul.u32 %s14, 128
    %s16 = sadd.s32 %s15, 0
    %s17 = sld [smem:[#allocation4 + %s16]]
    %s18 = smul.u32 4, %s17
    %p19 = scmp.lt.s32.totalorder %s18, 3
    %s20 = scalar_select %p19, %s18, 3
    %s21 = smul.addr %s20, 4
    %s22 = scalar_lea.vmem %s2, %s21
    %s23 = sadd.s32 0, 0
    %s24 = smul.u32 %s23, 128
    %s25 = sadd.s32 %s24, 0
    %s26 = sld [smem:[#allocation4 + %s25]]
    %s27 = smul.u32 4, %s26
  $region5: #{gcn_forward.7} parent=0 // pred_fallthru
    _
  // Predicated region
  $region6: #{gcn_forward.7} parent=0 // pred_check
    _
  $region7: #{gcn_forward.7} parent=0 // pred_check_branch
    %29 = sbr.rel (0) target = $region9
  $region8: #{gcn_forward.7} parent=0 // pred_region
    _
  $region9: #{gcn_forward.7} parent=0 // pred_fallthru
    _
  // Predicated region
  $region10: #{gcn_forward.7} parent=0 // pred_check
    _
  $region11: #{gcn_forward.7} parent=0 // pred_check_branch
    %31 = sbr.rel (0) target = $region13
  $region12: #{gcn_forward.7} parent=0 // pred_region
    _
  $region13: #{gcn_forward.7} parent=0 // pred_fallthru
    _
  %s32 = sadd.s32 0, 0
  %s33 = smul.u32 %s32, 128
  %s34 = sadd.s32 %s33, 0
  %s35 = sld [smem:[#allocation4 + %s34]]
  %s36 = smul.u32 4, %s35
  %p37 = scmp.lt.s32.totalorder %s36, 3
  %s38 = scalar_select %p37, %s36, 3
  %s39 = smul.addr %s38, 4
  %s40 = scalar_lea.vmem %s2, %s39
  %s41 = sadd.s32 0, 0
  %s42 = smul.u32 %s41, 128
  %s43 = sadd.s32 %s42, 0
  %s44 = sld [smem:[#allocation4 + %s43]]
  %s45 = smul.u32 4, %s44
  %p46 = scmp.lt.s32.totalorder %s45, 3
  %s47 = scalar_select %p46, %s45, 3
  %s48 = smul.addr %s47, 4
  %s49 = scalar_lea.vmem %s2, %s48
  %s50 = sadd.s32 0, 0
  %s51 = smul.u32 %s50, 128
  %s52 = sadd.s32 %s51, 0
  %s53 = sld [smem:[#allocation4 + %s52]]
  %s54 = smul.u32 4, %s53
  %p56 = scmp.eq.s32.totalorder 0, 0
  // Predicated region
  $region14: #{gcn_forward.7} parent=0 // pred_check
    %p57 = pneg %p56
  $region15: #{gcn_forward.7} parent=0 // pred_check_branch
    %59 = sbr.rel (%p57) target = $region17
  $region16: #{gcn_forward.7} parent=0 // pred_region
    %60 = vst [vmem:[#allocation2] sm:$0xff] 0.0
    %61 = vst [vmem:[#allocation2 + $0x8] sm:$0xff] 0.0
    %62 = vst [vmem:[#allocation2 + $0x10] sm:$0xff] 0.0
    %63 = vst [vmem:[#allocation2 + $0x18] sm:$0xff] 0.0
    %64 = vst [vmem:[#allocation2 + $0x20] sm:$0xff] 0.0
    %65 = vst [vmem:[#allocation2 + $0x28] sm:$0xff] 0.0
    %66 = vst [vmem:[#allocation2 + $0x30] sm:$0xff] 0.0
    %67 = vst [vmem:[#allocation2 + $0x38] sm:$0xff] 0.0
    %68 = vst [vmem:[#allocation2 + $0x40] sm:$0xff] 0.0
    %69 = vst [vmem:[#allocation2 + $0x48] sm:$0xff] 0.0
    %70 = vst [vmem:[#allocation2 + $0x50] sm:$0xff] 0.0
    %71 = vst [vmem:[#allocation2 + $0x58] sm:$0xff] 0.0
    %72 = vst [vmem:[#allocation2 + $0x60] sm:$0xff] 0.0
    %73 = vst [vmem:[#allocation2 + $0x68] sm:$0xff] 0.0
    %74 = vst [vmem:[#allocation2 + $0x70] sm:$0xff] 0.0
    %75 = vst [vmem:[#allocation2 + $0x78] sm:$0xff] 0.0
    %76 = vst [vmem:[#allocation2 + $0x80] sm:$0xff] 0.0
    %77 = vst [vmem:[#allocation2 + $0x88] sm:$0xff] 0.0
    %78 = vst [vmem:[#allocation2 + $0x90] sm:$0xff] 0.0
    %79 = vst [vmem:[#allocation2 + $0x98] sm:$0xff] 0.0
    %80 = vst [vmem:[#allocation2 + $0xa0] sm:$0xff] 0.0
    %81 = vst [vmem:[#allocation2 + $0xa8] sm:$0xff] 0.0
    %82 = vst [vmem:[#allocation2 + $0xb0] sm:$0xff] 0.0
    %83 = vst [vmem:[#allocation2 + $0xb8] sm:$0xff] 0.0
    %84 = vst [vmem:[#allocation2 + $0xc0] sm:$0xff] 0.0
    %85 = vst [vmem:[#allocation2 + $0xc8] sm:$0xff] 0.0
    %86 = vst [vmem:[#allocation2 + $0xd0] sm:$0xff] 0.0
    %87 = vst [vmem:[#allocation2 + $0xd8] sm:$0xff] 0.0
    %88 = vst [vmem:[#allocation2 + $0xe0] sm:$0xff] 0.0
    %89 = vst [vmem:[#allocation2 + $0xe8] sm:$0xff] 0.0
    %90 = vst [vmem:[#allocation2 + $0xf0] sm:$0xff] 0.0
    %91 = vst [vmem:[#allocation2 + $0xf8] sm:$0xff] 0.0
    %92 = vst [vmem:[#allocation2 + $0x100] sm:$0xff] 0.0
    %93 = vst [vmem:[#allocation2 + $0x108] sm:$0xff] 0.0
    %94 = vst [vmem:[#allocation2 + $0x110] sm:$0xff] 0.0
    %95 = vst [vmem:[#allocation2 + $0x118] sm:$0xff] 0.0
    %96 = vst [vmem:[#allocation2 + $0x120] sm:$0xff] 0.0
    %97 = vst [vmem:[#allocation2 + $0x128] sm:$0xff] 0.0
    %98 = vst [vmem:[#allocation2 + $0x130] sm:$0xff] 0.0
    %99 = vst [vmem:[#allocation2 + $0x138] sm:$0xff] 0.0
    %100 = vst [vmem:[#allocation2 + $0x140] sm:$0xff] 0.0
    %101 = vst [vmem:[#allocation2 + $0x148] sm:$0xff] 0.0
    %102 = vst [vmem:[#allocation2 + $0x150] sm:$0xff] 0.0
    %103 = vst [vmem:[#allocation2 + $0x158] sm:$0xff] 0.0
    %104 = vst [vmem:[#allocation2 + $0x160] sm:$0xff] 0.0
    %105 = vst [vmem:[#allocation2 + $0x168] sm:$0xff] 0.0
    %106 = vst [vmem:[#allocation2 + $0x170] sm:$0xff] 0.0
    %107 = vst [vmem:[#allocation2 + $0x178] sm:$0xff] 0.0
    %108 = vst [vmem:[#allocation2 + $0x180] sm:$0xff] 0.0
    %109 = vst [vmem:[#allocation2 + $0x188] sm:$0xff] 0.0
    %110 = vst [vmem:[#allocation2 + $0x190] sm:$0xff] 0.0
    %111 = vst [vmem:[#allocation2 + $0x198] sm:$0xff] 0.0
    %112 = vst [vmem:[#allocation2 + $0x1a0] sm:$0xff] 0.0
    %113 = vst [vmem:[#allocation2 + $0x1a8] sm:$0xff] 0.0
    %114 = vst [vmem:[#allocation2 + $0x1b0] sm:$0xff] 0.0
    %115 = vst [vmem:[#allocation2 + $0x1b8] sm:$0xff] 0.0
    %116 = vst [vmem:[#allocation2 + $0x1c0] sm:$0xff] 0.0
    %117 = vst [vmem:[#allocation2 + $0x1c8] sm:$0xff] 0.0
    %118 = vst [vmem:[#allocation2 + $0x1d0] sm:$0xff] 0.0
    %119 = vst [vmem:[#allocation2 + $0x1d8] sm:$0xff] 0.0
    %120 = vst [vmem:[#allocation2 + $0x1e0] sm:$0xff] 0.0
    %121 = vst [vmem:[#allocation2 + $0x1e8] sm:$0xff] 0.0
    %122 = vst [vmem:[#allocation2 + $0x1f0] sm:$0xff] 0.0
    %123 = vst [vmem:[#allocation2 + $0x1f8] sm:$0xff] 0.0
  $region17: #{gcn_forward.7} parent=0 // pred_fallthru
    _
  %s124 = sld [smem:[#allocation5]]
  %p125 = scmp.lt.s32.totalorder 0, %s124
  // Predicated region
  $region18: #{gcn_forward.7} parent=0 // pred_check
    %p126 = pneg %p125
  $region19: #{gcn_forward.7} parent=0 // pred_check_branch
    %128 = sbr.rel (%p126) target = $region21
  $region20: #{gcn_forward.7} parent=0 // pred_region
    %s129 = sadd.s32 0, 0
    %s130 = smul.u32 %s129, 128
    %s131 = sadd.s32 %s130, 0
    %s132 = sld [smem:[#allocation4 + %s131]]
    %s133 = smul.u32 %s132, 512
    %s134 = sshra.s32 %s133, 3
    %s135 = sand.u32 %s133, 7
    %s136 = smul.addr %s134, 4
    %s137 = scalar_lea.vmem %s3, %s136
    %v138 = vld [vmem:[%s137] sm:$0xf]
    %v139 = vld [vmem:[%s137 + $0x4] sm:$0xf]
    %v140 = vld [vmem:[%s137 + $0x8] sm:$0xf]
    %v141 = vld [vmem:[%s137 + $0xc] sm:$0xf]
    %v142 = vld [vmem:[%s137 + $0x10] sm:$0xf]
    %v143 = vld [vmem:[%s137 + $0x14] sm:$0xf]
    %v144 = vld [vmem:[%s137 + $0x18] sm:$0xf]
    %v145 = vld [vmem:[%s137 + $0x1c] sm:$0xf]
    %v146 = vld [vmem:[%s137 + $0x20] sm:$0xf]
    %v147 = vld [vmem:[%s137 + $0x24] sm:$0xf]
    %v148 = vld [vmem:[%s137 + $0x28] sm:$0xf]
    %v149 = vld [vmem:[%s137 + $0x2c] sm:$0xf]
    %v150 = vld [vmem:[%s137 + $0x30] sm:$0xf]
    %v151 = vld [vmem:[%s137 + $0x34] sm:$0xf]
    %v152 = vld [vmem:[%s137 + $0x38] sm:$0xf]
    %v153 = vld [vmem:[%s137 + $0x3c] sm:$0xf]
    %v154 = vld [vmem:[%s137 + $0x40] sm:$0xf]
    %v155 = vld [vmem:[%s137 + $0x44] sm:$0xf]
    %v156 = vld [vmem:[%s137 + $0x48] sm:$0xf]
    %v157 = vld [vmem:[%s137 + $0x4c] sm:$0xf]
    %v158 = vld [vmem:[%s137 + $0x50] sm:$0xf]
    %v159 = vld [vmem:[%s137 + $0x54] sm:$0xf]
    %v160 = vld [vmem:[%s137 + $0x58] sm:$0xf]
    %v161 = vld [vmem:[%s137 + $0x5c] sm:$0xf]
    %v162 = vld [vmem:[%s137 + $0x60] sm:$0xf]
    %v163 = vld [vmem:[%s137 + $0x64] sm:$0xf]
    %v164 = vld [vmem:[%s137 + $0x68] sm:$0xf]
    %v165 = vld [vmem:[%s137 + $0x6c] sm:$0xf]
    %v166 = vld [vmem:[%s137 + $0x70] sm:$0xf]
    %v167 = vld [vmem:[%s137 + $0x74] sm:$0xf]
    %v168 = vld [vmem:[%s137 + $0x78] sm:$0xf]
    %v169 = vld [vmem:[%s137 + $0x7c] sm:$0xf]
    %v170 = vld [vmem:[%s137 + $0x80] sm:$0xf]
    %v171 = vld [vmem:[%s137 + $0x84] sm:$0xf]
    %v172 = vld [vmem:[%s137 + $0x88] sm:$0xf]
    %v173 = vld [vmem:[%s137 + $0x8c] sm:$0xf]
    %v174 = vld [vmem:[%s137 + $0x90] sm:$0xf]
    %v175 = vld [vmem:[%s137 + $0x94] sm:$0xf]
    %v176 = vld [vmem:[%s137 + $0x98] sm:$0xf]
    %v177 = vld [vmem:[%s137 + $0x9c] sm:$0xf]
    %v178 = vld [vmem:[%s137 + $0xa0] sm:$0xf]
    %v179 = vld [vmem:[%s137 + $0xa4] sm:$0xf]
    %v180 = vld [vmem:[%s137 + $0xa8] sm:$0xf]
    %v181 = vld [vmem:[%s137 + $0xac] sm:$0xf]
    %v182 = vld [vmem:[%s137 + $0xb0] sm:$0xf]
    %v183 = vld [vmem:[%s137 + $0xb4] sm:$0xf]
    %v184 = vld [vmem:[%s137 + $0xb8] sm:$0xf]
    %v185 = vld [vmem:[%s137 + $0xbc] sm:$0xf]
    %v186 = vld [vmem:[%s137 + $0xc0] sm:$0xf]
    %v187 = vld [vmem:[%s137 + $0xc4] sm:$0xf]
    %v188 = vld [vmem:[%s137 + $0xc8] sm:$0xf]
    %v189 = vld [vmem:[%s137 + $0xcc] sm:$0xf]
    %v190 = vld [vmem:[%s137 + $0xd0] sm:$0xf]
    %v191 = vld [vmem:[%s137 + $0xd4] sm:$0xf]
    %v192 = vld [vmem:[%s137 + $0xd8] sm:$0xf]
    %v193 = vld [vmem:[%s137 + $0xdc] sm:$0xf]
    %v194 = vld [vmem:[%s137 + $0xe0] sm:$0xf]
    %v195 = vld [vmem:[%s137 + $0xe4] sm:$0xf]
    %v196 = vld [vmem:[%s137 + $0xe8] sm:$0xf]
    %v197 = vld [vmem:[%s137 + $0xec] sm:$0xf]
    %v198 = vld [vmem:[%s137 + $0xf0] sm:$0xf]
    %v199 = vld [vmem:[%s137 + $0xf4] sm:$0xf]
    %v200 = vld [vmem:[%s137 + $0xf8] sm:$0xf]
    %v201 = vld [vmem:[%s137 + $0xfc] sm:$0xf]
    %v202 = vld [vmem:[%s49] sm:$0xff]
    %v203 = vld [vmem:[%s49 + $0x8] sm:$0xff]
    %v204 = vld [vmem:[%s49 + $0x10] sm:$0xff]
    %v205 = vld [vmem:[%s49 + $0x18] sm:$0xff]
    %v206 = vld [vmem:[%s49 + $0x20] sm:$0xff]
    %v207 = vld [vmem:[%s49 + $0x28] sm:$0xff]
    %v208 = vld [vmem:[%s49 + $0x30] sm:$0xff]
    %v209 = vld [vmem:[%s49 + $0x38] sm:$0xff]
    %v210 = vld [vmem:[%s49 + $0x40] sm:$0xff]
    %v211 = vld [vmem:[%s49 + $0x48] sm:$0xff]
    %v212 = vld [vmem:[%s49 + $0x50] sm:$0xff]
    %v213 = vld [vmem:[%s49 + $0x58] sm:$0xff]
    %v214 = vld [vmem:[%s49 + $0x60] sm:$0xff]
    %v215 = vld [vmem:[%s49 + $0x68] sm:$0xff]
    %v216 = vld [vmem:[%s49 + $0x70] sm:$0xff]
    %v217 = vld [vmem:[%s49 + $0x78] sm:$0xff]
    %v218 = vld [vmem:[%s49 + $0x80] sm:$0xff]
    %v219 = vld [vmem:[%s49 + $0x88] sm:$0xff]
    %v220 = vld [vmem:[%s49 + $0x90] sm:$0xff]
    %v221 = vld [vmem:[%s49 + $0x98] sm:$0xff]
    %v222 = vld [vmem:[%s49 + $0xa0] sm:$0xff]
    %v223 = vld [vmem:[%s49 + $0xa8] sm:$0xff]
    %v224 = vld [vmem:[%s49 + $0xb0] sm:$0xff]
    %v225 = vld [vmem:[%s49 + $0xb8] sm:$0xff]
    %v226 = vld [vmem:[%s49 + $0xc0] sm:$0xff]
    %v227 = vld [vmem:[%s49 + $0xc8] sm:$0xff]
    %v228 = vld [vmem:[%s49 + $0xd0] sm:$0xff]
    %v229 = vld [vmem:[%s49 + $0xd8] sm:$0xff]
    %v230 = vld [vmem:[%s49 + $0xe0] sm:$0xff]
    %v231 = vld [vmem:[%s49 + $0xe8] sm:$0xff]
    %v232 = vld [vmem:[%s49 + $0xf0] sm:$0xff]
    %v233 = vld [vmem:[%s49 + $0xf8] sm:$0xff]
    %v234 = vld [vmem:[%s49 + $0x100] sm:$0xff]
    %v235 = vld [vmem:[%s49 + $0x108] sm:$0xff]
    %v236 = vld [vmem:[%s49 + $0x110] sm:$0xff]
    %v237 = vld [vmem:[%s49 + $0x118] sm:$0xff]
    %v238 = vld [vmem:[%s49 + $0x120] sm:$0xff]
    %v239 = vld [vmem:[%s49 + $0x128] sm:$0xff]
    %v240 = vld [vmem:[%s49 + $0x130] sm:$0xff]
    %v241 = vld [vmem:[%s49 + $0x138] sm:$0xff]
    %v242 = vld [vmem:[%s49 + $0x140] sm:$0xff]
    %v243 = vld [vmem:[%s49 + $0x148] sm:$0xff]
    %v244 = vld [vmem:[%s49 + $0x150] sm:$0xff]
    %v245 = vld [vmem:[%s49 + $0x158] sm:$0xff]
    %v246 = vld [vmem:[%s49 + $0x160] sm:$0xff]
    %v247 = vld [vmem:[%s49 + $0x168] sm:$0xff]
    %v248 = vld [vmem:[%s49 + $0x170] sm:$0xff]
    %v249 = vld [vmem:[%s49 + $0x178] sm:$0xff]
    %v250 = vld [vmem:[%s49 + $0x180] sm:$0xff]
    %v251 = vld [vmem:[%s49 + $0x188] sm:$0xff]
    %v252 = vld [vmem:[%s49 + $0x190] sm:$0xff]
    %v253 = vld [vmem:[%s49 + $0x198] sm:$0xff]
    %v254 = vld [vmem:[%s49 + $0x1a0] sm:$0xff]
    %v255 = vld [vmem:[%s49 + $0x1a8] sm:$0xff]
    %v256 = vld [vmem:[%s49 + $0x1b0] sm:$0xff]
    %v257 = vld [vmem:[%s49 + $0x1b8] sm:$0xff]
    %v258 = vld [vmem:[%s49 + $0x1c0] sm:$0xff]
    %v259 = vld [vmem:[%s49 + $0x1c8] sm:$0xff]
    %v260 = vld [vmem:[%s49 + $0x1d0] sm:$0xff]
    %v261 = vld [vmem:[%s49 + $0x1d8] sm:$0xff]
    %v262 = vld [vmem:[%s49 + $0x1e0] sm:$0xff]
    %v263 = vld [vmem:[%s49 + $0x1e8] sm:$0xff]
    %v264 = vld [vmem:[%s49 + $0x1f0] sm:$0xff]
    %v265 = vld [vmem:[%s49 + $0x1f8] sm:$0xff]
    %v266 = vld [vmem:[%s49 + $0x200] sm:$0xff]
    %v267 = vld [vmem:[%s49 + $0x208] sm:$0xff]
    %v268 = vld [vmem:[%s49 + $0x210] sm:$0xff]
    %v269 = vld [vmem:[%s49 + $0x218] sm:$0xff]
    %v270 = vld [vmem:[%s49 + $0x220] sm:$0xff]
    %v271 = vld [vmem:[%s49 + $0x228] sm:$0xff]
    %v272 = vld [vmem:[%s49 + $0x230] sm:$0xff]
    %v273 = vld [vmem:[%s49 + $0x238] sm:$0xff]
    %v274 = vld [vmem:[%s49 + $0x240] sm:$0xff]
    %v275 = vld [vmem:[%s49 + $0x248] sm:$0xff]
    %v276 = vld [vmem:[%s49 + $0x250] sm:$0xff]
    %v277 = vld [vmem:[%s49 + $0x258] sm:$0xff]
    %v278 = vld [vmem:[%s49 + $0x260] sm:$0xff]
    %v279 = vld [vmem:[%s49 + $0x268] sm:$0xff]
    %v280 = vld [vmem:[%s49 + $0x270] sm:$0xff]
    %v281 = vld [vmem:[%s49 + $0x278] sm:$0xff]
    %v282 = vld [vmem:[%s49 + $0x280] sm:$0xff]
    %v283 = vld [vmem:[%s49 + $0x288] sm:$0xff]
    %v284 = vld [vmem:[%s49 + $0x290] sm:$0xff]
    %v285 = vld [vmem:[%s49 + $0x298] sm:$0xff]
    %v286 = vld [vmem:[%s49 + $0x2a0] sm:$0xff]
    %v287 = vld [vmem:[%s49 + $0x2a8] sm:$0xff]
    %v288 = vld [vmem:[%s49 + $0x2b0] sm:$0xff]
    %v289 = vld [vmem:[%s49 + $0x2b8] sm:$0xff]
    %v290 = vld [vmem:[%s49 + $0x2c0] sm:$0xff]
    %v291 = vld [vmem:[%s49 + $0x2c8] sm:$0xff]
    %v292 = vld [vmem:[%s49 + $0x2d0] sm:$0xff]
    %v293 = vld [vmem:[%s49 + $0x2d8] sm:$0xff]
    %v294 = vld [vmem:[%s49 + $0x2e0] sm:$0xff]
    %v295 = vld [vmem:[%s49 + $0x2e8] sm:$0xff]
    %v296 = vld [vmem:[%s49 + $0x2f0] sm:$0xff]
    %v297 = vld [vmem:[%s49 + $0x2f8] sm:$0xff]
    %v298 = vld [vmem:[%s49 + $0x300] sm:$0xff]
    %v299 = vld [vmem:[%s49 + $0x308] sm:$0xff]
    %v300 = vld [vmem:[%s49 + $0x310] sm:$0xff]
    %v301 = vld [vmem:[%s49 + $0x318] sm:$0xff]
    %v302 = vld [vmem:[%s49 + $0x320] sm:$0xff]
    %v303 = vld [vmem:[%s49 + $0x328] sm:$0xff]
    %v304 = vld [vmem:[%s49 + $0x330] sm:$0xff]
    %v305 = vld [vmem:[%s49 + $0x338] sm:$0xff]
    %v306 = vld [vmem:[%s49 + $0x340] sm:$0xff]
    %v307 = vld [vmem:[%s49 + $0x348] sm:$0xff]
    %v308 = vld [vmem:[%s49 + $0x350] sm:$0xff]
    %v309 = vld [vmem:[%s49 + $0x358] sm:$0xff]
    %v310 = vld [vmem:[%s49 + $0x360] sm:$0xff]
    %v311 = vld [vmem:[%s49 + $0x368] sm:$0xff]
    %v312 = vld [vmem:[%s49 + $0x370] sm:$0xff]
    %v313 = vld [vmem:[%s49 + $0x378] sm:$0xff]
    %v314 = vld [vmem:[%s49 + $0x380] sm:$0xff]
    %v315 = vld [vmem:[%s49 + $0x388] sm:$0xff]
    %v316 = vld [vmem:[%s49 + $0x390] sm:$0xff]
    %v317 = vld [vmem:[%s49 + $0x398] sm:$0xff]
    %v318 = vld [vmem:[%s49 + $0x3a0] sm:$0xff]
    %v319 = vld [vmem:[%s49 + $0x3a8] sm:$0xff]
    %v320 = vld [vmem:[%s49 + $0x3b0] sm:$0xff]
    %v321 = vld [vmem:[%s49 + $0x3b8] sm:$0xff]
    %v322 = vld [vmem:[%s49 + $0x3c0] sm:$0xff]
    %v323 = vld [vmem:[%s49 + $0x3c8] sm:$0xff]
    %v324 = vld [vmem:[%s49 + $0x3d0] sm:$0xff]
    %v325 = vld [vmem:[%s49 + $0x3d8] sm:$0xff]
    %v326 = vld [vmem:[%s49 + $0x3e0] sm:$0xff]
    %v327 = vld [vmem:[%s49 + $0x3e8] sm:$0xff]
    %v328 = vld [vmem:[%s49 + $0x3f0] sm:$0xff]
    %v329 = vld [vmem:[%s49 + $0x3f8] sm:$0xff]
    %v330 = vld [vmem:[#allocation2] sm:$0xff]
    %v331 = vld [vmem:[#allocation2 + $0x8] sm:$0xff]
    %v332 = vld [vmem:[#allocation2 + $0x10] sm:$0xff]
    %v333 = vld [vmem:[#allocation2 + $0x18] sm:$0xff]
    %v334 = vld [vmem:[#allocation2 + $0x20] sm:$0xff]
    %v335 = vld [vmem:[#allocation2 + $0x28] sm:$0xff]
    %v336 = vld [vmem:[#allocation2 + $0x30] sm:$0xff]
    %v337 = vld [vmem:[#allocation2 + $0x38] sm:$0xff]
    %v338 = vld [vmem:[#allocation2 + $0x40] sm:$0xff]
    %v339 = vld [vmem:[#allocation2 + $0x48] sm:$0xff]
    %v340 = vld [vmem:[#allocation2 + $0x50] sm:$0xff]
    %v341 = vld [vmem:[#allocation2 + $0x58] sm:$0xff]
    %v342 = vld [vmem:[#allocation2 + $0x60] sm:$0xff]
    %v343 = vld [vmem:[#allocation2 + $0x68] sm:$0xff]
    %v344 = vld [vmem:[#allocation2 + $0x70] sm:$0xff]
    %v345 = vld [vmem:[#allocation2 + $0x78] sm:$0xff]
    %v346 = vld [vmem:[#allocation2 + $0x80] sm:$0xff]
    %v347 = vld [vmem:[#allocation2 + $0x88] sm:$0xff]
    %v348 = vld [vmem:[#allocation2 + $0x90] sm:$0xff]
    %v349 = vld [vmem:[#allocation2 + $0x98] sm:$0xff]
    %v350 = vld [vmem:[#allocation2 + $0xa0] sm:$0xff]
    %v351 = vld [vmem:[#allocation2 + $0xa8] sm:$0xff]
    %v352 = vld [vmem:[#allocation2 + $0xb0] sm:$0xff]
    %v353 = vld [vmem:[#allocation2 + $0xb8] sm:$0xff]
    %v354 = vld [vmem:[#allocation2 + $0xc0] sm:$0xff]
    %v355 = vld [vmem:[#allocation2 + $0xc8] sm:$0xff]
    %v356 = vld [vmem:[#allocation2 + $0xd0] sm:$0xff]
    %v357 = vld [vmem:[#allocation2 + $0xd8] sm:$0xff]
    %v358 = vld [vmem:[#allocation2 + $0xe0] sm:$0xff]
    %v359 = vld [vmem:[#allocation2 + $0xe8] sm:$0xff]
    %v360 = vld [vmem:[#allocation2 + $0xf0] sm:$0xff]
    %v361 = vld [vmem:[#allocation2 + $0xf8] sm:$0xff]
    %v362 = vld [vmem:[#allocation2 + $0x100] sm:$0xff]
    %v363 = vld [vmem:[#allocation2 + $0x108] sm:$0xff]
    %v364 = vld [vmem:[#allocation2 + $0x110] sm:$0xff]
    %v365 = vld [vmem:[#allocation2 + $0x118] sm:$0xff]
    %v366 = vld [vmem:[#allocation2 + $0x120] sm:$0xff]
    %v367 = vld [vmem:[#allocation2 + $0x128] sm:$0xff]
    %v368 = vld [vmem:[#allocation2 + $0x130] sm:$0xff]
    %v369 = vld [vmem:[#allocation2 + $0x138] sm:$0xff]
    %v370 = vld [vmem:[#allocation2 + $0x140] sm:$0xff]
    %v371 = vld [vmem:[#allocation2 + $0x148] sm:$0xff]
    %v372 = vld [vmem:[#allocation2 + $0x150] sm:$0xff]
    %v373 = vld [vmem:[#allocation2 + $0x158] sm:$0xff]
    %v374 = vld [vmem:[#allocation2 + $0x160] sm:$0xff]
    %v375 = vld [vmem:[#allocation2 + $0x168] sm:$0xff]
    %v376 = vld [vmem:[#allocation2 + $0x170] sm:$0xff]
    %v377 = vld [vmem:[#allocation2 + $0x178] sm:$0xff]
    %v378 = vld [vmem:[#allocation2 + $0x180] sm:$0xff]
    %v379 = vld [vmem:[#allocation2 + $0x188] sm:$0xff]
    %v380 = vld [vmem:[#allocation2 + $0x190] sm:$0xff]
    %v381 = vld [vmem:[#allocation2 + $0x198] sm:$0xff]
    %v382 = vld [vmem:[#allocation2 + $0x1a0] sm:$0xff]
    %v383 = vld [vmem:[#allocation2 + $0x1a8] sm:$0xff]
    %v384 = vld [vmem:[#allocation2 + $0x1b0] sm:$0xff]
    %v385 = vld [vmem:[#allocation2 + $0x1b8] sm:$0xff]
    %v386 = vld [vmem:[#allocation2 + $0x1c0] sm:$0xff]
    %v387 = vld [vmem:[#allocation2 + $0x1c8] sm:$0xff]
    %v388 = vld [vmem:[#allocation2 + $0x1d0] sm:$0xff]
    %v389 = vld [vmem:[#allocation2 + $0x1d8] sm:$0xff]
    %v390 = vld [vmem:[#allocation2 + $0x1e0] sm:$0xff]
    %v391 = vld [vmem:[#allocation2 + $0x1e8] sm:$0xff]
    %v392 = vld [vmem:[#allocation2 + $0x1f0] sm:$0xff]
    %v393 = vld [vmem:[#allocation2 + $0x1f8] sm:$0xff]
    %v522 = vunpack.c.l.b16 %v202
    %v523 = vunpack.c.h.b16 %v202
    %v524 = vunpack.c.l.b16 %v203
    %v525 = vunpack.c.h.b16 %v203
    %v526 = vunpack.c.l.b16 %v204
    %v527 = vunpack.c.h.b16 %v204
    %v528 = vunpack.c.l.b16 %v205
    %v529 = vunpack.c.h.b16 %v205
    %v530 = vunpack.c.l.b16 %v206
    %v531 = vunpack.c.h.b16 %v206
    %v532 = vunpack.c.l.b16 %v207
    %v533 = vunpack.c.h.b16 %v207
    %v534 = vunpack.c.l.b16 %v208
    %v535 = vunpack.c.h.b16 %v208
    %v536 = vunpack.c.l.b16 %v209
    %v537 = vunpack.c.h.b16 %v209
    %v538 = vunpack.c.l.b16 %v210
    %v539 = vunpack.c.h.b16 %v210
    %v540 = vunpack.c.l.b16 %v211
    %v541 = vunpack.c.h.b16 %v211
    %v542 = vunpack.c.l.b16 %v212
    %v543 = vunpack.c.h.b16 %v212
    %v544 = vunpack.c.l.b16 %v213
    %v545 = vunpack.c.h.b16 %v213
    %v546 = vunpack.c.l.b16 %v214
    %v547 = vunpack.c.h.b16 %v214
    %v548 = vunpack.c.l.b16 %v215
    %v549 = vunpack.c.h.b16 %v215
    %v550 = vunpack.c.l.b16 %v216
    %v551 = vunpack.c.h.b16 %v216
    %v552 = vunpack.c.l.b16 %v217
    %v553 = vunpack.c.h.b16 %v217
    %v554 = vunpack.c.l.b16 %v218
    %v555 = vunpack.c.h.b16 %v218
    %v556 = vunpack.c.l.b16 %v219
    %v557 = vunpack.c.h.b16 %v219
    %v558 = vunpack.c.l.b16 %v220
    %v559 = vunpack.c.h.b16 %v220
    %v560 = vunpack.c.l.b16 %v221
    %v561 = vunpack.c.h.b16 %v221
    %v562 = vunpack.c.l.b16 %v222
    %v563 = vunpack.c.h.b16 %v222
    %v564 = vunpack.c.l.b16 %v223
    %v565 = vunpack.c.h.b16 %v223
    %v566 = vunpack.c.l.b16 %v224
    %v567 = vunpack.c.h.b16 %v224
    %v568 = vunpack.c.l.b16 %v225
    %v569 = vunpack.c.h.b16 %v225
    %v570 = vunpack.c.l.b16 %v226
    %v571 = vunpack.c.h.b16 %v226
    %v572 = vunpack.c.l.b16 %v227
    %v573 = vunpack.c.h.b16 %v227
    %v574 = vunpack.c.l.b16 %v228
    %v575 = vunpack.c.h.b16 %v228
    %v576 = vunpack.c.l.b16 %v229
    %v577 = vunpack.c.h.b16 %v229
    %v578 = vunpack.c.l.b16 %v230
    %v579 = vunpack.c.h.b16 %v230
    %v580 = vunpack.c.l.b16 %v231
    %v581 = vunpack.c.h.b16 %v231
    %v582 = vunpack.c.l.b16 %v232
    %v583 = vunpack.c.h.b16 %v232
    %v584 = vunpack.c.l.b16 %v233
    %v585 = vunpack.c.h.b16 %v233
    %v586 = vunpack.c.l.b16 %v234
    %v587 = vunpack.c.h.b16 %v234
    %v588 = vunpack.c.l.b16 %v235
    %v589 = vunpack.c.h.b16 %v235
    %v590 = vunpack.c.l.b16 %v236
    %v591 = vunpack.c.h.b16 %v236
    %v592 = vunpack.c.l.b16 %v237
    %v593 = vunpack.c.h.b16 %v237
    %v594 = vunpack.c.l.b16 %v238
    %v595 = vunpack.c.h.b16 %v238
    %v596 = vunpack.c.l.b16 %v239
    %v597 = vunpack.c.h.b16 %v239
    %v598 = vunpack.c.l.b16 %v240
    %v599 = vunpack.c.h.b16 %v240
    %v600 = vunpack.c.l.b16 %v241
    %v601 = vunpack.c.h.b16 %v241
    %v602 = vunpack.c.l.b16 %v242
    %v603 = vunpack.c.h.b16 %v242
    %v604 = vunpack.c.l.b16 %v243
    %v605 = vunpack.c.h.b16 %v243
    %v606 = vunpack.c.l.b16 %v244
    %v607 = vunpack.c.h.b16 %v244
    %v608 = vunpack.c.l.b16 %v245
    %v609 = vunpack.c.h.b16 %v245
    %v610 = vunpack.c.l.b16 %v246
    %v611 = vunpack.c.h.b16 %v246
    %v612 = vunpack.c.l.b16 %v247
    %v613 = vunpack.c.h.b16 %v247
    %v614 = vunpack.c.l.b16 %v248
    %v615 = vunpack.c.h.b16 %v248
    %v616 = vunpack.c.l.b16 %v249
    %v617 = vunpack.c.h.b16 %v249
    %v618 = vunpack.c.l.b16 %v250
    %v619 = vunpack.c.h.b16 %v250
    %v620 = vunpack.c.l.b16 %v251
    %v621 = vunpack.c.h.b16 %v251
    %v622 = vunpack.c.l.b16 %v252
    %v623 = vunpack.c.h.b16 %v252
    %v624 = vunpack.c.l.b16 %v253
    %v625 = vunpack.c.h.b16 %v253
    %v626 = vunpack.c.l.b16 %v254
    %v627 = vunpack.c.h.b16 %v254
    %v628 = vunpack.c.l.b16 %v255
    %v629 = vunpack.c.h.b16 %v255
    %v630 = vunpack.c.l.b16 %v256
    %v631 = vunpack.c.h.b16 %v256
    %v632 = vunpack.c.l.b16 %v257
    %v633 = vunpack.c.h.b16 %v257
    %v634 = vunpack.c.l.b16 %v258
    %v635 = vunpack.c.h.b16 %v258
    %v636 = vunpack.c.l.b16 %v259
    %v637 = vunpack.c.h.b16 %v259
    %v638 = vunpack.c.l.b16 %v260
    %v639 = vunpack.c.h.b16 %v260
    %v640 = vunpack.c.l.b16 %v261
    %v641 = vunpack.c.h.b16 %v261
    %v642 = vunpack.c.l.b16 %v262
    %v643 = vunpack.c.h.b16 %v262
    %v644 = vunpack.c.l.b16 %v263
    %v645 = vunpack.c.h.b16 %v263
    %v646 = vunpack.c.l.b16 %v264
    %v647 = vunpack.c.h.b16 %v264
    %v648 = vunpack.c.l.b16 %v265
    %v649 = vunpack.c.h.b16 %v265
    %v650 = vunpack.c.l.b16 %v266
    %v651 = vunpack.c.h.b16 %v266
    %v652 = vunpack.c.l.b16 %v267
    %v653 = vunpack.c.h.b16 %v267
    %v654 = vunpack.c.l.b16 %v268
    %v655 = vunpack.c.h.b16 %v268
    %v656 = vunpack.c.l.b16 %v269
    %v657 = vunpack.c.h.b16 %v269
    %v658 = vunpack.c.l.b16 %v270
    %v659 = vunpack.c.h.b16 %v270
    %v660 = vunpack.c.l.b16 %v271
    %v661 = vunpack.c.h.b16 %v271
    %v662 = vunpack.c.l.b16 %v272
    %v663 = vunpack.c.h.b16 %v272
    %v664 = vunpack.c.l.b16 %v273
    %v665 = vunpack.c.h.b16 %v273
    %v666 = vunpack.c.l.b16 %v274
    %v667 = vunpack.c.h.b16 %v274
    %v668 = vunpack.c.l.b16 %v275
    %v669 = vunpack.c.h.b16 %v275
    %v670 = vunpack.c.l.b16 %v276
    %v671 = vunpack.c.h.b16 %v276
    %v672 = vunpack.c.l.b16 %v277
    %v673 = vunpack.c.h.b16 %v277
    %v674 = vunpack.c.l.b16 %v278
    %v675 = vunpack.c.h.b16 %v278
    %v676 = vunpack.c.l.b16 %v279
    %v677 = vunpack.c.h.b16 %v279
    %v678 = vunpack.c.l.b16 %v280
    %v679 = vunpack.c.h.b16 %v280
    %v680 = vunpack.c.l.b16 %v281
    %v681 = vunpack.c.h.b16 %v281
    %v682 = vunpack.c.l.b16 %v282
    %v683 = vunpack.c.h.b16 %v282
    %v684 = vunpack.c.l.b16 %v283
    %v685 = vunpack.c.h.b16 %v283
    %v686 = vunpack.c.l.b16 %v284
    %v687 = vunpack.c.h.b16 %v284
    %v688 = vunpack.c.l.b16 %v285
    %v689 = vunpack.c.h.b16 %v285
    %v690 = vunpack.c.l.b16 %v286
    %v691 = vunpack.c.h.b16 %v286
    %v692 = vunpack.c.l.b16 %v287
    %v693 = vunpack.c.h.b16 %v287
    %v694 = vunpack.c.l.b16 %v288
    %v695 = vunpack.c.h.b16 %v288
    %v696 = vunpack.c.l.b16 %v289
    %v697 = vunpack.c.h.b16 %v289
    %v698 = vunpack.c.l.b16 %v290
    %v699 = vunpack.c.h.b16 %v290
    %v700 = vunpack.c.l.b16 %v291
    %v701 = vunpack.c.h.b16 %v291
    %v702 = vunpack.c.l.b16 %v292
    %v703 = vunpack.c.h.b16 %v292
    %v704 = vunpack.c.l.b16 %v293
    %v705 = vunpack.c.h.b16 %v293
    %v706 = vunpack.c.l.b16 %v294
    %v707 = vunpack.c.h.b16 %v294
    %v708 = vunpack.c.l.b16 %v295
    %v709 = vunpack.c.h.b16 %v295
    %v710 = vunpack.c.l.b16 %v296
    %v711 = vunpack.c.h.b16 %v296
    %v712 = vunpack.c.l.b16 %v297
    %v713 = vunpack.c.h.b16 %v297
    %v714 = vunpack.c.l.b16 %v298
    %v715 = vunpack.c.h.b16 %v298
    %v716 = vunpack.c.l.b16 %v299
    %v717 = vunpack.c.h.b16 %v299
    %v718 = vunpack.c.l.b16 %v300
    %v719 = vunpack.c.h.b16 %v300
    %v720 = vunpack.c.l.b16 %v301
    %v721 = vunpack.c.h.b16 %v301
    %v722 = vunpack.c.l.b16 %v302
    %v723 = vunpack.c.h.b16 %v302
    %v724 = vunpack.c.l.b16 %v303
    %v725 = vunpack.c.h.b16 %v303
    %v726 = vunpack.c.l.b16 %v304
    %v727 = vunpack.c.h.b16 %v304
    %v728 = vunpack.c.l.b16 %v305
    %v729 = vunpack.c.h.b16 %v305
    %v730 = vunpack.c.l.b16 %v306
    %v731 = vunpack.c.h.b16 %v306
    %v732 = vunpack.c.l.b16 %v307
    %v733 = vunpack.c.h.b16 %v307
    %v734 = vunpack.c.l.b16 %v308
    %v735 = vunpack.c.h.b16 %v308
    %v736 = vunpack.c.l.b16 %v309
    %v737 = vunpack.c.h.b16 %v309
    %v738 = vunpack.c.l.b16 %v310
    %v739 = vunpack.c.h.b16 %v310
    %v740 = vunpack.c.l.b16 %v311
    %v741 = vunpack.c.h.b16 %v311
    %v742 = vunpack.c.l.b16 %v312
    %v743 = vunpack.c.h.b16 %v312
    %v744 = vunpack.c.l.b16 %v313
    %v745 = vunpack.c.h.b16 %v313
    %v746 = vunpack.c.l.b16 %v314
    %v747 = vunpack.c.h.b16 %v314
    %v748 = vunpack.c.l.b16 %v315
    %v749 = vunpack.c.h.b16 %v315
    %v750 = vunpack.c.l.b16 %v316
    %v751 = vunpack.c.h.b16 %v316
    %v752 = vunpack.c.l.b16 %v317
    %v753 = vunpack.c.h.b16 %v317
    %v754 = vunpack.c.l.b16 %v318
    %v755 = vunpack.c.h.b16 %v318
    %v756 = vunpack.c.l.b16 %v319
    %v757 = vunpack.c.h.b16 %v319
    %v758 = vunpack.c.l.b16 %v320
    %v759 = vunpack.c.h.b16 %v320
    %v760 = vunpack.c.l.b16 %v321
    %v761 = vunpack.c.h.b16 %v321
    %v762 = vunpack.c.l.b16 %v322
    %v763 = vunpack.c.h.b16 %v322
    %v764 = vunpack.c.l.b16 %v323
    %v765 = vunpack.c.h.b16 %v323
    %v766 = vunpack.c.l.b16 %v324
    %v767 = vunpack.c.h.b16 %v324
    %v768 = vunpack.c.l.b16 %v325
    %v769 = vunpack.c.h.b16 %v325
    %v770 = vunpack.c.l.b16 %v326
    %v771 = vunpack.c.h.b16 %v326
    %v772 = vunpack.c.l.b16 %v327
    %v773 = vunpack.c.h.b16 %v327
    %v774 = vunpack.c.l.b16 %v328
    %v775 = vunpack.c.h.b16 %v328
    %v776 = vunpack.c.l.b16 %v329
    %v777 = vunpack.c.h.b16 %v329
    %v778 = vpack.c.b16 %v526, %v522
    %v779 = vpack.c.b16 %v527, %v523
    %v780 = vpack.c.b16 %v528, %v524
    %v781 = vpack.c.b16 %v529, %v525
    %v782 = vpack.c.b16 %v534, %v530
    %v783 = vpack.c.b16 %v535, %v531
    %v784 = vpack.c.b16 %v536, %v532
    %v785 = vpack.c.b16 %v537, %v533
    %v786 = vpack.c.b16 %v542, %v538
    %v787 = vpack.c.b16 %v543, %v539
    %v788 = vpack.c.b16 %v544, %v540
    %v789 = vpack.c.b16 %v545, %v541
    %v790 = vpack.c.b16 %v550, %v546
    %v791 = vpack.c.b16 %v551, %v547
    %v792 = vpack.c.b16 %v552, %v548
    %v793 = vpack.c.b16 %v553, %v549
    %v794 = vpack.c.b16 %v558, %v554
    %v795 = vpack.c.b16 %v559, %v555
    %v796 = vpack.c.b16 %v560, %v556
    %v797 = vpack.c.b16 %v561, %v557
    %v798 = vpack.c.b16 %v566, %v562
    %v799 = vpack.c.b16 %v567, %v563
    %v800 = vpack.c.b16 %v568, %v564
    %v801 = vpack.c.b16 %v569, %v565
    %v802 = vpack.c.b16 %v574, %v570
    %v803 = vpack.c.b16 %v575, %v571
    %v804 = vpack.c.b16 %v576, %v572
    %v805 = vpack.c.b16 %v577, %v573
    %v806 = vpack.c.b16 %v582, %v578
    %v807 = vpack.c.b16 %v583, %v579
    %v808 = vpack.c.b16 %v584, %v580
    %v809 = vpack.c.b16 %v585, %v581
    %v810 = vpack.c.b16 %v590, %v586
    %v811 = vpack.c.b16 %v591, %v587
    %v812 = vpack.c.b16 %v592, %v588
    %v813 = vpack.c.b16 %v593, %v589
    %v814 = vpack.c.b16 %v598, %v594
    %v815 = vpack.c.b16 %v599, %v595
    %v816 = vpack.c.b16 %v600, %v596
    %v817 = vpack.c.b16 %v601, %v597
    %v818 = vpack.c.b16 %v606, %v602
    %v819 = vpack.c.b16 %v607, %v603
    %v820 = vpack.c.b16 %v608, %v604
    %v821 = vpack.c.b16 %v609, %v605
    %v822 = vpack.c.b16 %v614, %v610
    %v823 = vpack.c.b16 %v615, %v611
    %v824 = vpack.c.b16 %v616, %v612
    %v825 = vpack.c.b16 %v617, %v613
    %v826 = vpack.c.b16 %v622, %v618
    %v827 = vpack.c.b16 %v623, %v619
    %v828 = vpack.c.b16 %v624, %v620
    %v829 = vpack.c.b16 %v625, %v621
    %v830 = vpack.c.b16 %v630, %v626
    %v831 = vpack.c.b16 %v631, %v627
    %v832 = vpack.c.b16 %v632, %v628
    %v833 = vpack.c.b16 %v633, %v629
    %v834 = vpack.c.b16 %v638, %v634
    %v835 = vpack.c.b16 %v639, %v635
    %v836 = vpack.c.b16 %v640, %v636
    %v837 = vpack.c.b16 %v641, %v637
    %v838 = vpack.c.b16 %v646, %v642
    %v839 = vpack.c.b16 %v647, %v643
    %v840 = vpack.c.b16 %v648, %v644
    %v841 = vpack.c.b16 %v649, %v645
    %v842 = vpack.c.b16 %v654, %v650
    %v843 = vpack.c.b16 %v655, %v651
    %v844 = vpack.c.b16 %v656, %v652
    %v845 = vpack.c.b16 %v657, %v653
    %v846 = vpack.c.b16 %v662, %v658
    %v847 = vpack.c.b16 %v663, %v659
    %v848 = vpack.c.b16 %v664, %v660
    %v849 = vpack.c.b16 %v665, %v661
    %v850 = vpack.c.b16 %v670, %v666
    %v851 = vpack.c.b16 %v671, %v667
    %v852 = vpack.c.b16 %v672, %v668
    %v853 = vpack.c.b16 %v673, %v669
    %v854 = vpack.c.b16 %v678, %v674
    %v855 = vpack.c.b16 %v679, %v675
    %v856 = vpack.c.b16 %v680, %v676
    %v857 = vpack.c.b16 %v681, %v677
    %v858 = vpack.c.b16 %v686, %v682
    %v859 = vpack.c.b16 %v687, %v683
    %v860 = vpack.c.b16 %v688, %v684
    %v861 = vpack.c.b16 %v689, %v685
    %v862 = vpack.c.b16 %v694, %v690
    %v863 = vpack.c.b16 %v695, %v691
    %v864 = vpack.c.b16 %v696, %v692
    %v865 = vpack.c.b16 %v697, %v693
    %v866 = vpack.c.b16 %v702, %v698
    %v867 = vpack.c.b16 %v703, %v699
    %v868 = vpack.c.b16 %v704, %v700
    %v869 = vpack.c.b16 %v705, %v701
    %v870 = vpack.c.b16 %v710, %v706
    %v871 = vpack.c.b16 %v711, %v707
    %v872 = vpack.c.b16 %v712, %v708
    %v873 = vpack.c.b16 %v713, %v709
    %v874 = vpack.c.b16 %v718, %v714
    %v875 = vpack.c.b16 %v719, %v715
    %v876 = vpack.c.b16 %v720, %v716
    %v877 = vpack.c.b16 %v721, %v717
    %v878 = vpack.c.b16 %v726, %v722
    %v879 = vpack.c.b16 %v727, %v723
    %v880 = vpack.c.b16 %v728, %v724
    %v881 = vpack.c.b16 %v729, %v725
    %v882 = vpack.c.b16 %v734, %v730
    %v883 = vpack.c.b16 %v735, %v731
    %v884 = vpack.c.b16 %v736, %v732
    %v885 = vpack.c.b16 %v737, %v733
    %v886 = vpack.c.b16 %v742, %v738
    %v887 = vpack.c.b16 %v743, %v739
    %v888 = vpack.c.b16 %v744, %v740
    %v889 = vpack.c.b16 %v745, %v741
    %v890 = vpack.c.b16 %v750, %v746
    %v891 = vpack.c.b16 %v751, %v747
    %v892 = vpack.c.b16 %v752, %v748
    %v893 = vpack.c.b16 %v753, %v749
    %v894 = vpack.c.b16 %v758, %v754
    %v895 = vpack.c.b16 %v759, %v755
    %v896 = vpack.c.b16 %v760, %v756
    %v897 = vpack.c.b16 %v761, %v757
    %v898 = vpack.c.b16 %v766, %v762
    %v899 = vpack.c.b16 %v767, %v763
    %v900 = vpack.c.b16 %v768, %v764
    %v901 = vpack.c.b16 %v769, %v765
    %v902 = vpack.c.b16 %v774, %v770
    %v903 = vpack.c.b16 %v775, %v771
    %v904 = vpack.c.b16 %v776, %v772
    %v905 = vpack.c.b16 %v777, %v773
    %v1098 = vunpack.c.l.b16 %v138
    %v1099 = vunpack.c.l.b16 %v139
    %v1100 = vunpack.c.l.b16 %v140
    %v1101 = vunpack.c.l.b16 %v141
    %v1102 = vunpack.c.l.b16 %v142
    %v1103 = vunpack.c.l.b16 %v143
    %v1104 = vunpack.c.l.b16 %v144
    %v1105 = vunpack.c.l.b16 %v145
    %v1106 = vunpack.c.l.b16 %v146
    %v1107 = vunpack.c.l.b16 %v147
    %v1108 = vunpack.c.l.b16 %v148
    %v1109 = vunpack.c.l.b16 %v149
    %v1110 = vunpack.c.l.b16 %v150
    %v1111 = vunpack.c.l.b16 %v151
    %v1112 = vunpack.c.l.b16 %v152
    %v1113 = vunpack.c.l.b16 %v153
    %v1114 = vunpack.c.l.b16 %v154
    %v1115 = vunpack.c.l.b16 %v155
    %v1116 = vunpack.c.l.b16 %v156
    %v1117 = vunpack.c.l.b16 %v157
    %v1118 = vunpack.c.l.b16 %v158
    %v1119 = vunpack.c.l.b16 %v159
    %v1120 = vunpack.c.l.b16 %v160
    %v1121 = vunpack.c.l.b16 %v161
    %v1122 = vunpack.c.l.b16 %v162
    %v1123 = vunpack.c.l.b16 %v163
    %v1124 = vunpack.c.l.b16 %v164
    %v1125 = vunpack.c.l.b16 %v165
    %v1126 = vunpack.c.l.b16 %v166
    %v1127 = vunpack.c.l.b16 %v167
    %v1128 = vunpack.c.l.b16 %v168
    %v1129 = vunpack.c.l.b16 %v169
    %v1130 = vunpack.c.l.b16 %v170
    %v1131 = vunpack.c.l.b16 %v171
    %v1132 = vunpack.c.l.b16 %v172
    %v1133 = vunpack.c.l.b16 %v173
    %v1134 = vunpack.c.l.b16 %v174
    %v1135 = vunpack.c.l.b16 %v175
    %v1136 = vunpack.c.l.b16 %v176
    %v1137 = vunpack.c.l.b16 %v177
    %v1138 = vunpack.c.l.b16 %v178
    %v1139 = vunpack.c.l.b16 %v179
    %v1140 = vunpack.c.l.b16 %v180
    %v1141 = vunpack.c.l.b16 %v181
    %v1142 = vunpack.c.l.b16 %v182
    %v1143 = vunpack.c.l.b16 %v183
    %v1144 = vunpack.c.l.b16 %v184
    %v1145 = vunpack.c.l.b16 %v185
    %v1146 = vunpack.c.l.b16 %v186
    %v1147 = vunpack.c.l.b16 %v187
    %v1148 = vunpack.c.l.b16 %v188
    %v1149 = vunpack.c.l.b16 %v189
    %v1150 = vunpack.c.l.b16 %v190
    %v1151 = vunpack.c.l.b16 %v191
    %v1152 = vunpack.c.l.b16 %v192
    %v1153 = vunpack.c.l.b16 %v193
    %v1154 = vunpack.c.l.b16 %v194
    %v1155 = vunpack.c.l.b16 %v195
    %v1156 = vunpack.c.l.b16 %v196
    %v1157 = vunpack.c.l.b16 %v197
    %v1158 = vunpack.c.l.b16 %v198
    %v1159 = vunpack.c.l.b16 %v199
    %v1160 = vunpack.c.l.b16 %v200
    %v1161 = vunpack.c.l.b16 %v201
    %v1162 = vpack.c.b16 %v1099, %v1098
    %v1163 = vpack.c.b16 %v1101, %v1100
    %v1164 = vpack.c.b16 %v1103, %v1102
    %v1165 = vpack.c.b16 %v1105, %v1104
    %v1166 = vpack.c.b16 %v1107, %v1106
    %v1167 = vpack.c.b16 %v1109, %v1108
    %v1168 = vpack.c.b16 %v1111, %v1110
    %v1169 = vpack.c.b16 %v1113, %v1112
    %v1170 = vpack.c.b16 %v1115, %v1114
    %v1171 = vpack.c.b16 %v1117, %v1116
    %v1172 = vpack.c.b16 %v1119, %v1118
    %v1173 = vpack.c.b16 %v1121, %v1120
    %v1174 = vpack.c.b16 %v1123, %v1122
    %v1175 = vpack.c.b16 %v1125, %v1124
    %v1176 = vpack.c.b16 %v1127, %v1126
    %v1177 = vpack.c.b16 %v1129, %v1128
    %v1178 = vpack.c.b16 %v1131, %v1130
    %v1179 = vpack.c.b16 %v1133, %v1132
    %v1180 = vpack.c.b16 %v1135, %v1134
    %v1181 = vpack.c.b16 %v1137, %v1136
    %v1182 = vpack.c.b16 %v1139, %v1138
    %v1183 = vpack.c.b16 %v1141, %v1140
    %v1184 = vpack.c.b16 %v1143, %v1142
    %v1185 = vpack.c.b16 %v1145, %v1144
    %v1186 = vpack.c.b16 %v1147, %v1146
    %v1187 = vpack.c.b16 %v1149, %v1148
    %v1188 = vpack.c.b16 %v1151, %v1150
    %v1189 = vpack.c.b16 %v1153, %v1152
    %v1190 = vpack.c.b16 %v1155, %v1154
    %v1191 = vpack.c.b16 %v1157, %v1156
    %v1192 = vpack.c.b16 %v1159, %v1158
    %v1193 = vpack.c.b16 %v1161, %v1160
    %1226 = vmatprep.subr.bf16.mxu0 0
    %1227 = vmatpush1.bf16.msra.mxu0 %v1169
    %1228 = vmatprep.subr.bf16.mxu0 0
    %1229 = vmatpush1.bf16.msra.mxu0 %v1168
    %1230 = vmatprep.subr.bf16.mxu0 0
    %1231 = vmatpush1.bf16.msra.mxu0 %v1167
    %1232 = vmatprep.subr.bf16.mxu0 0
    %1233 = vmatpush1.bf16.msra.mxu0 %v1166
    %1234 = vmatprep.subr.bf16.mxu0 0
    %1235 = vmatpush1.bf16.msra.mxu0 %v1165
    %1236 = vmatprep.subr.bf16.mxu0 0
    %1237 = vmatpush1.bf16.msra.mxu0 %v1164
    %1238 = vmatprep.subr.bf16.mxu0 0
    %1239 = vmatpush1.bf16.msra.mxu0 %v1163
    %1240 = vmatprep.subr.bf16.mxu0 0
    %1241 = vmatpush1.bf16.msra.mxu0 %v1162
    %1242 = vmatprep.subr.bf16.mxu0 0
    %1243 = vmatpush2.bf16.msra.mxu0 %v1177
    %1244 = vmatprep.subr.bf16.mxu0 0
    %1245 = vmatpush2.bf16.msra.mxu0 %v1176
    %1246 = vmatprep.subr.bf16.mxu0 0
    %1247 = vmatpush2.bf16.msra.mxu0 %v1175
    %1248 = vmatprep.subr.bf16.mxu0 0
    %1249 = vmatpush2.bf16.msra.mxu0 %v1174
    %1250 = vmatprep.subr.bf16.mxu0 0
    %1251 = vmatpush2.bf16.msra.mxu0 %v1173
    %1252 = vmatprep.subr.bf16.mxu0 0
    %1253 = vmatpush2.bf16.msra.mxu0 %v1172
    %1254 = vmatprep.subr.bf16.mxu0 0
    %1255 = vmatpush2.bf16.msra.mxu0 %v1171
    %1256 = vmatprep.subr.bf16.mxu0 0
    %1257 = vmatpush2.bf16.msra.mxu0 %v1170
    %1258 = vmatprep.mubr.bf16.mxu0 %v779
    %1259 = vmatmul.mubr.bf16.gmra.mxu0 %v778
    %v1260 = vpop.f32.mrf.mxu0
    %v1261 = vadd.f32 0.0, %v1260
    %v1262 = vpop.f32.mrf.mxu0
    %v1263 = vpop.f32.mrf.mxu0
    %v1264 = vadd.f32 0.0, %v1263
    %v1265 = vpop.f32.mrf.mxu0
    %1266 = vmatprep.mubr.bf16.mxu0 %v783
    %1267 = vmatmul.mubr.bf16.gmra.mxu0 %v782
    %v1268 = vpop.f32.mrf.mxu0
    %v1269 = vadd.f32 0.0, %v1268
    %v1270 = vpop.f32.mrf.mxu0
    %v1271 = vpop.f32.mrf.mxu0
    %v1272 = vadd.f32 0.0, %v1271
    %v1273 = vpop.f32.mrf.mxu0
    %1274 = vmatprep.mubr.bf16.mxu0 %v787
    %1275 = vmatmul.mubr.bf16.gmra.mxu0 %v786
    %v1276 = vpop.f32.mrf.mxu0
    %v1277 = vadd.f32 0.0, %v1276
    %v1278 = vpop.f32.mrf.mxu0
    %v1279 = vpop.f32.mrf.mxu0
    %v1280 = vadd.f32 0.0, %v1279
    %v1281 = vpop.f32.mrf.mxu0
    %1282 = vmatprep.mubr.bf16.mxu0 %v791
    %1283 = vmatmul.mubr.bf16.gmra.mxu0 %v790
    %v1284 = vpop.f32.mrf.mxu0
    %v1285 = vadd.f32 0.0, %v1284
    %v1286 = vpop.f32.mrf.mxu0
    %v1287 = vpop.f32.mrf.mxu0
    %v1288 = vadd.f32 0.0, %v1287
    %v1289 = vpop.f32.mrf.mxu0
    %1290 = vmatprep.mubr.bf16.mxu0 %v795
    %1291 = vmatmul.mubr.bf16.gmra.mxu0 %v794
    %v1292 = vpop.f32.mrf.mxu0
    %v1293 = vadd.f32 0.0, %v1292
    %v1294 = vpop.f32.mrf.mxu0
    %v1295 = vpop.f32.mrf.mxu0
    %v1296 = vadd.f32 0.0, %v1295
    %v1297 = vpop.f32.mrf.mxu0
    %1298 = vmatprep.mubr.bf16.mxu0 %v799
    %1299 = vmatmul.mubr.bf16.gmra.mxu0 %v798
    %v1300 = vpop.f32.mrf.mxu0
    %v1301 = vadd.f32 0.0, %v1300
    %v1302 = vpop.f32.mrf.mxu0
    %v1303 = vpop.f32.mrf.mxu0
    %v1304 = vadd.f32 0.0, %v1303
    %v1305 = vpop.f32.mrf.mxu0
    %1306 = vmatprep.mubr.bf16.mxu0 %v803
    %1307 = vmatmul.mubr.bf16.gmra.mxu0 %v802
    %v1308 = vpop.f32.mrf.mxu0
    %v1309 = vadd.f32 0.0, %v1308
    %v1310 = vpop.f32.mrf.mxu0
    %v1311 = vpop.f32.mrf.mxu0
    %v1312 = vadd.f32 0.0, %v1311
    %v1313 = vpop.f32.mrf.mxu0
    %1314 = vmatprep.mubr.bf16.mxu0 %v807
    %1315 = vmatmul.mubr.bf16.gmra.mxu0 %v806
    %v1316 = vpop.f32.mrf.mxu0
    %v1317 = vadd.f32 0.0, %v1316
    %v1318 = vpop.f32.mrf.mxu0
    %v1319 = vpop.f32.mrf.mxu0
    %v1320 = vadd.f32 0.0, %v1319
    %v1321 = vpop.f32.mrf.mxu0
    %1322 = vmatprep.mubr.bf16.mxu0 %v811
    %1323 = vmatmul.mubr.bf16.gmra.mxu0 %v810
    %v1324 = vpop.f32.mrf.mxu0
    %v1325 = vadd.f32 0.0, %v1324
    %v1326 = vpop.f32.mrf.mxu0
    %v1327 = vpop.f32.mrf.mxu0
    %v1328 = vadd.f32 0.0, %v1327
    %v1329 = vpop.f32.mrf.mxu0
    %1330 = vmatprep.mubr.bf16.mxu0 %v815
    %1331 = vmatmul.mubr.bf16.gmra.mxu0 %v814
    %v1332 = vpop.f32.mrf.mxu0
    %v1333 = vadd.f32 0.0, %v1332
    %v1334 = vpop.f32.mrf.mxu0
    %v1335 = vpop.f32.mrf.mxu0
    %v1336 = vadd.f32 0.0, %v1335
    %v1337 = vpop.f32.mrf.mxu0
    %1338 = vmatprep.mubr.bf16.mxu0 %v819
    %1339 = vmatmul.mubr.bf16.gmra.mxu0 %v818
    %v1340 = vpop.f32.mrf.mxu0
    %v1341 = vadd.f32 0.0, %v1340
    %v1342 = vpop.f32.mrf.mxu0
    %v1343 = vpop.f32.mrf.mxu0
    %v1344 = vadd.f32 0.0, %v1343
    %v1345 = vpop.f32.mrf.mxu0
    %1346 = vmatprep.mubr.bf16.mxu0 %v823
    %1347 = vmatmul.mubr.bf16.gmra.mxu0 %v822
    %v1348 = vpop.f32.mrf.mxu0
    %v1349 = vadd.f32 0.0, %v1348
    %v1350 = vpop.f32.mrf.mxu0
    %v1351 = vpop.f32.mrf.mxu0
    %v1352 = vadd.f32 0.0, %v1351
    %v1353 = vpop.f32.mrf.mxu0
    %1354 = vmatprep.mubr.bf16.mxu0 %v827
    %1355 = vmatmul.mubr.bf16.gmra.mxu0 %v826
    %v1356 = vpop.f32.mrf.mxu0
    %v1357 = vadd.f32 0.0, %v1356
    %v1358 = vpop.f32.mrf.mxu0
    %v1359 = vpop.f32.mrf.mxu0
    %v1360 = vadd.f32 0.0, %v1359
    %v1361 = vpop.f32.mrf.mxu0
    %1362 = vmatprep.mubr.bf16.mxu0 %v831
    %1363 = vmatmul.mubr.bf16.gmra.mxu0 %v830
    %v1364 = vpop.f32.mrf.mxu0
    %v1365 = vadd.f32 0.0, %v1364
    %v1366 = vpop.f32.mrf.mxu0
    %v1367 = vpop.f32.mrf.mxu0
    %v1368 = vadd.f32 0.0, %v1367
    %v1369 = vpop.f32.mrf.mxu0
    %1370 = vmatprep.mubr.bf16.mxu0 %v835
    %1371 = vmatmul.mubr.bf16.gmra.mxu0 %v834
    %v1372 = vpop.f32.mrf.mxu0
    %v1373 = vadd.f32 0.0, %v1372
    %v1374 = vpop.f32.mrf.mxu0
    %v1375 = vpop.f32.mrf.mxu0
    %v1376 = vadd.f32 0.0, %v1375
    %v1377 = vpop.f32.mrf.mxu0
    %1378 = vmatprep.mubr.bf16.mxu0 %v839
    %1379 = vmatmul.mubr.bf16.gmra.mxu0 %v838
    %v1380 = vpop.f32.mrf.mxu0
    %v1381 = vadd.f32 0.0, %v1380
    %v1382 = vpop.f32.mrf.mxu0
    %v1383 = vpop.f32.mrf.mxu0
    %v1384 = vadd.f32 0.0, %v1383
    %v1385 = vpop.f32.mrf.mxu0
    %1386 = vmatprep.mubr.bf16.mxu0 %v843
    %1387 = vmatmul.mubr.bf16.gmra.mxu0 %v842
    %v1388 = vpop.f32.mrf.mxu0
    %v1389 = vadd.f32 0.0, %v1388
    %v1390 = vpop.f32.mrf.mxu0
    %v1391 = vpop.f32.mrf.mxu0
    %v1392 = vadd.f32 0.0, %v1391
    %v1393 = vpop.f32.mrf.mxu0
    %1394 = vmatprep.mubr.bf16.mxu0 %v847
    %1395 = vmatmul.mubr.bf16.gmra.mxu0 %v846
    %v1396 = vpop.f32.mrf.mxu0
    %v1397 = vadd.f32 0.0, %v1396
    %v1398 = vpop.f32.mrf.mxu0
    %v1399 = vpop.f32.mrf.mxu0
    %v1400 = vadd.f32 0.0, %v1399
    %v1401 = vpop.f32.mrf.mxu0
    %1402 = vmatprep.mubr.bf16.mxu0 %v851
    %1403 = vmatmul.mubr.bf16.gmra.mxu0 %v850
    %v1404 = vpop.f32.mrf.mxu0
    %v1405 = vadd.f32 0.0, %v1404
    %v1406 = vpop.f32.mrf.mxu0
    %v1407 = vpop.f32.mrf.mxu0
    %v1408 = vadd.f32 0.0, %v1407
    %v1409 = vpop.f32.mrf.mxu0
    %1410 = vmatprep.mubr.bf16.mxu0 %v855
    %1411 = vmatmul.mubr.bf16.gmra.mxu0 %v854
    %v1412 = vpop.f32.mrf.mxu0
    %v1413 = vadd.f32 0.0, %v1412
    %v1414 = vpop.f32.mrf.mxu0
    %v1415 = vpop.f32.mrf.mxu0
    %v1416 = vadd.f32 0.0, %v1415
    %v1417 = vpop.f32.mrf.mxu0
    %1418 = vmatprep.mubr.bf16.mxu0 %v859
    %1419 = vmatmul.mubr.bf16.gmra.mxu0 %v858
    %v1420 = vpop.f32.mrf.mxu0
    %v1421 = vadd.f32 0.0, %v1420
    %v1422 = vpop.f32.mrf.mxu0
    %v1423 = vpop.f32.mrf.mxu0
    %v1424 = vadd.f32 0.0, %v1423
    %v1425 = vpop.f32.mrf.mxu0
    %1426 = vmatprep.mubr.bf16.mxu0 %v863
    %1427 = vmatmul.mubr.bf16.gmra.mxu0 %v862
    %v1428 = vpop.f32.mrf.mxu0
    %v1429 = vadd.f32 0.0, %v1428
    %v1430 = vpop.f32.mrf.mxu0
    %v1431 = vpop.f32.mrf.mxu0
    %v1432 = vadd.f32 0.0, %v1431
    %v1433 = vpop.f32.mrf.mxu0
    %1434 = vmatprep.mubr.bf16.mxu0 %v867
    %1435 = vmatmul.mubr.bf16.gmra.mxu0 %v866
    %v1436 = vpop.f32.mrf.mxu0
    %v1437 = vadd.f32 0.0, %v1436
    %v1438 = vpop.f32.mrf.mxu0
    %v1439 = vpop.f32.mrf.mxu0
    %v1440 = vadd.f32 0.0, %v1439
    %v1441 = vpop.f32.mrf.mxu0
    %1442 = vmatprep.mubr.bf16.mxu0 %v871
    %1443 = vmatmul.mubr.bf16.gmra.mxu0 %v870
    %v1444 = vpop.f32.mrf.mxu0
    %v1445 = vadd.f32 0.0, %v1444
    %v1446 = vpop.f32.mrf.mxu0
    %v1447 = vpop.f32.mrf.mxu0
    %v1448 = vadd.f32 0.0, %v1447
    %v1449 = vpop.f32.mrf.mxu0
    %1450 = vmatprep.mubr.bf16.mxu0 %v875
    %1451 = vmatmul.mubr.bf16.gmra.mxu0 %v874
    %v1452 = vpop.f32.mrf.mxu0
    %v1453 = vadd.f32 0.0, %v1452
    %v1454 = vpop.f32.mrf.mxu0
    %v1455 = vpop.f32.mrf.mxu0
    %v1456 = vadd.f32 0.0, %v1455
    %v1457 = vpop.f32.mrf.mxu0
    %1458 = vmatprep.mubr.bf16.mxu0 %v879
    %1459 = vmatmul.mubr.bf16.gmra.mxu0 %v878
    %v1460 = vpop.f32.mrf.mxu0
    %v1461 = vadd.f32 0.0, %v1460
    %v1462 = vpop.f32.mrf.mxu0
    %v1463 = vpop.f32.mrf.mxu0
    %v1464 = vadd.f32 0.0, %v1463
    %v1465 = vpop.f32.mrf.mxu0
    %1466 = vmatprep.mubr.bf16.mxu0 %v883
    %1467 = vmatmul.mubr.bf16.gmra.mxu0 %v882
    %v1468 = vpop.f32.mrf.mxu0
    %v1469 = vadd.f32 0.0, %v1468
    %v1470 = vpop.f32.mrf.mxu0
    %v1471 = vpop.f32.mrf.mxu0
    %v1472 = vadd.f32 0.0, %v1471
    %v1473 = vpop.f32.mrf.mxu0
    %1474 = vmatprep.mubr.bf16.mxu0 %v887
    %1475 = vmatmul.mubr.bf16.gmra.mxu0 %v886
    %v1476 = vpop.f32.mrf.mxu0
    %v1477 = vadd.f32 0.0, %v1476
    %v1478 = vpop.f32.mrf.mxu0
    %v1479 = vpop.f32.mrf.mxu0
    %v1480 = vadd.f32 0.0, %v1479
    %v1481 = vpop.f32.mrf.mxu0
    %1482 = vmatprep.mubr.bf16.mxu0 %v891
    %1483 = vmatmul.mubr.bf16.gmra.mxu0 %v890
    %v1484 = vpop.f32.mrf.mxu0
    %v1485 = vadd.f32 0.0, %v1484
    %v1486 = vpop.f32.mrf.mxu0
    %v1487 = vpop.f32.mrf.mxu0
    %v1488 = vadd.f32 0.0, %v1487
    %v1489 = vpop.f32.mrf.mxu0
    %1490 = vmatprep.mubr.bf16.mxu0 %v895
    %1491 = vmatmul.mubr.bf16.gmra.mxu0 %v894
    %v1492 = vpop.f32.mrf.mxu0
    %v1493 = vadd.f32 0.0, %v1492
    %v1494 = vpop.f32.mrf.mxu0
    %v1495 = vpop.f32.mrf.mxu0
    %v1496 = vadd.f32 0.0, %v1495
    %v1497 = vpop.f32.mrf.mxu0
    %1498 = vmatprep.mubr.bf16.mxu0 %v899
    %1499 = vmatmul.mubr.bf16.gmra.mxu0 %v898
    %v1500 = vpop.f32.mrf.mxu0
    %v1501 = vadd.f32 0.0, %v1500
    %v1502 = vpop.f32.mrf.mxu0
    %v1503 = vpop.f32.mrf.mxu0
    %v1504 = vadd.f32 0.0, %v1503
    %v1505 = vpop.f32.mrf.mxu0
    %1506 = vmatprep.mubr.bf16.mxu0 %v903
    %1507 = vmatmul.mubr.bf16.gmra.mxu0 %v902
    %v1508 = vpop.f32.mrf.mxu0
    %v1509 = vadd.f32 0.0, %v1508
    %v1510 = vpop.f32.mrf.mxu0
    %v1511 = vpop.f32.mrf.mxu0
    %v1512 = vadd.f32 0.0, %v1511
    %v1513 = vpop.f32.mrf.mxu0
    %1514 = vdwg.mxu0
    %1515 = vmatprep.subr.bf16.mxu0 0
    %1516 = vmatpush1.bf16.msra.mxu0 %v1185
    %1517 = vmatprep.subr.bf16.mxu0 0
    %1518 = vmatpush1.bf16.msra.mxu0 %v1184
    %1519 = vmatprep.subr.bf16.mxu0 0
    %1520 = vmatpush1.bf16.msra.mxu0 %v1183
    %1521 = vmatprep.subr.bf16.mxu0 0
    %1522 = vmatpush1.bf16.msra.mxu0 %v1182
    %1523 = vmatprep.subr.bf16.mxu0 0
    %1524 = vmatpush1.bf16.msra.mxu0 %v1181
    %1525 = vmatprep.subr.bf16.mxu0 0
    %1526 = vmatpush1.bf16.msra.mxu0 %v1180
    %1527 = vmatprep.subr.bf16.mxu0 0
    %1528 = vmatpush1.bf16.msra.mxu0 %v1179
    %1529 = vmatprep.subr.bf16.mxu0 0
    %1530 = vmatpush1.bf16.msra.mxu0 %v1178
    %1531 = vmatprep.subr.bf16.mxu0 0
    %1532 = vmatpush2.bf16.msra.mxu0 %v1193
    %1533 = vmatprep.subr.bf16.mxu0 0
    %1534 = vmatpush2.bf16.msra.mxu0 %v1192
    %1535 = vmatprep.subr.bf16.mxu0 0
    %1536 = vmatpush2.bf16.msra.mxu0 %v1191
    %1537 = vmatprep.subr.bf16.mxu0 0
    %1538 = vmatpush2.bf16.msra.mxu0 %v1190
    %1539 = vmatprep.subr.bf16.mxu0 0
    %1540 = vmatpush2.bf16.msra.mxu0 %v1189
    %1541 = vmatprep.subr.bf16.mxu0 0
    %1542 = vmatpush2.bf16.msra.mxu0 %v1188
    %1543 = vmatprep.subr.bf16.mxu0 0
    %1544 = vmatpush2.bf16.msra.mxu0 %v1187
    %1545 = vmatprep.subr.bf16.mxu0 0
    %1546 = vmatpush2.bf16.msra.mxu0 %v1186
    %1547 = vmatprep.mubr.bf16.mxu0 %v781
    %1548 = vmatmul.mubr.bf16.gmra.mxu0 %v780
    %v1549 = vpop.f32.mrf.mxu0
    %v1550 = vadd.f32 %v1261, %v1549
    %v1551 = vpop.f32.mrf.mxu0
    %v1552 = vpop.f32.mrf.mxu0
    %v1553 = vadd.f32 %v1264, %v1552
    %v1554 = vpop.f32.mrf.mxu0
    %1555 = vmatprep.mubr.bf16.mxu0 %v785
    %1556 = vmatmul.mubr.bf16.gmra.mxu0 %v784
    %v1557 = vpop.f32.mrf.mxu0
    %v1558 = vadd.f32 %v1269, %v1557
    %v1559 = vpop.f32.mrf.mxu0
    %v1560 = vpop.f32.mrf.mxu0
    %v1561 = vadd.f32 %v1272, %v1560
    %v1562 = vpop.f32.mrf.mxu0
    %1563 = vmatprep.mubr.bf16.mxu0 %v789
    %1564 = vmatmul.mubr.bf16.gmra.mxu0 %v788
    %v1565 = vpop.f32.mrf.mxu0
    %v1566 = vadd.f32 %v1277, %v1565
    %v1567 = vpop.f32.mrf.mxu0
    %v1568 = vpop.f32.mrf.mxu0
    %v1569 = vadd.f32 %v1280, %v1568
    %v1570 = vpop.f32.mrf.mxu0
    %1571 = vmatprep.mubr.bf16.mxu0 %v793
    %1572 = vmatmul.mubr.bf16.gmra.mxu0 %v792
    %v1573 = vpop.f32.mrf.mxu0
    %v1574 = vadd.f32 %v1285, %v1573
    %v1575 = vpop.f32.mrf.mxu0
    %v1576 = vpop.f32.mrf.mxu0
    %v1577 = vadd.f32 %v1288, %v1576
    %v1578 = vpop.f32.mrf.mxu0
    %1579 = vmatprep.mubr.bf16.mxu0 %v797
    %1580 = vmatmul.mubr.bf16.gmra.mxu0 %v796
    %v1581 = vpop.f32.mrf.mxu0
    %v1582 = vadd.f32 %v1293, %v1581
    %v1583 = vpop.f32.mrf.mxu0
    %v1584 = vpop.f32.mrf.mxu0
    %v1585 = vadd.f32 %v1296, %v1584
    %v1586 = vpop.f32.mrf.mxu0
    %1587 = vmatprep.mubr.bf16.mxu0 %v801
    %1588 = vmatmul.mubr.bf16.gmra.mxu0 %v800
    %v1589 = vpop.f32.mrf.mxu0
    %v1590 = vadd.f32 %v1301, %v1589
    %v1591 = vpop.f32.mrf.mxu0
    %v1592 = vpop.f32.mrf.mxu0
    %v1593 = vadd.f32 %v1304, %v1592
    %v1594 = vpop.f32.mrf.mxu0
    %1595 = vmatprep.mubr.bf16.mxu0 %v805
    %1596 = vmatmul.mubr.bf16.gmra.mxu0 %v804
    %v1597 = vpop.f32.mrf.mxu0
    %v1598 = vadd.f32 %v1309, %v1597
    %v1599 = vpop.f32.mrf.mxu0
    %v1600 = vpop.f32.mrf.mxu0
    %v1601 = vadd.f32 %v1312, %v1600
    %v1602 = vpop.f32.mrf.mxu0
    %1603 = vmatprep.mubr.bf16.mxu0 %v809
    %1604 = vmatmul.mubr.bf16.gmra.mxu0 %v808
    %v1605 = vpop.f32.mrf.mxu0
    %v1606 = vadd.f32 %v1317, %v1605
    %v1607 = vpop.f32.mrf.mxu0
    %v1608 = vpop.f32.mrf.mxu0
    %v1609 = vadd.f32 %v1320, %v1608
    %v1610 = vpop.f32.mrf.mxu0
    %1611 = vmatprep.mubr.bf16.mxu0 %v813
    %1612 = vmatmul.mubr.bf16.gmra.mxu0 %v812
    %v1613 = vpop.f32.mrf.mxu0
    %v1614 = vadd.f32 %v1325, %v1613
    %v1615 = vpop.f32.mrf.mxu0
    %v1616 = vpop.f32.mrf.mxu0
    %v1617 = vadd.f32 %v1328, %v1616
    %v1618 = vpop.f32.mrf.mxu0
    %1619 = vmatprep.mubr.bf16.mxu0 %v817
    %1620 = vmatmul.mubr.bf16.gmra.mxu0 %v816
    %v1621 = vpop.f32.mrf.mxu0
    %v1622 = vadd.f32 %v1333, %v1621
    %v1623 = vpop.f32.mrf.mxu0
    %v1624 = vpop.f32.mrf.mxu0
    %v1625 = vadd.f32 %v1336, %v1624
    %v1626 = vpop.f32.mrf.mxu0
    %1627 = vmatprep.mubr.bf16.mxu0 %v821
    %1628 = vmatmul.mubr.bf16.gmra.mxu0 %v820
    %v1629 = vpop.f32.mrf.mxu0
    %v1630 = vadd.f32 %v1341, %v1629
    %v1631 = vpop.f32.mrf.mxu0
    %v1632 = vpop.f32.mrf.mxu0
    %v1633 = vadd.f32 %v1344, %v1632
    %v1634 = vpop.f32.mrf.mxu0
    %1635 = vmatprep.mubr.bf16.mxu0 %v825
    %1636 = vmatmul.mubr.bf16.gmra.mxu0 %v824
    %v1637 = vpop.f32.mrf.mxu0
    %v1638 = vadd.f32 %v1349, %v1637
    %v1639 = vpop.f32.mrf.mxu0
    %v1640 = vpop.f32.mrf.mxu0
    %v1641 = vadd.f32 %v1352, %v1640
    %v1642 = vpop.f32.mrf.mxu0
    %1643 = vmatprep.mubr.bf16.mxu0 %v829
    %1644 = vmatmul.mubr.bf16.gmra.mxu0 %v828
    %v1645 = vpop.f32.mrf.mxu0
    %v1646 = vadd.f32 %v1357, %v1645
    %v1647 = vpop.f32.mrf.mxu0
    %v1648 = vpop.f32.mrf.mxu0
    %v1649 = vadd.f32 %v1360, %v1648
    %v1650 = vpop.f32.mrf.mxu0
    %1651 = vmatprep.mubr.bf16.mxu0 %v833
    %1652 = vmatmul.mubr.bf16.gmra.mxu0 %v832
    %v1653 = vpop.f32.mrf.mxu0
    %v1654 = vadd.f32 %v1365, %v1653
    %v1655 = vpop.f32.mrf.mxu0
    %v1656 = vpop.f32.mrf.mxu0
    %v1657 = vadd.f32 %v1368, %v1656
    %v1658 = vpop.f32.mrf.mxu0
    %1659 = vmatprep.mubr.bf16.mxu0 %v837
    %1660 = vmatmul.mubr.bf16.gmra.mxu0 %v836
    %v1661 = vpop.f32.mrf.mxu0
    %v1662 = vadd.f32 %v1373, %v1661
    %v1663 = vpop.f32.mrf.mxu0
    %v1664 = vpop.f32.mrf.mxu0
    %v1665 = vadd.f32 %v1376, %v1664
    %v1666 = vpop.f32.mrf.mxu0
    %1667 = vmatprep.mubr.bf16.mxu0 %v841
    %1668 = vmatmul.mubr.bf16.gmra.mxu0 %v840
    %v1669 = vpop.f32.mrf.mxu0
    %v1670 = vadd.f32 %v1381, %v1669
    %v1671 = vpop.f32.mrf.mxu0
    %v1672 = vpop.f32.mrf.mxu0
    %v1673 = vadd.f32 %v1384, %v1672
    %v1674 = vpop.f32.mrf.mxu0
    %1675 = vmatprep.mubr.bf16.mxu0 %v845
    %1676 = vmatmul.mubr.bf16.gmra.mxu0 %v844
    %v1677 = vpop.f32.mrf.mxu0
    %v1678 = vadd.f32 %v1389, %v1677
    %v1679 = vpop.f32.mrf.mxu0
    %v1680 = vpop.f32.mrf.mxu0
    %v1681 = vadd.f32 %v1392, %v1680
    %v1682 = vpop.f32.mrf.mxu0
    %1683 = vmatprep.mubr.bf16.mxu0 %v849
    %1684 = vmatmul.mubr.bf16.gmra.mxu0 %v848
    %v1685 = vpop.f32.mrf.mxu0
    %v1686 = vadd.f32 %v1397, %v1685
    %v1687 = vpop.f32.mrf.mxu0
    %v1688 = vpop.f32.mrf.mxu0
    %v1689 = vadd.f32 %v1400, %v1688
    %v1690 = vpop.f32.mrf.mxu0
    %1691 = vmatprep.mubr.bf16.mxu0 %v853
    %1692 = vmatmul.mubr.bf16.gmra.mxu0 %v852
    %v1693 = vpop.f32.mrf.mxu0
    %v1694 = vadd.f32 %v1405, %v1693
    %v1695 = vpop.f32.mrf.mxu0
    %v1696 = vpop.f32.mrf.mxu0
    %v1697 = vadd.f32 %v1408, %v1696
    %v1698 = vpop.f32.mrf.mxu0
    %1699 = vmatprep.mubr.bf16.mxu0 %v857
    %1700 = vmatmul.mubr.bf16.gmra.mxu0 %v856
    %v1701 = vpop.f32.mrf.mxu0
    %v1702 = vadd.f32 %v1413, %v1701
    %v1703 = vpop.f32.mrf.mxu0
    %v1704 = vpop.f32.mrf.mxu0
    %v1705 = vadd.f32 %v1416, %v1704
    %v1706 = vpop.f32.mrf.mxu0
    %1707 = vmatprep.mubr.bf16.mxu0 %v861
    %1708 = vmatmul.mubr.bf16.gmra.mxu0 %v860
    %v1709 = vpop.f32.mrf.mxu0
    %v1710 = vadd.f32 %v1421, %v1709
    %v1711 = vpop.f32.mrf.mxu0
    %v1712 = vpop.f32.mrf.mxu0
    %v1713 = vadd.f32 %v1424, %v1712
    %v1714 = vpop.f32.mrf.mxu0
    %1715 = vmatprep.mubr.bf16.mxu0 %v865
    %1716 = vmatmul.mubr.bf16.gmra.mxu0 %v864
    %v1717 = vpop.f32.mrf.mxu0
    %v1718 = vadd.f32 %v1429, %v1717
    %v1719 = vpop.f32.mrf.mxu0
    %v1720 = vpop.f32.mrf.mxu0
    %v1721 = vadd.f32 %v1432, %v1720
    %v1722 = vpop.f32.mrf.mxu0
    %1723 = vmatprep.mubr.bf16.mxu0 %v869
    %1724 = vmatmul.mubr.bf16.gmra.mxu0 %v868
    %v1725 = vpop.f32.mrf.mxu0
    %v1726 = vadd.f32 %v1437, %v1725
    %v1727 = vpop.f32.mrf.mxu0
    %v1728 = vpop.f32.mrf.mxu0
    %v1729 = vadd.f32 %v1440, %v1728
    %v1730 = vpop.f32.mrf.mxu0
    %1731 = vmatprep.mubr.bf16.mxu0 %v873
    %1732 = vmatmul.mubr.bf16.gmra.mxu0 %v872
    %v1733 = vpop.f32.mrf.mxu0
    %v1734 = vadd.f32 %v1445, %v1733
    %v1735 = vpop.f32.mrf.mxu0
    %v1736 = vpop.f32.mrf.mxu0
    %v1737 = vadd.f32 %v1448, %v1736
    %v1738 = vpop.f32.mrf.mxu0
    %1739 = vmatprep.mubr.bf16.mxu0 %v877
    %1740 = vmatmul.mubr.bf16.gmra.mxu0 %v876
    %v1741 = vpop.f32.mrf.mxu0
    %v1742 = vadd.f32 %v1453, %v1741
    %v1743 = vpop.f32.mrf.mxu0
    %v1744 = vpop.f32.mrf.mxu0
    %v1745 = vadd.f32 %v1456, %v1744
    %v1746 = vpop.f32.mrf.mxu0
    %1747 = vmatprep.mubr.bf16.mxu0 %v881
    %1748 = vmatmul.mubr.bf16.gmra.mxu0 %v880
    %v1749 = vpop.f32.mrf.mxu0
    %v1750 = vadd.f32 %v1461, %v1749
    %v1751 = vpop.f32.mrf.mxu0
    %v1752 = vpop.f32.mrf.mxu0
    %v1753 = vadd.f32 %v1464, %v1752
    %v1754 = vpop.f32.mrf.mxu0
    %1755 = vmatprep.mubr.bf16.mxu0 %v885
    %1756 = vmatmul.mubr.bf16.gmra.mxu0 %v884
    %v1757 = vpop.f32.mrf.mxu0
    %v1758 = vadd.f32 %v1469, %v1757
    %v1759 = vpop.f32.mrf.mxu0
    %v1760 = vpop.f32.mrf.mxu0
    %v1761 = vadd.f32 %v1472, %v1760
    %v1762 = vpop.f32.mrf.mxu0
    %1763 = vmatprep.mubr.bf16.mxu0 %v889
    %1764 = vmatmul.mubr.bf16.gmra.mxu0 %v888
    %v1765 = vpop.f32.mrf.mxu0
    %v1766 = vadd.f32 %v1477, %v1765
    %v1767 = vpop.f32.mrf.mxu0
    %v1768 = vpop.f32.mrf.mxu0
    %v1769 = vadd.f32 %v1480, %v1768
    %v1770 = vpop.f32.mrf.mxu0
    %1771 = vmatprep.mubr.bf16.mxu0 %v893
    %1772 = vmatmul.mubr.bf16.gmra.mxu0 %v892
    %v1773 = vpop.f32.mrf.mxu0
    %v1774 = vadd.f32 %v1485, %v1773
    %v1775 = vpop.f32.mrf.mxu0
    %v1776 = vpop.f32.mrf.mxu0
    %v1777 = vadd.f32 %v1488, %v1776
    %v1778 = vpop.f32.mrf.mxu0
    %1779 = vmatprep.mubr.bf16.mxu0 %v897
    %1780 = vmatmul.mubr.bf16.gmra.mxu0 %v896
    %v1781 = vpop.f32.mrf.mxu0
    %v1782 = vadd.f32 %v1493, %v1781
    %v1783 = vpop.f32.mrf.mxu0
    %v1784 = vpop.f32.mrf.mxu0
    %v1785 = vadd.f32 %v1496, %v1784
    %v1786 = vpop.f32.mrf.mxu0
    %1787 = vmatprep.mubr.bf16.mxu0 %v901
    %1788 = vmatmul.mubr.bf16.gmra.mxu0 %v900
    %v1789 = vpop.f32.mrf.mxu0
    %v1790 = vadd.f32 %v1501, %v1789
    %v1791 = vpop.f32.mrf.mxu0
    %v1792 = vpop.f32.mrf.mxu0
    %v1793 = vadd.f32 %v1504, %v1792
    %v1794 = vpop.f32.mrf.mxu0
    %1795 = vmatprep.mubr.bf16.mxu0 %v905
    %1796 = vmatmul.mubr.bf16.gmra.mxu0 %v904
    %v1797 = vpop.f32.mrf.mxu0
    %v1798 = vadd.f32 %v1509, %v1797
    %v1799 = vpop.f32.mrf.mxu0
    %v1800 = vpop.f32.mrf.mxu0
    %v1801 = vadd.f32 %v1512, %v1800
    %v1802 = vpop.f32.mrf.mxu0
    %1803 = vdwg.mxu0
    %v1804 = vadd.f32 %v330, %v1550
    %v1805 = vadd.f32 %v331, %v1553
    %v1806 = vadd.f32 %v332, %v1558
    %v1807 = vadd.f32 %v333, %v1561
    %v1808 = vadd.f32 %v334, %v1566
    %v1809 = vadd.f32 %v335, %v1569
    %v1810 = vadd.f32 %v336, %v1574
    %v1811 = vadd.f32 %v337, %v1577
    %v1812 = vadd.f32 %v338, %v1582
    %v1813 = vadd.f32 %v339, %v1585
    %v1814 = vadd.f32 %v340, %v1590
    %v1815 = vadd.f32 %v341, %v1593
    %v1816 = vadd.f32 %v342, %v1598
    %v1817 = vadd.f32 %v343, %v1601
    %v1818 = vadd.f32 %v344, %v1606
    %v1819 = vadd.f32 %v345, %v1609
    %v1820 = vadd.f32 %v346, %v1614
    %v1821 = vadd.f32 %v347, %v1617
    %v1822 = vadd.f32 %v348, %v1622
    %v1823 = vadd.f32 %v349, %v1625
    %v1824 = vadd.f32 %v350, %v1630
    %v1825 = vadd.f32 %v351, %v1633
    %v1826 = vadd.f32 %v352, %v1638
    %v1827 = vadd.f32 %v353, %v1641
    %v1828 = vadd.f32 %v354, %v1646
    %v1829 = vadd.f32 %v355, %v1649
    %v1830 = vadd.f32 %v356, %v1654
    %v1831 = vadd.f32 %v357, %v1657
    %v1832 = vadd.f32 %v358, %v1662
    %v1833 = vadd.f32 %v359, %v1665
    %v1834 = vadd.f32 %v360, %v1670
    %v1835 = vadd.f32 %v361, %v1673
    %v1836 = vadd.f32 %v362, %v1678
    %v1837 = vadd.f32 %v363, %v1681
    %v1838 = vadd.f32 %v364, %v1686
    %v1839 = vadd.f32 %v365, %v1689
    %v1840 = vadd.f32 %v366, %v1694
    %v1841 = vadd.f32 %v367, %v1697
    %v1842 = vadd.f32 %v368, %v1702
    %v1843 = vadd.f32 %v369, %v1705
    %v1844 = vadd.f32 %v370, %v1710
    %v1845 = vadd.f32 %v371, %v1713
    %v1846 = vadd.f32 %v372, %v1718
    %v1847 = vadd.f32 %v373, %v1721
    %v1848 = vadd.f32 %v374, %v1726
    %v1849 = vadd.f32 %v375, %v1729
    %v1850 = vadd.f32 %v376, %v1734
    %v1851 = vadd.f32 %v377, %v1737
    %v1852 = vadd.f32 %v378, %v1742
    %v1853 = vadd.f32 %v379, %v1745
    %v1854 = vadd.f32 %v380, %v1750
    %v1855 = vadd.f32 %v381, %v1753
    %v1856 = vadd.f32 %v382, %v1758
    %v1857 = vadd.f32 %v383, %v1761
    %v1858 = vadd.f32 %v384, %v1766
    %v1859 = vadd.f32 %v385, %v1769
    %v1860 = vadd.f32 %v386, %v1774
    %v1861 = vadd.f32 %v387, %v1777
    %v1862 = vadd.f32 %v388, %v1782
    %v1863 = vadd.f32 %v389, %v1785
    %v1864 = vadd.f32 %v390, %v1790
    %v1865 = vadd.f32 %v391, %v1793
    %v1866 = vadd.f32 %v392, %v1798
    %v1867 = vadd.f32 %v393, %v1801
    %1868 = vst [vmem:[#allocation2] sm:$0xff] %v1804
    %1869 = vst [vmem:[#allocation2 + $0x8] sm:$0xff] %v1805
    %1870 = vst [vmem:[#allocation2 + $0x10] sm:$0xff] %v1806
    %1871 = vst [vmem:[#allocation2 + $0x18] sm:$0xff] %v1807
    %1872 = vst [vmem:[#allocation2 + $0x20] sm:$0xff] %v1808
    %1873 = vst [vmem:[#allocation2 + $0x28] sm:$0xff] %v1809
    %1874 = vst [vmem:[#allocation2 + $0x30] sm:$0xff] %v1810
    %1875 = vst [vmem:[#allocation2 + $0x38] sm:$0xff] %v1811
    %1876 = vst [vmem:[#allocation2 + $0x40] sm:$0xff] %v1812
    %1877 = vst [vmem:[#allocation2 + $0x48] sm:$0xff] %v1813
    %1878 = vst [vmem:[#allocation2 + $0x50] sm:$0xff] %v1814
    %1879 = vst [vmem:[#allocation2 + $0x58] sm:$0xff] %v1815
    %1880 = vst [vmem:[#allocation2 + $0x60] sm:$0xff] %v1816
    %1881 = vst [vmem:[#allocation2 + $0x68] sm:$0xff] %v1817
    %1882 = vst [vmem:[#allocation2 + $0x70] sm:$0xff] %v1818
    %1883 = vst [vmem:[#allocation2 + $0x78] sm:$0xff] %v1819
    %1884 = vst [vmem:[#allocation2 + $0x80] sm:$0xff] %v1820
    %1885 = vst [vmem:[#allocation2 + $0x88] sm:$0xff] %v1821
    %1886 = vst [vmem:[#allocation2 + $0x90] sm:$0xff] %v1822
    %1887 = vst [vmem:[#allocation2 + $0x98] sm:$0xff] %v1823
    %1888 = vst [vmem:[#allocation2 + $0xa0] sm:$0xff] %v1824
    %1889 = vst [vmem:[#allocation2 + $0xa8] sm:$0xff] %v1825
    %1890 = vst [vmem:[#allocation2 + $0xb0] sm:$0xff] %v1826
    %1891 = vst [vmem:[#allocation2 + $0xb8] sm:$0xff] %v1827
    %1892 = vst [vmem:[#allocation2 + $0xc0] sm:$0xff] %v1828
    %1893 = vst [vmem:[#allocation2 + $0xc8] sm:$0xff] %v1829
    %1894 = vst [vmem:[#allocation2 + $0xd0] sm:$0xff] %v1830
    %1895 = vst [vmem:[#allocation2 + $0xd8] sm:$0xff] %v1831
    %1896 = vst [vmem:[#allocation2 + $0xe0] sm:$0xff] %v1832
    %1897 = vst [vmem:[#allocation2 + $0xe8] sm:$0xff] %v1833
    %1898 = vst [vmem:[#allocation2 + $0xf0] sm:$0xff] %v1834
    %1899 = vst [vmem:[#allocation2 + $0xf8] sm:$0xff] %v1835
    %1900 = vst [vmem:[#allocation2 + $0x100] sm:$0xff] %v1836
    %1901 = vst [vmem:[#allocation2 + $0x108] sm:$0xff] %v1837
    %1902 = vst [vmem:[#allocation2 + $0x110] sm:$0xff] %v1838
    %1903 = vst [vmem:[#allocation2 + $0x118] sm:$0xff] %v1839
    %1904 = vst [vmem:[#allocation2 + $0x120] sm:$0xff] %v1840
    %1905 = vst [vmem:[#allocation2 + $0x128] sm:$0xff] %v1841
    %1906 = vst [vmem:[#allocation2 + $0x130] sm:$0xff] %v1842
    %1907 = vst [vmem:[#allocation2 + $0x138] sm:$0xff] %v1843
    %1908 = vst [vmem:[#allocation2 + $0x140] sm:$0xff] %v1844
    %1909 = vst [vmem:[#allocation2 + $0x148] sm:$0xff] %v1845
    %1910 = vst [vmem:[#allocation2 + $0x150] sm:$0xff] %v1846
    %1911 = vst [vmem:[#allocation2 + $0x158] sm:$0xff] %v1847
    %1912 = vst [vmem:[#allocation2 + $0x160] sm:$0xff] %v1848
    %1913 = vst [vmem:[#allocation2 + $0x168] sm:$0xff] %v1849
    %1914 = vst [vmem:[#allocation2 + $0x170] sm:$0xff] %v1850
    %1915 = vst [vmem:[#allocation2 + $0x178] sm:$0xff] %v1851
    %1916 = vst [vmem:[#allocation2 + $0x180] sm:$0xff] %v1852
    %1917 = vst [vmem:[#allocation2 + $0x188] sm:$0xff] %v1853
    %1918 = vst [vmem:[#allocation2 + $0x190] sm:$0xff] %v1854
    %1919 = vst [vmem:[#allocation2 + $0x198] sm:$0xff] %v1855
    %1920 = vst [vmem:[#allocation2 + $0x1a0] sm:$0xff] %v1856
    %1921 = vst [vmem:[#allocation2 + $0x1a8] sm:$0xff] %v1857
    %1922 = vst [vmem:[#allocation2 + $0x1b0] sm:$0xff] %v1858
    %1923 = vst [vmem:[#allocation2 + $0x1b8] sm:$0xff] %v1859
    %1924 = vst [vmem:[#allocation2 + $0x1c0] sm:$0xff] %v1860
    %1925 = vst [vmem:[#allocation2 + $0x1c8] sm:$0xff] %v1861
    %1926 = vst [vmem:[#allocation2 + $0x1d0] sm:$0xff] %v1862
    %1927 = vst [vmem:[#allocation2 + $0x1d8] sm:$0xff] %v1863
    %1928 = vst [vmem:[#allocation2 + $0x1e0] sm:$0xff] %v1864
    %1929 = vst [vmem:[#allocation2 + $0x1e8] sm:$0xff] %v1865
    %1930 = vst [vmem:[#allocation2 + $0x1f0] sm:$0xff] %v1866
    %1931 = vst [vmem:[#allocation2 + $0x1f8] sm:$0xff] %v1867
  $region21: #{gcn_forward.7} parent=0 // pred_fallthru
    _
  // Predicated region
  $region22: #{gcn_forward.7} parent=0 // pred_check
    %p1932 = pneg %p56
  $region23: #{gcn_forward.7} parent=0 // pred_check_branch
    %1934 = sbr.rel (%p1932) target = $region25
  $region24: #{gcn_forward.7} parent=0 // pred_region
    %v1935 = vld [vmem:[#allocation2] sm:$0xff]
    %v1936 = vld [vmem:[#allocation2 + $0x8] sm:$0xff]
    %v1937 = vld [vmem:[#allocation2 + $0x10] sm:$0xff]
    %v1938 = vld [vmem:[#allocation2 + $0x18] sm:$0xff]
    %v1939 = vld [vmem:[#allocation2 + $0x20] sm:$0xff]
    %v1940 = vld [vmem:[#allocation2 + $0x28] sm:$0xff]
    %v1941 = vld [vmem:[#allocation2 + $0x30] sm:$0xff]
    %v1942 = vld [vmem:[#allocation2 + $0x38] sm:$0xff]
    %v1943 = vld [vmem:[#allocation2 + $0x40] sm:$0xff]
    %v1944 = vld [vmem:[#allocation2 + $0x48] sm:$0xff]
    %v1945 = vld [vmem:[#allocation2 + $0x50] sm:$0xff]
    %v1946 = vld [vmem:[#allocation2 + $0x58] sm:$0xff]
    %v1947 = vld [vmem:[#allocation2 + $0x60] sm:$0xff]
    %v1948 = vld [vmem:[#allocation2 + $0x68] sm:$0xff]
    %v1949 = vld [vmem:[#allocation2 + $0x70] sm:$0xff]
    %v1950 = vld [vmem:[#allocation2 + $0x78] sm:$0xff]
    %v1951 = vld [vmem:[#allocation2 + $0x80] sm:$0xff]
    %v1952 = vld [vmem:[#allocation2 + $0x88] sm:$0xff]
    %v1953 = vld [vmem:[#allocation2 + $0x90] sm:$0xff]
    %v1954 = vld [vmem:[#allocation2 + $0x98] sm:$0xff]
    %v1955 = vld [vmem:[#allocation2 + $0xa0] sm:$0xff]
    %v1956 = vld [vmem:[#allocation2 + $0xa8] sm:$0xff]
    %v1957 = vld [vmem:[#allocation2 + $0xb0] sm:$0xff]
    %v1958 = vld [vmem:[#allocation2 + $0xb8] sm:$0xff]
    %v1959 = vld [vmem:[#allocation2 + $0xc0] sm:$0xff]
    %v1960 = vld [vmem:[#allocation2 + $0xc8] sm:$0xff]
    %v1961 = vld [vmem:[#allocation2 + $0xd0] sm:$0xff]
    %v1962 = vld [vmem:[#allocation2 + $0xd8] sm:$0xff]
    %v1963 = vld [vmem:[#allocation2 + $0xe0] sm:$0xff]
    %v1964 = vld [vmem:[#allocation2 + $0xe8] sm:$0xff]
    %v1965 = vld [vmem:[#allocation2 + $0xf0] sm:$0xff]
    %v1966 = vld [vmem:[#allocation2 + $0xf8] sm:$0xff]
    %v1967 = vld [vmem:[#allocation2 + $0x100] sm:$0xff]
    %v1968 = vld [vmem:[#allocation2 + $0x108] sm:$0xff]
    %v1969 = vld [vmem:[#allocation2 + $0x110] sm:$0xff]
    %v1970 = vld [vmem:[#allocation2 + $0x118] sm:$0xff]
    %v1971 = vld [vmem:[#allocation2 + $0x120] sm:$0xff]
    %v1972 = vld [vmem:[#allocation2 + $0x128] sm:$0xff]
    %v1973 = vld [vmem:[#allocation2 + $0x130] sm:$0xff]
    %v1974 = vld [vmem:[#allocation2 + $0x138] sm:$0xff]
    %v1975 = vld [vmem:[#allocation2 + $0x140] sm:$0xff]
    %v1976 = vld [vmem:[#allocation2 + $0x148] sm:$0xff]
    %v1977 = vld [vmem:[#allocation2 + $0x150] sm:$0xff]
    %v1978 = vld [vmem:[#allocation2 + $0x158] sm:$0xff]
    %v1979 = vld [vmem:[#allocation2 + $0x160] sm:$0xff]
    %v1980 = vld [vmem:[#allocation2 + $0x168] sm:$0xff]
    %v1981 = vld [vmem:[#allocation2 + $0x170] sm:$0xff]
    %v1982 = vld [vmem:[#allocation2 + $0x178] sm:$0xff]
    %v1983 = vld [vmem:[#allocation2 + $0x180] sm:$0xff]
    %v1984 = vld [vmem:[#allocation2 + $0x188] sm:$0xff]
    %v1985 = vld [vmem:[#allocation2 + $0x190] sm:$0xff]
    %v1986 = vld [vmem:[#allocation2 + $0x198] sm:$0xff]
    %v1987 = vld [vmem:[#allocation2 + $0x1a0] sm:$0xff]
    %v1988 = vld [vmem:[#allocation2 + $0x1a8] sm:$0xff]
    %v1989 = vld [vmem:[#allocation2 + $0x1b0] sm:$0xff]
    %v1990 = vld [vmem:[#allocation2 + $0x1b8] sm:$0xff]
    %v1991 = vld [vmem:[#allocation2 + $0x1c0] sm:$0xff]
    %v1992 = vld [vmem:[#allocation2 + $0x1c8] sm:$0xff]
    %v1993 = vld [vmem:[#allocation2 + $0x1d0] sm:$0xff]
    %v1994 = vld [vmem:[#allocation2 + $0x1d8] sm:$0xff]
    %v1995 = vld [vmem:[#allocation2 + $0x1e0] sm:$0xff]
    %v1996 = vld [vmem:[#allocation2 + $0x1e8] sm:$0xff]
    %v1997 = vld [vmem:[#allocation2 + $0x1f0] sm:$0xff]
    %v1998 = vld [vmem:[#allocation2 + $0x1f8] sm:$0xff]
    %v1999 = vld [vmem:[%s4] sm:$0x1]
    %v2001 = vlaneseq
    %v2002 = vshrl.u32 %v2001, 7
    %v2003 = vsub.s32 0, %v2002
    %v2004 = vrot.slane %v1999, %v2003
    %v2006 = vadd.f32 %v1935, %v2004
    %v2007 = vadd.f32 %v1936, %v2004
    %v2008 = vadd.f32 %v1937, %v2004
    %v2009 = vadd.f32 %v1938, %v2004
    %v2010 = vadd.f32 %v1939, %v2004
    %v2011 = vadd.f32 %v1940, %v2004
    %v2012 = vadd.f32 %v1941, %v2004
    %v2013 = vadd.f32 %v1942, %v2004
    %v2014 = vadd.f32 %v1943, %v2004
    %v2015 = vadd.f32 %v1944, %v2004
    %v2016 = vadd.f32 %v1945, %v2004
    %v2017 = vadd.f32 %v1946, %v2004
    %v2018 = vadd.f32 %v1947, %v2004
    %v2019 = vadd.f32 %v1948, %v2004
    %v2020 = vadd.f32 %v1949, %v2004
    %v2021 = vadd.f32 %v1950, %v2004
    %v2022 = vadd.f32 %v1951, %v2004
    %v2023 = vadd.f32 %v1952, %v2004
    %v2024 = vadd.f32 %v1953, %v2004
    %v2025 = vadd.f32 %v1954, %v2004
    %v2026 = vadd.f32 %v1955, %v2004
    %v2027 = vadd.f32 %v1956, %v2004
    %v2028 = vadd.f32 %v1957, %v2004
    %v2029 = vadd.f32 %v1958, %v2004
    %v2030 = vadd.f32 %v1959, %v2004
    %v2031 = vadd.f32 %v1960, %v2004
    %v2032 = vadd.f32 %v1961, %v2004
    %v2033 = vadd.f32 %v1962, %v2004
    %v2034 = vadd.f32 %v1963, %v2004
    %v2035 = vadd.f32 %v1964, %v2004
    %v2036 = vadd.f32 %v1965, %v2004
    %v2037 = vadd.f32 %v1966, %v2004
    %v2038 = vadd.f32 %v1967, %v2004
    %v2039 = vadd.f32 %v1968, %v2004
    %v2040 = vadd.f32 %v1969, %v2004
    %v2041 = vadd.f32 %v1970, %v2004
    %v2042 = vadd.f32 %v1971, %v2004
    %v2043 = vadd.f32 %v1972, %v2004
    %v2044 = vadd.f32 %v1973, %v2004
    %v2045 = vadd.f32 %v1974, %v2004
    %v2046 = vadd.f32 %v1975, %v2004
    %v2047 = vadd.f32 %v1976, %v2004
    %v2048 = vadd.f32 %v1977, %v2004
    %v2049 = vadd.f32 %v1978, %v2004
    %v2050 = vadd.f32 %v1979, %v2004
    %v2051 = vadd.f32 %v1980, %v2004
    %v2052 = vadd.f32 %v1981, %v2004
    %v2053 = vadd.f32 %v1982, %v2004
    %v2054 = vadd.f32 %v1983, %v2004
    %v2055 = vadd.f32 %v1984, %v2004
    %v2056 = vadd.f32 %v1985, %v2004
    %v2057 = vadd.f32 %v1986, %v2004
    %v2058 = vadd.f32 %v1987, %v2004
    %v2059 = vadd.f32 %v1988, %v2004
    %v2060 = vadd.f32 %v1989, %v2004
    %v2061 = vadd.f32 %v1990, %v2004
    %v2062 = vadd.f32 %v1991, %v2004
    %v2063 = vadd.f32 %v1992, %v2004
    %v2064 = vadd.f32 %v1993, %v2004
    %v2065 = vadd.f32 %v1994, %v2004
    %v2066 = vadd.f32 %v1995, %v2004
    %v2067 = vadd.f32 %v1996, %v2004
    %v2068 = vadd.f32 %v1997, %v2004
    %v2069 = vadd.f32 %v1998, %v2004
    %v2070 = vlaneseq
    %v2071 = vand.u32 %v2070, 127
    %vm2072 = vcmp.lt.s32.totalorder %v2071, 4
    %v2073 = vsel %vm2072, %v2006, -1e+30
    %v2074 = vsel %vm2072, %v2007, -1e+30
    %v2075 = vsel %vm2072, %v2008, -1e+30
    %v2076 = vsel %vm2072, %v2009, -1e+30
    %v2077 = vsel %vm2072, %v2010, -1e+30
    %v2078 = vsel %vm2072, %v2011, -1e+30
    %v2079 = vsel %vm2072, %v2012, -1e+30
    %v2080 = vsel %vm2072, %v2013, -1e+30
    %v2081 = vsel %vm2072, %v2014, -1e+30
    %v2082 = vsel %vm2072, %v2015, -1e+30
    %v2083 = vsel %vm2072, %v2016, -1e+30
    %v2084 = vsel %vm2072, %v2017, -1e+30
    %v2085 = vsel %vm2072, %v2018, -1e+30
    %v2086 = vsel %vm2072, %v2019, -1e+30
    %v2087 = vsel %vm2072, %v2020, -1e+30
    %v2088 = vsel %vm2072, %v2021, -1e+30
    %v2089 = vsel %vm2072, %v2022, -1e+30
    %v2090 = vsel %vm2072, %v2023, -1e+30
    %v2091 = vsel %vm2072, %v2024, -1e+30
    %v2092 = vsel %vm2072, %v2025, -1e+30
    %v2093 = vsel %vm2072, %v2026, -1e+30
    %v2094 = vsel %vm2072, %v2027, -1e+30
    %v2095 = vsel %vm2072, %v2028, -1e+30
    %v2096 = vsel %vm2072, %v2029, -1e+30
    %v2097 = vsel %vm2072, %v2030, -1e+30
    %v2098 = vsel %vm2072, %v2031, -1e+30
    %v2099 = vsel %vm2072, %v2032, -1e+30
    %v2100 = vsel %vm2072, %v2033, -1e+30
    %v2101 = vsel %vm2072, %v2034, -1e+30
    %v2102 = vsel %vm2072, %v2035, -1e+30
    %v2103 = vsel %vm2072, %v2036, -1e+30
    %v2104 = vsel %vm2072, %v2037, -1e+30
    %v2105 = vsel %vm2072, %v2038, -1e+30
    %v2106 = vsel %vm2072, %v2039, -1e+30
    %v2107 = vsel %vm2072, %v2040, -1e+30
    %v2108 = vsel %vm2072, %v2041, -1e+30
    %v2109 = vsel %vm2072, %v2042, -1e+30
    %v2110 = vsel %vm2072, %v2043, -1e+30
    %v2111 = vsel %vm2072, %v2044, -1e+30
    %v2112 = vsel %vm2072, %v2045, -1e+30
    %v2113 = vsel %vm2072, %v2046, -1e+30
    %v2114 = vsel %vm2072, %v2047, -1e+30
    %v2115 = vsel %vm2072, %v2048, -1e+30
    %v2116 = vsel %vm2072, %v2049, -1e+30
    %v2117 = vsel %vm2072, %v2050, -1e+30
    %v2118 = vsel %vm2072, %v2051, -1e+30
    %v2119 = vsel %vm2072, %v2052, -1e+30
    %v2120 = vsel %vm2072, %v2053, -1e+30
    %v2121 = vsel %vm2072, %v2054, -1e+30
    %v2122 = vsel %vm2072, %v2055, -1e+30
    %v2123 = vsel %vm2072, %v2056, -1e+30
    %v2124 = vsel %vm2072, %v2057, -1e+30
    %v2125 = vsel %vm2072, %v2058, -1e+30
    %v2126 = vsel %vm2072, %v2059, -1e+30
    %v2127 = vsel %vm2072, %v2060, -1e+30
    %v2128 = vsel %vm2072, %v2061, -1e+30
    %v2129 = vsel %vm2072, %v2062, -1e+30
    %v2130 = vsel %vm2072, %v2063, -1e+30
    %v2131 = vsel %vm2072, %v2064, -1e+30
    %v2132 = vsel %vm2072, %v2065, -1e+30
    %v2133 = vsel %vm2072, %v2066, -1e+30
    %v2134 = vsel %vm2072, %v2067, -1e+30
    %v2135 = vsel %vm2072, %v2068, -1e+30
    %v2136 = vsel %vm2072, %v2069, -1e+30
    %2137 = vmax.xlane.f32.xlu0 %v2073
    %v2138 = vpop.xlane.xlu0 %2137
    %2139 = vmax.xlane.f32.xlu0 %v2074
    %v2140 = vpop.xlane.xlu0 %2139
    %2141 = vmax.xlane.f32.xlu0 %v2075
    %v2142 = vpop.xlane.xlu0 %2141
    %2143 = vmax.xlane.f32.xlu0 %v2076
    %v2144 = vpop.xlane.xlu0 %2143
    %2145 = vmax.xlane.f32.xlu0 %v2077
    %v2146 = vpop.xlane.xlu0 %2145
    %2147 = vmax.xlane.f32.xlu0 %v2078
    %v2148 = vpop.xlane.xlu0 %2147
    %2149 = vmax.xlane.f32.xlu0 %v2079
    %v2150 = vpop.xlane.xlu0 %2149
    %2151 = vmax.xlane.f32.xlu0 %v2080
    %v2152 = vpop.xlane.xlu0 %2151
    %2153 = vmax.xlane.f32.xlu0 %v2081
    %v2154 = vpop.xlane.xlu0 %2153
    %2155 = vmax.xlane.f32.xlu0 %v2082
    %v2156 = vpop.xlane.xlu0 %2155
    %2157 = vmax.xlane.f32.xlu0 %v2083
    %v2158 = vpop.xlane.xlu0 %2157
    %2159 = vmax.xlane.f32.xlu0 %v2084
    %v2160 = vpop.xlane.xlu0 %2159
    %2161 = vmax.xlane.f32.xlu0 %v2085
    %v2162 = vpop.xlane.xlu0 %2161
    %2163 = vmax.xlane.f32.xlu0 %v2086
    %v2164 = vpop.xlane.xlu0 %2163
    %2165 = vmax.xlane.f32.xlu0 %v2087
    %v2166 = vpop.xlane.xlu0 %2165
    %2167 = vmax.xlane.f32.xlu0 %v2088
    %v2168 = vpop.xlane.xlu0 %2167
    %2169 = vmax.xlane.f32.xlu0 %v2089
    %v2170 = vpop.xlane.xlu0 %2169
    %2171 = vmax.xlane.f32.xlu0 %v2090
    %v2172 = vpop.xlane.xlu0 %2171
    %2173 = vmax.xlane.f32.xlu0 %v2091
    %v2174 = vpop.xlane.xlu0 %2173
    %2175 = vmax.xlane.f32.xlu0 %v2092
    %v2176 = vpop.xlane.xlu0 %2175
    %2177 = vmax.xlane.f32.xlu0 %v2093
    %v2178 = vpop.xlane.xlu0 %2177
    %2179 = vmax.xlane.f32.xlu0 %v2094
    %v2180 = vpop.xlane.xlu0 %2179
    %2181 = vmax.xlane.f32.xlu0 %v2095
    %v2182 = vpop.xlane.xlu0 %2181
    %2183 = vmax.xlane.f32.xlu0 %v2096
    %v2184 = vpop.xlane.xlu0 %2183
    %2185 = vmax.xlane.f32.xlu0 %v2097
    %v2186 = vpop.xlane.xlu0 %2185
    %2187 = vmax.xlane.f32.xlu0 %v2098
    %v2188 = vpop.xlane.xlu0 %2187
    %2189 = vmax.xlane.f32.xlu0 %v2099
    %v2190 = vpop.xlane.xlu0 %2189
    %2191 = vmax.xlane.f32.xlu0 %v2100
    %v2192 = vpop.xlane.xlu0 %2191
    %2193 = vmax.xlane.f32.xlu0 %v2101
    %v2194 = vpop.xlane.xlu0 %2193
    %2195 = vmax.xlane.f32.xlu0 %v2102
    %v2196 = vpop.xlane.xlu0 %2195
    %2197 = vmax.xlane.f32.xlu0 %v2103
    %v2198 = vpop.xlane.xlu0 %2197
    %2199 = vmax.xlane.f32.xlu0 %v2104
    %v2200 = vpop.xlane.xlu0 %2199
    %2201 = vmax.xlane.f32.xlu0 %v2105
    %v2202 = vpop.xlane.xlu0 %2201
    %2203 = vmax.xlane.f32.xlu0 %v2106
    %v2204 = vpop.xlane.xlu0 %2203
    %2205 = vmax.xlane.f32.xlu0 %v2107
    %v2206 = vpop.xlane.xlu0 %2205
    %2207 = vmax.xlane.f32.xlu0 %v2108
    %v2208 = vpop.xlane.xlu0 %2207
    %2209 = vmax.xlane.f32.xlu0 %v2109
    %v2210 = vpop.xlane.xlu0 %2209
    %2211 = vmax.xlane.f32.xlu0 %v2110
    %v2212 = vpop.xlane.xlu0 %2211
    %2213 = vmax.xlane.f32.xlu0 %v2111
    %v2214 = vpop.xlane.xlu0 %2213
    %2215 = vmax.xlane.f32.xlu0 %v2112
    %v2216 = vpop.xlane.xlu0 %2215
    %2217 = vmax.xlane.f32.xlu0 %v2113
    %v2218 = vpop.xlane.xlu0 %2217
    %2219 = vmax.xlane.f32.xlu0 %v2114
    %v2220 = vpop.xlane.xlu0 %2219
    %2221 = vmax.xlane.f32.xlu0 %v2115
    %v2222 = vpop.xlane.xlu0 %2221
    %2223 = vmax.xlane.f32.xlu0 %v2116
    %v2224 = vpop.xlane.xlu0 %2223
    %2225 = vmax.xlane.f32.xlu0 %v2117
    %v2226 = vpop.xlane.xlu0 %2225
    %2227 = vmax.xlane.f32.xlu0 %v2118
    %v2228 = vpop.xlane.xlu0 %2227
    %2229 = vmax.xlane.f32.xlu0 %v2119
    %v2230 = vpop.xlane.xlu0 %2229
    %2231 = vmax.xlane.f32.xlu0 %v2120
    %v2232 = vpop.xlane.xlu0 %2231
    %2233 = vmax.xlane.f32.xlu0 %v2121
    %v2234 = vpop.xlane.xlu0 %2233
    %2235 = vmax.xlane.f32.xlu0 %v2122
    %v2236 = vpop.xlane.xlu0 %2235
    %2237 = vmax.xlane.f32.xlu0 %v2123
    %v2238 = vpop.xlane.xlu0 %2237
    %2239 = vmax.xlane.f32.xlu0 %v2124
    %v2240 = vpop.xlane.xlu0 %2239
    %2241 = vmax.xlane.f32.xlu0 %v2125
    %v2242 = vpop.xlane.xlu0 %2241
    %2243 = vmax.xlane.f32.xlu0 %v2126
    %v2244 = vpop.xlane.xlu0 %2243
    %2245 = vmax.xlane.f32.xlu0 %v2127
    %v2246 = vpop.xlane.xlu0 %2245
    %2247 = vmax.xlane.f32.xlu0 %v2128
    %v2248 = vpop.xlane.xlu0 %2247
    %2249 = vmax.xlane.f32.xlu0 %v2129
    %v2250 = vpop.xlane.xlu0 %2249
    %2251 = vmax.xlane.f32.xlu0 %v2130
    %v2252 = vpop.xlane.xlu0 %2251
    %2253 = vmax.xlane.f32.xlu0 %v2131
    %v2254 = vpop.xlane.xlu0 %2253
    %2255 = vmax.xlane.f32.xlu0 %v2132
    %v2256 = vpop.xlane.xlu0 %2255
    %2257 = vmax.xlane.f32.xlu0 %v2133
    %v2258 = vpop.xlane.xlu0 %2257
    %2259 = vmax.xlane.f32.xlu0 %v2134
    %v2260 = vpop.xlane.xlu0 %2259
    %2261 = vmax.xlane.f32.xlu0 %v2135
    %v2262 = vpop.xlane.xlu0 %2261
    %2263 = vmax.xlane.f32.xlu0 %v2136
    %v2264 = vpop.xlane.xlu0 %2263
    %v2265 = vsub.f32 %v2073, %v2138
    %v2266 = vsub.f32 %v2074, %v2140
    %v2267 = vsub.f32 %v2075, %v2142
    %v2268 = vsub.f32 %v2076, %v2144
    %v2269 = vsub.f32 %v2077, %v2146
    %v2270 = vsub.f32 %v2078, %v2148
    %v2271 = vsub.f32 %v2079, %v2150
    %v2272 = vsub.f32 %v2080, %v2152
    %v2273 = vsub.f32 %v2081, %v2154
    %v2274 = vsub.f32 %v2082, %v2156
    %v2275 = vsub.f32 %v2083, %v2158
    %v2276 = vsub.f32 %v2084, %v2160
    %v2277 = vsub.f32 %v2085, %v2162
    %v2278 = vsub.f32 %v2086, %v2164
    %v2279 = vsub.f32 %v2087, %v2166
    %v2280 = vsub.f32 %v2088, %v2168
    %v2281 = vsub.f32 %v2089, %v2170
    %v2282 = vsub.f32 %v2090, %v2172
    %v2283 = vsub.f32 %v2091, %v2174
    %v2284 = vsub.f32 %v2092, %v2176
    %v2285 = vsub.f32 %v2093, %v2178
    %v2286 = vsub.f32 %v2094, %v2180
    %v2287 = vsub.f32 %v2095, %v2182
    %v2288 = vsub.f32 %v2096, %v2184
    %v2289 = vsub.f32 %v2097, %v2186
    %v2290 = vsub.f32 %v2098, %v2188
    %v2291 = vsub.f32 %v2099, %v2190
    %v2292 = vsub.f32 %v2100, %v2192
    %v2293 = vsub.f32 %v2101, %v2194
    %v2294 = vsub.f32 %v2102, %v2196
    %v2295 = vsub.f32 %v2103, %v2198
    %v2296 = vsub.f32 %v2104, %v2200
    %v2297 = vsub.f32 %v2105, %v2202
    %v2298 = vsub.f32 %v2106, %v2204
    %v2299 = vsub.f32 %v2107, %v2206
    %v2300 = vsub.f32 %v2108, %v2208
    %v2301 = vsub.f32 %v2109, %v2210
    %v2302 = vsub.f32 %v2110, %v2212
    %v2303 = vsub.f32 %v2111, %v2214
    %v2304 = vsub.f32 %v2112, %v2216
    %v2305 = vsub.f32 %v2113, %v2218
    %v2306 = vsub.f32 %v2114, %v2220
    %v2307 = vsub.f32 %v2115, %v2222
    %v2308 = vsub.f32 %v2116, %v2224
    %v2309 = vsub.f32 %v2117, %v2226
    %v2310 = vsub.f32 %v2118, %v2228
    %v2311 = vsub.f32 %v2119, %v2230
    %v2312 = vsub.f32 %v2120, %v2232
    %v2313 = vsub.f32 %v2121, %v2234
    %v2314 = vsub.f32 %v2122, %v2236
    %v2315 = vsub.f32 %v2123, %v2238
    %v2316 = vsub.f32 %v2124, %v2240
    %v2317 = vsub.f32 %v2125, %v2242
    %v2318 = vsub.f32 %v2126, %v2244
    %v2319 = vsub.f32 %v2127, %v2246
    %v2320 = vsub.f32 %v2128, %v2248
    %v2321 = vsub.f32 %v2129, %v2250
    %v2322 = vsub.f32 %v2130, %v2252
    %v2323 = vsub.f32 %v2131, %v2254
    %v2324 = vsub.f32 %v2132, %v2256
    %v2325 = vsub.f32 %v2133, %v2258
    %v2326 = vsub.f32 %v2134, %v2260
    %v2327 = vsub.f32 %v2135, %v2262
    %v2328 = vsub.f32 %v2136, %v2264
    %v2329 = vmul.f32 %v2265, 1.442695
    %v2330 = vpow.pop %v2329
    %v2331 = vmul.f32 %v2266, 1.442695
    %v2332 = vpow.pop %v2331
    %v2333 = vmul.f32 %v2267, 1.442695
    %v2334 = vpow.pop %v2333
    %v2335 = vmul.f32 %v2268, 1.442695
    %v2336 = vpow.pop %v2335
    %v2337 = vmul.f32 %v2269, 1.442695
    %v2338 = vpow.pop %v2337
    %v2339 = vmul.f32 %v2270, 1.442695
    %v2340 = vpow.pop %v2339
    %v2341 = vmul.f32 %v2271, 1.442695
    %v2342 = vpow.pop %v2341
    %v2343 = vmul.f32 %v2272, 1.442695
    %v2344 = vpow.pop %v2343
    %v2345 = vmul.f32 %v2273, 1.442695
    %v2346 = vpow.pop %v2345
    %v2347 = vmul.f32 %v2274, 1.442695
    %v2348 = vpow.pop %v2347
    %v2349 = vmul.f32 %v2275, 1.442695
    %v2350 = vpow.pop %v2349
    %v2351 = vmul.f32 %v2276, 1.442695
    %v2352 = vpow.pop %v2351
    %v2353 = vmul.f32 %v2277, 1.442695
    %v2354 = vpow.pop %v2353
    %v2355 = vmul.f32 %v2278, 1.442695
    %v2356 = vpow.pop %v2355
    %v2357 = vmul.f32 %v2279, 1.442695
    %v2358 = vpow.pop %v2357
    %v2359 = vmul.f32 %v2280, 1.442695
    %v2360 = vpow.pop %v2359
    %v2361 = vmul.f32 %v2281, 1.442695
    %v2362 = vpow.pop %v2361
    %v2363 = vmul.f32 %v2282, 1.442695
    %v2364 = vpow.pop %v2363
    %v2365 = vmul.f32 %v2283, 1.442695
    %v2366 = vpow.pop %v2365
    %v2367 = vmul.f32 %v2284, 1.442695
    %v2368 = vpow.pop %v2367
    %v2369 = vmul.f32 %v2285, 1.442695
    %v2370 = vpow.pop %v2369
    %v2371 = vmul.f32 %v2286, 1.442695
    %v2372 = vpow.pop %v2371
    %v2373 = vmul.f32 %v2287, 1.442695
    %v2374 = vpow.pop %v2373
    %v2375 = vmul.f32 %v2288, 1.442695
    %v2376 = vpow.pop %v2375
    %v2377 = vmul.f32 %v2289, 1.442695
    %v2378 = vpow.pop %v2377
    %v2379 = vmul.f32 %v2290, 1.442695
    %v2380 = vpow.pop %v2379
    %v2381 = vmul.f32 %v2291, 1.442695
    %v2382 = vpow.pop %v2381
    %v2383 = vmul.f32 %v2292, 1.442695
    %v2384 = vpow.pop %v2383
    %v2385 = vmul.f32 %v2293, 1.442695
    %v2386 = vpow.pop %v2385
    %v2387 = vmul.f32 %v2294, 1.442695
    %v2388 = vpow.pop %v2387
    %v2389 = vmul.f32 %v2295, 1.442695
    %v2390 = vpow.pop %v2389
    %v2391 = vmul.f32 %v2296, 1.442695
    %v2392 = vpow.pop %v2391
    %v2393 = vmul.f32 %v2297, 1.442695
    %v2394 = vpow.pop %v2393
    %v2395 = vmul.f32 %v2298, 1.442695
    %v2396 = vpow.pop %v2395
    %v2397 = vmul.f32 %v2299, 1.442695
    %v2398 = vpow.pop %v2397
    %v2399 = vmul.f32 %v2300, 1.442695
    %v2400 = vpow.pop %v2399
    %v2401 = vmul.f32 %v2301, 1.442695
    %v2402 = vpow.pop %v2401
    %v2403 = vmul.f32 %v2302, 1.442695
    %v2404 = vpow.pop %v2403
    %v2405 = vmul.f32 %v2303, 1.442695
    %v2406 = vpow.pop %v2405
    %v2407 = vmul.f32 %v2304, 1.442695
    %v2408 = vpow.pop %v2407
    %v2409 = vmul.f32 %v2305, 1.442695
    %v2410 = vpow.pop %v2409
    %v2411 = vmul.f32 %v2306, 1.442695
    %v2412 = vpow.pop %v2411
    %v2413 = vmul.f32 %v2307, 1.442695
    %v2414 = vpow.pop %v2413
    %v2415 = vmul.f32 %v2308, 1.442695
    %v2416 = vpow.pop %v2415
    %v2417 = vmul.f32 %v2309, 1.442695
    %v2418 = vpow.pop %v2417
    %v2419 = vmul.f32 %v2310, 1.442695
    %v2420 = vpow.pop %v2419
    %v2421 = vmul.f32 %v2311, 1.442695
    %v2422 = vpow.pop %v2421
    %v2423 = vmul.f32 %v2312, 1.442695
    %v2424 = vpow.pop %v2423
    %v2425 = vmul.f32 %v2313, 1.442695
    %v2426 = vpow.pop %v2425
    %v2427 = vmul.f32 %v2314, 1.442695
    %v2428 = vpow.pop %v2427
    %v2429 = vmul.f32 %v2315, 1.442695
    %v2430 = vpow.pop %v2429
    %v2431 = vmul.f32 %v2316, 1.442695
    %v2432 = vpow.pop %v2431
    %v2433 = vmul.f32 %v2317, 1.442695
    %v2434 = vpow.pop %v2433
    %v2435 = vmul.f32 %v2318, 1.442695
    %v2436 = vpow.pop %v2435
    %v2437 = vmul.f32 %v2319, 1.442695
    %v2438 = vpow.pop %v2437
    %v2439 = vmul.f32 %v2320, 1.442695
    %v2440 = vpow.pop %v2439
    %v2441 = vmul.f32 %v2321, 1.442695
    %v2442 = vpow.pop %v2441
    %v2443 = vmul.f32 %v2322, 1.442695
    %v2444 = vpow.pop %v2443
    %v2445 = vmul.f32 %v2323, 1.442695
    %v2446 = vpow.pop %v2445
    %v2447 = vmul.f32 %v2324, 1.442695
    %v2448 = vpow.pop %v2447
    %v2449 = vmul.f32 %v2325, 1.442695
    %v2450 = vpow.pop %v2449
    %v2451 = vmul.f32 %v2326, 1.442695
    %v2452 = vpow.pop %v2451
    %v2453 = vmul.f32 %v2327, 1.442695
    %v2454 = vpow.pop %v2453
    %v2455 = vmul.f32 %v2328, 1.442695
    %v2456 = vpow.pop %v2455
    %2457 = vadd.xlane.f32.xlu0 %v2330
    %v2458 = vpop.xlane.xlu0 %2457
    %2459 = vadd.xlane.f32.xlu0 %v2332
    %v2460 = vpop.xlane.xlu0 %2459
    %2461 = vadd.xlane.f32.xlu0 %v2334
    %v2462 = vpop.xlane.xlu0 %2461
    %2463 = vadd.xlane.f32.xlu0 %v2336
    %v2464 = vpop.xlane.xlu0 %2463
    %2465 = vadd.xlane.f32.xlu0 %v2338
    %v2466 = vpop.xlane.xlu0 %2465
    %2467 = vadd.xlane.f32.xlu0 %v2340
    %v2468 = vpop.xlane.xlu0 %2467
    %2469 = vadd.xlane.f32.xlu0 %v2342
    %v2470 = vpop.xlane.xlu0 %2469
    %2471 = vadd.xlane.f32.xlu0 %v2344
    %v2472 = vpop.xlane.xlu0 %2471
    %2473 = vadd.xlane.f32.xlu0 %v2346
    %v2474 = vpop.xlane.xlu0 %2473
    %2475 = vadd.xlane.f32.xlu0 %v2348
    %v2476 = vpop.xlane.xlu0 %2475
    %2477 = vadd.xlane.f32.xlu0 %v2350
    %v2478 = vpop.xlane.xlu0 %2477
    %2479 = vadd.xlane.f32.xlu0 %v2352
    %v2480 = vpop.xlane.xlu0 %2479
    %2481 = vadd.xlane.f32.xlu0 %v2354
    %v2482 = vpop.xlane.xlu0 %2481
    %2483 = vadd.xlane.f32.xlu0 %v2356
    %v2484 = vpop.xlane.xlu0 %2483
    %2485 = vadd.xlane.f32.xlu0 %v2358
    %v2486 = vpop.xlane.xlu0 %2485
    %2487 = vadd.xlane.f32.xlu0 %v2360
    %v2488 = vpop.xlane.xlu0 %2487
    %2489 = vadd.xlane.f32.xlu0 %v2362
    %v2490 = vpop.xlane.xlu0 %2489
    %2491 = vadd.xlane.f32.xlu0 %v2364
    %v2492 = vpop.xlane.xlu0 %2491
    %2493 = vadd.xlane.f32.xlu0 %v2366
    %v2494 = vpop.xlane.xlu0 %2493
    %2495 = vadd.xlane.f32.xlu0 %v2368
    %v2496 = vpop.xlane.xlu0 %2495
    %2497 = vadd.xlane.f32.xlu0 %v2370
    %v2498 = vpop.xlane.xlu0 %2497
    %2499 = vadd.xlane.f32.xlu0 %v2372
    %v2500 = vpop.xlane.xlu0 %2499
    %2501 = vadd.xlane.f32.xlu0 %v2374
    %v2502 = vpop.xlane.xlu0 %2501
    %2503 = vadd.xlane.f32.xlu0 %v2376
    %v2504 = vpop.xlane.xlu0 %2503
    %2505 = vadd.xlane.f32.xlu0 %v2378
    %v2506 = vpop.xlane.xlu0 %2505
    %2507 = vadd.xlane.f32.xlu0 %v2380
    %v2508 = vpop.xlane.xlu0 %2507
    %2509 = vadd.xlane.f32.xlu0 %v2382
    %v2510 = vpop.xlane.xlu0 %2509
    %2511 = vadd.xlane.f32.xlu0 %v2384
    %v2512 = vpop.xlane.xlu0 %2511
    %2513 = vadd.xlane.f32.xlu0 %v2386
    %v2514 = vpop.xlane.xlu0 %2513
    %2515 = vadd.xlane.f32.xlu0 %v2388
    %v2516 = vpop.xlane.xlu0 %2515
    %2517 = vadd.xlane.f32.xlu0 %v2390
    %v2518 = vpop.xlane.xlu0 %2517
    %2519 = vadd.xlane.f32.xlu0 %v2392
    %v2520 = vpop.xlane.xlu0 %2519
    %2521 = vadd.xlane.f32.xlu0 %v2394
    %v2522 = vpop.xlane.xlu0 %2521
    %2523 = vadd.xlane.f32.xlu0 %v2396
    %v2524 = vpop.xlane.xlu0 %2523
    %2525 = vadd.xlane.f32.xlu0 %v2398
    %v2526 = vpop.xlane.xlu0 %2525
    %2527 = vadd.xlane.f32.xlu0 %v2400
    %v2528 = vpop.xlane.xlu0 %2527
    %2529 = vadd.xlane.f32.xlu0 %v2402
    %v2530 = vpop.xlane.xlu0 %2529
    %2531 = vadd.xlane.f32.xlu0 %v2404
    %v2532 = vpop.xlane.xlu0 %2531
    %2533 = vadd.xlane.f32.xlu0 %v2406
    %v2534 = vpop.xlane.xlu0 %2533
    %2535 = vadd.xlane.f32.xlu0 %v2408
    %v2536 = vpop.xlane.xlu0 %2535
    %2537 = vadd.xlane.f32.xlu0 %v2410
    %v2538 = vpop.xlane.xlu0 %2537
    %2539 = vadd.xlane.f32.xlu0 %v2412
    %v2540 = vpop.xlane.xlu0 %2539
    %2541 = vadd.xlane.f32.xlu0 %v2414
    %v2542 = vpop.xlane.xlu0 %2541
    %2543 = vadd.xlane.f32.xlu0 %v2416
    %v2544 = vpop.xlane.xlu0 %2543
    %2545 = vadd.xlane.f32.xlu0 %v2418
    %v2546 = vpop.xlane.xlu0 %2545
    %2547 = vadd.xlane.f32.xlu0 %v2420
    %v2548 = vpop.xlane.xlu0 %2547
    %2549 = vadd.xlane.f32.xlu0 %v2422
    %v2550 = vpop.xlane.xlu0 %2549
    %2551 = vadd.xlane.f32.xlu0 %v2424
    %v2552 = vpop.xlane.xlu0 %2551
    %2553 = vadd.xlane.f32.xlu0 %v2426
    %v2554 = vpop.xlane.xlu0 %2553
    %2555 = vadd.xlane.f32.xlu0 %v2428
    %v2556 = vpop.xlane.xlu0 %2555
    %2557 = vadd.xlane.f32.xlu0 %v2430
    %v2558 = vpop.xlane.xlu0 %2557
    %2559 = vadd.xlane.f32.xlu0 %v2432
    %v2560 = vpop.xlane.xlu0 %2559
    %2561 = vadd.xlane.f32.xlu0 %v2434
    %v2562 = vpop.xlane.xlu0 %2561
    %2563 = vadd.xlane.f32.xlu0 %v2436
    %v2564 = vpop.xlane.xlu0 %2563
    %2565 = vadd.xlane.f32.xlu0 %v2438
    %v2566 = vpop.xlane.xlu0 %2565
    %2567 = vadd.xlane.f32.xlu0 %v2440
    %v2568 = vpop.xlane.xlu0 %2567
    %2569 = vadd.xlane.f32.xlu0 %v2442
    %v2570 = vpop.xlane.xlu0 %2569
    %2571 = vadd.xlane.f32.xlu0 %v2444
    %v2572 = vpop.xlane.xlu0 %2571
    %2573 = vadd.xlane.f32.xlu0 %v2446
    %v2574 = vpop.xlane.xlu0 %2573
    %2575 = vadd.xlane.f32.xlu0 %v2448
    %v2576 = vpop.xlane.xlu0 %2575
    %2577 = vadd.xlane.f32.xlu0 %v2450
    %v2578 = vpop.xlane.xlu0 %2577
    %2579 = vadd.xlane.f32.xlu0 %v2452
    %v2580 = vpop.xlane.xlu0 %2579
    %2581 = vadd.xlane.f32.xlu0 %v2454
    %v2582 = vpop.xlane.xlu0 %2581
    %2583 = vadd.xlane.f32.xlu0 %v2456
    %v2584 = vpop.xlane.xlu0 %2583
    %v2585 = vlog2.pop %v2458
    %v2586 = vmul.f32 %v2585, 0.6931472
    %v2587 = vlog2.pop %v2460
    %v2588 = vmul.f32 %v2587, 0.6931472
    %v2589 = vlog2.pop %v2462
    %v2590 = vmul.f32 %v2589, 0.6931472
    %v2591 = vlog2.pop %v2464
    %v2592 = vmul.f32 %v2591, 0.6931472
    %v2593 = vlog2.pop %v2466
    %v2594 = vmul.f32 %v2593, 0.6931472
    %v2595 = vlog2.pop %v2468
    %v2596 = vmul.f32 %v2595, 0.6931472
    %v2597 = vlog2.pop %v2470
    %v2598 = vmul.f32 %v2597, 0.6931472
    %v2599 = vlog2.pop %v2472
    %v2600 = vmul.f32 %v2599, 0.6931472
    %v2601 = vlog2.pop %v2474
    %v2602 = vmul.f32 %v2601, 0.6931472
    %v2603 = vlog2.pop %v2476
    %v2604 = vmul.f32 %v2603, 0.6931472
    %v2605 = vlog2.pop %v2478
    %v2606 = vmul.f32 %v2605, 0.6931472
    %v2607 = vlog2.pop %v2480
    %v2608 = vmul.f32 %v2607, 0.6931472
    %v2609 = vlog2.pop %v2482
    %v2610 = vmul.f32 %v2609, 0.6931472
    %v2611 = vlog2.pop %v2484
    %v2612 = vmul.f32 %v2611, 0.6931472
    %v2613 = vlog2.pop %v2486
    %v2614 = vmul.f32 %v2613, 0.6931472
    %v2615 = vlog2.pop %v2488
    %v2616 = vmul.f32 %v2615, 0.6931472
    %v2617 = vlog2.pop %v2490
    %v2618 = vmul.f32 %v2617, 0.6931472
    %v2619 = vlog2.pop %v2492
    %v2620 = vmul.f32 %v2619, 0.6931472
    %v2621 = vlog2.pop %v2494
    %v2622 = vmul.f32 %v2621, 0.6931472
    %v2623 = vlog2.pop %v2496
    %v2624 = vmul.f32 %v2623, 0.6931472
    %v2625 = vlog2.pop %v2498
    %v2626 = vmul.f32 %v2625, 0.6931472
    %v2627 = vlog2.pop %v2500
    %v2628 = vmul.f32 %v2627, 0.6931472
    %v2629 = vlog2.pop %v2502
    %v2630 = vmul.f32 %v2629, 0.6931472
    %v2631 = vlog2.pop %v2504
    %v2632 = vmul.f32 %v2631, 0.6931472
    %v2633 = vlog2.pop %v2506
    %v2634 = vmul.f32 %v2633, 0.6931472
    %v2635 = vlog2.pop %v2508
    %v2636 = vmul.f32 %v2635, 0.6931472
    %v2637 = vlog2.pop %v2510
    %v2638 = vmul.f32 %v2637, 0.6931472
    %v2639 = vlog2.pop %v2512
    %v2640 = vmul.f32 %v2639, 0.6931472
    %v2641 = vlog2.pop %v2514
    %v2642 = vmul.f32 %v2641, 0.6931472
    %v2643 = vlog2.pop %v2516
    %v2644 = vmul.f32 %v2643, 0.6931472
    %v2645 = vlog2.pop %v2518
    %v2646 = vmul.f32 %v2645, 0.6931472
    %v2647 = vlog2.pop %v2520
    %v2648 = vmul.f32 %v2647, 0.6931472
    %v2649 = vlog2.pop %v2522
    %v2650 = vmul.f32 %v2649, 0.6931472
    %v2651 = vlog2.pop %v2524
    %v2652 = vmul.f32 %v2651, 0.6931472
    %v2653 = vlog2.pop %v2526
    %v2654 = vmul.f32 %v2653, 0.6931472
    %v2655 = vlog2.pop %v2528
    %v2656 = vmul.f32 %v2655, 0.6931472
    %v2657 = vlog2.pop %v2530
    %v2658 = vmul.f32 %v2657, 0.6931472
    %v2659 = vlog2.pop %v2532
    %v2660 = vmul.f32 %v2659, 0.6931472
    %v2661 = vlog2.pop %v2534
    %v2662 = vmul.f32 %v2661, 0.6931472
    %v2663 = vlog2.pop %v2536
    %v2664 = vmul.f32 %v2663, 0.6931472
    %v2665 = vlog2.pop %v2538
    %v2666 = vmul.f32 %v2665, 0.6931472
    %v2667 = vlog2.pop %v2540
    %v2668 = vmul.f32 %v2667, 0.6931472
    %v2669 = vlog2.pop %v2542
    %v2670 = vmul.f32 %v2669, 0.6931472
    %v2671 = vlog2.pop %v2544
    %v2672 = vmul.f32 %v2671, 0.6931472
    %v2673 = vlog2.pop %v2546
    %v2674 = vmul.f32 %v2673, 0.6931472
    %v2675 = vlog2.pop %v2548
    %v2676 = vmul.f32 %v2675, 0.6931472
    %v2677 = vlog2.pop %v2550
    %v2678 = vmul.f32 %v2677, 0.6931472
    %v2679 = vlog2.pop %v2552
    %v2680 = vmul.f32 %v2679, 0.6931472
    %v2681 = vlog2.pop %v2554
    %v2682 = vmul.f32 %v2681, 0.6931472
    %v2683 = vlog2.pop %v2556
    %v2684 = vmul.f32 %v2683, 0.6931472
    %v2685 = vlog2.pop %v2558
    %v2686 = vmul.f32 %v2685, 0.6931472
    %v2687 = vlog2.pop %v2560
    %v2688 = vmul.f32 %v2687, 0.6931472
    %v2689 = vlog2.pop %v2562
    %v2690 = vmul.f32 %v2689, 0.6931472
    %v2691 = vlog2.pop %v2564
    %v2692 = vmul.f32 %v2691, 0.6931472
    %v2693 = vlog2.pop %v2566
    %v2694 = vmul.f32 %v2693, 0.6931472
    %v2695 = vlog2.pop %v2568
    %v2696 = vmul.f32 %v2695, 0.6931472
    %v2697 = vlog2.pop %v2570
    %v2698 = vmul.f32 %v2697, 0.6931472
    %v2699 = vlog2.pop %v2572
    %v2700 = vmul.f32 %v2699, 0.6931472
    %v2701 = vlog2.pop %v2574
    %v2702 = vmul.f32 %v2701, 0.6931472
    %v2703 = vlog2.pop %v2576
    %v2704 = vmul.f32 %v2703, 0.6931472
    %v2705 = vlog2.pop %v2578
    %v2706 = vmul.f32 %v2705, 0.6931472
    %v2707 = vlog2.pop %v2580
    %v2708 = vmul.f32 %v2707, 0.6931472
    %v2709 = vlog2.pop %v2582
    %v2710 = vmul.f32 %v2709, 0.6931472
    %v2711 = vlog2.pop %v2584
    %v2712 = vmul.f32 %v2711, 0.6931472
    %v2713 = vadd.f32 %v2586, %v2138
    %v2714 = vadd.f32 %v2588, %v2140
    %v2715 = vadd.f32 %v2590, %v2142
    %v2716 = vadd.f32 %v2592, %v2144
    %v2717 = vadd.f32 %v2594, %v2146
    %v2718 = vadd.f32 %v2596, %v2148
    %v2719 = vadd.f32 %v2598, %v2150
    %v2720 = vadd.f32 %v2600, %v2152
    %v2721 = vadd.f32 %v2602, %v2154
    %v2722 = vadd.f32 %v2604, %v2156
    %v2723 = vadd.f32 %v2606, %v2158
    %v2724 = vadd.f32 %v2608, %v2160
    %v2725 = vadd.f32 %v2610, %v2162
    %v2726 = vadd.f32 %v2612, %v2164
    %v2727 = vadd.f32 %v2614, %v2166
    %v2728 = vadd.f32 %v2616, %v2168
    %v2729 = vadd.f32 %v2618, %v2170
    %v2730 = vadd.f32 %v2620, %v2172
    %v2731 = vadd.f32 %v2622, %v2174
    %v2732 = vadd.f32 %v2624, %v2176
    %v2733 = vadd.f32 %v2626, %v2178
    %v2734 = vadd.f32 %v2628, %v2180
    %v2735 = vadd.f32 %v2630, %v2182
    %v2736 = vadd.f32 %v2632, %v2184
    %v2737 = vadd.f32 %v2634, %v2186
    %v2738 = vadd.f32 %v2636, %v2188
    %v2739 = vadd.f32 %v2638, %v2190
    %v2740 = vadd.f32 %v2640, %v2192
    %v2741 = vadd.f32 %v2642, %v2194
    %v2742 = vadd.f32 %v2644, %v2196
    %v2743 = vadd.f32 %v2646, %v2198
    %v2744 = vadd.f32 %v2648, %v2200
    %v2745 = vadd.f32 %v2650, %v2202
    %v2746 = vadd.f32 %v2652, %v2204
    %v2747 = vadd.f32 %v2654, %v2206
    %v2748 = vadd.f32 %v2656, %v2208
    %v2749 = vadd.f32 %v2658, %v2210
    %v2750 = vadd.f32 %v2660, %v2212
    %v2751 = vadd.f32 %v2662, %v2214
    %v2752 = vadd.f32 %v2664, %v2216
    %v2753 = vadd.f32 %v2666, %v2218
    %v2754 = vadd.f32 %v2668, %v2220
    %v2755 = vadd.f32 %v2670, %v2222
    %v2756 = vadd.f32 %v2672, %v2224
    %v2757 = vadd.f32 %v2674, %v2226
    %v2758 = vadd.f32 %v2676, %v2228
    %v2759 = vadd.f32 %v2678, %v2230
    %v2760 = vadd.f32 %v2680, %v2232
    %v2761 = vadd.f32 %v2682, %v2234
    %v2762 = vadd.f32 %v2684, %v2236
    %v2763 = vadd.f32 %v2686, %v2238
    %v2764 = vadd.f32 %v2688, %v2240
    %v2765 = vadd.f32 %v2690, %v2242
    %v2766 = vadd.f32 %v2692, %v2244
    %v2767 = vadd.f32 %v2694, %v2246
    %v2768 = vadd.f32 %v2696, %v2248
    %v2769 = vadd.f32 %v2698, %v2250
    %v2770 = vadd.f32 %v2700, %v2252
    %v2771 = vadd.f32 %v2702, %v2254
    %v2772 = vadd.f32 %v2704, %v2256
    %v2773 = vadd.f32 %v2706, %v2258
    %v2774 = vadd.f32 %v2708, %v2260
    %v2775 = vadd.f32 %v2710, %v2262
    %v2776 = vadd.f32 %v2712, %v2264
    %v2777 = vsub.f32 %v2006, %v2713
    %v2778 = vsub.f32 %v2007, %v2714
    %v2779 = vsub.f32 %v2008, %v2715
    %v2780 = vsub.f32 %v2009, %v2716
    %v2781 = vsub.f32 %v2010, %v2717
    %v2782 = vsub.f32 %v2011, %v2718
    %v2783 = vsub.f32 %v2012, %v2719
    %v2784 = vsub.f32 %v2013, %v2720
    %v2785 = vsub.f32 %v2014, %v2721
    %v2786 = vsub.f32 %v2015, %v2722
    %v2787 = vsub.f32 %v2016, %v2723
    %v2788 = vsub.f32 %v2017, %v2724
    %v2789 = vsub.f32 %v2018, %v2725
    %v2790 = vsub.f32 %v2019, %v2726
    %v2791 = vsub.f32 %v2020, %v2727
    %v2792 = vsub.f32 %v2021, %v2728
    %v2793 = vsub.f32 %v2022, %v2729
    %v2794 = vsub.f32 %v2023, %v2730
    %v2795 = vsub.f32 %v2024, %v2731
    %v2796 = vsub.f32 %v2025, %v2732
    %v2797 = vsub.f32 %v2026, %v2733
    %v2798 = vsub.f32 %v2027, %v2734
    %v2799 = vsub.f32 %v2028, %v2735
    %v2800 = vsub.f32 %v2029, %v2736
    %v2801 = vsub.f32 %v2030, %v2737
    %v2802 = vsub.f32 %v2031, %v2738
    %v2803 = vsub.f32 %v2032, %v2739
    %v2804 = vsub.f32 %v2033, %v2740
    %v2805 = vsub.f32 %v2034, %v2741
    %v2806 = vsub.f32 %v2035, %v2742
    %v2807 = vsub.f32 %v2036, %v2743
    %v2808 = vsub.f32 %v2037, %v2744
    %v2809 = vsub.f32 %v2038, %v2745
    %v2810 = vsub.f32 %v2039, %v2746
    %v2811 = vsub.f32 %v2040, %v2747
    %v2812 = vsub.f32 %v2041, %v2748
    %v2813 = vsub.f32 %v2042, %v2749
    %v2814 = vsub.f32 %v2043, %v2750
    %v2815 = vsub.f32 %v2044, %v2751
    %v2816 = vsub.f32 %v2045, %v2752
    %v2817 = vsub.f32 %v2046, %v2753
    %v2818 = vsub.f32 %v2047, %v2754
    %v2819 = vsub.f32 %v2048, %v2755
    %v2820 = vsub.f32 %v2049, %v2756
    %v2821 = vsub.f32 %v2050, %v2757
    %v2822 = vsub.f32 %v2051, %v2758
    %v2823 = vsub.f32 %v2052, %v2759
    %v2824 = vsub.f32 %v2053, %v2760
    %v2825 = vsub.f32 %v2054, %v2761
    %v2826 = vsub.f32 %v2055, %v2762
    %v2827 = vsub.f32 %v2056, %v2763
    %v2828 = vsub.f32 %v2057, %v2764
    %v2829 = vsub.f32 %v2058, %v2765
    %v2830 = vsub.f32 %v2059, %v2766
    %v2831 = vsub.f32 %v2060, %v2767
    %v2832 = vsub.f32 %v2061, %v2768
    %v2833 = vsub.f32 %v2062, %v2769
    %v2834 = vsub.f32 %v2063, %v2770
    %v2835 = vsub.f32 %v2064, %v2771
    %v2836 = vsub.f32 %v2065, %v2772
    %v2837 = vsub.f32 %v2066, %v2773
    %v2838 = vsub.f32 %v2067, %v2774
    %v2839 = vsub.f32 %v2068, %v2775
    %v2840 = vsub.f32 %v2069, %v2776
    %v2841 = vsel %vm2072, %v2777, 0.0
    %v2842 = vsel %vm2072, %v2778, 0.0
    %v2843 = vsel %vm2072, %v2779, 0.0
    %v2844 = vsel %vm2072, %v2780, 0.0
    %v2845 = vsel %vm2072, %v2781, 0.0
    %v2846 = vsel %vm2072, %v2782, 0.0
    %v2847 = vsel %vm2072, %v2783, 0.0
    %v2848 = vsel %vm2072, %v2784, 0.0
    %v2849 = vsel %vm2072, %v2785, 0.0
    %v2850 = vsel %vm2072, %v2786, 0.0
    %v2851 = vsel %vm2072, %v2787, 0.0
    %v2852 = vsel %vm2072, %v2788, 0.0
    %v2853 = vsel %vm2072, %v2789, 0.0
    %v2854 = vsel %vm2072, %v2790, 0.0
    %v2855 = vsel %vm2072, %v2791, 0.0
    %v2856 = vsel %vm2072, %v2792, 0.0
    %v2857 = vsel %vm2072, %v2793, 0.0
    %v2858 = vsel %vm2072, %v2794, 0.0
    %v2859 = vsel %vm2072, %v2795, 0.0
    %v2860 = vsel %vm2072, %v2796, 0.0
    %v2861 = vsel %vm2072, %v2797, 0.0
    %v2862 = vsel %vm2072, %v2798, 0.0
    %v2863 = vsel %vm2072, %v2799, 0.0
    %v2864 = vsel %vm2072, %v2800, 0.0
    %v2865 = vsel %vm2072, %v2801, 0.0
    %v2866 = vsel %vm2072, %v2802, 0.0
    %v2867 = vsel %vm2072, %v2803, 0.0
    %v2868 = vsel %vm2072, %v2804, 0.0
    %v2869 = vsel %vm2072, %v2805, 0.0
    %v2870 = vsel %vm2072, %v2806, 0.0
    %v2871 = vsel %vm2072, %v2807, 0.0
    %v2872 = vsel %vm2072, %v2808, 0.0
    %v2873 = vsel %vm2072, %v2809, 0.0
    %v2874 = vsel %vm2072, %v2810, 0.0
    %v2875 = vsel %vm2072, %v2811, 0.0
    %v2876 = vsel %vm2072, %v2812, 0.0
    %v2877 = vsel %vm2072, %v2813, 0.0
    %v2878 = vsel %vm2072, %v2814, 0.0
    %v2879 = vsel %vm2072, %v2815, 0.0
    %v2880 = vsel %vm2072, %v2816, 0.0
    %v2881 = vsel %vm2072, %v2817, 0.0
    %v2882 = vsel %vm2072, %v2818, 0.0
    %v2883 = vsel %vm2072, %v2819, 0.0
    %v2884 = vsel %vm2072, %v2820, 0.0
    %v2885 = vsel %vm2072, %v2821, 0.0
    %v2886 = vsel %vm2072, %v2822, 0.0
    %v2887 = vsel %vm2072, %v2823, 0.0
    %v2888 = vsel %vm2072, %v2824, 0.0
    %v2889 = vsel %vm2072, %v2825, 0.0
    %v2890 = vsel %vm2072, %v2826, 0.0
    %v2891 = vsel %vm2072, %v2827, 0.0
    %v2892 = vsel %vm2072, %v2828, 0.0
    %v2893 = vsel %vm2072, %v2829, 0.0
    %v2894 = vsel %vm2072, %v2830, 0.0
    %v2895 = vsel %vm2072, %v2831, 0.0
    %v2896 = vsel %vm2072, %v2832, 0.0
    %v2897 = vsel %vm2072, %v2833, 0.0
    %v2898 = vsel %vm2072, %v2834, 0.0
    %v2899 = vsel %vm2072, %v2835, 0.0
    %v2900 = vsel %vm2072, %v2836, 0.0
    %v2901 = vsel %vm2072, %v2837, 0.0
    %v2902 = vsel %vm2072, %v2838, 0.0
    %v2903 = vsel %vm2072, %v2839, 0.0
    %v2904 = vsel %vm2072, %v2840, 0.0
    %2905 = vst [vmem:[%s5] sm:$0xff] %v2841
    %2906 = vst [vmem:[%s5 + $0x8] sm:$0xff] %v2842
    %2907 = vst [vmem:[%s5 + $0x10] sm:$0xff] %v2843
    %2908 = vst [vmem:[%s5 + $0x18] sm:$0xff] %v2844
    %2909 = vst [vmem:[%s5 + $0x20] sm:$0xff] %v2845
    %2910 = vst [vmem:[%s5 + $0x28] sm:$0xff] %v2846
    %2911 = vst [vmem:[%s5 + $0x30] sm:$0xff] %v2847
    %2912 = vst [vmem:[%s5 + $0x38] sm:$0xff] %v2848
    %2913 = vst [vmem:[%s5 + $0x40] sm:$0xff] %v2849
    %2914 = vst [vmem:[%s5 + $0x48] sm:$0xff] %v2850
    %2915 = vst [vmem:[%s5 + $0x50] sm:$0xff] %v2851
    %2916 = vst [vmem:[%s5 + $0x58] sm:$0xff] %v2852
    %2917 = vst [vmem:[%s5 + $0x60] sm:$0xff] %v2853
    %2918 = vst [vmem:[%s5 + $0x68] sm:$0xff] %v2854
    %2919 = vst [vmem:[%s5 + $0x70] sm:$0xff] %v2855
    %2920 = vst [vmem:[%s5 + $0x78] sm:$0xff] %v2856
    %2921 = vst [vmem:[%s5 + $0x80] sm:$0xff] %v2857
    %2922 = vst [vmem:[%s5 + $0x88] sm:$0xff] %v2858
    %2923 = vst [vmem:[%s5 + $0x90] sm:$0xff] %v2859
    %2924 = vst [vmem:[%s5 + $0x98] sm:$0xff] %v2860
    %2925 = vst [vmem:[%s5 + $0xa0] sm:$0xff] %v2861
    %2926 = vst [vmem:[%s5 + $0xa8] sm:$0xff] %v2862
    %2927 = vst [vmem:[%s5 + $0xb0] sm:$0xff] %v2863
    %2928 = vst [vmem:[%s5 + $0xb8] sm:$0xff] %v2864
    %2929 = vst [vmem:[%s5 + $0xc0] sm:$0xff] %v2865
    %2930 = vst [vmem:[%s5 + $0xc8] sm:$0xff] %v2866
    %2931 = vst [vmem:[%s5 + $0xd0] sm:$0xff] %v2867
    %2932 = vst [vmem:[%s5 + $0xd8] sm:$0xff] %v2868
    %2933 = vst [vmem:[%s5 + $0xe0] sm:$0xff] %v2869
    %2934 = vst [vmem:[%s5 + $0xe8] sm:$0xff] %v2870
    %2935 = vst [vmem:[%s5 + $0xf0] sm:$0xff] %v2871
    %2936 = vst [vmem:[%s5 + $0xf8] sm:$0xff] %v2872
    %2937 = vst [vmem:[%s5 + $0x100] sm:$0xff] %v2873
    %2938 = vst [vmem:[%s5 + $0x108] sm:$0xff] %v2874
    %2939 = vst [vmem:[%s5 + $0x110] sm:$0xff] %v2875
    %2940 = vst [vmem:[%s5 + $0x118] sm:$0xff] %v2876
    %2941 = vst [vmem:[%s5 + $0x120] sm:$0xff] %v2877
    %2942 = vst [vmem:[%s5 + $0x128] sm:$0xff] %v2878
    %2943 = vst [vmem:[%s5 + $0x130] sm:$0xff] %v2879
    %2944 = vst [vmem:[%s5 + $0x138] sm:$0xff] %v2880
    %2945 = vst [vmem:[%s5 + $0x140] sm:$0xff] %v2881
    %2946 = vst [vmem:[%s5 + $0x148] sm:$0xff] %v2882
    %2947 = vst [vmem:[%s5 + $0x150] sm:$0xff] %v2883
    %2948 = vst [vmem:[%s5 + $0x158] sm:$0xff] %v2884
    %2949 = vst [vmem:[%s5 + $0x160] sm:$0xff] %v2885
    %2950 = vst [vmem:[%s5 + $0x168] sm:$0xff] %v2886
    %2951 = vst [vmem:[%s5 + $0x170] sm:$0xff] %v2887
    %2952 = vst [vmem:[%s5 + $0x178] sm:$0xff] %v2888
    %2953 = vst [vmem:[%s5 + $0x180] sm:$0xff] %v2889
    %2954 = vst [vmem:[%s5 + $0x188] sm:$0xff] %v2890
    %2955 = vst [vmem:[%s5 + $0x190] sm:$0xff] %v2891
    %2956 = vst [vmem:[%s5 + $0x198] sm:$0xff] %v2892
    %2957 = vst [vmem:[%s5 + $0x1a0] sm:$0xff] %v2893
    %2958 = vst [vmem:[%s5 + $0x1a8] sm:$0xff] %v2894
    %2959 = vst [vmem:[%s5 + $0x1b0] sm:$0xff] %v2895
    %2960 = vst [vmem:[%s5 + $0x1b8] sm:$0xff] %v2896
    %2961 = vst [vmem:[%s5 + $0x1c0] sm:$0xff] %v2897
    %2962 = vst [vmem:[%s5 + $0x1c8] sm:$0xff] %v2898
    %2963 = vst [vmem:[%s5 + $0x1d0] sm:$0xff] %v2899
    %2964 = vst [vmem:[%s5 + $0x1d8] sm:$0xff] %v2900
    %2965 = vst [vmem:[%s5 + $0x1e0] sm:$0xff] %v2901
    %2966 = vst [vmem:[%s5 + $0x1e8] sm:$0xff] %v2902
    %2967 = vst [vmem:[%s5 + $0x1f0] sm:$0xff] %v2903
    %2968 = vst [vmem:[%s5 + $0x1f8] sm:$0xff] %v2904
  $region25: #{gcn_forward.7} parent=0 // pred_fallthru
    _
  // Predicated region
  $region26: #{gcn_forward.7} parent=0 // pred_check
    _
  $region27: #{gcn_forward.7} parent=0 // pred_check_branch
    %2970 = sbr.rel (0) target = $region29
  $region28: #{gcn_forward.7} parent=0 // pred_region
    _
  $region29: #{gcn_forward.7} parent=0 // pred_fallthru
    _
  // Predicated region
  $region30: #{gcn_forward.7} parent=0 // pred_check
    _
  $region31: #{gcn_forward.7} parent=0 // pred_check_branch
    %2972 = sbr.rel (0) target = $region33
  $region32: #{gcn_forward.7} parent=0 // pred_region
    _
  $region33: #{gcn_forward.7} parent=0 // pred_fallthru
    _

</llo_original>
